<compile_context>
chip_gen: v7x
topology: tpu7x:2x2x1
jax: 0.10.0
libtpu: 0.0.40
codegen_flags: <defaults>
</compile_context>

<pallas_src>
import functools
import math

import jax
import jax.numpy as jnp
from jax import lax
from jax.experimental import pallas as pl
from jax.experimental.pallas import tpu as pltpu


_VMEM_LIMIT = 32 * 1024 * 1024   # explicit budget: safe on v5e/v6e (128 MiB) and v7x (64 MiB)


def _round_up(x, m):
    return ((x + m - 1) // m) * m


def _compiler_params():
    return pltpu.CompilerParams(dimension_semantics=("parallel",),
                                vmem_limit_bytes=_VMEM_LIMIT)


# ----------------------------------------------------------------------------
# In-kernel helpers
# ----------------------------------------------------------------------------
def _layer_norm(x, alpha, bias, eps, denom):
    """torch Norm: alpha * (x - mean) / (std_unbiased + eps) + bias   (exact division)."""
    mean = jnp.mean(x, axis=-1, keepdims=True)
    xc = x - mean
    std = jnp.sqrt(jnp.sum(xc * xc, axis=-1, keepdims=True) / denom)
    return alpha * xc / (std + eps) + bias


def _attention_core(q, k, v, neg, cq, sq, ck, sk, wo, heads, d_k):
    """RoPE + masked softmax attention + per-head output projection (summed).

    q arrives pre-scaled by 1/sqrt(d_k) (folded into the Q weights at init).
    q/k per-head channels are de-interleaved (evens | odds) via a column permutation of the
    projection weights, so RoPE is a rotate-half on contiguous halves.  v keeps the original
    channel order, so the per-head output projection slices of wo match the torch layout.
    """
    dk2 = d_k // 2
    dn = (((1,), (1,)), ((), ()))      # contract last dims of both operands (q @ k^T)
    acc = None
    for h in range(heads):             # heads=4 unroll; overhead/VPU bound at these shapes
        base = h * d_k
        q0 = q[:, base:base + dk2]
        q1 = q[:, base + dk2:base + d_k]
        k0 = k[:, base:base + dk2]
        k1 = k[:, base + dk2:base + d_k]
        # RoPE: even' = x0*cos - x1*sin ; odd' = x1*cos + x0*sin
        qr0 = q0 * cq - q1 * sq
        qr1 = q1 * cq + q0 * sq
        kr0 = k0 * ck - k1 * sk
        kr1 = k1 * ck + k0 * sk
        # score = qr . kr as the sum of the two half-channel contractions (no concatenates)
        s = lax.dot_general(qr0.astype(jnp.bfloat16), kr0.astype(jnp.bfloat16),
                            dn, preferred_element_type=jnp.float32)
        s = s + lax.dot_general(qr1.astype(jnp.bfloat16), kr1.astype(jnp.bfloat16),
                                dn, preferred_element_type=jnp.float32)
        s = s + neg                                     # additive mask bias (== -1e9 fill)
        s = s - jnp.max(s, axis=-1, keepdims=True)
        p = jnp.exp(s)
        p = p * pl.reciprocal(jnp.sum(p, axis=-1, keepdims=True), approx=True)
        vh = v[:, base:base + d_k]
        oh = jnp.dot(p.astype(jnp.bfloat16), vh.astype(jnp.bfloat16),
                     preferred_element_type=jnp.float32)            # [Sq, d_k]
        part = jnp.dot(oh.astype(jnp.bfloat16), wo[base:base + d_k, :],
                       preferred_element_type=jnp.float32)          # [Sq, D]
        acc = part if acc is None else acc + part
    return acc


# ----------------------------------------------------------------------------
# Fused Pallas kernels (one per transformer sub-block)
# ----------------------------------------------------------------------------
def _self_attn_block_kernel(x_ref, na_ref, nb_ref, wqkv_ref, bqkv_ref, wo_ref, bo_ref,
                            cos_ref, sin_ref, m_ref, o_ref, *, heads, d_k, eps, denom):
    """o = x + OutProj(Attention(RoPE(QKV(Norm(x)))))   for one batch element."""
    D = heads * d_k
    x = x_ref[0]                                          # [S, D] f32 residual stream
    xn = _layer_norm(x, na_ref[...], nb_ref[...], eps, denom)
    qkv = jnp.dot(xn.astype(jnp.bfloat16), wqkv_ref[...],
                  preferred_element_type=jnp.float32) + bqkv_ref[...]
    q = qkv[:, :D]
    k = qkv[:, D:2 * D]
    v = qkv[:, 2 * D:]
    neg = jnp.where(m_ref[0] == 0.0, -1000000000.0, 0.0)  # [1, Sk] additive mask bias
    cos = cos_ref[...]
    sin = sin_ref[...]
    attn = _attention_core(q, k, v, neg, cos, sin, cos, sin, wo_ref[...], heads, d_k)
    # TODO(synk): dropout layers are identity (eval-mode forward)
    o_ref[0] = x + attn + bo_ref[...]


def _cross_attn_block_kernel(x_ref, kv_ref, na_ref, nb_ref, wq_ref, bq_ref,
                             wkv_ref, bkv_ref, wo_ref, bo_ref,
                             cq_ref, sq_ref, ck_ref, sk_ref, m_ref, o_ref,
                             *, heads, d_k, eps, denom):
    """o = x + OutProj(Attention(Q=Norm(x), K/V=e_outputs))   for one batch element."""
    D = heads * d_k
    x = x_ref[0]                                          # [Sq, D]
    xn = _layer_norm(x, na_ref[...], nb_ref[...], eps, denom)
    q = jnp.dot(xn.astype(jnp.bfloat16), wq_ref[...],
                preferred_element_type=jnp.float32) + bq_ref[...]
    kv = jnp.dot(kv_ref[0].astype(jnp.bfloat16), wkv_ref[...],
                 preferred_element_type=jnp.float32) + bkv_ref[...]
    k = kv[:, :D]
    v = kv[:, D:]
    neg = jnp.where(m_ref[0] == 0.0, -1000000000.0, 0.0)
    attn = _attention_core(q, k, v, neg, cq_ref[...], sq_ref[...],
                           ck_ref[...], sk_ref[...], wo_ref[...], heads, d_k)
    o_ref[0] = x + attn + bo_ref[...]


def _ffn_block_kernel(x_ref, a_ref, b_ref, w1_ref, b1_ref, w2_ref, b2_ref, o_ref,
                      *, eps, denom):
    """o = x + W2(ReLU(W1(Norm(x))))  — both FFN weights VMEM-resident, hidden never hits HBM."""
    x = x_ref[0]
    xn = _layer_norm(x, a_ref[...], b_ref[...], eps, denom)
    h = jnp.dot(xn.astype(jnp.bfloat16), w1_ref[...],
                preferred_element_type=jnp.float32) + b1_ref[...]
    h = jnp.maximum(h, 0.0)
    y = jnp.dot(h.astype(jnp.bfloat16), w2_ref[...],
                preferred_element_type=jnp.float32) + b2_ref[...]
    o_ref[0] = x + y


def _norm_kernel(x_ref, a_ref, b_ref, o_ref, *, eps, denom):
    o_ref[0] = _layer_norm(x_ref[0], a_ref[...], b_ref[...], eps, denom)


def _norm_proj_kernel(x_ref, a_ref, b_ref, w_ref, bias_ref, o_ref, *, eps, denom):
    """Final decoder Norm fused with the (pre-padded, lane-dense) vocabulary projection."""
    xn = _layer_norm(x_ref[0], a_ref[...], b_ref[...], eps, denom)
    o_ref[0] = jnp.dot(xn.astype(jnp.bfloat16), w_ref[...],
                       preferred_element_type=jnp.float32) + bias_ref[...]


# ----------------------------------------------------------------------------
# Pallas wrappers
# ----------------------------------------------------------------------------
def self_attn_block(x, mask, p, alpha, bias, cos, sin, heads):
    B, S, D = x.shape
    d_k = D // heads
    dk2 = d_k // 2
    kern = functools.partial(_self_attn_block_kernel, heads=heads, d_k=d_k,
                             eps=1e-6, denom=float(D - 1))
    return pl.pallas_call(
        kern,
        out_shape=jax.ShapeDtypeStruct((B, S, D), jnp.float32),
        grid=(B,),
        in_specs=[
            pl.BlockSpec((1, S, D), lambda b: (b, 0, 0)),      # x (residual stream)
            pl.BlockSpec((1, D), lambda b: (0, 0)),            # norm alpha
            pl.BlockSpec((1, D), lambda b: (0, 0)),            # norm bias
            pl.BlockSpec((D, 3 * D), lambda b: (0, 0)),        # fused wq|wk|wv (bf16)
            pl.BlockSpec((1, 3 * D), lambda b: (0, 0)),        # fused bias
            pl.BlockSpec((D, D), lambda b: (0, 0)),            # wo (bf16)
            pl.BlockSpec((1, D), lambda b: (0, 0)),            # bo
            pl.BlockSpec((S, dk2), lambda b: (0, 0)),          # cos
            pl.BlockSpec((S, dk2), lambda b: (0, 0)),          # sin
            pl.BlockSpec((1, 1, S), lambda b: (b, 0, 0)),      # mask
        ],
        out_specs=pl.BlockSpec((1, S, D), lambda b: (b, 0, 0)),
        compiler_params=_compiler_params(),
    )(x, alpha, bias, p["wqkv"], p["bqkv"], p["wo"], p["bo"], cos[:S], sin[:S], mask)


def cross_attn_block(x, kv, mask, p, alpha, bias, cos, sin, heads):
    B, Sq, D = x.shape
    Sk = kv.shape[1]
    d_k = D // heads
    dk2 = d_k // 2
    kern = functools.partial(_cross_attn_block_kernel, heads=heads, d_k=d_k,
                             eps=1e-6, denom=float(D - 1))
    return pl.pallas_call(
        kern,
        out_shape=jax.ShapeDtypeStruct((B, Sq, D), jnp.float32),
        grid=(B,),
        in_specs=[
            pl.BlockSpec((1, Sq, D), lambda b: (b, 0, 0)),     # x (decoder stream)
            pl.BlockSpec((1, Sk, D), lambda b: (b, 0, 0)),     # e_outputs (K/V source)
            pl.BlockSpec((1, D), lambda b: (0, 0)),            # norm alpha
            pl.BlockSpec((1, D), lambda b: (0, 0)),            # norm bias
            pl.BlockSpec((D, D), lambda b: (0, 0)),            # wq (bf16, scale folded)
            pl.BlockSpec((1, D), lambda b: (0, 0)),            # bq
            pl.BlockSpec((D, 2 * D), lambda b: (0, 0)),        # fused wk|wv (bf16)
            pl.BlockSpec((1, 2 * D), lambda b: (0, 0)),        # fused bias
            pl.BlockSpec((D, D), lambda b: (0, 0)),            # wo
            pl.BlockSpec((1, D), lambda b: (0, 0)),            # bo
            pl.BlockSpec((Sq, dk2), lambda b: (0, 0)),         # cos_q
            pl.BlockSpec((Sq, dk2), lambda b: (0, 0)),         # sin_q
            pl.BlockSpec((Sk, dk2), lambda b: (0, 0)),         # cos_k
            pl.BlockSpec((Sk, dk2), lambda b: (0, 0)),         # sin_k
            pl.BlockSpec((1, 1, Sk), lambda b: (b, 0, 0)),     # mask
        ],
        out_specs=pl.BlockSpec((1, Sq, D), lambda b: (b, 0, 0)),
        compiler_params=_compiler_params(),
    )(x, kv, alpha, bias, p["wq"], p["bq"], p["wkv"], p["bkv"], p["wo"], p["bo"],
      cos[:Sq], sin[:Sq], cos[:Sk], sin[:Sk], mask)


def ffn_block(x, p, alpha, bias):
    B, S, D = x.shape
    d_ff = p["w1"].shape[1]
    kern = functools.partial(_ffn_block_kernel, eps=1e-6, denom=float(D - 1))
    return pl.pallas_call(
        kern,
        out_shape=jax.ShapeDtypeStruct((B, S, D), jnp.float32),
        grid=(B,),
        in_specs=[
            pl.BlockSpec((1, S, D), lambda b: (b, 0, 0)),
            pl.BlockSpec((1, D), lambda b: (0, 0)),
            pl.BlockSpec((1, D), lambda b: (0, 0)),
            pl.BlockSpec((D, d_ff), lambda b: (0, 0)),         # w1 (bf16, 128 KiB)
            pl.BlockSpec((1, d_ff), lambda b: (0, 0)),
            pl.BlockSpec((d_ff, D), lambda b: (0, 0)),         # w2 (bf16, 128 KiB)
            pl.BlockSpec((1, D), lambda b: (0, 0)),
        ],
        out_specs=pl.BlockSpec((1, S, D), lambda b: (b, 0, 0)),
        compiler_params=_compiler_params(),
    )(x, alpha, bias, p["w1"], p["b1"], p["w2"], p["b2"])


def layer_norm(x, alpha, bias):
    B, S, D = x.shape
    kern = functools.partial(_norm_kernel, eps=1e-6, denom=float(D - 1))
    return pl.pallas_call(
        kern,
        out_shape=jax.ShapeDtypeStruct((B, S, D), jnp.float32),
        grid=(B,),
        in_specs=[pl.BlockSpec((1, S, D), lambda b: (b, 0, 0)),
                  pl.BlockSpec((1, D), lambda b: (0, 0)),
                  pl.BlockSpec((1, D), lambda b: (0, 0))],
        out_specs=pl.BlockSpec((1, S, D), lambda b: (b, 0, 0)),
        compiler_params=_compiler_params(),
    )(x, alpha, bias)


def norm_proj_block(x, alpha, bias, w, b):
    B, S, D = x.shape
    Np = w.shape[1]
    kern = functools.partial(_norm_proj_kernel, eps=1e-6, denom=float(D - 1))
    return pl.pallas_call(
        kern,
        out_shape=jax.ShapeDtypeStruct((B, S, Np), jnp.float32),
        grid=(B,),
        in_specs=[pl.BlockSpec((1, S, D), lambda b: (b, 0, 0)),
                  pl.BlockSpec((1, D), lambda b: (0, 0)),
                  pl.BlockSpec((1, D), lambda b: (0, 0)),
                  pl.BlockSpec((D, Np), lambda b: (0, 0)),
                  pl.BlockSpec((1, Np), lambda b: (0, 0))],
        out_specs=pl.BlockSpec((1, S, Np), lambda b: (b, 0, 0)),
        compiler_params=_compiler_params(),
    )(x, alpha, bias, w, b)


# ----------------------------------------------------------------------------
# Model forward (embedding gather in plain JAX, everything else in fused kernels)
# ----------------------------------------------------------------------------
def encoder_forward(src, mask, p, cos, sin, heads):
    x = jnp.take(p["embed"], src, axis=0)
    for lp in p["layers"]:
        x = self_attn_block(x, mask, lp["attn"], lp["n1a"], lp["n1b"], cos, sin, heads)
        x = ffn_block(x, lp["ff"], lp["n2a"], lp["n2b"])
    return layer_norm(x, p["na"], p["nb"])


def decoder_forward(trg, e_outputs, src_mask, trg_mask, p, cos, sin, heads):
    x = jnp.take(p["embed"], trg, axis=0)
    for lp in p["layers"]:
        x = self_attn_block(x, trg_mask, lp["attn1"], lp["n1a"], lp["n1b"], cos, sin, heads)
        x = cross_attn_block(x, e_outputs, src_mask, lp["attn2"],
                             lp["n2a"], lp["n2b"], cos, sin, heads)
        x = ffn_block(x, lp["ff"], lp["n3a"], lp["n3b"])
    return x   # final decoder Norm is fused into the output projection kernel


def transformer_forward(params, src, trg, src_mask, trg_mask, cos, sin, *, heads, trg_vocab):
    e_outputs = encoder_forward(src, src_mask, params["encoder"], cos, sin, heads)
    d_x = decoder_forward(trg, e_outputs, src_mask, trg_mask,
                          params["decoder"], cos, sin, heads)
    logits = norm_proj_block(d_x, params["decoder"]["na"], params["decoder"]["nb"],
                             params["wout"], params["bout"])
    return logits[:, :, :trg_vocab]          # strip the lane-dense vocab padding


# ----------------------------------------------------------------------------
# Deterministic parameter initialization (pre-permuted / pre-fused / pre-padded / bf16)
# ----------------------------------------------------------------------------
def _init_linear(key, d_in, d_out):
    kw, kb = jax.random.split(key)
    w = jax.random.normal(kw, (d_in, d_out), jnp.float32) * 0.02
    b = jax.random.normal(kb, (d_out,), jnp.float32) * 0.02
    return w, b


def _rope_perm(d_model, heads):
    """Per-head column order: even channels first, then odd channels (de-interleave)."""
    d_k = d_model // heads
    order = []
    for h in range(heads):
        base = h * d_k
        order += [base + j for j in range(0, d_k, 2)]
        order += [base + j for j in range(1, d_k, 2)]
    return jnp.array(order, dtype=jnp.int32)


def _init_norm(d_model):
    return jnp.ones((1, d_model), jnp.float32), jnp.zeros((1, d_model), jnp.float32)


def _init_mha(key, d_model, heads, cross=False):
    kq, kk, kv, ko = jax.random.split(key, 4)
    wq, bq = _init_linear(kq, d_model, d_model)
    wk, bk = _init_linear(kk, d_model, d_model)
    wv, bv = _init_linear(kv, d_model, d_model)
    wo, bo = _init_linear(ko, d_model, d_model)
    d_k = d_model // heads
    scale = 1.0 / math.sqrt(d_k)
    perm = _rope_perm(d_model, heads)
    wq, bq = wq[:, perm] * scale, bq[perm] * scale       # de-interleave + fold 1/sqrt(d_k)
    wk, bk = wk[:, perm], bk[perm]                       # de-interleave (no scale)
    p = {"wo": wo.astype(jnp.bfloat16), "bo": bo.reshape(1, d_model)}
    if cross:
        p["wq"], p["bq"] = wq.astype(jnp.bfloat16), bq.reshape(1, d_model)
        p["wkv"] = jnp.concatenate([wk, wv], axis=1).astype(jnp.bfloat16)
        p["bkv"] = jnp.concatenate([bk, bv]).reshape(1, 2 * d_model)
    else:
        p["wqkv"] = jnp.concatenate([wq, wk, wv], axis=1).astype(jnp.bfloat16)
        p["bqkv"] = jnp.concatenate([bq, bk, bv]).reshape(1, 3 * d_model)
    return p


def _init_ff(key, d_model, d_ff):
    k1, k2 = jax.random.split(key)
    w1, b1 = _init_linear(k1, d_model, d_ff)
    w2, b2 = _init_linear(k2, d_ff, d_model)
    return {"w1": w1.astype(jnp.bfloat16), "b1": b1.reshape(1, d_ff),
            "w2": w2.astype(jnp.bfloat16), "b2": b2.reshape(1, d_model)}


def init_params(key, src_vocab, trg_vocab, d_model, N, heads, d_ff):
    ke, kd, ko = jax.random.split(key, 3)

    enc = {"embed": jax.random.normal(jax.random.fold_in(ke, 0),
                                      (src_vocab, d_model), jnp.float32) * 0.02,
           "layers": []}
    for i in range(N):
        kl = jax.random.fold_in(ke, i + 1)
        ka, kf = jax.random.split(kl)
        n1a, n1b = _init_norm(d_model)
        n2a, n2b = _init_norm(d_model)
        enc["layers"].append({"n1a": n1a, "n1b": n1b, "n2a": n2a, "n2b": n2b,
                              "attn": _init_mha(ka, d_model, heads),
                              "ff": _init_ff(kf, d_model, d_ff)})
    enc["na"], enc["nb"] = _init_norm(d_model)

    dec = {"embed": jax.random.normal(jax.random.fold_in(kd, 0),
                                      (trg_vocab, d_model), jnp.float32) * 0.02,
           "layers": []}
    for i in range(N):
        kl = jax.random.fold_in(kd, i + 1)
        ka1, ka2, kf = jax.random.split(kl, 3)
        n1a, n1b = _init_norm(d_model)
        n2a, n2b = _init_norm(d_model)
        n3a, n3b = _init_norm(d_model)
        dec["layers"].append({"n1a": n1a, "n1b": n1b, "n2a": n2a, "n2b": n2b,
                              "n3a": n3a, "n3b": n3b,
                              "attn1": _init_mha(ka1, d_model, heads),
                              "attn2": _init_mha(ka2, d_model, heads, cross=True),
                              "ff": _init_ff(kf, d_model, d_ff)})
    dec["na"], dec["nb"] = _init_norm(d_model)

    # vocabulary projection, pre-padded to a lane-dense multiple of 128
    wout, bout = _init_linear(ko, d_model, trg_vocab)
    vpad = _round_up(trg_vocab, 128)
    wout = jnp.pad(wout, ((0, 0), (0, vpad - trg_vocab))).astype(jnp.bfloat16)
    bout = jnp.pad(bout, (0, vpad - trg_vocab)).reshape(1, vpad)

    return {"encoder": enc, "decoder": dec, "wout": wout, "bout": bout}


def rope_cache(d_k, seq_len, base=10000):
    theta = 1.0 / (base ** (jnp.arange(0, d_k, 2, dtype=jnp.float32) / d_k))
    idx = jnp.arange(seq_len, dtype=jnp.float32)
    idx_theta = jnp.outer(idx, theta)            # [S, d_k/2]
    return jnp.cos(idx_theta), jnp.sin(idx_theta)


# ----------------------------------------------------------------------------
if __name__ == "__main__":
    B, S = 2, 8
    d_model, heads, N_layers, d_ff = 32, 4, 2, 2048     # d_ff matches FeedForward default
    src_vocab, trg_vocab = 50, 60
    d_k = d_model // heads

    key = jax.random.PRNGKey(0)
    kp, ks, kt = jax.random.split(key, 3)

    params = init_params(kp, src_vocab, trg_vocab, d_model, N_layers, heads, d_ff)
    cos, sin = rope_cache(d_k, S)

    src = jax.random.randint(ks, (B, S), 0, src_vocab, dtype=jnp.int32)
    trg = jax.random.randint(kt, (B, S), 0, trg_vocab, dtype=jnp.int32)

    # padding-style masks, same shape/semantics as the PyTorch module ([B,1,S])
    src_mask = jnp.ones((B, 1, S), jnp.float32).at[1, 0, 6:].set(0.0)
    trg_mask = jnp.ones((B, 1, S), jnp.float32).at[0, 0, 7:].set(0.0)

    fwd = jax.jit(functools.partial(transformer_forward, heads=heads, trg_vocab=trg_vocab))
    out = fwd(params, src, trg, src_mask, trg_mask, cos, sin)
    out = jax.block_until_ready(out)
    assert out.shape == (B, S, trg_vocab), out.shape
    assert bool(jnp.all(jnp.isfinite(out)))
    print("KERNEL_OK")
</pallas_src>

<mosaic_0001>
module attributes {stable_mosaic.version = 11 : i64} {
  func.func @_ffn_block_kernel(%arg0: i32, %arg1: memref<1x8x32xf32, #tpu.memory_space<vmem>>, %arg2: memref<1x32xf32, #tpu.memory_space<vmem>>, %arg3: memref<1x32xf32, #tpu.memory_space<vmem>>, %arg4: memref<32x2048xbf16, #tpu.memory_space<vmem>>, %arg5: memref<1x2048xf32, #tpu.memory_space<vmem>>, %arg6: memref<2048x32xbf16, #tpu.memory_space<vmem>>, %arg7: memref<1x32xf32, #tpu.memory_space<vmem>>, %arg8: memref<1x8x32xf32, #tpu.memory_space<vmem>>) attributes {dimension_semantics = [#tpu.dimension_semantics<parallel>], iteration_bounds = array<i64: 2>, scalar_prefetch = 0 : i64, scratch_operands = 0 : i64, tpu.core_type = #tpu.core_type<tc>, window_params = [{transform_indices = @transform_0, window_bounds = array<i64: 1, 8, 32>}, {pipeline_mode = #tpu.pipeline_mode<synchronous>, transform_indices = @transform_1, window_bounds = array<i64: 1, 32>}, {pipeline_mode = #tpu.pipeline_mode<synchronous>, transform_indices = @transform_2, window_bounds = array<i64: 1, 32>}, {pipeline_mode = #tpu.pipeline_mode<synchronous>, transform_indices = @transform_3, window_bounds = array<i64: 32, 2048>}, {pipeline_mode = #tpu.pipeline_mode<synchronous>, transform_indices = @transform_4, window_bounds = array<i64: 1, 2048>}, {pipeline_mode = #tpu.pipeline_mode<synchronous>, transform_indices = @transform_5, window_bounds = array<i64: 2048, 32>}, {pipeline_mode = #tpu.pipeline_mode<synchronous>, transform_indices = @transform_6, window_bounds = array<i64: 1, 32>}, {transform_indices = @transform_7, window_bounds = array<i64: 1, 8, 32>}]} {
    %c0 = arith.constant 0 : index
    %c0_0 = arith.constant 0 : index
    %c0_1 = arith.constant 0 : index
    %0 = vector.load %arg1[%c0, %c0_0, %c0_1] : memref<1x8x32xf32, #tpu.memory_space<vmem>>, vector<1x8x32xf32>
    %1 = vector.shape_cast %0 : vector<1x8x32xf32> to vector<8x32xf32>
    %c0_2 = arith.constant 0 : index
    %c0_3 = arith.constant 0 : index
    %2 = vector.load %arg2[%c0_2, %c0_3] : memref<1x32xf32, #tpu.memory_space<vmem>>, vector<1x32xf32>
    %c0_4 = arith.constant 0 : index
    %c0_5 = arith.constant 0 : index
    %3 = vector.load %arg3[%c0_4, %c0_5] : memref<1x32xf32, #tpu.memory_space<vmem>>, vector<1x32xf32>
    %cst = arith.constant dense<0.000000e+00> : vector<8xf32>
    %4 = vector.multi_reduction <add>, %1, %cst [1] : vector<8x32xf32> to vector<8xf32>
    %5 = vector.shape_cast %4 : vector<8xf32> to vector<8x1xf32>
    %cst_6 = arith.constant 3.200000e+01 : f32
    %6 = vector.broadcast %cst_6 : f32 to vector<8x1xf32>
    %7 = arith.divf %5, %6 : vector<8x1xf32>
    %8 = vector.broadcast %7 : vector<8x1xf32> to vector<8x32xf32>
    %9 = arith.subf %1, %8 : vector<8x32xf32>
    %10 = arith.mulf %9, %9 : vector<8x32xf32>
    %cst_7 = arith.constant dense<0.000000e+00> : vector<8xf32>
    %11 = vector.multi_reduction <add>, %10, %cst_7 [1] : vector<8x32xf32> to vector<8xf32>
    %12 = vector.shape_cast %11 : vector<8xf32> to vector<8x1xf32>
    %cst_8 = arith.constant 3.100000e+01 : f32
    %13 = vector.broadcast %cst_8 : f32 to vector<8x1xf32>
    %14 = arith.divf %12, %13 : vector<8x1xf32>
    %15 = math.sqrt %14 : vector<8x1xf32>
    %16 = vector.broadcast %2 : vector<1x32xf32> to vector<8x32xf32>
    %17 = arith.mulf %16, %9 : vector<8x32xf32>
    %cst_9 = arith.constant 9.99999997E-7 : f32
    %18 = vector.broadcast %cst_9 : f32 to vector<8x1xf32>
    %19 = arith.addf %15, %18 : vector<8x1xf32>
    %20 = vector.broadcast %19 : vector<8x1xf32> to vector<8x32xf32>
    %21 = arith.divf %17, %20 : vector<8x32xf32>
    %22 = vector.broadcast %3 : vector<1x32xf32> to vector<8x32xf32>
    %23 = arith.addf %21, %22 : vector<8x32xf32>
    %24 = arith.truncf %23 : vector<8x32xf32> to vector<8x32xbf16>
    %c0_10 = arith.constant 0 : index
    %c0_11 = arith.constant 0 : index
    %25 = vector.load %arg4[%c0_10, %c0_11] : memref<32x2048xbf16, #tpu.memory_space<vmem>>, vector<32x2048xbf16>
    %cst_12 = arith.constant dense<0.000000e+00> : vector<8x2048xf32>
    %26 = tpu.matmul %24, %25, %cst_12 {dimension_numbers = #tpu.dot_dimension_numbers<[1], [0], [0], [1], [0, 0, 1, 1], [], []>} : vector<8x32xbf16>, vector<32x2048xbf16>, vector<8x2048xf32> -> vector<8x2048xf32>
    %c0_13 = arith.constant 0 : index
    %c0_14 = arith.constant 0 : index
    %27 = vector.load %arg5[%c0_13, %c0_14] : memref<1x2048xf32, #tpu.memory_space<vmem>>, vector<1x2048xf32>
    %28 = vector.broadcast %27 : vector<1x2048xf32> to vector<8x2048xf32>
    %29 = arith.addf %26, %28 : vector<8x2048xf32>
    %cst_15 = arith.constant 0.000000e+00 : f32
    %30 = vector.broadcast %cst_15 : f32 to vector<8x2048xf32>
    %31 = arith.maximumf %29, %30 : vector<8x2048xf32>
    %32 = arith.truncf %31 : vector<8x2048xf32> to vector<8x2048xbf16>
    %c0_16 = arith.constant 0 : index
    %c0_17 = arith.constant 0 : index
    %33 = vector.load %arg6[%c0_16, %c0_17] : memref<2048x32xbf16, #tpu.memory_space<vmem>>, vector<2048x32xbf16>
    %cst_18 = arith.constant dense<0.000000e+00> : vector<8x32xf32>
    %34 = tpu.matmul %32, %33, %cst_18 {dimension_numbers = #tpu.dot_dimension_numbers<[1], [0], [0], [1], [0, 0, 1, 1], [], []>} : vector<8x2048xbf16>, vector<2048x32xbf16>, vector<8x32xf32> -> vector<8x32xf32>
    %c0_19 = arith.constant 0 : index
    %c0_20 = arith.constant 0 : index
    %35 = vector.load %arg7[%c0_19, %c0_20] : memref<1x32xf32, #tpu.memory_space<vmem>>, vector<1x32xf32>
    %36 = vector.broadcast %35 : vector<1x32xf32> to vector<8x32xf32>
    %37 = arith.addf %34, %36 : vector<8x32xf32>
    %38 = arith.addf %1, %37 : vector<8x32xf32>
    %c0_21 = arith.constant 0 : index
    %c0_22 = arith.constant 0 : index
    %c0_23 = arith.constant 0 : index
    %39 = vector.load %arg8[%c0_21, %c0_22, %c0_23] : memref<1x8x32xf32, #tpu.memory_space<vmem>>, vector<1x8x32xf32>
    %40 = vector.shape_cast %39 : vector<1x8x32xf32> to vector<8x32xf32>
    %41 = vector.shape_cast %38 : vector<8x32xf32> to vector<1x8x32xf32>
    tpu.vector_store %arg8[%c0_21, %c0_22, %c0_23], %41 {strides = array<i32>} : memref<1x8x32xf32, #tpu.memory_space<vmem>>, vector<1x8x32xf32>,
    return
  }
  func.func @transform_0(%arg0: i32) -> (i32, i32, i32) {
    %c0_i32 = arith.constant 0 : i32
    %c0_i32_0 = arith.constant 0 : i32
    %c0_i32_1 = arith.constant 0 : i32
    return %arg0, %c0_i32, %c0_i32_0 : i32, i32, i32
  }
  func.func @transform_1(%arg0: i32) -> (i32, i32) {
    %c0_i32 = arith.constant 0 : i32
    %c0_i32_0 = arith.constant 0 : i32
    %c0_i32_1 = arith.constant 0 : i32
    return %c0_i32, %c0_i32_0 : i32, i32
  }
  func.func @transform_2(%arg0: i32) -> (i32, i32) {
    %c0_i32 = arith.constant 0 : i32
    %c0_i32_0 = arith.constant 0 : i32
    %c0_i32_1 = arith.constant 0 : i32
    return %c0_i32, %c0_i32_0 : i32, i32
  }
  func.func @transform_3(%arg0: i32) -> (i32, i32) {
    %c0_i32 = arith.constant 0 : i32
    %c0_i32_0 = arith.constant 0 : i32
    %c0_i32_1 = arith.constant 0 : i32
    return %c0_i32, %c0_i32_0 : i32, i32
  }
  func.func @transform_4(%arg0: i32) -> (i32, i32) {
    %c0_i32 = arith.constant 0 : i32
    %c0_i32_0 = arith.constant 0 : i32
    %c0_i32_1 = arith.constant 0 : i32
    return %c0_i32, %c0_i32_0 : i32, i32
  }
  func.func @transform_5(%arg0: i32) -> (i32, i32) {
    %c0_i32 = arith.constant 0 : i32
    %c0_i32_0 = arith.constant 0 : i32
    %c0_i32_1 = arith.constant 0 : i32
    return %c0_i32, %c0_i32_0 : i32, i32
  }
  func.func @transform_6(%arg0: i32) -> (i32, i32) {
    %c0_i32 = arith.constant 0 : i32
    %c0_i32_0 = arith.constant 0 : i32
    %c0_i32_1 = arith.constant 0 : i32
    return %c0_i32, %c0_i32_0 : i32, i32
  }
  func.func @transform_7(%arg0: i32) -> (i32, i32, i32) {
    %c0_i32 = arith.constant 0 : i32
    %c0_i32_0 = arith.constant 0 : i32
    %c0_i32_1 = arith.constant 0 : i32
    return %arg0, %c0_i32, %c0_i32_0 : i32, i32, i32
  }
}

module attributes {stable_mosaic.version = 11 : i64} {
  func.func @_self_attn_block_kernel(%arg0: i32, %arg1: memref<1x8x32xf32, #tpu.memory_space<vmem>>, %arg2: memref<1x32xf32, #tpu.memory_space<vmem>>, %arg3: memref<1x32xf32, #tpu.memory_space<vmem>>, %arg4: memref<32x96xbf16, #tpu.memory_space<vmem>>, %arg5: memref<1x96xf32, #tpu.memory_space<vmem>>, %arg6: memref<32x32xbf16, #tpu.memory_space<vmem>>, %arg7: memref<1x32xf32, #tpu.memory_space<vmem>>, %arg8: memref<8x4xf32, #tpu.memory_space<vmem>>, %arg9: memref<8x4xf32, #tpu.memory_space<vmem>>, %arg10: memref<1x1x8xf32, #tpu.memory_space<vmem>>, %arg11: memref<1x8x32xf32, #tpu.memory_space<vmem>>) attributes {dimension_semantics = [#tpu.dimension_semantics<parallel>], iteration_bounds = array<i64: 2>, scalar_prefetch = 0 : i64, scratch_operands = 0 : i64, tpu.core_type = #tpu.core_type<tc>, window_params = [{transform_indices = @transform_0, window_bounds = array<i64: 1, 8, 32>}, {pipeline_mode = #tpu.pipeline_mode<synchronous>, transform_indices = @transform_1, window_bounds = array<i64: 1, 32>}, {pipeline_mode = #tpu.pipeline_mode<synchronous>, transform_indices = @transform_2, window_bounds = array<i64: 1, 32>}, {pipeline_mode = #tpu.pipeline_mode<synchronous>, transform_indices = @transform_3, window_bounds = array<i64: 32, 96>}, {pipeline_mode = #tpu.pipeline_mode<synchronous>, transform_indices = @transform_4, window_bounds = array<i64: 1, 96>}, {pipeline_mode = #tpu.pipeline_mode<synchronous>, transform_indices = @transform_5, window_bounds = array<i64: 32, 32>}, {pipeline_mode = #tpu.pipeline_mode<synchronous>, transform_indices = @transform_6, window_bounds = array<i64: 1, 32>}, {pipeline_mode = #tpu.pipeline_mode<synchronous>, transform_indices = @transform_7, window_bounds = array<i64: 8, 4>}, {pipeline_mode = #tpu.pipeline_mode<synchronous>, transform_indices = @transform_8, window_bounds = array<i64: 8, 4>}, {transform_indices = @transform_9, window_bounds = array<i64: 1, 1, 8>}, {transform_indices = @transform_10, window_bounds = array<i64: 1, 8, 32>}]} {
    %c0 = arith.constant 0 : index
    %c0_0 = arith.constant 0 : index
    %c0_1 = arith.constant 0 : index
    %0 = vector.load %arg1[%c0, %c0_0, %c0_1] : memref<1x8x32xf32, #tpu.memory_space<vmem>>, vector<1x8x32xf32>
    %1 = vector.shape_cast %0 : vector<1x8x32xf32> to vector<8x32xf32>
    %c0_2 = arith.constant 0 : index
    %c0_3 = arith.constant 0 : index
    %2 = vector.load %arg2[%c0_2, %c0_3] : memref<1x32xf32, #tpu.memory_space<vmem>>, vector<1x32xf32>
    %c0_4 = arith.constant 0 : index
    %c0_5 = arith.constant 0 : index
    %3 = vector.load %arg3[%c0_4, %c0_5] : memref<1x32xf32, #tpu.memory_space<vmem>>, vector<1x32xf32>
    %cst = arith.constant dense<0.000000e+00> : vector<8xf32>
    %4 = vector.multi_reduction <add>, %1, %cst [1] : vector<8x32xf32> to vector<8xf32>
    %5 = vector.shape_cast %4 : vector<8xf32> to vector<8x1xf32>
    %cst_6 = arith.constant 3.200000e+01 : f32
    %6 = vector.broadcast %cst_6 : f32 to vector<8x1xf32>
    %7 = arith.divf %5, %6 : vector<8x1xf32>
    %8 = vector.broadcast %7 : vector<8x1xf32> to vector<8x32xf32>
    %9 = arith.subf %1, %8 : vector<8x32xf32>
    %10 = arith.mulf %9, %9 : vector<8x32xf32>
    %cst_7 = arith.constant dense<0.000000e+00> : vector<8xf32>
    %11 = vector.multi_reduction <add>, %10, %cst_7 [1] : vector<8x32xf32> to vector<8xf32>
    %12 = vector.shape_cast %11 : vector<8xf32> to vector<8x1xf32>
    %cst_8 = arith.constant 3.100000e+01 : f32
    %13 = vector.broadcast %cst_8 : f32 to vector<8x1xf32>
    %14 = arith.divf %12, %13 : vector<8x1xf32>
    %15 = math.sqrt %14 : vector<8x1xf32>
    %16 = vector.broadcast %2 : vector<1x32xf32> to vector<8x32xf32>
    %17 = arith.mulf %16, %9 : vector<8x32xf32>
    %cst_9 = arith.constant 9.99999997E-7 : f32
    %18 = vector.broadcast %cst_9 : f32 to vector<8x1xf32>
    %19 = arith.addf %15, %18 : vector<8x1xf32>
    %20 = vector.broadcast %19 : vector<8x1xf32> to vector<8x32xf32>
    %21 = arith.divf %17, %20 : vector<8x32xf32>
    %22 = vector.broadcast %3 : vector<1x32xf32> to vector<8x32xf32>
    %23 = arith.addf %21, %22 : vector<8x32xf32>
    %24 = arith.truncf %23 : vector<8x32xf32> to vector<8x32xbf16>
    %c0_10 = arith.constant 0 : index
    %c0_11 = arith.constant 0 : index
    %25 = vector.load %arg4[%c0_10, %c0_11] : memref<32x96xbf16, #tpu.memory_space<vmem>>, vector<32x96xbf16>
    %cst_12 = arith.constant dense<0.000000e+00> : vector<8x96xf32>
    %26 = tpu.matmul %24, %25, %cst_12 {dimension_numbers = #tpu.dot_dimension_numbers<[1], [0], [0], [1], [0, 0, 1, 1], [], []>} : vector<8x32xbf16>, vector<32x96xbf16>, vector<8x96xf32> -> vector<8x96xf32>
    %c0_13 = arith.constant 0 : index
    %c0_14 = arith.constant 0 : index
    %27 = vector.load %arg5[%c0_13, %c0_14] : memref<1x96xf32, #tpu.memory_space<vmem>>, vector<1x96xf32>
    %28 = vector.broadcast %27 : vector<1x96xf32> to vector<8x96xf32>
    %29 = arith.addf %26, %28 : vector<8x96xf32>
    %30 = vector.extract_strided_slice %29 {offsets = [0, 0], sizes = [8, 32], strides = [1, 1]} : vector<8x96xf32> to vector<8x32xf32>
    %31 = vector.extract_strided_slice %29 {offsets = [0, 32], sizes = [8, 32], strides = [1, 1]} : vector<8x96xf32> to vector<8x32xf32>
    %32 = vector.extract_strided_slice %29 {offsets = [0, 64], sizes = [8, 32], strides = [1, 1]} : vector<8x96xf32> to vector<8x32xf32>
    %c0_15 = arith.constant 0 : index
    %c0_16 = arith.constant 0 : index
    %c0_17 = arith.constant 0 : index
    %33 = vector.load %arg10[%c0_15, %c0_16, %c0_17] : memref<1x1x8xf32, #tpu.memory_space<vmem>>, vector<1x1x8xf32>
    %34 = vector.shape_cast %33 : vector<1x1x8xf32> to vector<1x8xf32>
    %cst_18 = arith.constant 0.000000e+00 : f32
    %35 = vector.broadcast %cst_18 : f32 to vector<1x8xf32>
    %36 = arith.cmpf oeq, %34, %35 : vector<1x8xf32>
    %cst_19 = arith.constant -1.000000e+09 : f32
    %cst_20 = arith.constant 0.000000e+00 : f32
    %37 = vector.broadcast %cst_19 : f32 to vector<1x8xf32>
    %38 = vector.broadcast %cst_20 : f32 to vector<1x8xf32>
    %39 = arith.select %36, %37, %38 : vector<1x8xi1>, vector<1x8xf32>
    %c0_21 = arith.constant 0 : index
    %c0_22 = arith.constant 0 : index
    %40 = vector.load %arg8[%c0_21, %c0_22] : memref<8x4xf32, #tpu.memory_space<vmem>>, vector<8x4xf32>
    %c0_23 = arith.constant 0 : index
    %c0_24 = arith.constant 0 : index
    %41 = vector.load %arg9[%c0_23, %c0_24] : memref<8x4xf32, #tpu.memory_space<vmem>>, vector<8x4xf32>
    %c0_25 = arith.constant 0 : index
    %c0_26 = arith.constant 0 : index
    %42 = vector.load %arg6[%c0_25, %c0_26] : memref<32x32xbf16, #tpu.memory_space<vmem>>, vector<32x32xbf16>
    %43 = vector.extract_strided_slice %30 {offsets = [0, 0], sizes = [8, 4], strides = [1, 1]} : vector<8x32xf32> to vector<8x4xf32>
    %44 = vector.extract_strided_slice %30 {offsets = [0, 4], sizes = [8, 4], strides = [1, 1]} : vector<8x32xf32> to vector<8x4xf32>
    %45 = vector.extract_strided_slice %31 {offsets = [0, 0], sizes = [8, 4], strides = [1, 1]} : vector<8x32xf32> to vector<8x4xf32>
    %46 = vector.extract_strided_slice %31 {offsets = [0, 4], sizes = [8, 4], strides = [1, 1]} : vector<8x32xf32> to vector<8x4xf32>
    %47 = arith.mulf %43, %40 : vector<8x4xf32>
    %48 = arith.mulf %44, %41 : vector<8x4xf32>
    %49 = arith.subf %47, %48 : vector<8x4xf32>
    %50 = arith.mulf %44, %40 : vector<8x4xf32>
    %51 = arith.mulf %43, %41 : vector<8x4xf32>
    %52 = arith.addf %50, %51 : vector<8x4xf32>
    %53 = arith.mulf %45, %40 : vector<8x4xf32>
    %54 = arith.mulf %46, %41 : vector<8x4xf32>
    %55 = arith.subf %53, %54 : vector<8x4xf32>
    %56 = arith.mulf %46, %40 : vector<8x4xf32>
    %57 = arith.mulf %45, %41 : vector<8x4xf32>
    %58 = arith.addf %56, %57 : vector<8x4xf32>
    %59 = arith.truncf %49 : vector<8x4xf32> to vector<8x4xbf16>
    %60 = arith.truncf %55 : vector<8x4xf32> to vector<8x4xbf16>
    %cst_27 = arith.constant dense<0.000000e+00> : vector<8x8xf32>
    %61 = tpu.matmul %59, %60, %cst_27 {dimension_numbers = #tpu.dot_dimension_numbers<[1], [1], [0], [0], [0, 0, 1, 0], [], []>} : vector<8x4xbf16>, vector<8x4xbf16>, vector<8x8xf32> -> vector<8x8xf32>
    %62 = arith.truncf %52 : vector<8x4xf32> to vector<8x4xbf16>
    %63 = arith.truncf %58 : vector<8x4xf32> to vector<8x4xbf16>
    %cst_28 = arith.constant dense<0.000000e+00> : vector<8x8xf32>
    %64 = tpu.matmul %62, %63, %cst_28 {dimension_numbers = #tpu.dot_dimension_numbers<[1], [1], [0], [0], [0, 0, 1, 0], [], []>} : vector<8x4xbf16>, vector<8x4xbf16>, vector<8x8xf32> -> vector<8x8xf32>
    %65 = arith.addf %61, %64 : vector<8x8xf32>
    %66 = vector.broadcast %39 : vector<1x8xf32> to vector<8x8xf32>
    %67 = arith.addf %65, %66 : vector<8x8xf32>
    %cst_29 = arith.constant dense<0xFF800000> : vector<8xf32>
    %68 = vector.multi_reduction <maximumf>, %67, %cst_29 [1] : vector<8x8xf32> to vector<8xf32>
    %69 = vector.shape_cast %68 : vector<8xf32> to vector<8x1xf32>
    %70 = vector.broadcast %69 : vector<8x1xf32> to vector<8x8xf32>
    %71 = arith.subf %67, %70 : vector<8x8xf32>
    %72 = math.exp %71 : vector<8x8xf32>
    %cst_30 = arith.constant dense<0.000000e+00> : vector<8xf32>
    %73 = vector.multi_reduction <add>, %72, %cst_30 [1] : vector<8x8xf32> to vector<8xf32>
    %74 = vector.shape_cast %73 : vector<8xf32> to vector<8x1xf32>
    %75 = tpu.reciprocal %74 {approx = true} : vector<8x1xf32> -> vector<8x1xf32>
    %76 = vector.broadcast %75 : vector<8x1xf32> to vector<8x8xf32>
    %77 = arith.mulf %72, %76 : vector<8x8xf32>
    %78 = vector.extract_strided_slice %32 {offsets = [0, 0], sizes = [8, 8], strides = [1, 1]} : vector<8x32xf32> to vector<8x8xf32>
    %79 = arith.truncf %77 : vector<8x8xf32> to vector<8x8xbf16>
    %80 = arith.truncf %78 : vector<8x8xf32> to vector<8x8xbf16>
    %cst_31 = arith.constant dense<0.000000e+00> : vector<8x8xf32>
    %81 = tpu.matmul %79, %80, %cst_31 {dimension_numbers = #tpu.dot_dimension_numbers<[1], [0], [0], [1], [0, 0, 1, 1], [], []>} : vector<8x8xbf16>, vector<8x8xbf16>, vector<8x8xf32> -> vector<8x8xf32>
    %82 = arith.truncf %81 : vector<8x8xf32> to vector<8x8xbf16>
    %83 = vector.extract_strided_slice %42 {offsets = [0, 0], sizes = [8, 32], strides = [1, 1]} : vector<32x32xbf16> to vector<8x32xbf16>
    %cst_32 = arith.constant dense<0.000000e+00> : vector<8x32xf32>
    %84 = tpu.matmul %82, %83, %cst_32 {dimension_numbers = #tpu.dot_dimension_numbers<[1], [0], [0], [1], [0, 0, 1, 1], [], []>} : vector<8x8xbf16>, vector<8x32xbf16>, vector<8x32xf32> -> vector<8x32xf32>
    %85 = vector.extract_strided_slice %30 {offsets = [0, 8], sizes = [8, 4], strides = [1, 1]} : vector<8x32xf32> to vector<8x4xf32>
    %86 = vector.extract_strided_slice %30 {offsets = [0, 12], sizes = [8, 4], strides = [1, 1]} : vector<8x32xf32> to vector<8x4xf32>
    %87 = vector.extract_strided_slice %31 {offsets = [0, 8], sizes = [8, 4], strides = [1, 1]} : vector<8x32xf32> to vector<8x4xf32>
    %88 = vector.extract_strided_slice %31 {offsets = [0, 12], sizes = [8, 4], strides = [1, 1]} : vector<8x32xf32> to vector<8x4xf32>
    %89 = arith.mulf %85, %40 : vector<8x4xf32>
    %90 = arith.mulf %86, %41 : vector<8x4xf32>
    %91 = arith.subf %89, %90 : vector<8x4xf32>
    %92 = arith.mulf %86, %40 : vector<8x4xf32>
    %93 = arith.mulf %85, %41 : vector<8x4xf32>
    %94 = arith.addf %92, %93 : vector<8x4xf32>
    %95 = arith.mulf %87, %40 : vector<8x4xf32>
    %96 = arith.mulf %88, %41 : vector<8x4xf32>
    %97 = arith.subf %95, %96 : vector<8x4xf32>
    %98 = arith.mulf %88, %40 : vector<8x4xf32>
    %99 = arith.mulf %87, %41 : vector<8x4xf32>
    %100 = arith.addf %98, %99 : vector<8x4xf32>
    %101 = arith.truncf %91 : vector<8x4xf32> to vector<8x4xbf16>
    %102 = arith.truncf %97 : vector<8x4xf32> to vector<8x4xbf16>
    %cst_33 = arith.constant dense<0.000000e+00> : vector<8x8xf32>
    %103 = tpu.matmul %101, %102, %cst_33 {dimension_numbers = #tpu.dot_dimension_numbers<[1], [1], [0], [0], [0, 0, 1, 0], [], []>} : vector<8x4xbf16>, vector<8x4xbf16>, vector<8x8xf32> -> vector<8x8xf32>
    %104 = arith.truncf %94 : vector<8x4xf32> to vector<8x4xbf16>
    %105 = arith.truncf %100 : vector<8x4xf32> to vector<8x4xbf16>
    %cst_34 = arith.constant dense<0.000000e+00> : vector<8x8xf32>
    %106 = tpu.matmul %104, %105, %cst_34 {dimension_numbers = #tpu.dot_dimension_numbers<[1], [1], [0], [0], [0, 0, 1, 0], [], []>} : vector<8x4xbf16>, vector<8x4xbf16>, vector<8x8xf32> -> vector<8x8xf32>
    %107 = arith.addf %103, %106 : vector<8x8xf32>
    %108 = vector.broadcast %39 : vector<1x8xf32> to vector<8x8xf32>
    %109 = arith.addf %107, %108 : vector<8x8xf32>
    %cst_35 = arith.constant dense<0xFF800000> : vector<8xf32>
    %110 = vector.multi_reduction <maximumf>, %109, %cst_35 [1] : vector<8x8xf32> to vector<8xf32>
    %111 = vector.shape_cast %110 : vector<8xf32> to vector<8x1xf32>
    %112 = vector.broadcast %111 : vector<8x1xf32> to vector<8x8xf32>
    %113 = arith.subf %109, %112 : vector<8x8xf32>
    %114 = math.exp %113 : vector<8x8xf32>
    %cst_36 = arith.constant dense<0.000000e+00> : vector<8xf32>
    %115 = vector.multi_reduction <add>, %114, %cst_36 [1] : vector<8x8xf32> to vector<8xf32>
    %116 = vector.shape_cast %115 : vector<8xf32> to vector<8x1xf32>
    %117 = tpu.reciprocal %116 {approx = true} : vector<8x1xf32> -> vector<8x1xf32>
    %118 = vector.broadcast %117 : vector<8x1xf32> to vector<8x8xf32>
    %119 = arith.mulf %114, %118 : vector<8x8xf32>
    %120 = vector.extract_strided_slice %32 {offsets = [0, 8], sizes = [8, 8], strides = [1, 1]} : vector<8x32xf32> to vector<8x8xf32>
    %121 = arith.truncf %119 : vector<8x8xf32> to vector<8x8xbf16>
    %122 = arith.truncf %120 : vector<8x8xf32> to vector<8x8xbf16>
    %cst_37 = arith.constant dense<0.000000e+00> : vector<8x8xf32>
    %123 = tpu.matmul %121, %122, %cst_37 {dimension_numbers = #tpu.dot_dimension_numbers<[1], [0], [0], [1], [0, 0, 1, 1], [], []>} : vector<8x8xbf16>, vector<8x8xbf16>, vector<8x8xf32> -> vector<8x8xf32>
    %124 = arith.truncf %123 : vector<8x8xf32> to vector<8x8xbf16>
    %125 = vector.extract_strided_slice %42 {offsets = [8, 0], sizes = [8, 32], strides = [1, 1]} : vector<32x32xbf16> to vector<8x32xbf16>
    %cst_38 = arith.constant dense<0.000000e+00> : vector<8x32xf32>
    %126 = tpu.matmul %124, %125, %cst_38 {dimension_numbers = #tpu.dot_dimension_numbers<[1], [0], [0], [1], [0, 0, 1, 1], [], []>} : vector<8x8xbf16>, vector<8x32xbf16>, vector<8x32xf32> -> vector<8x32xf32>
    %127 = arith.addf %84, %126 : vector<8x32xf32>
    %128 = vector.extract_strided_slice %30 {offsets = [0, 16], sizes = [8, 4], strides = [1, 1]} : vector<8x32xf32> to vector<8x4xf32>
    %129 = vector.extract_strided_slice %30 {offsets = [0, 20], sizes = [8, 4], strides = [1, 1]} : vector<8x32xf32> to vector<8x4xf32>
    %130 = vector.extract_strided_slice %31 {offsets = [0, 16], sizes = [8, 4], strides = [1, 1]} : vector<8x32xf32> to vector<8x4xf32>
    %131 = vector.extract_strided_slice %31 {offsets = [0, 20], sizes = [8, 4], strides = [1, 1]} : vector<8x32xf32> to vector<8x4xf32>
    %132 = arith.mulf %128, %40 : vector<8x4xf32>
    %133 = arith.mulf %129, %41 : vector<8x4xf32>
    %134 = arith.subf %132, %133 : vector<8x4xf32>
    %135 = arith.mulf %129, %40 : vector<8x4xf32>
    %136 = arith.mulf %128, %41 : vector<8x4xf32>
    %137 = arith.addf %135, %136 : vector<8x4xf32>
    %138 = arith.mulf %130, %40 : vector<8x4xf32>
    %139 = arith.mulf %131, %41 : vector<8x4xf32>
    %140 = arith.subf %138, %139 : vector<8x4xf32>
    %141 = arith.mulf %131, %40 : vector<8x4xf32>
    %142 = arith.mulf %130, %41 : vector<8x4xf32>
    %143 = arith.addf %141, %142 : vector<8x4xf32>
    %144 = arith.truncf %134 : vector<8x4xf32> to vector<8x4xbf16>
    %145 = arith.truncf %140 : vector<8x4xf32> to vector<8x4xbf16>
    %cst_39 = arith.constant dense<0.000000e+00> : vector<8x8xf32>
    %146 = tpu.matmul %144, %145, %cst_39 {dimension_numbers = #tpu.dot_dimension_numbers<[1], [1], [0], [0], [0, 0, 1, 0], [], []>} : vector<8x4xbf16>, vector<8x4xbf16>, vector<8x8xf32> -> vector<8x8xf32>
    %147 = arith.truncf %137 : vector<8x4xf32> to vector<8x4xbf16>
    %148 = arith.truncf %143 : vector<8x4xf32> to vector<8x4xbf16>
    %cst_40 = arith.constant dense<0.000000e+00> : vector<8x8xf32>
    %149 = tpu.matmul %147, %148, %cst_40 {dimension_numbers = #tpu.dot_dimension_numbers<[1], [1], [0], [0], [0, 0, 1, 0], [], []>} : vector<8x4xbf16>, vector<8x4xbf16>, vector<8x8xf32> -> vector<8x8xf32>
    %150 = arith.addf %146, %149 : vector<8x8xf32>
    %151 = vector.broadcast %39 : vector<1x8xf32> to vector<8x8xf32>
    %152 = arith.addf %150, %151 : vector<8x8xf32>
    %cst_41 = arith.constant dense<0xFF800000> : vector<8xf32>
    %153 = vector.multi_reduction <maximumf>, %152, %cst_41 [1] : vector<8x8xf32> to vector<8xf32>
    %154 = vector.shape_cast %153 : vector<8xf32> to vector<8x1xf32>
    %155 = vector.broadcast %154 : vector<8x1xf32> to vector<8x8xf32>
    %156 = arith.subf %152, %155 : vector<8x8xf32>
    %157 = math.exp %156 : vector<8x8xf32>
    %cst_42 = arith.constant dense<0.000000e+00> : vector<8xf32>
    %158 = vector.multi_reduction <add>, %157, %cst_42 [1] : vector<8x8xf32> to vector<8xf32>
    %159 = vector.shape_cast %158 : vector<8xf32> to vector<8x1xf32>
    %160 = tpu.reciprocal %159 {approx = true} : vector<8x1xf32> -> vector<8x1xf32>
    %161 = vector.broadcast %160 : vector<8x1xf32> to vector<8x8xf32>
    %162 = arith.mulf %157, %161 : vector<8x8xf32>
    %163 = vector.extract_strided_slice %32 {offsets = [0, 16], sizes = [8, 8], strides = [1, 1]} : vector<8x32xf32> to vector<8x8xf32>
    %164 = arith.truncf %162 : vector<8x8xf32> to vector<8x8xbf16>
    %165 = arith.truncf %163 : vector<8x8xf32> to vector<8x8xbf16>
    %cst_43 = arith.constant dense<0.000000e+00> : vector<8x8xf32>
    %166 = tpu.matmul %164, %165, %cst_43 {dimension_numbers = #tpu.dot_dimension_numbers<[1], [0], [0], [1], [0, 0, 1, 1], [], []>} : vector<8x8xbf16>, vector<8x8xbf16>, vector<8x8xf32> -> vector<8x8xf32>
    %167 = arith.truncf %166 : vector<8x8xf32> to vector<8x8xbf16>
    %168 = vector.extract_strided_slice %42 {offsets = [16, 0], sizes = [8, 32], strides = [1, 1]} : vector<32x32xbf16> to vector<8x32xbf16>
    %cst_44 = arith.constant dense<0.000000e+00> : vector<8x32xf32>
    %169 = tpu.matmul %167, %168, %cst_44 {dimension_numbers = #tpu.dot_dimension_numbers<[1], [0], [0], [1], [0, 0, 1, 1], [], []>} : vector<8x8xbf16>, vector<8x32xbf16>, vector<8x32xf32> -> vector<8x32xf32>
    %170 = arith.addf %127, %169 : vector<8x32xf32>
    %171 = vector.extract_strided_slice %30 {offsets = [0, 24], sizes = [8, 4], strides = [1, 1]} : vector<8x32xf32> to vector<8x4xf32>
    %172 = vector.extract_strided_slice %30 {offsets = [0, 28], sizes = [8, 4], strides = [1, 1]} : vector<8x32xf32> to vector<8x4xf32>
    %173 = vector.extract_strided_slice %31 {offsets = [0, 24], sizes = [8, 4], strides = [1, 1]} : vector<8x32xf32> to vector<8x4xf32>
    %174 = vector.extract_strided_slice %31 {offsets = [0, 28], sizes = [8, 4], strides = [1, 1]} : vector<8x32xf32> to vector<8x4xf32>
    %175 = arith.mulf %171, %40 : vector<8x4xf32>
    %176 = arith.mulf %172, %41 : vector<8x4xf32>
    %177 = arith.subf %175, %176 : vector<8x4xf32>
    %178 = arith.mulf %172, %40 : vector<8x4xf32>
    %179 = arith.mulf %171, %41 : vector<8x4xf32>
    %180 = arith.addf %178, %179 : vector<8x4xf32>
    %181 = arith.mulf %173, %40 : vector<8x4xf32>
    %182 = arith.mulf %174, %41 : vector<8x4xf32>
    %183 = arith.subf %181, %182 : vector<8x4xf32>
    %184 = arith.mulf %174, %40 : vector<8x4xf32>
    %185 = arith.mulf %173, %41 : vector<8x4xf32>
    %186 = arith.addf %184, %185 : vector<8x4xf32>
    %187 = arith.truncf %177 : vector<8x4xf32> to vector<8x4xbf16>
    %188 = arith.truncf %183 : vector<8x4xf32> to vector<8x4xbf16>
    %cst_45 = arith.constant dense<0.000000e+00> : vector<8x8xf32>
    %189 = tpu.matmul %187, %188, %cst_45 {dimension_numbers = #tpu.dot_dimension_numbers<[1], [1], [0], [0], [0, 0, 1, 0], [], []>} : vector<8x4xbf16>, vector<8x4xbf16>, vector<8x8xf32> -> vector<8x8xf32>
    %190 = arith.truncf %180 : vector<8x4xf32> to vector<8x4xbf16>
    %191 = arith.truncf %186 : vector<8x4xf32> to vector<8x4xbf16>
    %cst_46 = arith.constant dense<0.000000e+00> : vector<8x8xf32>
    %192 = tpu.matmul %190, %191, %cst_46 {dimension_numbers = #tpu.dot_dimension_numbers<[1], [1], [0], [0], [0, 0, 1, 0], [], []>} : vector<8x4xbf16>, vector<8x4xbf16>, vector<8x8xf32> -> vector<8x8xf32>
    %193 = arith.addf %189, %192 : vector<8x8xf32>
    %194 = vector.broadcast %39 : vector<1x8xf32> to vector<8x8xf32>
    %195 = arith.addf %193, %194 : vector<8x8xf32>
    %cst_47 = arith.constant dense<0xFF800000> : vector<8xf32>
    %196 = vector.multi_reduction <maximumf>, %195, %cst_47 [1] : vector<8x8xf32> to vector<8xf32>
    %197 = vector.shape_cast %196 : vector<8xf32> to vector<8x1xf32>
    %198 = vector.broadcast %197 : vector<8x1xf32> to vector<8x8xf32>
    %199 = arith.subf %195, %198 : vector<8x8xf32>
    %200 = math.exp %199 : vector<8x8xf32>
    %cst_48 = arith.constant dense<0.000000e+00> : vector<8xf32>
    %201 = vector.multi_reduction <add>, %200, %cst_48 [1] : vector<8x8xf32> to vector<8xf32>
    %202 = vector.shape_cast %201 : vector<8xf32> to vector<8x1xf32>
    %203 = tpu.reciprocal %202 {approx = true} : vector<8x1xf32> -> vector<8x1xf32>
    %204 = vector.broadcast %203 : vector<8x1xf32> to vector<8x8xf32>
    %205 = arith.mulf %200, %204 : vector<8x8xf32>
    %206 = vector.extract_strided_slice %32 {offsets = [0, 24], sizes = [8, 8], strides = [1, 1]} : vector<8x32xf32> to vector<8x8xf32>
    %207 = arith.truncf %205 : vector<8x8xf32> to vector<8x8xbf16>
    %208 = arith.truncf %206 : vector<8x8xf32> to vector<8x8xbf16>
    %cst_49 = arith.constant dense<0.000000e+00> : vector<8x8xf32>
    %209 = tpu.matmul %207, %208, %cst_49 {dimension_numbers = #tpu.dot_dimension_numbers<[1], [0], [0], [1], [0, 0, 1, 1], [], []>} : vector<8x8xbf16>, vector<8x8xbf16>, vector<8x8xf32> -> vector<8x8xf32>
    %210 = arith.truncf %209 : vector<8x8xf32> to vector<8x8xbf16>
    %211 = vector.extract_strided_slice %42 {offsets = [24, 0], sizes = [8, 32], strides = [1, 1]} : vector<32x32xbf16> to vector<8x32xbf16>
    %cst_50 = arith.constant dense<0.000000e+00> : vector<8x32xf32>
    %212 = tpu.matmul %210, %211, %cst_50 {dimension_numbers = #tpu.dot_dimension_numbers<[1], [0], [0], [1], [0, 0, 1, 1], [], []>} : vector<8x8xbf16>, vector<8x32xbf16>, vector<8x32xf32> -> vector<8x32xf32>
    %213 = arith.addf %170, %212 : vector<8x32xf32>
    %214 = arith.addf %1, %213 : vector<8x32xf32>
    %c0_51 = arith.constant 0 : index
    %c0_52 = arith.constant 0 : index
    %215 = vector.load %arg7[%c0_51, %c0_52] : memref<1x32xf32, #tpu.memory_space<vmem>>, vector<1x32xf32>
    %216 = vector.broadcast %215 : vector<1x32xf32> to vector<8x32xf32>
    %217 = arith.addf %214, %216 : vector<8x32xf32>
    %c0_53 = arith.constant 0 : index
    %c0_54 = arith.constant 0 : index
    %c0_55 = arith.constant 0 : index
    %218 = vector.load %arg11[%c0_53, %c0_54, %c0_55] : memref<1x8x32xf32, #tpu.memory_space<vmem>>, vector<1x8x32xf32>
    %219 = vector.shape_cast %218 : vector<1x8x32xf32> to vector<8x32xf32>
    %220 = vector.shape_cast %217 : vector<8x32xf32> to vector<1x8x32xf32>
    tpu.vector_store %arg11[%c0_53, %c0_54, %c0_55], %220 {strides = array<i32>} : memref<1x8x32xf32, #tpu.memory_space<vmem>>, vector<1x8x32xf32>,
    return
  }
  func.func @transform_0(%arg0: i32) -> (i32, i32, i32) {
    %c0_i32 = arith.constant 0 : i32
    %c0_i32_0 = arith.constant 0 : i32
    %c0_i32_1 = arith.constant 0 : i32
    return %arg0, %c0_i32, %c0_i32_0 : i32, i32, i32
  }
  func.func @transform_1(%arg0: i32) -> (i32, i32) {
    %c0_i32 = arith.constant 0 : i32
    %c0_i32_0 = arith.constant 0 : i32
    %c0_i32_1 = arith.constant 0 : i32
    return %c0_i32, %c0_i32_0 : i32, i32
  }
  func.func @transform_2(%arg0: i32) -> (i32, i32) {
    %c0_i32 = arith.constant 0 : i32
    %c0_i32_0 = arith.constant 0 : i32
    %c0_i32_1 = arith.constant 0 : i32
    return %c0_i32, %c0_i32_0 : i32, i32
  }
  func.func @transform_3(%arg0: i32) -> (i32, i32) {
    %c0_i32 = arith.constant 0 : i32
    %c0_i32_0 = arith.constant 0 : i32
    %c0_i32_1 = arith.constant 0 : i32
    return %c0_i32, %c0_i32_0 : i32, i32
  }
  func.func @transform_4(%arg0: i32) -> (i32, i32) {
    %c0_i32 = arith.constant 0 : i32
    %c0_i32_0 = arith.constant 0 : i32
    %c0_i32_1 = arith.constant 0 : i32
    return %c0_i32, %c0_i32_0 : i32, i32
  }
  func.func @transform_5(%arg0: i32) -> (i32, i32) {
    %c0_i32 = arith.constant 0 : i32
    %c0_i32_0 = arith.constant 0 : i32
    %c0_i32_1 = arith.constant 0 : i32
    return %c0_i32, %c0_i32_0 : i32, i32
  }
  func.func @transform_6(%arg0: i32) -> (i32, i32) {
    %c0_i32 = arith.constant 0 : i32
    %c0_i32_0 = arith.constant 0 : i32
    %c0_i32_1 = arith.constant 0 : i32
    return %c0_i32, %c0_i32_0 : i32, i32
  }
  func.func @transform_7(%arg0: i32) -> (i32, i32) {
    %c0_i32 = arith.constant 0 : i32
    %c0_i32_0 = arith.constant 0 : i32
    %c0_i32_1 = arith.constant 0 : i32
    return %c0_i32, %c0_i32_0 : i32, i32
  }
  func.func @transform_8(%arg0: i32) -> (i32, i32) {
    %c0_i32 = arith.constant 0 : i32
    %c0_i32_0 = arith.constant 0 : i32
    %c0_i32_1 = arith.constant 0 : i32
    return %c0_i32, %c0_i32_0 : i32, i32
  }
  func.func @transform_9(%arg0: i32) -> (i32, i32, i32) {
    %c0_i32 = arith.constant 0 : i32
    %c0_i32_0 = arith.constant 0 : i32
    %c0_i32_1 = arith.constant 0 : i32
    return %arg0, %c0_i32, %c0_i32_0 : i32, i32, i32
  }
  func.func @transform_10(%arg0: i32) -> (i32, i32, i32) {
    %c0_i32 = arith.constant 0 : i32
    %c0_i32_0 = arith.constant 0 : i32
    %c0_i32_1 = arith.constant 0 : i32
    return %arg0, %c0_i32, %c0_i32_0 : i32, i32, i32
  }
}

module attributes {stable_mosaic.version = 11 : i64} {
  func.func @_norm_kernel(%arg0: i32, %arg1: memref<1x8x32xf32, #tpu.memory_space<vmem>>, %arg2: memref<1x32xf32, #tpu.memory_space<vmem>>, %arg3: memref<1x32xf32, #tpu.memory_space<vmem>>, %arg4: memref<1x8x32xf32, #tpu.memory_space<vmem>>) attributes {dimension_semantics = [#tpu.dimension_semantics<parallel>], iteration_bounds = array<i64: 2>, scalar_prefetch = 0 : i64, scratch_operands = 0 : i64, tpu.core_type = #tpu.core_type<tc>, window_params = [{transform_indices = @transform_0, window_bounds = array<i64: 1, 8, 32>}, {pipeline_mode = #tpu.pipeline_mode<synchronous>, transform_indices = @transform_1, window_bounds = array<i64: 1, 32>}, {pipeline_mode = #tpu.pipeline_mode<synchronous>, transform_indices = @transform_2, window_bounds = array<i64: 1, 32>}, {transform_indices = @transform_3, window_bounds = array<i64: 1, 8, 32>}]} {
    %c0 = arith.constant 0 : index
    %c0_0 = arith.constant 0 : index
    %c0_1 = arith.constant 0 : index
    %0 = vector.load %arg1[%c0, %c0_0, %c0_1] : memref<1x8x32xf32, #tpu.memory_space<vmem>>, vector<1x8x32xf32>
    %1 = vector.shape_cast %0 : vector<1x8x32xf32> to vector<8x32xf32>
    %c0_2 = arith.constant 0 : index
    %c0_3 = arith.constant 0 : index
    %2 = vector.load %arg2[%c0_2, %c0_3] : memref<1x32xf32, #tpu.memory_space<vmem>>, vector<1x32xf32>
    %c0_4 = arith.constant 0 : index
    %c0_5 = arith.constant 0 : index
    %3 = vector.load %arg3[%c0_4, %c0_5] : memref<1x32xf32, #tpu.memory_space<vmem>>, vector<1x32xf32>
    %cst = arith.constant dense<0.000000e+00> : vector<8xf32>
    %4 = vector.multi_reduction <add>, %1, %cst [1] : vector<8x32xf32> to vector<8xf32>
    %5 = vector.shape_cast %4 : vector<8xf32> to vector<8x1xf32>
    %cst_6 = arith.constant 3.200000e+01 : f32
    %6 = vector.broadcast %cst_6 : f32 to vector<8x1xf32>
    %7 = arith.divf %5, %6 : vector<8x1xf32>
    %8 = vector.broadcast %7 : vector<8x1xf32> to vector<8x32xf32>
    %9 = arith.subf %1, %8 : vector<8x32xf32>
    %10 = arith.mulf %9, %9 : vector<8x32xf32>
    %cst_7 = arith.constant dense<0.000000e+00> : vector<8xf32>
    %11 = vector.multi_reduction <add>, %10, %cst_7 [1] : vector<8x32xf32> to vector<8xf32>
    %12 = vector.shape_cast %11 : vector<8xf32> to vector<8x1xf32>
    %cst_8 = arith.constant 3.100000e+01 : f32
    %13 = vector.broadcast %cst_8 : f32 to vector<8x1xf32>
    %14 = arith.divf %12, %13 : vector<8x1xf32>
    %15 = math.sqrt %14 : vector<8x1xf32>
    %16 = vector.broadcast %2 : vector<1x32xf32> to vector<8x32xf32>
    %17 = arith.mulf %16, %9 : vector<8x32xf32>
    %cst_9 = arith.constant 9.99999997E-7 : f32
    %18 = vector.broadcast %cst_9 : f32 to vector<8x1xf32>
    %19 = arith.addf %15, %18 : vector<8x1xf32>
    %20 = vector.broadcast %19 : vector<8x1xf32> to vector<8x32xf32>
    %21 = arith.divf %17, %20 : vector<8x32xf32>
    %22 = vector.broadcast %3 : vector<1x32xf32> to vector<8x32xf32>
    %23 = arith.addf %21, %22 : vector<8x32xf32>
    %c0_10 = arith.constant 0 : index
    %c0_11 = arith.constant 0 : index
    %c0_12 = arith.constant 0 : index
    %24 = vector.load %arg4[%c0_10, %c0_11, %c0_12] : memref<1x8x32xf32, #tpu.memory_space<vmem>>, vector<1x8x32xf32>
    %25 = vector.shape_cast %24 : vector<1x8x32xf32> to vector<8x32xf32>
    %26 = vector.shape_cast %23 : vector<8x32xf32> to vector<1x8x32xf32>
    tpu.vector_store %arg4[%c0_10, %c0_11, %c0_12], %26 {strides = array<i32>} : memref<1x8x32xf32, #tpu.memory_space<vmem>>, vector<1x8x32xf32>,
    return
  }
  func.func @transform_0(%arg0: i32) -> (i32, i32, i32) {
    %c0_i32 = arith.constant 0 : i32
    %c0_i32_0 = arith.constant 0 : i32
    %c0_i32_1 = arith.constant 0 : i32
    return %arg0, %c0_i32, %c0_i32_0 : i32, i32, i32
  }
  func.func @transform_1(%arg0: i32) -> (i32, i32) {
    %c0_i32 = arith.constant 0 : i32
    %c0_i32_0 = arith.constant 0 : i32
    %c0_i32_1 = arith.constant 0 : i32
    return %c0_i32, %c0_i32_0 : i32, i32
  }
  func.func @transform_2(%arg0: i32) -> (i32, i32) {
    %c0_i32 = arith.constant 0 : i32
    %c0_i32_0 = arith.constant 0 : i32
    %c0_i32_1 = arith.constant 0 : i32
    return %c0_i32, %c0_i32_0 : i32, i32
  }
  func.func @transform_3(%arg0: i32) -> (i32, i32, i32) {
    %c0_i32 = arith.constant 0 : i32
    %c0_i32_0 = arith.constant 0 : i32
    %c0_i32_1 = arith.constant 0 : i32
    return %arg0, %c0_i32, %c0_i32_0 : i32, i32, i32
  }
}

module attributes {stable_mosaic.version = 11 : i64} {
  func.func @_norm_proj_kernel(%arg0: i32, %arg1: memref<1x8x32xf32, #tpu.memory_space<vmem>>, %arg2: memref<1x32xf32, #tpu.memory_space<vmem>>, %arg3: memref<1x32xf32, #tpu.memory_space<vmem>>, %arg4: memref<32x128xbf16, #tpu.memory_space<vmem>>, %arg5: memref<1x128xf32, #tpu.memory_space<vmem>>, %arg6: memref<1x8x128xf32, #tpu.memory_space<vmem>>) attributes {dimension_semantics = [#tpu.dimension_semantics<parallel>], iteration_bounds = array<i64: 2>, scalar_prefetch = 0 : i64, scratch_operands = 0 : i64, tpu.core_type = #tpu.core_type<tc>, window_params = [{transform_indices = @transform_0, window_bounds = array<i64: 1, 8, 32>}, {pipeline_mode = #tpu.pipeline_mode<synchronous>, transform_indices = @transform_1, window_bounds = array<i64: 1, 32>}, {pipeline_mode = #tpu.pipeline_mode<synchronous>, transform_indices = @transform_2, window_bounds = array<i64: 1, 32>}, {pipeline_mode = #tpu.pipeline_mode<synchronous>, transform_indices = @transform_3, window_bounds = array<i64: 32, 128>}, {pipeline_mode = #tpu.pipeline_mode<synchronous>, transform_indices = @transform_4, window_bounds = array<i64: 1, 128>}, {transform_indices = @transform_5, window_bounds = array<i64: 1, 8, 128>}]} {
    %c0 = arith.constant 0 : index
    %c0_0 = arith.constant 0 : index
    %c0_1 = arith.constant 0 : index
    %0 = vector.load %arg1[%c0, %c0_0, %c0_1] : memref<1x8x32xf32, #tpu.memory_space<vmem>>, vector<1x8x32xf32>
    %1 = vector.shape_cast %0 : vector<1x8x32xf32> to vector<8x32xf32>
    %c0_2 = arith.constant 0 : index
    %c0_3 = arith.constant 0 : index
    %2 = vector.load %arg2[%c0_2, %c0_3] : memref<1x32xf32, #tpu.memory_space<vmem>>, vector<1x32xf32>
    %c0_4 = arith.constant 0 : index
    %c0_5 = arith.constant 0 : index
    %3 = vector.load %arg3[%c0_4, %c0_5] : memref<1x32xf32, #tpu.memory_space<vmem>>, vector<1x32xf32>
    %cst = arith.constant dense<0.000000e+00> : vector<8xf32>
    %4 = vector.multi_reduction <add>, %1, %cst [1] : vector<8x32xf32> to vector<8xf32>
    %5 = vector.shape_cast %4 : vector<8xf32> to vector<8x1xf32>
    %cst_6 = arith.constant 3.200000e+01 : f32
    %6 = vector.broadcast %cst_6 : f32 to vector<8x1xf32>
    %7 = arith.divf %5, %6 : vector<8x1xf32>
    %8 = vector.broadcast %7 : vector<8x1xf32> to vector<8x32xf32>
    %9 = arith.subf %1, %8 : vector<8x32xf32>
    %10 = arith.mulf %9, %9 : vector<8x32xf32>
    %cst_7 = arith.constant dense<0.000000e+00> : vector<8xf32>
    %11 = vector.multi_reduction <add>, %10, %cst_7 [1] : vector<8x32xf32> to vector<8xf32>
    %12 = vector.shape_cast %11 : vector<8xf32> to vector<8x1xf32>
    %cst_8 = arith.constant 3.100000e+01 : f32
    %13 = vector.broadcast %cst_8 : f32 to vector<8x1xf32>
    %14 = arith.divf %12, %13 : vector<8x1xf32>
    %15 = math.sqrt %14 : vector<8x1xf32>
    %16 = vector.broadcast %2 : vector<1x32xf32> to vector<8x32xf32>
    %17 = arith.mulf %16, %9 : vector<8x32xf32>
    %cst_9 = arith.constant 9.99999997E-7 : f32
    %18 = vector.broadcast %cst_9 : f32 to vector<8x1xf32>
    %19 = arith.addf %15, %18 : vector<8x1xf32>
    %20 = vector.broadcast %19 : vector<8x1xf32> to vector<8x32xf32>
    %21 = arith.divf %17, %20 : vector<8x32xf32>
    %22 = vector.broadcast %3 : vector<1x32xf32> to vector<8x32xf32>
    %23 = arith.addf %21, %22 : vector<8x32xf32>
    %24 = arith.truncf %23 : vector<8x32xf32> to vector<8x32xbf16>
    %c0_10 = arith.constant 0 : index
    %c0_11 = arith.constant 0 : index
    %25 = vector.load %arg4[%c0_10, %c0_11] : memref<32x128xbf16, #tpu.memory_space<vmem>>, vector<32x128xbf16>
    %cst_12 = arith.constant dense<0.000000e+00> : vector<8x128xf32>
    %26 = tpu.matmul %24, %25, %cst_12 {dimension_numbers = #tpu.dot_dimension_numbers<[1], [0], [0], [1], [0, 0, 1, 1], [], []>} : vector<8x32xbf16>, vector<32x128xbf16>, vector<8x128xf32> -> vector<8x128xf32>
    %c0_13 = arith.constant 0 : index
    %c0_14 = arith.constant 0 : index
    %27 = vector.load %arg5[%c0_13, %c0_14] : memref<1x128xf32, #tpu.memory_space<vmem>>, vector<1x128xf32>
    %28 = vector.broadcast %27 : vector<1x128xf32> to vector<8x128xf32>
    %29 = arith.addf %26, %28 : vector<8x128xf32>
    %c0_15 = arith.constant 0 : index
    %c0_16 = arith.constant 0 : index
    %c0_17 = arith.constant 0 : index
    %30 = vector.load %arg6[%c0_15, %c0_16, %c0_17] : memref<1x8x128xf32, #tpu.memory_space<vmem>>, vector<1x8x128xf32>
    %31 = vector.shape_cast %30 : vector<1x8x128xf32> to vector<8x128xf32>
    %32 = vector.shape_cast %29 : vector<8x128xf32> to vector<1x8x128xf32>
    tpu.vector_store %arg6[%c0_15, %c0_16, %c0_17], %32 {strides = array<i32>} : memref<1x8x128xf32, #tpu.memory_space<vmem>>, vector<1x8x128xf32>,
    return
  }
  func.func @transform_0(%arg0: i32) -> (i32, i32, i32) {
    %c0_i32 = arith.constant 0 : i32
    %c0_i32_0 = arith.constant 0 : i32
    %c0_i32_1 = arith.constant 0 : i32
    return %arg0, %c0_i32, %c0_i32_0 : i32, i32, i32
  }
  func.func @transform_1(%arg0: i32) -> (i32, i32) {
    %c0_i32 = arith.constant 0 : i32
    %c0_i32_0 = arith.constant 0 : i32
    %c0_i32_1 = arith.constant 0 : i32
    return %c0_i32, %c0_i32_0 : i32, i32
  }
  func.func @transform_2(%arg0: i32) -> (i32, i32) {
    %c0_i32 = arith.constant 0 : i32
    %c0_i32_0 = arith.constant 0 : i32
    %c0_i32_1 = arith.constant 0 : i32
    return %c0_i32, %c0_i32_0 : i32, i32
  }
  func.func @transform_3(%arg0: i32) -> (i32, i32) {
    %c0_i32 = arith.constant 0 : i32
    %c0_i32_0 = arith.constant 0 : i32
    %c0_i32_1 = arith.constant 0 : i32
    return %c0_i32, %c0_i32_0 : i32, i32
  }
  func.func @transform_4(%arg0: i32) -> (i32, i32) {
    %c0_i32 = arith.constant 0 : i32
    %c0_i32_0 = arith.constant 0 : i32
    %c0_i32_1 = arith.constant 0 : i32
    return %c0_i32, %c0_i32_0 : i32, i32
  }
  func.func @transform_5(%arg0: i32) -> (i32, i32, i32) {
    %c0_i32 = arith.constant 0 : i32
    %c0_i32_0 = arith.constant 0 : i32
    %c0_i32_1 = arith.constant 0 : i32
    return %arg0, %c0_i32, %c0_i32_0 : i32, i32, i32
  }
}

module attributes {stable_mosaic.version = 11 : i64} {
  func.func @_cross_attn_block_kernel(%arg0: i32, %arg1: memref<1x8x32xf32, #tpu.memory_space<vmem>>, %arg2: memref<1x8x32xf32, #tpu.memory_space<vmem>>, %arg3: memref<1x32xf32, #tpu.memory_space<vmem>>, %arg4: memref<1x32xf32, #tpu.memory_space<vmem>>, %arg5: memref<32x32xbf16, #tpu.memory_space<vmem>>, %arg6: memref<1x32xf32, #tpu.memory_space<vmem>>, %arg7: memref<32x64xbf16, #tpu.memory_space<vmem>>, %arg8: memref<1x64xf32, #tpu.memory_space<vmem>>, %arg9: memref<32x32xbf16, #tpu.memory_space<vmem>>, %arg10: memref<1x32xf32, #tpu.memory_space<vmem>>, %arg11: memref<8x4xf32, #tpu.memory_space<vmem>>, %arg12: memref<8x4xf32, #tpu.memory_space<vmem>>, %arg13: memref<8x4xf32, #tpu.memory_space<vmem>>, %arg14: memref<8x4xf32, #tpu.memory_space<vmem>>, %arg15: memref<1x1x8xf32, #tpu.memory_space<vmem>>, %arg16: memref<1x8x32xf32, #tpu.memory_space<vmem>>) attributes {dimension_semantics = [#tpu.dimension_semantics<parallel>], iteration_bounds = array<i64: 2>, scalar_prefetch = 0 : i64, scratch_operands = 0 : i64, tpu.core_type = #tpu.core_type<tc>, window_params = [{transform_indices = @transform_0, window_bounds = array<i64: 1, 8, 32>}, {transform_indices = @transform_1, window_bounds = array<i64: 1, 8, 32>}, {pipeline_mode = #tpu.pipeline_mode<synchronous>, transform_indices = @transform_2, window_bounds = array<i64: 1, 32>}, {pipeline_mode = #tpu.pipeline_mode<synchronous>, transform_indices = @transform_3, window_bounds = array<i64: 1, 32>}, {pipeline_mode = #tpu.pipeline_mode<synchronous>, transform_indices = @transform_4, window_bounds = array<i64: 32, 32>}, {pipeline_mode = #tpu.pipeline_mode<synchronous>, transform_indices = @transform_5, window_bounds = array<i64: 1, 32>}, {pipeline_mode = #tpu.pipeline_mode<synchronous>, transform_indices = @transform_6, window_bounds = array<i64: 32, 64>}, {pipeline_mode = #tpu.pipeline_mode<synchronous>, transform_indices = @transform_7, window_bounds = array<i64: 1, 64>}, {pipeline_mode = #tpu.pipeline_mode<synchronous>, transform_indices = @transform_8, window_bounds = array<i64: 32, 32>}, {pipeline_mode = #tpu.pipeline_mode<synchronous>, transform_indices = @transform_9, window_bounds = array<i64: 1, 32>}, {pipeline_mode = #tpu.pipeline_mode<synchronous>, transform_indices = @transform_10, window_bounds = array<i64: 8, 4>}, {pipeline_mode = #tpu.pipeline_mode<synchronous>, transform_indices = @transform_11, window_bounds = array<i64: 8, 4>}, {pipeline_mode = #tpu.pipeline_mode<synchronous>, transform_indices = @transform_12, window_bounds = array<i64: 8, 4>}, {pipeline_mode = #tpu.pipeline_mode<synchronous>, transform_indices = @transform_13, window_bounds = array<i64: 8, 4>}, {transform_indices = @transform_14, window_bounds = array<i64: 1, 1, 8>}, {transform_indices = @transform_15, window_bounds = array<i64: 1, 8, 32>}]} {
    %c0 = arith.constant 0 : index
    %c0_0 = arith.constant 0 : index
    %c0_1 = arith.constant 0 : index
    %0 = vector.load %arg1[%c0, %c0_0, %c0_1] : memref<1x8x32xf32, #tpu.memory_space<vmem>>, vector<1x8x32xf32>
    %1 = vector.shape_cast %0 : vector<1x8x32xf32> to vector<8x32xf32>
    %c0_2 = arith.constant 0 : index
    %c0_3 = arith.constant 0 : index
    %2 = vector.load %arg3[%c0_2, %c0_3] : memref<1x32xf32, #tpu.memory_space<vmem>>, vector<1x32xf32>
    %c0_4 = arith.constant 0 : index
    %c0_5 = arith.constant 0 : index
    %3 = vector.load %arg4[%c0_4, %c0_5] : memref<1x32xf32, #tpu.memory_space<vmem>>, vector<1x32xf32>
    %cst = arith.constant dense<0.000000e+00> : vector<8xf32>
    %4 = vector.multi_reduction <add>, %1, %cst [1] : vector<8x32xf32> to vector<8xf32>
    %5 = vector.shape_cast %4 : vector<8xf32> to vector<8x1xf32>
    %cst_6 = arith.constant 3.200000e+01 : f32
    %6 = vector.broadcast %cst_6 : f32 to vector<8x1xf32>
    %7 = arith.divf %5, %6 : vector<8x1xf32>
    %8 = vector.broadcast %7 : vector<8x1xf32> to vector<8x32xf32>
    %9 = arith.subf %1, %8 : vector<8x32xf32>
    %10 = arith.mulf %9, %9 : vector<8x32xf32>
    %cst_7 = arith.constant dense<0.000000e+00> : vector<8xf32>
    %11 = vector.multi_reduction <add>, %10, %cst_7 [1] : vector<8x32xf32> to vector<8xf32>
    %12 = vector.shape_cast %11 : vector<8xf32> to vector<8x1xf32>
    %cst_8 = arith.constant 3.100000e+01 : f32
    %13 = vector.broadcast %cst_8 : f32 to vector<8x1xf32>
    %14 = arith.divf %12, %13 : vector<8x1xf32>
    %15 = math.sqrt %14 : vector<8x1xf32>
    %16 = vector.broadcast %2 : vector<1x32xf32> to vector<8x32xf32>
    %17 = arith.mulf %16, %9 : vector<8x32xf32>
    %cst_9 = arith.constant 9.99999997E-7 : f32
    %18 = vector.broadcast %cst_9 : f32 to vector<8x1xf32>
    %19 = arith.addf %15, %18 : vector<8x1xf32>
    %20 = vector.broadcast %19 : vector<8x1xf32> to vector<8x32xf32>
    %21 = arith.divf %17, %20 : vector<8x32xf32>
    %22 = vector.broadcast %3 : vector<1x32xf32> to vector<8x32xf32>
    %23 = arith.addf %21, %22 : vector<8x32xf32>
    %24 = arith.truncf %23 : vector<8x32xf32> to vector<8x32xbf16>
    %c0_10 = arith.constant 0 : index
    %c0_11 = arith.constant 0 : index
    %25 = vector.load %arg5[%c0_10, %c0_11] : memref<32x32xbf16, #tpu.memory_space<vmem>>, vector<32x32xbf16>
    %cst_12 = arith.constant dense<0.000000e+00> : vector<8x32xf32>
    %26 = tpu.matmul %24, %25, %cst_12 {dimension_numbers = #tpu.dot_dimension_numbers<[1], [0], [0], [1], [0, 0, 1, 1], [], []>} : vector<8x32xbf16>, vector<32x32xbf16>, vector<8x32xf32> -> vector<8x32xf32>
    %c0_13 = arith.constant 0 : index
    %c0_14 = arith.constant 0 : index
    %27 = vector.load %arg6[%c0_13, %c0_14] : memref<1x32xf32, #tpu.memory_space<vmem>>, vector<1x32xf32>
    %28 = vector.broadcast %27 : vector<1x32xf32> to vector<8x32xf32>
    %29 = arith.addf %26, %28 : vector<8x32xf32>
    %c0_15 = arith.constant 0 : index
    %c0_16 = arith.constant 0 : index
    %c0_17 = arith.constant 0 : index
    %30 = vector.load %arg2[%c0_15, %c0_16, %c0_17] : memref<1x8x32xf32, #tpu.memory_space<vmem>>, vector<1x8x32xf32>
    %31 = vector.shape_cast %30 : vector<1x8x32xf32> to vector<8x32xf32>
    %32 = arith.truncf %31 : vector<8x32xf32> to vector<8x32xbf16>
    %c0_18 = arith.constant 0 : index
    %c0_19 = arith.constant 0 : index
    %33 = vector.load %arg7[%c0_18, %c0_19] : memref<32x64xbf16, #tpu.memory_space<vmem>>, vector<32x64xbf16>
    %cst_20 = arith.constant dense<0.000000e+00> : vector<8x64xf32>
    %34 = tpu.matmul %32, %33, %cst_20 {dimension_numbers = #tpu.dot_dimension_numbers<[1], [0], [0], [1], [0, 0, 1, 1], [], []>} : vector<8x32xbf16>, vector<32x64xbf16>, vector<8x64xf32> -> vector<8x64xf32>
    %c0_21 = arith.constant 0 : index
    %c0_22 = arith.constant 0 : index
    %35 = vector.load %arg8[%c0_21, %c0_22] : memref<1x64xf32, #tpu.memory_space<vmem>>, vector<1x64xf32>
    %36 = vector.broadcast %35 : vector<1x64xf32> to vector<8x64xf32>
    %37 = arith.addf %34, %36 : vector<8x64xf32>
    %38 = vector.extract_strided_slice %37 {offsets = [0, 0], sizes = [8, 32], strides = [1, 1]} : vector<8x64xf32> to vector<8x32xf32>
    %39 = vector.extract_strided_slice %37 {offsets = [0, 32], sizes = [8, 32], strides = [1, 1]} : vector<8x64xf32> to vector<8x32xf32>
    %c0_23 = arith.constant 0 : index
    %c0_24 = arith.constant 0 : index
    %c0_25 = arith.constant 0 : index
    %40 = vector.load %arg15[%c0_23, %c0_24, %c0_25] : memref<1x1x8xf32, #tpu.memory_space<vmem>>, vector<1x1x8xf32>
    %41 = vector.shape_cast %40 : vector<1x1x8xf32> to vector<1x8xf32>
    %cst_26 = arith.constant 0.000000e+00 : f32
    %42 = vector.broadcast %cst_26 : f32 to vector<1x8xf32>
    %43 = arith.cmpf oeq, %41, %42 : vector<1x8xf32>
    %cst_27 = arith.constant -1.000000e+09 : f32
    %cst_28 = arith.constant 0.000000e+00 : f32
    %44 = vector.broadcast %cst_27 : f32 to vector<1x8xf32>
    %45 = vector.broadcast %cst_28 : f32 to vector<1x8xf32>
    %46 = arith.select %43, %44, %45 : vector<1x8xi1>, vector<1x8xf32>
    %c0_29 = arith.constant 0 : index
    %c0_30 = arith.constant 0 : index
    %47 = vector.load %arg11[%c0_29, %c0_30] : memref<8x4xf32, #tpu.memory_space<vmem>>, vector<8x4xf32>
    %c0_31 = arith.constant 0 : index
    %c0_32 = arith.constant 0 : index
    %48 = vector.load %arg12[%c0_31, %c0_32] : memref<8x4xf32, #tpu.memory_space<vmem>>, vector<8x4xf32>
    %c0_33 = arith.constant 0 : index
    %c0_34 = arith.constant 0 : index
    %49 = vector.load %arg13[%c0_33, %c0_34] : memref<8x4xf32, #tpu.memory_space<vmem>>, vector<8x4xf32>
    %c0_35 = arith.constant 0 : index
    %c0_36 = arith.constant 0 : index
    %50 = vector.load %arg14[%c0_35, %c0_36] : memref<8x4xf32, #tpu.memory_space<vmem>>, vector<8x4xf32>
    %c0_37 = arith.constant 0 : index
    %c0_38 = arith.constant 0 : index
    %51 = vector.load %arg9[%c0_37, %c0_38] : memref<32x32xbf16, #tpu.memory_space<vmem>>, vector<32x32xbf16>
    %52 = vector.extract_strided_slice %29 {offsets = [0, 0], sizes = [8, 4], strides = [1, 1]} : vector<8x32xf32> to vector<8x4xf32>
    %53 = vector.extract_strided_slice %29 {offsets = [0, 4], sizes = [8, 4], strides = [1, 1]} : vector<8x32xf32> to vector<8x4xf32>
    %54 = vector.extract_strided_slice %38 {offsets = [0, 0], sizes = [8, 4], strides = [1, 1]} : vector<8x32xf32> to vector<8x4xf32>
    %55 = vector.extract_strided_slice %38 {offsets = [0, 4], sizes = [8, 4], strides = [1, 1]} : vector<8x32xf32> to vector<8x4xf32>
    %56 = arith.mulf %52, %47 : vector<8x4xf32>
    %57 = arith.mulf %53, %48 : vector<8x4xf32>
    %58 = arith.subf %56, %57 : vector<8x4xf32>
    %59 = arith.mulf %53, %47 : vector<8x4xf32>
    %60 = arith.mulf %52, %48 : vector<8x4xf32>
    %61 = arith.addf %59, %60 : vector<8x4xf32>
    %62 = arith.mulf %54, %49 : vector<8x4xf32>
    %63 = arith.mulf %55, %50 : vector<8x4xf32>
    %64 = arith.subf %62, %63 : vector<8x4xf32>
    %65 = arith.mulf %55, %49 : vector<8x4xf32>
    %66 = arith.mulf %54, %50 : vector<8x4xf32>
    %67 = arith.addf %65, %66 : vector<8x4xf32>
    %68 = arith.truncf %58 : vector<8x4xf32> to vector<8x4xbf16>
    %69 = arith.truncf %64 : vector<8x4xf32> to vector<8x4xbf16>
    %cst_39 = arith.constant dense<0.000000e+00> : vector<8x8xf32>
    %70 = tpu.matmul %68, %69, %cst_39 {dimension_numbers = #tpu.dot_dimension_numbers<[1], [1], [0], [0], [0, 0, 1, 0], [], []>} : vector<8x4xbf16>, vector<8x4xbf16>, vector<8x8xf32> -> vector<8x8xf32>
    %71 = arith.truncf %61 : vector<8x4xf32> to vector<8x4xbf16>
    %72 = arith.truncf %67 : vector<8x4xf32> to vector<8x4xbf16>
    %cst_40 = arith.constant dense<0.000000e+00> : vector<8x8xf32>
    %73 = tpu.matmul %71, %72, %cst_40 {dimension_numbers = #tpu.dot_dimension_numbers<[1], [1], [0], [0], [0, 0, 1, 0], [], []>} : vector<8x4xbf16>, vector<8x4xbf16>, vector<8x8xf32> -> vector<8x8xf32>
    %74 = arith.addf %70, %73 : vector<8x8xf32>
    %75 = vector.broadcast %46 : vector<1x8xf32> to vector<8x8xf32>
    %76 = arith.addf %74, %75 : vector<8x8xf32>
    %cst_41 = arith.constant dense<0xFF800000> : vector<8xf32>
    %77 = vector.multi_reduction <maximumf>, %76, %cst_41 [1] : vector<8x8xf32> to vector<8xf32>
    %78 = vector.shape_cast %77 : vector<8xf32> to vector<8x1xf32>
    %79 = vector.broadcast %78 : vector<8x1xf32> to vector<8x8xf32>
    %80 = arith.subf %76, %79 : vector<8x8xf32>
    %81 = math.exp %80 : vector<8x8xf32>
    %cst_42 = arith.constant dense<0.000000e+00> : vector<8xf32>
    %82 = vector.multi_reduction <add>, %81, %cst_42 [1] : vector<8x8xf32> to vector<8xf32>
    %83 = vector.shape_cast %82 : vector<8xf32> to vector<8x1xf32>
    %84 = tpu.reciprocal %83 {approx = true} : vector<8x1xf32> -> vector<8x1xf32>
    %85 = vector.broadcast %84 : vector<8x1xf32> to vector<8x8xf32>
    %86 = arith.mulf %81, %85 : vector<8x8xf32>
    %87 = vector.extract_strided_slice %39 {offsets = [0, 0], sizes = [8, 8], strides = [1, 1]} : vector<8x32xf32> to vector<8x8xf32>
    %88 = arith.truncf %86 : vector<8x8xf32> to vector<8x8xbf16>
    %89 = arith.truncf %87 : vector<8x8xf32> to vector<8x8xbf16>
    %cst_43 = arith.constant dense<0.000000e+00> : vector<8x8xf32>
    %90 = tpu.matmul %88, %89, %cst_43 {dimension_numbers = #tpu.dot_dimension_numbers<[1], [0], [0], [1], [0, 0, 1, 1], [], []>} : vector<8x8xbf16>, vector<8x8xbf16>, vector<8x8xf32> -> vector<8x8xf32>
    %91 = arith.truncf %90 : vector<8x8xf32> to vector<8x8xbf16>
    %92 = vector.extract_strided_slice %51 {offsets = [0, 0], sizes = [8, 32], strides = [1, 1]} : vector<32x32xbf16> to vector<8x32xbf16>
    %cst_44 = arith.constant dense<0.000000e+00> : vector<8x32xf32>
    %93 = tpu.matmul %91, %92, %cst_44 {dimension_numbers = #tpu.dot_dimension_numbers<[1], [0], [0], [1], [0, 0, 1, 1], [], []>} : vector<8x8xbf16>, vector<8x32xbf16>, vector<8x32xf32> -> vector<8x32xf32>
    %94 = vector.extract_strided_slice %29 {offsets = [0, 8], sizes = [8, 4], strides = [1, 1]} : vector<8x32xf32> to vector<8x4xf32>
    %95 = vector.extract_strided_slice %29 {offsets = [0, 12], sizes = [8, 4], strides = [1, 1]} : vector<8x32xf32> to vector<8x4xf32>
    %96 = vector.extract_strided_slice %38 {offsets = [0, 8], sizes = [8, 4], strides = [1, 1]} : vector<8x32xf32> to vector<8x4xf32>
    %97 = vector.extract_strided_slice %38 {offsets = [0, 12], sizes = [8, 4], strides = [1, 1]} : vector<8x32xf32> to vector<8x4xf32>
    %98 = arith.mulf %94, %47 : vector<8x4xf32>
    %99 = arith.mulf %95, %48 : vector<8x4xf32>
    %100 = arith.subf %98, %99 : vector<8x4xf32>
    %101 = arith.mulf %95, %47 : vector<8x4xf32>
    %102 = arith.mulf %94, %48 : vector<8x4xf32>
    %103 = arith.addf %101, %102 : vector<8x4xf32>
    %104 = arith.mulf %96, %49 : vector<8x4xf32>
    %105 = arith.mulf %97, %50 : vector<8x4xf32>
    %106 = arith.subf %104, %105 : vector<8x4xf32>
    %107 = arith.mulf %97, %49 : vector<8x4xf32>
    %108 = arith.mulf %96, %50 : vector<8x4xf32>
    %109 = arith.addf %107, %108 : vector<8x4xf32>
    %110 = arith.truncf %100 : vector<8x4xf32> to vector<8x4xbf16>
    %111 = arith.truncf %106 : vector<8x4xf32> to vector<8x4xbf16>
    %cst_45 = arith.constant dense<0.000000e+00> : vector<8x8xf32>
    %112 = tpu.matmul %110, %111, %cst_45 {dimension_numbers = #tpu.dot_dimension_numbers<[1], [1], [0], [0], [0, 0, 1, 0], [], []>} : vector<8x4xbf16>, vector<8x4xbf16>, vector<8x8xf32> -> vector<8x8xf32>
    %113 = arith.truncf %103 : vector<8x4xf32> to vector<8x4xbf16>
    %114 = arith.truncf %109 : vector<8x4xf32> to vector<8x4xbf16>
    %cst_46 = arith.constant dense<0.000000e+00> : vector<8x8xf32>
    %115 = tpu.matmul %113, %114, %cst_46 {dimension_numbers = #tpu.dot_dimension_numbers<[1], [1], [0], [0], [0, 0, 1, 0], [], []>} : vector<8x4xbf16>, vector<8x4xbf16>, vector<8x8xf32> -> vector<8x8xf32>
    %116 = arith.addf %112, %115 : vector<8x8xf32>
    %117 = vector.broadcast %46 : vector<1x8xf32> to vector<8x8xf32>
    %118 = arith.addf %116, %117 : vector<8x8xf32>
    %cst_47 = arith.constant dense<0xFF800000> : vector<8xf32>
    %119 = vector.multi_reduction <maximumf>, %118, %cst_47 [1] : vector<8x8xf32> to vector<8xf32>
    %120 = vector.shape_cast %119 : vector<8xf32> to vector<8x1xf32>
    %121 = vector.broadcast %120 : vector<8x1xf32> to vector<8x8xf32>
    %122 = arith.subf %118, %121 : vector<8x8xf32>
    %123 = math.exp %122 : vector<8x8xf32>
    %cst_48 = arith.constant dense<0.000000e+00> : vector<8xf32>
    %124 = vector.multi_reduction <add>, %123, %cst_48 [1] : vector<8x8xf32> to vector<8xf32>
    %125 = vector.shape_cast %124 : vector<8xf32> to vector<8x1xf32>
    %126 = tpu.reciprocal %125 {approx = true} : vector<8x1xf32> -> vector<8x1xf32>
    %127 = vector.broadcast %126 : vector<8x1xf32> to vector<8x8xf32>
    %128 = arith.mulf %123, %127 : vector<8x8xf32>
    %129 = vector.extract_strided_slice %39 {offsets = [0, 8], sizes = [8, 8], strides = [1, 1]} : vector<8x32xf32> to vector<8x8xf32>
    %130 = arith.truncf %128 : vector<8x8xf32> to vector<8x8xbf16>
    %131 = arith.truncf %129 : vector<8x8xf32> to vector<8x8xbf16>
    %cst_49 = arith.constant dense<0.000000e+00> : vector<8x8xf32>
    %132 = tpu.matmul %130, %131, %cst_49 {dimension_numbers = #tpu.dot_dimension_numbers<[1], [0], [0], [1], [0, 0, 1, 1], [], []>} : vector<8x8xbf16>, vector<8x8xbf16>, vector<8x8xf32> -> vector<8x8xf32>
    %133 = arith.truncf %132 : vector<8x8xf32> to vector<8x8xbf16>
    %134 = vector.extract_strided_slice %51 {offsets = [8, 0], sizes = [8, 32], strides = [1, 1]} : vector<32x32xbf16> to vector<8x32xbf16>
    %cst_50 = arith.constant dense<0.000000e+00> : vector<8x32xf32>
    %135 = tpu.matmul %133, %134, %cst_50 {dimension_numbers = #tpu.dot_dimension_numbers<[1], [0], [0], [1], [0, 0, 1, 1], [], []>} : vector<8x8xbf16>, vector<8x32xbf16>, vector<8x32xf32> -> vector<8x32xf32>
    %136 = arith.addf %93, %135 : vector<8x32xf32>
    %137 = vector.extract_strided_slice %29 {offsets = [0, 16], sizes = [8, 4], strides = [1, 1]} : vector<8x32xf32> to vector<8x4xf32>
    %138 = vector.extract_strided_slice %29 {offsets = [0, 20], sizes = [8, 4], strides = [1, 1]} : vector<8x32xf32> to vector<8x4xf32>
    %139 = vector.extract_strided_slice %38 {offsets = [0, 16], sizes = [8, 4], strides = [1, 1]} : vector<8x32xf32> to vector<8x4xf32>
    %140 = vector.extract_strided_slice %38 {offsets = [0, 20], sizes = [8, 4], strides = [1, 1]} : vector<8x32xf32> to vector<8x4xf32>
    %141 = arith.mulf %137, %47 : vector<8x4xf32>
    %142 = arith.mulf %138, %48 : vector<8x4xf32>
    %143 = arith.subf %141, %142 : vector<8x4xf32>
    %144 = arith.mulf %138, %47 : vector<8x4xf32>
    %145 = arith.mulf %137, %48 : vector<8x4xf32>
    %146 = arith.addf %144, %145 : vector<8x4xf32>
    %147 = arith.mulf %139, %49 : vector<8x4xf32>
    %148 = arith.mulf %140, %50 : vector<8x4xf32>
    %149 = arith.subf %147, %148 : vector<8x4xf32>
    %150 = arith.mulf %140, %49 : vector<8x4xf32>
    %151 = arith.mulf %139, %50 : vector<8x4xf32>
    %152 = arith.addf %150, %151 : vector<8x4xf32>
    %153 = arith.truncf %143 : vector<8x4xf32> to vector<8x4xbf16>
    %154 = arith.truncf %149 : vector<8x4xf32> to vector<8x4xbf16>
    %cst_51 = arith.constant dense<0.000000e+00> : vector<8x8xf32>
    %155 = tpu.matmul %153, %154, %cst_51 {dimension_numbers = #tpu.dot_dimension_numbers<[1], [1], [0], [0], [0, 0, 1, 0], [], []>} : vector<8x4xbf16>, vector<8x4xbf16>, vector<8x8xf32> -> vector<8x8xf32>
    %156 = arith.truncf %146 : vector<8x4xf32> to vector<8x4xbf16>
    %157 = arith.truncf %152 : vector<8x4xf32> to vector<8x4xbf16>
    %cst_52 = arith.constant dense<0.000000e+00> : vector<8x8xf32>
    %158 = tpu.matmul %156, %157, %cst_52 {dimension_numbers = #tpu.dot_dimension_numbers<[1], [1], [0], [0], [0, 0, 1, 0], [], []>} : vector<8x4xbf16>, vector<8x4xbf16>, vector<8x8xf32> -> vector<8x8xf32>
    %159 = arith.addf %155, %158 : vector<8x8xf32>
    %160 = vector.broadcast %46 : vector<1x8xf32> to vector<8x8xf32>
    %161 = arith.addf %159, %160 : vector<8x8xf32>
    %cst_53 = arith.constant dense<0xFF800000> : vector<8xf32>
    %162 = vector.multi_reduction <maximumf>, %161, %cst_53 [1] : vector<8x8xf32> to vector<8xf32>
    %163 = vector.shape_cast %162 : vector<8xf32> to vector<8x1xf32>
    %164 = vector.broadcast %163 : vector<8x1xf32> to vector<8x8xf32>
    %165 = arith.subf %161, %164 : vector<8x8xf32>
    %166 = math.exp %165 : vector<8x8xf32>
    %cst_54 = arith.constant dense<0.000000e+00> : vector<8xf32>
    %167 = vector.multi_reduction <add>, %166, %cst_54 [1] : vector<8x8xf32> to vector<8xf32>
    %168 = vector.shape_cast %167 : vector<8xf32> to vector<8x1xf32>
    %169 = tpu.reciprocal %168 {approx = true} : vector<8x1xf32> -> vector<8x1xf32>
    %170 = vector.broadcast %169 : vector<8x1xf32> to vector<8x8xf32>
    %171 = arith.mulf %166, %170 : vector<8x8xf32>
    %172 = vector.extract_strided_slice %39 {offsets = [0, 16], sizes = [8, 8], strides = [1, 1]} : vector<8x32xf32> to vector<8x8xf32>
    %173 = arith.truncf %171 : vector<8x8xf32> to vector<8x8xbf16>
    %174 = arith.truncf %172 : vector<8x8xf32> to vector<8x8xbf16>
    %cst_55 = arith.constant dense<0.000000e+00> : vector<8x8xf32>
    %175 = tpu.matmul %173, %174, %cst_55 {dimension_numbers = #tpu.dot_dimension_numbers<[1], [0], [0], [1], [0, 0, 1, 1], [], []>} : vector<8x8xbf16>, vector<8x8xbf16>, vector<8x8xf32> -> vector<8x8xf32>
    %176 = arith.truncf %175 : vector<8x8xf32> to vector<8x8xbf16>
    %177 = vector.extract_strided_slice %51 {offsets = [16, 0], sizes = [8, 32], strides = [1, 1]} : vector<32x32xbf16> to vector<8x32xbf16>
    %cst_56 = arith.constant dense<0.000000e+00> : vector<8x32xf32>
    %178 = tpu.matmul %176, %177, %cst_56 {dimension_numbers = #tpu.dot_dimension_numbers<[1], [0], [0], [1], [0, 0, 1, 1], [], []>} : vector<8x8xbf16>, vector<8x32xbf16>, vector<8x32xf32> -> vector<8x32xf32>
    %179 = arith.addf %136, %178 : vector<8x32xf32>
    %180 = vector.extract_strided_slice %29 {offsets = [0, 24], sizes = [8, 4], strides = [1, 1]} : vector<8x32xf32> to vector<8x4xf32>
    %181 = vector.extract_strided_slice %29 {offsets = [0, 28], sizes = [8, 4], strides = [1, 1]} : vector<8x32xf32> to vector<8x4xf32>
    %182 = vector.extract_strided_slice %38 {offsets = [0, 24], sizes = [8, 4], strides = [1, 1]} : vector<8x32xf32> to vector<8x4xf32>
    %183 = vector.extract_strided_slice %38 {offsets = [0, 28], sizes = [8, 4], strides = [1, 1]} : vector<8x32xf32> to vector<8x4xf32>
    %184 = arith.mulf %180, %47 : vector<8x4xf32>
    %185 = arith.mulf %181, %48 : vector<8x4xf32>
    %186 = arith.subf %184, %185 : vector<8x4xf32>
    %187 = arith.mulf %181, %47 : vector<8x4xf32>
    %188 = arith.mulf %180, %48 : vector<8x4xf32>
    %189 = arith.addf %187, %188 : vector<8x4xf32>
    %190 = arith.mulf %182, %49 : vector<8x4xf32>
    %191 = arith.mulf %183, %50 : vector<8x4xf32>
    %192 = arith.subf %190, %191 : vector<8x4xf32>
    %193 = arith.mulf %183, %49 : vector<8x4xf32>
    %194 = arith.mulf %182, %50 : vector<8x4xf32>
    %195 = arith.addf %193, %194 : vector<8x4xf32>
    %196 = arith.truncf %186 : vector<8x4xf32> to vector<8x4xbf16>
    %197 = arith.truncf %192 : vector<8x4xf32> to vector<8x4xbf16>
    %cst_57 = arith.constant dense<0.000000e+00> : vector<8x8xf32>
    %198 = tpu.matmul %196, %197, %cst_57 {dimension_numbers = #tpu.dot_dimension_numbers<[1], [1], [0], [0], [0, 0, 1, 0], [], []>} : vector<8x4xbf16>, vector<8x4xbf16>, vector<8x8xf32> -> vector<8x8xf32>
    %199 = arith.truncf %189 : vector<8x4xf32> to vector<8x4xbf16>
    %200 = arith.truncf %195 : vector<8x4xf32> to vector<8x4xbf16>
    %cst_58 = arith.constant dense<0.000000e+00> : vector<8x8xf32>
    %201 = tpu.matmul %199, %200, %cst_58 {dimension_numbers = #tpu.dot_dimension_numbers<[1], [1], [0], [0], [0, 0, 1, 0], [], []>} : vector<8x4xbf16>, vector<8x4xbf16>, vector<8x8xf32> -> vector<8x8xf32>
    %202 = arith.addf %198, %201 : vector<8x8xf32>
    %203 = vector.broadcast %46 : vector<1x8xf32> to vector<8x8xf32>
    %204 = arith.addf %202, %203 : vector<8x8xf32>
    %cst_59 = arith.constant dense<0xFF800000> : vector<8xf32>
    %205 = vector.multi_reduction <maximumf>, %204, %cst_59 [1] : vector<8x8xf32> to vector<8xf32>
    %206 = vector.shape_cast %205 : vector<8xf32> to vector<8x1xf32>
    %207 = vector.broadcast %206 : vector<8x1xf32> to vector<8x8xf32>
    %208 = arith.subf %204, %207 : vector<8x8xf32>
    %209 = math.exp %208 : vector<8x8xf32>
    %cst_60 = arith.constant dense<0.000000e+00> : vector<8xf32>
    %210 = vector.multi_reduction <add>, %209, %cst_60 [1] : vector<8x8xf32> to vector<8xf32>
    %211 = vector.shape_cast %210 : vector<8xf32> to vector<8x1xf32>
    %212 = tpu.reciprocal %211 {approx = true} : vector<8x1xf32> -> vector<8x1xf32>
    %213 = vector.broadcast %212 : vector<8x1xf32> to vector<8x8xf32>
    %214 = arith.mulf %209, %213 : vector<8x8xf32>
    %215 = vector.extract_strided_slice %39 {offsets = [0, 24], sizes = [8, 8], strides = [1, 1]} : vector<8x32xf32> to vector<8x8xf32>
    %216 = arith.truncf %214 : vector<8x8xf32> to vector<8x8xbf16>
    %217 = arith.truncf %215 : vector<8x8xf32> to vector<8x8xbf16>
    %cst_61 = arith.constant dense<0.000000e+00> : vector<8x8xf32>
    %218 = tpu.matmul %216, %217, %cst_61 {dimension_numbers = #tpu.dot_dimension_numbers<[1], [0], [0], [1], [0, 0, 1, 1], [], []>} : vector<8x8xbf16>, vector<8x8xbf16>, vector<8x8xf32> -> vector<8x8xf32>
    %219 = arith.truncf %218 : vector<8x8xf32> to vector<8x8xbf16>
    %220 = vector.extract_strided_slice %51 {offsets = [24, 0], sizes = [8, 32], strides = [1, 1]} : vector<32x32xbf16> to vector<8x32xbf16>
    %cst_62 = arith.constant dense<0.000000e+00> : vector<8x32xf32>
    %221 = tpu.matmul %219, %220, %cst_62 {dimension_numbers = #tpu.dot_dimension_numbers<[1], [0], [0], [1], [0, 0, 1, 1], [], []>} : vector<8x8xbf16>, vector<8x32xbf16>, vector<8x32xf32> -> vector<8x32xf32>
    %222 = arith.addf %179, %221 : vector<8x32xf32>
    %223 = arith.addf %1, %222 : vector<8x32xf32>
    %c0_63 = arith.constant 0 : index
    %c0_64 = arith.constant 0 : index
    %224 = vector.load %arg10[%c0_63, %c0_64] : memref<1x32xf32, #tpu.memory_space<vmem>>, vector<1x32xf32>
    %225 = vector.broadcast %224 : vector<1x32xf32> to vector<8x32xf32>
    %226 = arith.addf %223, %225 : vector<8x32xf32>
    %c0_65 = arith.constant 0 : index
    %c0_66 = arith.constant 0 : index
    %c0_67 = arith.constant 0 : index
    %227 = vector.load %arg16[%c0_65, %c0_66, %c0_67] : memref<1x8x32xf32, #tpu.memory_space<vmem>>, vector<1x8x32xf32>
    %228 = vector.shape_cast %227 : vector<1x8x32xf32> to vector<8x32xf32>
    %229 = vector.shape_cast %226 : vector<8x32xf32> to vector<1x8x32xf32>
    tpu.vector_store %arg16[%c0_65, %c0_66, %c0_67], %229 {strides = array<i32>} : memref<1x8x32xf32, #tpu.memory_space<vmem>>, vector<1x8x32xf32>,
    return
  }
  func.func @transform_0(%arg0: i32) -> (i32, i32, i32) {
    %c0_i32 = arith.constant 0 : i32
    %c0_i32_0 = arith.constant 0 : i32
    %c0_i32_1 = arith.constant 0 : i32
    return %arg0, %c0_i32, %c0_i32_0 : i32, i32, i32
  }
  func.func @transform_1(%arg0: i32) -> (i32, i32, i32) {
    %c0_i32 = arith.constant 0 : i32
    %c0_i32_0 = arith.constant 0 : i32
    %c0_i32_1 = arith.constant 0 : i32
    return %arg0, %c0_i32, %c0_i32_0 : i32, i32, i32
  }
  func.func @transform_2(%arg0: i32) -> (i32, i32) {
    %c0_i32 = arith.constant 0 : i32
    %c0_i32_0 = arith.constant 0 : i32
    %c0_i32_1 = arith.constant 0 : i32
    return %c0_i32, %c0_i32_0 : i32, i32
  }
  func.func @transform_3(%arg0: i32) -> (i32, i32) {
    %c0_i32 = arith.constant 0 : i32
    %c0_i32_0 = arith.constant 0 : i32
    %c0_i32_1 = arith.constant 0 : i32
    return %c0_i32, %c0_i32_0 : i32, i32
  }
  func.func @transform_4(%arg0: i32) -> (i32, i32) {
    %c0_i32 = arith.constant 0 : i32
    %c0_i32_0 = arith.constant 0 : i32
    %c0_i32_1 = arith.constant 0 : i32
    return %c0_i32, %c0_i32_0 : i32, i32
  }
  func.func @transform_5(%arg0: i32) -> (i32, i32) {
    %c0_i32 = arith.constant 0 : i32
    %c0_i32_0 = arith.constant 0 : i32
    %c0_i32_1 = arith.constant 0 : i32
    return %c0_i32, %c0_i32_0 : i32, i32
  }
  func.func @transform_6(%arg0: i32) -> (i32, i32) {
    %c0_i32 = arith.constant 0 : i32
    %c0_i32_0 = arith.constant 0 : i32
    %c0_i32_1 = arith.constant 0 : i32
    return %c0_i32, %c0_i32_0 : i32, i32
  }
  func.func @transform_7(%arg0: i32) -> (i32, i32) {
    %c0_i32 = arith.constant 0 : i32
    %c0_i32_0 = arith.constant 0 : i32
    %c0_i32_1 = arith.constant 0 : i32
    return %c0_i32, %c0_i32_0 : i32, i32
  }
  func.func @transform_8(%arg0: i32) -> (i32, i32) {
    %c0_i32 = arith.constant 0 : i32
    %c0_i32_0 = arith.constant 0 : i32
    %c0_i32_1 = arith.constant 0 : i32
    return %c0_i32, %c0_i32_0 : i32, i32
  }
  func.func @transform_9(%arg0: i32) -> (i32, i32) {
    %c0_i32 = arith.constant 0 : i32
    %c0_i32_0 = arith.constant 0 : i32
    %c0_i32_1 = arith.constant 0 : i32
    return %c0_i32, %c0_i32_0 : i32, i32
  }
  func.func @transform_10(%arg0: i32) -> (i32, i32) {
    %c0_i32 = arith.constant 0 : i32
    %c0_i32_0 = arith.constant 0 : i32
    %c0_i32_1 = arith.constant 0 : i32
    return %c0_i32, %c0_i32_0 : i32, i32
  }
  func.func @transform_11(%arg0: i32) -> (i32, i32) {
    %c0_i32 = arith.constant 0 : i32
    %c0_i32_0 = arith.constant 0 : i32
    %c0_i32_1 = arith.constant 0 : i32
    return %c0_i32, %c0_i32_0 : i32, i32
  }
  func.func @transform_12(%arg0: i32) -> (i32, i32) {
    %c0_i32 = arith.constant 0 : i32
    %c0_i32_0 = arith.constant 0 : i32
    %c0_i32_1 = arith.constant 0 : i32
    return %c0_i32, %c0_i32_0 : i32, i32
  }
  func.func @transform_13(%arg0: i32) -> (i32, i32) {
    %c0_i32 = arith.constant 0 : i32
    %c0_i32_0 = arith.constant 0 : i32
    %c0_i32_1 = arith.constant 0 : i32
    return %c0_i32, %c0_i32_0 : i32, i32
  }
  func.func @transform_14(%arg0: i32) -> (i32, i32, i32) {
    %c0_i32 = arith.constant 0 : i32
    %c0_i32_0 = arith.constant 0 : i32
    %c0_i32_1 = arith.constant 0 : i32
    return %arg0, %c0_i32, %c0_i32_0 : i32, i32, i32
  }
  func.func @transform_15(%arg0: i32) -> (i32, i32, i32) {
    %c0_i32 = arith.constant 0 : i32
    %c0_i32_0 = arith.constant 0 : i32
    %c0_i32_1 = arith.constant 0 : i32
    return %arg0, %c0_i32, %c0_i32_0 : i32, i32, i32
  }
}

</mosaic_0001>

<llo_original>
// kernel: transformer_forward.16
$region0: #{transformer_forward.16}
  #allocation0 [shape = 'u32[]', space=smem, size = 0x4, offset = 0x4, fixed_abs, tag = 'smem constant byte address 0x4 - core index']
  #allocation1 [shape = 'u32[144,128]{1,0:T(1,128)}', space=vmem, size = 0x12000, scoped, tag = 'internal scratch']
  %s0 = inlined_call_operand.vmem [shape: f32[2,8,32], index: 0, kind: input, shape index: {}]
  %s1 = inlined_call_operand.vmem [shape: f32[1,32], index: 1, kind: input, shape index: {}]
  %s2 = inlined_call_operand.vmem [shape: f32[1,32], index: 2, kind: input, shape index: {}]
  %s3 = inlined_call_operand.vmem [shape: f32[2,8,32], index: 3, kind: output, shape index: {}]
  %s4 = sld [smem:[#allocation0]]
  $region45: #{transformer_forward.16} parent=0
    _
  %s6 = ssub.s32 1, %s4
  %s7 = scalar_select 0, %s6, %s4
  loop: start=0, step=1, limit=4
  $region2: #{transformer_forward.16} parent=0 // loop_pre_header
    _
  $region3: #{transformer_forward.16} parent=0 // loop_header
    %s9 = sphi 0, %s13
    %p10 = scmp.ge.s32.totalorder %s9, 4
    %s19 = sphi 0, %s21
    %s22 = sphi 0, %s19
    %s23 = sphi 0, %s22
    %s39 = sphi 0, %s23
    %s43 = sphi 0, %s43
    %s45 = sphi 0, %s43
    %s46 = sphi 0, %s45
    %s60 = sphi 0, %s46
    %s64 = sphi 0, %s64
    %s66 = sphi 0, %s64
    %s67 = sphi 0, %s66
    %s81 = sphi 0, %s67
    %s87 = sphi 0, %s89
    %s90 = sphi 0, %s87
    %s91 = sphi 0, %s90
    %s107 = sphi 0, %s91
  $region4: #{transformer_forward.16} parent=0 // loop_header_branch
    %12 = sbr.rel (%p10) target = $region8
  $region5: #{transformer_forward.16} parent=0 // loop_body
    %s14 = ssub.s32 %s9, 1
    %s15 = ssub.s32 %s9, 2
    %s16 = sadd.s32 %s9, 1
    %s17 = ssub.s32 %s9, %s16
    %p18 = scmp.eq.s32.totalorder %s17, 0
    %s20 = sadd.s32 %s19, 1
    %s21 = scalar_select %p18, %s19, %s20
    %p24 = pneg %p18
    %p25 = scmp.eq.s32.totalorder %s9, 1
    %p26 = por %p24, %p25
    %p27 = scmp.ne.s32.totalorder %s19, %s22
    %p28 = scmp.eq.s32.totalorder %s9, 0
    %p29 = por %p27, %p28
    %p30 = scmp.ne.s32.totalorder %s19, %s22
    %p31 = scmp.eq.s32.totalorder %s14, 1
    %p32 = por %p30, %p31
    %p33 = scmp.ne.s32.totalorder %s22, %s23
    %p34 = scmp.eq.s32.totalorder %s14, 0
    %p35 = por %p33, %p34
    %p36 = scmp.ne.s32.totalorder %s22, %s23
    %p37 = scmp.eq.s32.totalorder %s15, 1
    %p38 = por %p36, %p37
    %p40 = scmp.ne.s32.totalorder %s23, %s39
    %p41 = scmp.eq.s32.totalorder %s15, 0
    %p42 = por %p40, %p41
    %s44 = sadd.s32 %s43, 1
    %p47 = scmp.eq.s32.totalorder %s9, 1
    %p48 = scmp.ne.s32.totalorder %s43, %s45
    %p49 = scmp.eq.s32.totalorder %s9, 0
    %p50 = por %p48, %p49
    %p51 = scmp.ne.s32.totalorder %s43, %s45
    %p52 = scmp.eq.s32.totalorder %s14, 1
    %p53 = por %p51, %p52
    %p54 = scmp.ne.s32.totalorder %s45, %s46
    %p55 = scmp.eq.s32.totalorder %s14, 0
    %p56 = por %p54, %p55
    %p57 = scmp.ne.s32.totalorder %s45, %s46
    %p58 = scmp.eq.s32.totalorder %s15, 1
    %p59 = por %p57, %p58
    %p61 = scmp.ne.s32.totalorder %s46, %s60
    %p62 = scmp.eq.s32.totalorder %s15, 0
    %p63 = por %p61, %p62
    %s65 = sadd.s32 %s64, 1
    %p68 = scmp.eq.s32.totalorder %s9, 1
    %p69 = scmp.ne.s32.totalorder %s64, %s66
    %p70 = scmp.eq.s32.totalorder %s9, 0
    %p71 = por %p69, %p70
    %p72 = scmp.ne.s32.totalorder %s64, %s66
    %p73 = scmp.eq.s32.totalorder %s14, 1
    %p74 = por %p72, %p73
    %p75 = scmp.ne.s32.totalorder %s66, %s67
    %p76 = scmp.eq.s32.totalorder %s14, 0
    %p77 = por %p75, %p76
    %p78 = scmp.ne.s32.totalorder %s66, %s67
    %p79 = scmp.eq.s32.totalorder %s15, 1
    %p80 = por %p78, %p79
    %p82 = scmp.ne.s32.totalorder %s67, %s81
    %p83 = scmp.eq.s32.totalorder %s15, 0
    %p84 = por %p82, %p83
    %s85 = ssub.s32 %s9, %s16
    %p86 = scmp.eq.s32.totalorder %s85, 0
    %s88 = sadd.s32 %s87, 1
    %s89 = scalar_select %p86, %s87, %s88
    %p92 = pneg %p86
    %p93 = scmp.eq.s32.totalorder %s9, 1
    %p94 = por %p92, %p93
    %p95 = scmp.ne.s32.totalorder %s87, %s90
    %p96 = scmp.eq.s32.totalorder %s9, 0
    %p97 = por %p95, %p96
    %p98 = scmp.ne.s32.totalorder %s87, %s90
    %p99 = scmp.eq.s32.totalorder %s14, 1
    %p100 = por %p98, %p99
    %p101 = scmp.ne.s32.totalorder %s90, %s91
    %p102 = scmp.eq.s32.totalorder %s14, 0
    %p103 = por %p101, %p102
    %p104 = scmp.ne.s32.totalorder %s90, %s91
    %p105 = scmp.eq.s32.totalorder %s15, 1
    %p106 = por %p104, %p105
    %p108 = scmp.ne.s32.totalorder %s91, %s107
    %p109 = scmp.eq.s32.totalorder %s15, 0
    %p110 = por %p108, %p109
    %p111 = scmp.le.s32.totalorder 1, %s9
    %p112 = scmp.lt.s32.totalorder %s9, 3
    %p113 = pnand %p111, %p112
    %p114 = pneg %p113
    // Predicated region
    $region9: #{transformer_forward.16} parent=5 // pred_check
      _
    $region10: #{transformer_forward.16} parent=5 // pred_check_branch
      %116 = sbr.rel (%p113) target = $region12
    $region11: #{transformer_forward.16} parent=5 // pred_region
      %s117 = ssub.s32 %s9, 1
      // Predicated region
      $region13: #{transformer_forward.16} parent=11 // pred_check
        %p118 = pneg %p56
      $region14: #{transformer_forward.16} parent=11 // pred_check_branch
        %120 = sbr.rel (%p118) target = $region16
      $region15: #{transformer_forward.16} parent=11 // pred_region
        _
      $region16: #{transformer_forward.16} parent=11 // pred_fallthru
        _
      // Predicated region
      $region17: #{transformer_forward.16} parent=11 // pred_check
        %p121 = pneg %p77
      $region18: #{transformer_forward.16} parent=11 // pred_check_branch
        %123 = sbr.rel (%p121) target = $region20
      $region19: #{transformer_forward.16} parent=11 // pred_region
        _
      $region20: #{transformer_forward.16} parent=11 // pred_fallthru
        _
    $region12: #{transformer_forward.16} parent=5 // pred_fallthru
      _
    %p124 = scmp.lt.s32.totalorder %s9, 2
    // Predicated region
    $region21: #{transformer_forward.16} parent=5 // pred_check
      %p125 = pneg %p124
    $region22: #{transformer_forward.16} parent=5 // pred_check_branch
      %127 = sbr.rel (%p125) target = $region24
    $region23: #{transformer_forward.16} parent=5 // pred_region
      // Predicated region
      $region25: #{transformer_forward.16} parent=23 // pred_check
        %p128 = pneg %p29
      $region26: #{transformer_forward.16} parent=23 // pred_check_branch
        %130 = sbr.rel (%p128) target = $region28
      $region27: #{transformer_forward.16} parent=23 // pred_region
        %p131 = scmp.lt.s32.totalorder %s9, 1
        %s132 = scalar_select %p131, %s9, 1
        %s133 = smul.addr %s132, 8
        %s134 = scalar_lea.vmem %s0, %s133
      $region28: #{transformer_forward.16} parent=23 // pred_fallthru
        _
    $region24: #{transformer_forward.16} parent=5 // pred_fallthru
      _
    %p135 = scmp.le.s32.totalorder 1, %s9
    %p136 = scmp.lt.s32.totalorder %s9, 3
    %p137 = pnand %p135, %p136
    %p138 = pneg %p137
    // Predicated region
    $region29: #{transformer_forward.16} parent=5 // pred_check
      _
    $region30: #{transformer_forward.16} parent=5 // pred_check_branch
      %140 = sbr.rel (%p137) target = $region32
    $region31: #{transformer_forward.16} parent=5 // pred_region
      %s141 = ssub.s32 %s9, 1
      %p142 = scmp.lt.s32.totalorder %s14, 1
      %s143 = scalar_select %p142, %s14, 1
      %s144 = smul.addr %s143, 8
      %s145 = scalar_lea.vmem %s0, %s144
      %p146 = pneg %p35
      %p147 = pneg %p32
      %p148 = pneg %p56
      %p149 = pneg %p53
      %p150 = pneg %p77
      %p151 = pneg %p74
      %p152 = pneg %p103
      %p153 = pneg %p100
      %p154 = scmp.lt.s32.totalorder %s14, 1
      %s155 = scalar_select %p154, %s14, 1
      %s156 = smul.addr %s155, 8
      %s157 = scalar_lea.vmem %s3, %s156
      %p158 = scmp.lt.s32.totalorder %s14, 1
      %s159 = scalar_select %p158, %s14, 1
      %s160 = smul.addr %s159, 8
      %s161 = scalar_lea.vmem %s0, %s160
      %p162 = scmp.lt.s32.totalorder %s14, 1
      %s163 = scalar_select %p162, %s14, 1
      %s164 = smul.addr %s163, 8
      %s165 = scalar_lea.vmem %s3, %s164
      %v166 = vld [vmem:[%s161] sm:$0xff]
      %v167 = vld [vmem:[%s1] sm:$0x1]
      %v168 = vld [vmem:[%s2] sm:$0x1]
      %vm169 = vcmask 261120
      %v170 = vsel %vm169, %v166, 0.0
      %171 = vadd.xlane.f32.xlu0 %v170
      %v172 = vpop.xlane.xlu0 %171
      %v173 = vrcp.pop 32.0
      %v174 = vmul.f32 %v172, %v173
      %v175 = vsub.f32 %v166, %v174
      %v176 = vmul.f32 %v175, %v175
      %v177 = vsel %vm169, %v176, 0.0
      %178 = vadd.xlane.f32.xlu0 %v177
      %v179 = vpop.xlane.xlu0 %178
      %v180 = vrcp.pop 31.0
      %v181 = vmul.f32 %v179, %v180
      %v182 = vrsqrt.pop %v181
      %v183 = vmul.f32 %v181, %v182
      %vm184 = vcmp.eq.f32.partialorder %v181, inf
      %v185 = vsel %vm184, %v181, %v183
      %vm186 = vcmp.eq.f32.partialorder %v181, 0.0
      %v187 = vand.u32 %v181, 2147483648
      %v188 = vsel %vm186, %v187, %v185
      %v190 = vlaneseq
      %v191 = vshrl.u32 %v190, 7
      %v192 = vsub.s32 0, %v191
      %v193 = vrot.slane %v167, %v192
      %v195 = vmul.f32 %v193, %v175
      %v196 = vadd.f32 %v188, 1e-06
      %v197 = vrcp.pop %v196
      %v198 = vmul.f32 %v195, %v197
      %v200 = vlaneseq
      %v201 = vshrl.u32 %v200, 7
      %v202 = vsub.s32 0, %v201
      %v203 = vrot.slane %v168, %v202
      %v205 = vadd.f32 %v198, %v203
      %206 = vst.msk [vmem:[%s165] sm:$0xff] %vm169, %v205
      %p207 = scmp.lt.s32.totalorder %s14, 1
      %s208 = scalar_select %p207, %s14, 1
      %s209 = smul.addr %s208, 8
      %s210 = scalar_lea.vmem %s3, %s209
      // Predicated region
      $region33: #{transformer_forward.16} parent=31 // pred_check
        %p211 = pneg %p100
      $region34: #{transformer_forward.16} parent=31 // pred_check_branch
        %213 = sbr.rel (%p211) target = $region36
      $region35: #{transformer_forward.16} parent=31 // pred_region
        _
      $region36: #{transformer_forward.16} parent=31 // pred_fallthru
        _
    $region32: #{transformer_forward.16} parent=5 // pred_fallthru
      _
    %p214 = scmp.le.s32.totalorder 2, %s9
    // Predicated region
    $region37: #{transformer_forward.16} parent=5 // pred_check
      %p215 = pneg %p214
    $region38: #{transformer_forward.16} parent=5 // pred_check_branch
      %217 = sbr.rel (%p215) target = $region40
    $region39: #{transformer_forward.16} parent=5 // pred_region
      %s218 = ssub.s32 %s9, 2
      // Predicated region
      $region41: #{transformer_forward.16} parent=39 // pred_check
        %p219 = pneg %p106
      $region42: #{transformer_forward.16} parent=39 // pred_check_branch
        %221 = sbr.rel (%p219) target = $region44
      $region43: #{transformer_forward.16} parent=39 // pred_region
        %p222 = scmp.lt.s32.totalorder %s15, 1
        %s223 = scalar_select %p222, %s15, 1
        %s224 = smul.addr %s223, 8
        %s225 = scalar_lea.vmem %s3, %s224
      $region44: #{transformer_forward.16} parent=39 // pred_fallthru
        _
    $region40: #{transformer_forward.16} parent=5 // pred_fallthru
      _
  $region6: #{transformer_forward.16} parent=0 // loop_footer
    %s13 = sadd.s32 1, %s9
  $region7: #{transformer_forward.16} parent=0 // loop_footer_branch
    %8 = sbr.rel target = $region3
  $region8: #{transformer_forward.16} parent=0 // loop_exit
    _

// kernel: transformer_forward.12
$region0: #{transformer_forward.12}
  #allocation0 [shape = 'u32[]', space=smem, size = 0x4, offset = 0x4, fixed_abs, tag = 'smem constant byte address 0x4 - core index']
  #allocation1 [shape = 'u32[144,128]{1,0:T(1,128)}', space=vmem, size = 0x12000, scoped, tag = 'internal scratch']
  %s0 = inlined_call_operand.vmem [shape: f32[2,8,32], index: 0, kind: input, shape index: {}]
  %s1 = inlined_call_operand.vmem [shape: f32[1,32], index: 1, kind: input, shape index: {}]
  %s2 = inlined_call_operand.vmem [shape: f32[1,32], index: 2, kind: input, shape index: {}]
  %s3 = inlined_call_operand.vmem [shape: bf16[32,96], index: 3, kind: input, shape index: {}]
  %s4 = inlined_call_operand.vmem [shape: f32[1,96], index: 4, kind: input, shape index: {}]
  %s5 = inlined_call_operand.vmem [shape: bf16[32,32], index: 5, kind: input, shape index: {}]
  %s6 = inlined_call_operand.vmem [shape: f32[1,32], index: 6, kind: input, shape index: {}]
  %s7 = inlined_call_operand.vmem [shape: f32[8,4], index: 7, kind: input, shape index: {}]
  %s8 = inlined_call_operand.vmem [shape: f32[8,4], index: 8, kind: input, shape index: {}]
  %s9 = inlined_call_operand.vmem [shape: f32[2,1,8], index: 9, kind: input, shape index: {}]
  %s10 = inlined_call_operand.vmem [shape: f32[2,8,32], index: 10, kind: output, shape index: {}]
  %s11 = sld [smem:[#allocation0]]
  $region73: #{transformer_forward.12} parent=0
    _
  %s13 = ssub.s32 1, %s11
  %s14 = scalar_select 0, %s13, %s11
  loop: start=0, step=1, limit=4
  $region2: #{transformer_forward.12} parent=0 // loop_pre_header
    _
  $region3: #{transformer_forward.12} parent=0 // loop_header
    %s16 = sphi 0, %s20
    %p17 = scmp.ge.s32.totalorder %s16, 4
    %s26 = sphi 0, %s28
    %s29 = sphi 0, %s26
    %s30 = sphi 0, %s29
    %s46 = sphi 0, %s30
    %s50 = sphi 0, %s50
    %s52 = sphi 0, %s50
    %s53 = sphi 0, %s52
    %s67 = sphi 0, %s53
    %s71 = sphi 0, %s71
    %s73 = sphi 0, %s71
    %s74 = sphi 0, %s73
    %s88 = sphi 0, %s74
    %s92 = sphi 0, %s92
    %s94 = sphi 0, %s92
    %s95 = sphi 0, %s94
    %s109 = sphi 0, %s95
    %s113 = sphi 0, %s113
    %s115 = sphi 0, %s113
    %s116 = sphi 0, %s115
    %s130 = sphi 0, %s116
    %s134 = sphi 0, %s134
    %s136 = sphi 0, %s134
    %s137 = sphi 0, %s136
    %s151 = sphi 0, %s137
    %s155 = sphi 0, %s155
    %s157 = sphi 0, %s155
    %s158 = sphi 0, %s157
    %s172 = sphi 0, %s158
    %s176 = sphi 0, %s176
    %s178 = sphi 0, %s176
    %s179 = sphi 0, %s178
    %s193 = sphi 0, %s179
    %s197 = sphi 0, %s197
    %s199 = sphi 0, %s197
    %s200 = sphi 0, %s199
    %s214 = sphi 0, %s200
    %s220 = sphi 0, %s222
    %s223 = sphi 0, %s220
    %s224 = sphi 0, %s223
    %s240 = sphi 0, %s224
    %s246 = sphi 0, %s248
    %s249 = sphi 0, %s246
    %s250 = sphi 0, %s249
    %s266 = sphi 0, %s250
  $region4: #{transformer_forward.12} parent=0 // loop_header_branch
    %19 = sbr.rel (%p17) target = $region8
  $region5: #{transformer_forward.12} parent=0 // loop_body
    %s21 = ssub.s32 %s16, 1
    %s22 = ssub.s32 %s16, 2
    %s23 = sadd.s32 %s16, 1
    %s24 = ssub.s32 %s16, %s23
    %p25 = scmp.eq.s32.totalorder %s24, 0
    %s27 = sadd.s32 %s26, 1
    %s28 = scalar_select %p25, %s26, %s27
    %p31 = pneg %p25
    %p32 = scmp.eq.s32.totalorder %s16, 1
    %p33 = por %p31, %p32
    %p34 = scmp.ne.s32.totalorder %s26, %s29
    %p35 = scmp.eq.s32.totalorder %s16, 0
    %p36 = por %p34, %p35
    %p37 = scmp.ne.s32.totalorder %s26, %s29
    %p38 = scmp.eq.s32.totalorder %s21, 1
    %p39 = por %p37, %p38
    %p40 = scmp.ne.s32.totalorder %s29, %s30
    %p41 = scmp.eq.s32.totalorder %s21, 0
    %p42 = por %p40, %p41
    %p43 = scmp.ne.s32.totalorder %s29, %s30
    %p44 = scmp.eq.s32.totalorder %s22, 1
    %p45 = por %p43, %p44
    %p47 = scmp.ne.s32.totalorder %s30, %s46
    %p48 = scmp.eq.s32.totalorder %s22, 0
    %p49 = por %p47, %p48
    %s51 = sadd.s32 %s50, 1
    %p54 = scmp.eq.s32.totalorder %s16, 1
    %p55 = scmp.ne.s32.totalorder %s50, %s52
    %p56 = scmp.eq.s32.totalorder %s16, 0
    %p57 = por %p55, %p56
    %p58 = scmp.ne.s32.totalorder %s50, %s52
    %p59 = scmp.eq.s32.totalorder %s21, 1
    %p60 = por %p58, %p59
    %p61 = scmp.ne.s32.totalorder %s52, %s53
    %p62 = scmp.eq.s32.totalorder %s21, 0
    %p63 = por %p61, %p62
    %p64 = scmp.ne.s32.totalorder %s52, %s53
    %p65 = scmp.eq.s32.totalorder %s22, 1
    %p66 = por %p64, %p65
    %p68 = scmp.ne.s32.totalorder %s53, %s67
    %p69 = scmp.eq.s32.totalorder %s22, 0
    %p70 = por %p68, %p69
    %s72 = sadd.s32 %s71, 1
    %p75 = scmp.eq.s32.totalorder %s16, 1
    %p76 = scmp.ne.s32.totalorder %s71, %s73
    %p77 = scmp.eq.s32.totalorder %s16, 0
    %p78 = por %p76, %p77
    %p79 = scmp.ne.s32.totalorder %s71, %s73
    %p80 = scmp.eq.s32.totalorder %s21, 1
    %p81 = por %p79, %p80
    %p82 = scmp.ne.s32.totalorder %s73, %s74
    %p83 = scmp.eq.s32.totalorder %s21, 0
    %p84 = por %p82, %p83
    %p85 = scmp.ne.s32.totalorder %s73, %s74
    %p86 = scmp.eq.s32.totalorder %s22, 1
    %p87 = por %p85, %p86
    %p89 = scmp.ne.s32.totalorder %s74, %s88
    %p90 = scmp.eq.s32.totalorder %s22, 0
    %p91 = por %p89, %p90
    %s93 = sadd.s32 %s92, 1
    %p96 = scmp.eq.s32.totalorder %s16, 1
    %p97 = scmp.ne.s32.totalorder %s92, %s94
    %p98 = scmp.eq.s32.totalorder %s16, 0
    %p99 = por %p97, %p98
    %p100 = scmp.ne.s32.totalorder %s92, %s94
    %p101 = scmp.eq.s32.totalorder %s21, 1
    %p102 = por %p100, %p101
    %p103 = scmp.ne.s32.totalorder %s94, %s95
    %p104 = scmp.eq.s32.totalorder %s21, 0
    %p105 = por %p103, %p104
    %p106 = scmp.ne.s32.totalorder %s94, %s95
    %p107 = scmp.eq.s32.totalorder %s22, 1
    %p108 = por %p106, %p107
    %p110 = scmp.ne.s32.totalorder %s95, %s109
    %p111 = scmp.eq.s32.totalorder %s22, 0
    %p112 = por %p110, %p111
    %s114 = sadd.s32 %s113, 1
    %p117 = scmp.eq.s32.totalorder %s16, 1
    %p118 = scmp.ne.s32.totalorder %s113, %s115
    %p119 = scmp.eq.s32.totalorder %s16, 0
    %p120 = por %p118, %p119
    %p121 = scmp.ne.s32.totalorder %s113, %s115
    %p122 = scmp.eq.s32.totalorder %s21, 1
    %p123 = por %p121, %p122
    %p124 = scmp.ne.s32.totalorder %s115, %s116
    %p125 = scmp.eq.s32.totalorder %s21, 0
    %p126 = por %p124, %p125
    %p127 = scmp.ne.s32.totalorder %s115, %s116
    %p128 = scmp.eq.s32.totalorder %s22, 1
    %p129 = por %p127, %p128
    %p131 = scmp.ne.s32.totalorder %s116, %s130
    %p132 = scmp.eq.s32.totalorder %s22, 0
    %p133 = por %p131, %p132
    %s135 = sadd.s32 %s134, 1
    %p138 = scmp.eq.s32.totalorder %s16, 1
    %p139 = scmp.ne.s32.totalorder %s134, %s136
    %p140 = scmp.eq.s32.totalorder %s16, 0
    %p141 = por %p139, %p140
    %p142 = scmp.ne.s32.totalorder %s134, %s136
    %p143 = scmp.eq.s32.totalorder %s21, 1
    %p144 = por %p142, %p143
    %p145 = scmp.ne.s32.totalorder %s136, %s137
    %p146 = scmp.eq.s32.totalorder %s21, 0
    %p147 = por %p145, %p146
    %p148 = scmp.ne.s32.totalorder %s136, %s137
    %p149 = scmp.eq.s32.totalorder %s22, 1
    %p150 = por %p148, %p149
    %p152 = scmp.ne.s32.totalorder %s137, %s151
    %p153 = scmp.eq.s32.totalorder %s22, 0
    %p154 = por %p152, %p153
    %s156 = sadd.s32 %s155, 1
    %p159 = scmp.eq.s32.totalorder %s16, 1
    %p160 = scmp.ne.s32.totalorder %s155, %s157
    %p161 = scmp.eq.s32.totalorder %s16, 0
    %p162 = por %p160, %p161
    %p163 = scmp.ne.s32.totalorder %s155, %s157
    %p164 = scmp.eq.s32.totalorder %s21, 1
    %p165 = por %p163, %p164
    %p166 = scmp.ne.s32.totalorder %s157, %s158
    %p167 = scmp.eq.s32.totalorder %s21, 0
    %p168 = por %p166, %p167
    %p169 = scmp.ne.s32.totalorder %s157, %s158
    %p170 = scmp.eq.s32.totalorder %s22, 1
    %p171 = por %p169, %p170
    %p173 = scmp.ne.s32.totalorder %s158, %s172
    %p174 = scmp.eq.s32.totalorder %s22, 0
    %p175 = por %p173, %p174
    %s177 = sadd.s32 %s176, 1
    %p180 = scmp.eq.s32.totalorder %s16, 1
    %p181 = scmp.ne.s32.totalorder %s176, %s178
    %p182 = scmp.eq.s32.totalorder %s16, 0
    %p183 = por %p181, %p182
    %p184 = scmp.ne.s32.totalorder %s176, %s178
    %p185 = scmp.eq.s32.totalorder %s21, 1
    %p186 = por %p184, %p185
    %p187 = scmp.ne.s32.totalorder %s178, %s179
    %p188 = scmp.eq.s32.totalorder %s21, 0
    %p189 = por %p187, %p188
    %p190 = scmp.ne.s32.totalorder %s178, %s179
    %p191 = scmp.eq.s32.totalorder %s22, 1
    %p192 = por %p190, %p191
    %p194 = scmp.ne.s32.totalorder %s179, %s193
    %p195 = scmp.eq.s32.totalorder %s22, 0
    %p196 = por %p194, %p195
    %s198 = sadd.s32 %s197, 1
    %p201 = scmp.eq.s32.totalorder %s16, 1
    %p202 = scmp.ne.s32.totalorder %s197, %s199
    %p203 = scmp.eq.s32.totalorder %s16, 0
    %p204 = por %p202, %p203
    %p205 = scmp.ne.s32.totalorder %s197, %s199
    %p206 = scmp.eq.s32.totalorder %s21, 1
    %p207 = por %p205, %p206
    %p208 = scmp.ne.s32.totalorder %s199, %s200
    %p209 = scmp.eq.s32.totalorder %s21, 0
    %p210 = por %p208, %p209
    %p211 = scmp.ne.s32.totalorder %s199, %s200
    %p212 = scmp.eq.s32.totalorder %s22, 1
    %p213 = por %p211, %p212
    %p215 = scmp.ne.s32.totalorder %s200, %s214
    %p216 = scmp.eq.s32.totalorder %s22, 0
    %p217 = por %p215, %p216
    %s218 = ssub.s32 %s16, %s23
    %p219 = scmp.eq.s32.totalorder %s218, 0
    %s221 = sadd.s32 %s220, 1
    %s222 = scalar_select %p219, %s220, %s221
    %p225 = pneg %p219
    %p226 = scmp.eq.s32.totalorder %s16, 1
    %p227 = por %p225, %p226
    %p228 = scmp.ne.s32.totalorder %s220, %s223
    %p229 = scmp.eq.s32.totalorder %s16, 0
    %p230 = por %p228, %p229
    %p231 = scmp.ne.s32.totalorder %s220, %s223
    %p232 = scmp.eq.s32.totalorder %s21, 1
    %p233 = por %p231, %p232
    %p234 = scmp.ne.s32.totalorder %s223, %s224
    %p235 = scmp.eq.s32.totalorder %s21, 0
    %p236 = por %p234, %p235
    %p237 = scmp.ne.s32.totalorder %s223, %s224
    %p238 = scmp.eq.s32.totalorder %s22, 1
    %p239 = por %p237, %p238
    %p241 = scmp.ne.s32.totalorder %s224, %s240
    %p242 = scmp.eq.s32.totalorder %s22, 0
    %p243 = por %p241, %p242
    %s244 = ssub.s32 %s16, %s23
    %p245 = scmp.eq.s32.totalorder %s244, 0
    %s247 = sadd.s32 %s246, 1
    %s248 = scalar_select %p245, %s246, %s247
    %p251 = pneg %p245
    %p252 = scmp.eq.s32.totalorder %s16, 1
    %p253 = por %p251, %p252
    %p254 = scmp.ne.s32.totalorder %s246, %s249
    %p255 = scmp.eq.s32.totalorder %s16, 0
    %p256 = por %p254, %p255
    %p257 = scmp.ne.s32.totalorder %s246, %s249
    %p258 = scmp.eq.s32.totalorder %s21, 1
    %p259 = por %p257, %p258
    %p260 = scmp.ne.s32.totalorder %s249, %s250
    %p261 = scmp.eq.s32.totalorder %s21, 0
    %p262 = por %p260, %p261
    %p263 = scmp.ne.s32.totalorder %s249, %s250
    %p264 = scmp.eq.s32.totalorder %s22, 1
    %p265 = por %p263, %p264
    %p267 = scmp.ne.s32.totalorder %s250, %s266
    %p268 = scmp.eq.s32.totalorder %s22, 0
    %p269 = por %p267, %p268
    %p270 = scmp.le.s32.totalorder 1, %s16
    %p271 = scmp.lt.s32.totalorder %s16, 3
    %p272 = pnand %p270, %p271
    %p273 = pneg %p272
    // Predicated region
    $region9: #{transformer_forward.12} parent=5 // pred_check
      _
    $region10: #{transformer_forward.12} parent=5 // pred_check_branch
      %275 = sbr.rel (%p272) target = $region12
    $region11: #{transformer_forward.12} parent=5 // pred_region
      %s276 = ssub.s32 %s16, 1
      // Predicated region
      $region13: #{transformer_forward.12} parent=11 // pred_check
        %p277 = pneg %p63
      $region14: #{transformer_forward.12} parent=11 // pred_check_branch
        %279 = sbr.rel (%p277) target = $region16
      $region15: #{transformer_forward.12} parent=11 // pred_region
        _
      $region16: #{transformer_forward.12} parent=11 // pred_fallthru
        _
      // Predicated region
      $region17: #{transformer_forward.12} parent=11 // pred_check
        %p280 = pneg %p84
      $region18: #{transformer_forward.12} parent=11 // pred_check_branch
        %282 = sbr.rel (%p280) target = $region20
      $region19: #{transformer_forward.12} parent=11 // pred_region
        _
      $region20: #{transformer_forward.12} parent=11 // pred_fallthru
        _
      // Predicated region
      $region21: #{transformer_forward.12} parent=11 // pred_check
        %p283 = pneg %p105
      $region22: #{transformer_forward.12} parent=11 // pred_check_branch
        %285 = sbr.rel (%p283) target = $region24
      $region23: #{transformer_forward.12} parent=11 // pred_region
        _
      $region24: #{transformer_forward.12} parent=11 // pred_fallthru
        _
      // Predicated region
      $region25: #{transformer_forward.12} parent=11 // pred_check
        %p286 = pneg %p126
      $region26: #{transformer_forward.12} parent=11 // pred_check_branch
        %288 = sbr.rel (%p286) target = $region28
      $region27: #{transformer_forward.12} parent=11 // pred_region
        _
      $region28: #{transformer_forward.12} parent=11 // pred_fallthru
        _
      // Predicated region
      $region29: #{transformer_forward.12} parent=11 // pred_check
        %p289 = pneg %p147
      $region30: #{transformer_forward.12} parent=11 // pred_check_branch
        %291 = sbr.rel (%p289) target = $region32
      $region31: #{transformer_forward.12} parent=11 // pred_region
        _
      $region32: #{transformer_forward.12} parent=11 // pred_fallthru
        _
      // Predicated region
      $region33: #{transformer_forward.12} parent=11 // pred_check
        %p292 = pneg %p168
      $region34: #{transformer_forward.12} parent=11 // pred_check_branch
        %294 = sbr.rel (%p292) target = $region36
      $region35: #{transformer_forward.12} parent=11 // pred_region
        _
      $region36: #{transformer_forward.12} parent=11 // pred_fallthru
        _
      // Predicated region
      $region37: #{transformer_forward.12} parent=11 // pred_check
        %p295 = pneg %p189
      $region38: #{transformer_forward.12} parent=11 // pred_check_branch
        %297 = sbr.rel (%p295) target = $region40
      $region39: #{transformer_forward.12} parent=11 // pred_region
        _
      $region40: #{transformer_forward.12} parent=11 // pred_fallthru
        _
      // Predicated region
      $region41: #{transformer_forward.12} parent=11 // pred_check
        %p298 = pneg %p210
      $region42: #{transformer_forward.12} parent=11 // pred_check_branch
        %300 = sbr.rel (%p298) target = $region44
      $region43: #{transformer_forward.12} parent=11 // pred_region
        _
      $region44: #{transformer_forward.12} parent=11 // pred_fallthru
        _
    $region12: #{transformer_forward.12} parent=5 // pred_fallthru
      _
    %p301 = scmp.lt.s32.totalorder %s16, 2
    // Predicated region
    $region45: #{transformer_forward.12} parent=5 // pred_check
      %p302 = pneg %p301
    $region46: #{transformer_forward.12} parent=5 // pred_check_branch
      %304 = sbr.rel (%p302) target = $region48
    $region47: #{transformer_forward.12} parent=5 // pred_region
      // Predicated region
      $region49: #{transformer_forward.12} parent=47 // pred_check
        %p305 = pneg %p36
      $region50: #{transformer_forward.12} parent=47 // pred_check_branch
        %307 = sbr.rel (%p305) target = $region52
      $region51: #{transformer_forward.12} parent=47 // pred_region
        %p308 = scmp.lt.s32.totalorder %s16, 1
        %s309 = scalar_select %p308, %s16, 1
        %s310 = smul.addr %s309, 8
        %s311 = scalar_lea.vmem %s0, %s310
      $region52: #{transformer_forward.12} parent=47 // pred_fallthru
        _
      // Predicated region
      $region53: #{transformer_forward.12} parent=47 // pred_check
        %p312 = pneg %p230
      $region54: #{transformer_forward.12} parent=47 // pred_check_branch
        %314 = sbr.rel (%p312) target = $region56
      $region55: #{transformer_forward.12} parent=47 // pred_region
        %p315 = scmp.lt.s32.totalorder %s16, 1
        %s316 = scalar_select %p315, %s16, 1
        %s317 = scalar_lea.vmem %s9, %s316
      $region56: #{transformer_forward.12} parent=47 // pred_fallthru
        _
    $region48: #{transformer_forward.12} parent=5 // pred_fallthru
      _
    %p318 = scmp.le.s32.totalorder 1, %s16
    %p319 = scmp.lt.s32.totalorder %s16, 3
    %p320 = pnand %p318, %p319
    %p321 = pneg %p320
    // Predicated region
    $region57: #{transformer_forward.12} parent=5 // pred_check
      _
    $region58: #{transformer_forward.12} parent=5 // pred_check_branch
      %323 = sbr.rel (%p320) target = $region60
    $region59: #{transformer_forward.12} parent=5 // pred_region
      %s324 = ssub.s32 %s16, 1
      %p325 = scmp.lt.s32.totalorder %s21, 1
      %s326 = scalar_select %p325, %s21, 1
      %s327 = smul.addr %s326, 8
      %s328 = scalar_lea.vmem %s0, %s327
      %p329 = pneg %p42
      %p330 = pneg %p39
      %p331 = pneg %p63
      %p332 = pneg %p60
      %p333 = pneg %p84
      %p334 = pneg %p81
      %p335 = pneg %p105
      %p336 = pneg %p102
      %p337 = pneg %p126
      %p338 = pneg %p123
      %p339 = pneg %p147
      %p340 = pneg %p144
      %p341 = pneg %p168
      %p342 = pneg %p165
      %p343 = pneg %p189
      %p344 = pneg %p186
      %p345 = pneg %p210
      %p346 = pneg %p207
      %p347 = scmp.lt.s32.totalorder %s21, 1
      %s348 = scalar_select %p347, %s21, 1
      %s349 = scalar_lea.vmem %s9, %s348
      %p350 = pneg %p236
      %p351 = pneg %p233
      %p352 = pneg %p262
      %p353 = pneg %p259
      %p354 = scmp.lt.s32.totalorder %s21, 1
      %s355 = scalar_select %p354, %s21, 1
      %s356 = smul.addr %s355, 8
      %s357 = scalar_lea.vmem %s10, %s356
      %p358 = scmp.lt.s32.totalorder %s21, 1
      %s359 = scalar_select %p358, %s21, 1
      %s360 = smul.addr %s359, 8
      %s361 = scalar_lea.vmem %s0, %s360
      %p362 = scmp.lt.s32.totalorder %s21, 1
      %s363 = scalar_select %p362, %s21, 1
      %s364 = scalar_lea.vmem %s9, %s363
      %p365 = scmp.lt.s32.totalorder %s21, 1
      %s366 = scalar_select %p365, %s21, 1
      %s367 = smul.addr %s366, 8
      %s368 = scalar_lea.vmem %s10, %s367
      %v370 = vld [vmem:[%s361] sm:$0xff]
      %v371 = vld [vmem:[%s1] sm:$0x1]
      %v372 = vld [vmem:[%s2] sm:$0x1]
      %vm373 = vcmask 261120
      %v374 = vsel %vm373, %v370, 0.0
      %375 = vadd.xlane.f32.xlu0 %v374
      %v376 = vpop.xlane.xlu0 %375
      %v377 = vrcp.pop 32.0
      %v378 = vmul.f32 %v376, %v377
      %v379 = vsub.f32 %v370, %v378
      %v380 = vmul.f32 %v379, %v379
      %v381 = vsel %vm373, %v380, 0.0
      %382 = vadd.xlane.f32.xlu0 %v381
      %v383 = vpop.xlane.xlu0 %382
      %v384 = vrcp.pop 31.0
      %v385 = vmul.f32 %v383, %v384
      %v386 = vrsqrt.pop %v385
      %v387 = vmul.f32 %v385, %v386
      %vm388 = vcmp.eq.f32.partialorder %v385, inf
      %v389 = vsel %vm388, %v385, %v387
      %vm390 = vcmp.eq.f32.partialorder %v385, 0.0
      %v391 = vand.u32 %v385, 2147483648
      %v392 = vsel %vm390, %v391, %v389
      %v394 = vlaneseq
      %v395 = vshrl.u32 %v394, 7
      %v396 = vsub.s32 0, %v395
      %v397 = vrot.slane %v371, %v396
      %v399 = vmul.f32 %v397, %v379
      %v400 = vadd.f32 %v392, 1e-06
      %v401 = vrcp.pop %v400
      %v402 = vmul.f32 %v399, %v401
      %v404 = vlaneseq
      %v405 = vshrl.u32 %v404, 7
      %v406 = vsub.s32 0, %v405
      %v407 = vrot.slane %v372, %v406
      %v409 = vadd.f32 %v402, %v407
      %v410 = vpack.c.bf16 %v409, %v409
      %v411 = vld [vmem:[%s3] sm:$0xf]
      %v412 = vld [vmem:[%s3 + $0x4] sm:$0xf]
      %v413 = vld [vmem:[%s3 + $0x8] sm:$0xf]
      %v414 = vld [vmem:[%s3 + $0xc] sm:$0xf]
      %v415 = vld [vmem:[%s4] sm:$0x1]
      %v417 = vlaneseq
      %v418 = vshrl.u32 %v417, 7
      %v419 = vsub.s32 0, %v418
      %v420 = vrot.slane %v415, %v419
      %v426 = vunpack.c.l.b16 %v411
      %v427 = vunpack.c.l.b16 %v412
      %v428 = vunpack.c.l.b16 %v413
      %v429 = vunpack.c.l.b16 %v414
      %v430 = vpack.c.b16 %v427, %v426
      %v431 = vpack.c.b16 %v429, %v428
      %v435 = vsel %vm373, %v410, 0
      %437 = vmatprep.subr.bf16.mxu0 0
      %438 = vmatpush1.bf16.msra.mxu0 %v430
      %439 = vmatprep.subr.bf16.mxu0 0
      %440 = vmatpush1.bf16.msra.mxu0 %v431
      %441 = vmatprep.subr.bf16.mxu0 0
      %442 = vmatpush1.bf16.msra.mxu0 0
      %443 = vmatprep.subr.bf16.mxu0 0
      %444 = vmatpush1.bf16.msra.mxu0 0
      %445 = vmatprep.subr.bf16.mxu0 0
      %446 = vmatpush1.bf16.msra.mxu0 0
      %447 = vmatprep.subr.bf16.mxu0 0
      %448 = vmatpush1.bf16.msra.mxu0 0
      %449 = vmatprep.subr.bf16.mxu0 0
      %450 = vmatpush1.bf16.msra.mxu0 0
      %451 = vmatprep.subr.bf16.mxu0 0
      %452 = vmatpush1.bf16.msra.mxu0 0
      %453 = vmatprep.subr.bf16.mxu0 0
      %454 = vmatpush1.bf16.msra.mxu0 0
      %455 = vmatprep.subr.bf16.mxu0 0
      %456 = vmatpush1.bf16.msra.mxu0 0
      %457 = vmatprep.subr.bf16.mxu0 0
      %458 = vmatpush1.bf16.msra.mxu0 0
      %459 = vmatprep.subr.bf16.mxu0 0
      %460 = vmatpush1.bf16.msra.mxu0 0
      %461 = vmatprep.subr.bf16.mxu0 0
      %462 = vmatpush1.bf16.msra.mxu0 0
      %463 = vmatprep.subr.bf16.mxu0 0
      %464 = vmatpush1.bf16.msra.mxu0 0
      %465 = vmatprep.subr.bf16.mxu0 0
      %466 = vmatpush1.bf16.msra.mxu0 0
      %467 = vmatprep.subr.bf16.mxu0 0
      %468 = vmatpush1.bf16.msra.mxu0 0
      %469 = vmatprep.mubr.bf16.mxu0 0
      %470 = vmatmul.mubr.bf16.gmra.mrb[0].mxu0 %v435
      %v471 = vpop.f32.mrb[0].mxu0
      %v472 = vadd.f32 %v420, %v471
      %v473 = vpop.f32.mrb[0].mxu0
      %v474 = vpop.f32.mrb[0].mxu0
      %v475 = vpop.f32.mrb[0].mxu0
      %476 = vdwg.mxu0
      %v477 = vld [vmem:[%s364] sm:$0x1]
      %vm478 = vcmp.eq.f32.partialorder %v477, 0.0
      %v479 = vsel %vm478, -1e+09, 0.0
      %v480 = vld [vmem:[%s7] sm:$0xff]
      %v481 = vld [vmem:[%s8] sm:$0xff]
      %v482 = vld [vmem:[%s5] sm:$0xf]
      %v483 = vld [vmem:[%s5 + $0x4] sm:$0xf]
      %v484 = vld [vmem:[%s5 + $0x8] sm:$0xf]
      %v485 = vld [vmem:[%s5 + $0xc] sm:$0xf]
      %v486 = vmul.f32 %v472, %v480
      %488 = vrot.lane.b32.xlu0 %v481, 4
      %v489 = vpop.permute.xlu0 %488
      %v491 = vmul.f32 %v472, %v489
      %493 = vrot.lane.b32.xlu0 %v491, 124
      %v494 = vpop.permute.xlu0 %493
      %v496 = vsub.f32 %v486, %v494
      %498 = vrot.lane.b32.xlu0 %v480, 4
      %v499 = vpop.permute.xlu0 %498
      %v501 = vmul.f32 %v472, %v499
      %v502 = vmul.f32 %v472, %v481
      %504 = vrot.lane.b32.xlu0 %v502, 4
      %v505 = vpop.permute.xlu0 %504
      %v507 = vadd.f32 %v501, %v505
      %508 = vrot.lane.b32.xlu0 %v480, 32
      %v509 = vpop.permute.xlu0 %508
      %v511 = vmul.f32 %v472, %v509
      %512 = vrot.lane.b32.xlu0 %v481, 36
      %v513 = vpop.permute.xlu0 %512
      %v515 = vmul.f32 %v472, %v513
      %517 = vrot.lane.b32.xlu0 %v515, 124
      %v518 = vpop.permute.xlu0 %517
      %v520 = vsub.f32 %v511, %v518
      %521 = vrot.lane.b32.xlu0 %v480, 36
      %v522 = vpop.permute.xlu0 %521
      %v524 = vmul.f32 %v472, %v522
      %525 = vrot.lane.b32.xlu0 %v481, 32
      %v526 = vpop.permute.xlu0 %525
      %v528 = vmul.f32 %v472, %v526
      %530 = vrot.lane.b32.xlu0 %v528, 4
      %v531 = vpop.permute.xlu0 %530
      %v533 = vadd.f32 %v524, %v531
      %v534 = vpack.c.bf16 %v496, %v496
      %v535 = vpack.c.bf16 %v520, %v520
      %v536 = vpack.c.bf16 %v507, %v507
      %v537 = vpack.c.bf16 %v533, %v533
      %539 = vrot.lane.b32.xlu0 %v536, 124
      %v540 = vpop.permute.xlu0 %539
      %542 = vrot.lane.b32.xlu0 %v537, 92
      %v543 = vpop.permute.xlu0 %542
      %vm544 = vcmask 31744
      %v546 = vsel %vm544, %v540, 0
      %v549 = vsel %vm544, %v543, 0
      %551 = vmatprep.subr.bf16.mxu0 0
      %552 = vmatpush1.bf16.xpose.msra.mxu0 %v549
      %553 = vmatprep.subr.bf16.mxu0 0
      %554 = vmatpush1.bf16.xpose.msra.mxu0 0
      %555 = vmatprep.subr.bf16.mxu0 0
      %556 = vmatpush1.bf16.xpose.msra.mxu0 0
      %557 = vmatprep.subr.bf16.mxu0 0
      %558 = vmatpush1.bf16.xpose.msra.mxu0 0
      %559 = vmatprep.subr.bf16.mxu0 0
      %560 = vmatpush1.bf16.xpose.msra.mxu0 0
      %561 = vmatprep.subr.bf16.mxu0 0
      %562 = vmatpush1.bf16.xpose.msra.mxu0 0
      %563 = vmatprep.subr.bf16.mxu0 0
      %564 = vmatpush1.bf16.xpose.msra.mxu0 0
      %565 = vmatprep.subr.bf16.mxu0 0
      %566 = vmatpush1.bf16.xpose.msra.mxu0 0
      %567 = vmatprep.subr.bf16.mxu0 0
      %568 = vmatpush1.bf16.xpose.msra.mxu0 0
      %569 = vmatprep.subr.bf16.mxu0 0
      %570 = vmatpush1.bf16.xpose.msra.mxu0 0
      %571 = vmatprep.subr.bf16.mxu0 0
      %572 = vmatpush1.bf16.xpose.msra.mxu0 0
      %573 = vmatprep.subr.bf16.mxu0 0
      %574 = vmatpush1.bf16.xpose.msra.mxu0 0
      %575 = vmatprep.subr.bf16.mxu0 0
      %576 = vmatpush1.bf16.xpose.msra.mxu0 0
      %577 = vmatprep.subr.bf16.mxu0 0
      %578 = vmatpush1.bf16.xpose.msra.mxu0 0
      %579 = vmatprep.subr.bf16.mxu0 0
      %580 = vmatpush1.bf16.xpose.msra.mxu0 0
      %581 = vmatprep.subr.bf16.mxu0 0
      %582 = vmatpush1.bf16.xpose.msra.mxu0 0
      %583 = vmatprep.mubr.bf16.mxu0 0
      %584 = vmatmul.mubr.bf16.gmra.mrb[0].mxu0 %v546
      %v585 = vpop.f32.mrb[0].mxu0
      %v586 = vadd.f32 0.0, %v585
      %v587 = vpop.f32.mrb[0].mxu0
      %v588 = vpop.f32.mrb[0].mxu0
      %v589 = vpop.f32.mrb[0].mxu0
      %590 = vdwg.mxu0
      %592 = vrot.lane.b32.xlu0 %v535, 96
      %v593 = vpop.permute.xlu0 %592
      %v595 = vsel %vm544, %v534, 0
      %v598 = vsel %vm544, %v593, 0
      %600 = vmatprep.subr.bf16.mxu0 0
      %601 = vmatpush1.bf16.xpose.msra.mxu0 %v598
      %602 = vmatprep.subr.bf16.mxu0 0
      %603 = vmatpush1.bf16.xpose.msra.mxu0 0
      %604 = vmatprep.subr.bf16.mxu0 0
      %605 = vmatpush1.bf16.xpose.msra.mxu0 0
      %606 = vmatprep.subr.bf16.mxu0 0
      %607 = vmatpush1.bf16.xpose.msra.mxu0 0
      %608 = vmatprep.subr.bf16.mxu0 0
      %609 = vmatpush1.bf16.xpose.msra.mxu0 0
      %610 = vmatprep.subr.bf16.mxu0 0
      %611 = vmatpush1.bf16.xpose.msra.mxu0 0
      %612 = vmatprep.subr.bf16.mxu0 0
      %613 = vmatpush1.bf16.xpose.msra.mxu0 0
      %614 = vmatprep.subr.bf16.mxu0 0
      %615 = vmatpush1.bf16.xpose.msra.mxu0 0
      %616 = vmatprep.subr.bf16.mxu0 0
      %617 = vmatpush1.bf16.xpose.msra.mxu0 0
      %618 = vmatprep.subr.bf16.mxu0 0
      %619 = vmatpush1.bf16.xpose.msra.mxu0 0
      %620 = vmatprep.subr.bf16.mxu0 0
      %621 = vmatpush1.bf16.xpose.msra.mxu0 0
      %622 = vmatprep.subr.bf16.mxu0 0
      %623 = vmatpush1.bf16.xpose.msra.mxu0 0
      %624 = vmatprep.subr.bf16.mxu0 0
      %625 = vmatpush1.bf16.xpose.msra.mxu0 0
      %626 = vmatprep.subr.bf16.mxu0 0
      %627 = vmatpush1.bf16.xpose.msra.mxu0 0
      %628 = vmatprep.subr.bf16.mxu0 0
      %629 = vmatpush1.bf16.xpose.msra.mxu0 0
      %630 = vmatprep.subr.bf16.mxu0 0
      %631 = vmatpush1.bf16.xpose.msra.mxu0 0
      %632 = vmatprep.mubr.bf16.mxu0 0
      %633 = vmatmul.mubr.bf16.gmra.mrb[0].mxu0 %v595
      %v634 = vpop.f32.mrb[0].mxu0
      %v635 = vadd.f32 %v586, %v634
      %v636 = vpop.f32.mrb[0].mxu0
      %v637 = vpop.f32.mrb[0].mxu0
      %v638 = vpop.f32.mrb[0].mxu0
      %639 = vdwg.mxu0
      %v641 = vlaneseq
      %v642 = vshrl.u32 %v641, 7
      %v643 = vsub.s32 0, %v642
      %v644 = vrot.slane %v479, %v643
      %v646 = vadd.f32 %v635, %v644
      %vm647 = vcmask 64512
      %v648 = vsel %vm647, %v646, -inf
      %649 = vmax.xlane.f32.xlu0 %v648
      %v650 = vpop.xlane.xlu0 %649
      %v651 = vsub.f32 %v646, %v650
      %v652 = vmul.f32 %v651, 1.442695
      %v653 = vpow.pop %v652
      %v654 = vsel %vm647, %v653, 0.0
      %655 = vadd.xlane.f32.xlu0 %v654
      %v656 = vpop.xlane.xlu0 %655
      %v657 = vrcp.pop %v656
      %v658 = vmul.f32 %v653, %v657
      %v659 = vpack.c.bf16 %v658, %v658
      %v660 = vpack.c.bf16 %v472, %v472
      %662 = vrot.lane.b32.xlu0 %v660, 64
      %v663 = vpop.permute.xlu0 %662
      %v665 = vsel %vm647, %v659, 0
      %vm667 = vcmask 1043456
      %v669 = vsel %vm667, %v663, 0
      %671 = vmatprep.subr.bf16.mxu0 0
      %672 = vmatpush1.bf16.msra.mxu0 %v669
      %673 = vmatprep.subr.bf16.mxu0 0
      %674 = vmatpush1.bf16.msra.mxu0 0
      %675 = vmatprep.subr.bf16.mxu0 0
      %676 = vmatpush1.bf16.msra.mxu0 0
      %677 = vmatprep.subr.bf16.mxu0 0
      %678 = vmatpush1.bf16.msra.mxu0 0
      %679 = vmatprep.subr.bf16.mxu0 0
      %680 = vmatpush1.bf16.msra.mxu0 0
      %681 = vmatprep.subr.bf16.mxu0 0
      %682 = vmatpush1.bf16.msra.mxu0 0
      %683 = vmatprep.subr.bf16.mxu0 0
      %684 = vmatpush1.bf16.msra.mxu0 0
      %685 = vmatprep.subr.bf16.mxu0 0
      %686 = vmatpush1.bf16.msra.mxu0 0
      %687 = vmatprep.subr.bf16.mxu0 0
      %688 = vmatpush1.bf16.msra.mxu0 0
      %689 = vmatprep.subr.bf16.mxu0 0
      %690 = vmatpush1.bf16.msra.mxu0 0
      %691 = vmatprep.subr.bf16.mxu0 0
      %692 = vmatpush1.bf16.msra.mxu0 0
      %693 = vmatprep.subr.bf16.mxu0 0
      %694 = vmatpush1.bf16.msra.mxu0 0
      %695 = vmatprep.subr.bf16.mxu0 0
      %696 = vmatpush1.bf16.msra.mxu0 0
      %697 = vmatprep.subr.bf16.mxu0 0
      %698 = vmatpush1.bf16.msra.mxu0 0
      %699 = vmatprep.subr.bf16.mxu0 0
      %700 = vmatpush1.bf16.msra.mxu0 0
      %701 = vmatprep.subr.bf16.mxu0 0
      %702 = vmatpush1.bf16.msra.mxu0 0
      %703 = vmatprep.mubr.bf16.mxu0 0
      %704 = vmatmul.mubr.bf16.gmra.mrb[0].mxu0 %v665
      %v705 = vpop.f32.mrb[0].mxu0
      %v706 = vadd.f32 0.0, %v705
      %v707 = vpop.f32.mrb[0].mxu0
      %v708 = vpop.f32.mrb[0].mxu0
      %v709 = vpop.f32.mrb[0].mxu0
      %710 = vdwg.mxu0
      %v711 = vpack.c.bf16 %v706, %v706
      %712 = vrot.lane.b32.xlu0 %v480, 8
      %v713 = vpop.permute.xlu0 %712
      %v715 = vmul.f32 %v472, %v713
      %716 = vrot.lane.b32.xlu0 %v481, 12
      %v717 = vpop.permute.xlu0 %716
      %v719 = vmul.f32 %v472, %v717
      %721 = vrot.lane.b32.xlu0 %v719, 124
      %v722 = vpop.permute.xlu0 %721
      %v724 = vsub.f32 %v715, %v722
      %725 = vrot.lane.b32.xlu0 %v480, 12
      %v726 = vpop.permute.xlu0 %725
      %v728 = vmul.f32 %v472, %v726
      %729 = vrot.lane.b32.xlu0 %v481, 8
      %v730 = vpop.permute.xlu0 %729
      %v732 = vmul.f32 %v472, %v730
      %734 = vrot.lane.b32.xlu0 %v732, 4
      %v735 = vpop.permute.xlu0 %734
      %v737 = vadd.f32 %v728, %v735
      %738 = vrot.lane.b32.xlu0 %v480, 40
      %v739 = vpop.permute.xlu0 %738
      %v741 = vmul.f32 %v472, %v739
      %742 = vrot.lane.b32.xlu0 %v481, 44
      %v743 = vpop.permute.xlu0 %742
      %v745 = vmul.f32 %v472, %v743
      %747 = vrot.lane.b32.xlu0 %v745, 124
      %v748 = vpop.permute.xlu0 %747
      %v750 = vsub.f32 %v741, %v748
      %751 = vrot.lane.b32.xlu0 %v480, 44
      %v752 = vpop.permute.xlu0 %751
      %v754 = vmul.f32 %v472, %v752
      %755 = vrot.lane.b32.xlu0 %v481, 40
      %v756 = vpop.permute.xlu0 %755
      %v758 = vmul.f32 %v472, %v756
      %760 = vrot.lane.b32.xlu0 %v758, 4
      %v761 = vpop.permute.xlu0 %760
      %v763 = vadd.f32 %v754, %v761
      %v764 = vpack.c.bf16 %v724, %v724
      %v765 = vpack.c.bf16 %v750, %v750
      %v766 = vpack.c.bf16 %v737, %v737
      %v767 = vpack.c.bf16 %v763, %v763
      %769 = vrot.lane.b32.xlu0 %v766, 116
      %v770 = vpop.permute.xlu0 %769
      %772 = vrot.lane.b32.xlu0 %v767, 84
      %v773 = vpop.permute.xlu0 %772
      %v775 = vsel %vm544, %v770, 0
      %v778 = vsel %vm544, %v773, 0
      %780 = vmatprep.subr.bf16.mxu0 0
      %781 = vmatpush1.bf16.xpose.msra.mxu0 %v778
      %782 = vmatprep.subr.bf16.mxu0 0
      %783 = vmatpush1.bf16.xpose.msra.mxu0 0
      %784 = vmatprep.subr.bf16.mxu0 0
      %785 = vmatpush1.bf16.xpose.msra.mxu0 0
      %786 = vmatprep.subr.bf16.mxu0 0
      %787 = vmatpush1.bf16.xpose.msra.mxu0 0
      %788 = vmatprep.subr.bf16.mxu0 0
      %789 = vmatpush1.bf16.xpose.msra.mxu0 0
      %790 = vmatprep.subr.bf16.mxu0 0
      %791 = vmatpush1.bf16.xpose.msra.mxu0 0
      %792 = vmatprep.subr.bf16.mxu0 0
      %793 = vmatpush1.bf16.xpose.msra.mxu0 0
      %794 = vmatprep.subr.bf16.mxu0 0
      %795 = vmatpush1.bf16.xpose.msra.mxu0 0
      %796 = vmatprep.subr.bf16.mxu0 0
      %797 = vmatpush1.bf16.xpose.msra.mxu0 0
      %798 = vmatprep.subr.bf16.mxu0 0
      %799 = vmatpush1.bf16.xpose.msra.mxu0 0
      %800 = vmatprep.subr.bf16.mxu0 0
      %801 = vmatpush1.bf16.xpose.msra.mxu0 0
      %802 = vmatprep.subr.bf16.mxu0 0
      %803 = vmatpush1.bf16.xpose.msra.mxu0 0
      %804 = vmatprep.subr.bf16.mxu0 0
      %805 = vmatpush1.bf16.xpose.msra.mxu0 0
      %806 = vmatprep.subr.bf16.mxu0 0
      %807 = vmatpush1.bf16.xpose.msra.mxu0 0
      %808 = vmatprep.subr.bf16.mxu0 0
      %809 = vmatpush1.bf16.xpose.msra.mxu0 0
      %810 = vmatprep.subr.bf16.mxu0 0
      %811 = vmatpush1.bf16.xpose.msra.mxu0 0
      %812 = vmatprep.mubr.bf16.mxu0 0
      %813 = vmatmul.mubr.bf16.gmra.mrb[0].mxu0 %v775
      %v814 = vpop.f32.mrb[0].mxu0
      %v815 = vadd.f32 0.0, %v814
      %v816 = vpop.f32.mrb[0].mxu0
      %v817 = vpop.f32.mrb[0].mxu0
      %v818 = vpop.f32.mrb[0].mxu0
      %819 = vdwg.mxu0
      %821 = vrot.lane.b32.xlu0 %v764, 120
      %v822 = vpop.permute.xlu0 %821
      %824 = vrot.lane.b32.xlu0 %v765, 88
      %v825 = vpop.permute.xlu0 %824
      %v827 = vsel %vm544, %v822, 0
      %v830 = vsel %vm544, %v825, 0
      %832 = vmatprep.subr.bf16.mxu0 0
      %833 = vmatpush1.bf16.xpose.msra.mxu0 %v830
      %834 = vmatprep.subr.bf16.mxu0 0
      %835 = vmatpush1.bf16.xpose.msra.mxu0 0
      %836 = vmatprep.subr.bf16.mxu0 0
      %837 = vmatpush1.bf16.xpose.msra.mxu0 0
      %838 = vmatprep.subr.bf16.mxu0 0
      %839 = vmatpush1.bf16.xpose.msra.mxu0 0
      %840 = vmatprep.subr.bf16.mxu0 0
      %841 = vmatpush1.bf16.xpose.msra.mxu0 0
      %842 = vmatprep.subr.bf16.mxu0 0
      %843 = vmatpush1.bf16.xpose.msra.mxu0 0
      %844 = vmatprep.subr.bf16.mxu0 0
      %845 = vmatpush1.bf16.xpose.msra.mxu0 0
      %846 = vmatprep.subr.bf16.mxu0 0
      %847 = vmatpush1.bf16.xpose.msra.mxu0 0
      %848 = vmatprep.subr.bf16.mxu0 0
      %849 = vmatpush1.bf16.xpose.msra.mxu0 0
      %850 = vmatprep.subr.bf16.mxu0 0
      %851 = vmatpush1.bf16.xpose.msra.mxu0 0
      %852 = vmatprep.subr.bf16.mxu0 0
      %853 = vmatpush1.bf16.xpose.msra.mxu0 0
      %854 = vmatprep.subr.bf16.mxu0 0
      %855 = vmatpush1.bf16.xpose.msra.mxu0 0
      %856 = vmatprep.subr.bf16.mxu0 0
      %857 = vmatpush1.bf16.xpose.msra.mxu0 0
      %858 = vmatprep.subr.bf16.mxu0 0
      %859 = vmatpush1.bf16.xpose.msra.mxu0 0
      %860 = vmatprep.subr.bf16.mxu0 0
      %861 = vmatpush1.bf16.xpose.msra.mxu0 0
      %862 = vmatprep.subr.bf16.mxu0 0
      %863 = vmatpush1.bf16.xpose.msra.mxu0 0
      %864 = vmatprep.mubr.bf16.mxu0 0
      %865 = vmatmul.mubr.bf16.gmra.mrb[0].mxu0 %v827
      %v866 = vpop.f32.mrb[0].mxu0
      %v867 = vadd.f32 %v815, %v866
      %v868 = vpop.f32.mrb[0].mxu0
      %v869 = vpop.f32.mrb[0].mxu0
      %v870 = vpop.f32.mrb[0].mxu0
      %871 = vdwg.mxu0
      %v872 = vadd.f32 %v867, %v644
      %v873 = vsel %vm647, %v872, -inf
      %874 = vmax.xlane.f32.xlu0 %v873
      %v875 = vpop.xlane.xlu0 %874
      %v876 = vsub.f32 %v872, %v875
      %v877 = vmul.f32 %v876, 1.442695
      %v878 = vpow.pop %v877
      %v879 = vsel %vm647, %v878, 0.0
      %880 = vadd.xlane.f32.xlu0 %v879
      %v881 = vpop.xlane.xlu0 %880
      %v882 = vrcp.pop %v881
      %v883 = vmul.f32 %v878, %v882
      %v884 = vpack.c.bf16 %v883, %v883
      %885 = vrot.lane.b32.xlu0 %v660, 56
      %v886 = vpop.permute.xlu0 %885
      %v888 = vsel %vm647, %v884, 0
      %v891 = vsel %vm667, %v886, 0
      %893 = vmatprep.subr.bf16.mxu0 0
      %894 = vmatpush1.bf16.msra.mxu0 %v891
      %895 = vmatprep.subr.bf16.mxu0 0
      %896 = vmatpush1.bf16.msra.mxu0 0
      %897 = vmatprep.subr.bf16.mxu0 0
      %898 = vmatpush1.bf16.msra.mxu0 0
      %899 = vmatprep.subr.bf16.mxu0 0
      %900 = vmatpush1.bf16.msra.mxu0 0
      %901 = vmatprep.subr.bf16.mxu0 0
      %902 = vmatpush1.bf16.msra.mxu0 0
      %903 = vmatprep.subr.bf16.mxu0 0
      %904 = vmatpush1.bf16.msra.mxu0 0
      %905 = vmatprep.subr.bf16.mxu0 0
      %906 = vmatpush1.bf16.msra.mxu0 0
      %907 = vmatprep.subr.bf16.mxu0 0
      %908 = vmatpush1.bf16.msra.mxu0 0
      %909 = vmatprep.subr.bf16.mxu0 0
      %910 = vmatpush1.bf16.msra.mxu0 0
      %911 = vmatprep.subr.bf16.mxu0 0
      %912 = vmatpush1.bf16.msra.mxu0 0
      %913 = vmatprep.subr.bf16.mxu0 0
      %914 = vmatpush1.bf16.msra.mxu0 0
      %915 = vmatprep.subr.bf16.mxu0 0
      %916 = vmatpush1.bf16.msra.mxu0 0
      %917 = vmatprep.subr.bf16.mxu0 0
      %918 = vmatpush1.bf16.msra.mxu0 0
      %919 = vmatprep.subr.bf16.mxu0 0
      %920 = vmatpush1.bf16.msra.mxu0 0
      %921 = vmatprep.subr.bf16.mxu0 0
      %922 = vmatpush1.bf16.msra.mxu0 0
      %923 = vmatprep.subr.bf16.mxu0 0
      %924 = vmatpush1.bf16.msra.mxu0 0
      %925 = vmatprep.mubr.bf16.mxu0 0
      %926 = vmatmul.mubr.bf16.gmra.mrb[0].mxu0 %v888
      %v927 = vpop.f32.mrb[0].mxu0
      %v928 = vadd.f32 0.0, %v927
      %v929 = vpop.f32.mrb[0].mxu0
      %v930 = vpop.f32.mrb[0].mxu0
      %v931 = vpop.f32.mrb[0].mxu0
      %932 = vdwg.mxu0
      %v933 = vpack.c.bf16 %v928, %v928
      %v935 = vsel %vm647, %v933, 0
      %v938 = vsel %vm667, %v483, 0
      %940 = vmatprep.subr.bf16.mxu0 0
      %941 = vmatpush1.bf16.msra.mxu0 %v938
      %942 = vmatprep.subr.bf16.mxu0 0
      %943 = vmatpush1.bf16.msra.mxu0 0
      %944 = vmatprep.subr.bf16.mxu0 0
      %945 = vmatpush1.bf16.msra.mxu0 0
      %946 = vmatprep.subr.bf16.mxu0 0
      %947 = vmatpush1.bf16.msra.mxu0 0
      %948 = vmatprep.subr.bf16.mxu0 0
      %949 = vmatpush1.bf16.msra.mxu0 0
      %950 = vmatprep.subr.bf16.mxu0 0
      %951 = vmatpush1.bf16.msra.mxu0 0
      %952 = vmatprep.subr.bf16.mxu0 0
      %953 = vmatpush1.bf16.msra.mxu0 0
      %954 = vmatprep.subr.bf16.mxu0 0
      %955 = vmatpush1.bf16.msra.mxu0 0
      %956 = vmatprep.subr.bf16.mxu0 0
      %957 = vmatpush1.bf16.msra.mxu0 0
      %958 = vmatprep.subr.bf16.mxu0 0
      %959 = vmatpush1.bf16.msra.mxu0 0
      %960 = vmatprep.subr.bf16.mxu0 0
      %961 = vmatpush1.bf16.msra.mxu0 0
      %962 = vmatprep.subr.bf16.mxu0 0
      %963 = vmatpush1.bf16.msra.mxu0 0
      %964 = vmatprep.subr.bf16.mxu0 0
      %965 = vmatpush1.bf16.msra.mxu0 0
      %966 = vmatprep.subr.bf16.mxu0 0
      %967 = vmatpush1.bf16.msra.mxu0 0
      %968 = vmatprep.subr.bf16.mxu0 0
      %969 = vmatpush1.bf16.msra.mxu0 0
      %970 = vmatprep.subr.bf16.mxu0 0
      %971 = vmatpush1.bf16.msra.mxu0 0
      %972 = vmatprep.mubr.bf16.mxu0 0
      %973 = vmatmul.mubr.bf16.gmra.mrb[0].mxu0 %v935
      %v974 = vpop.f32.mrb[0].mxu0
      %v975 = vadd.f32 0.0, %v974
      %v976 = vpop.f32.mrb[0].mxu0
      %v977 = vpop.f32.mrb[0].mxu0
      %v978 = vpop.f32.mrb[0].mxu0
      %979 = vdwg.mxu0
      %v981 = vsel %vm647, %v711, 0
      %v984 = vsel %vm667, %v482, 0
      %986 = vmatprep.subr.bf16.mxu0 0
      %987 = vmatpush1.bf16.msra.mxu0 %v984
      %988 = vmatprep.subr.bf16.mxu0 0
      %989 = vmatpush1.bf16.msra.mxu0 0
      %990 = vmatprep.subr.bf16.mxu0 0
      %991 = vmatpush1.bf16.msra.mxu0 0
      %992 = vmatprep.subr.bf16.mxu0 0
      %993 = vmatpush1.bf16.msra.mxu0 0
      %994 = vmatprep.subr.bf16.mxu0 0
      %995 = vmatpush1.bf16.msra.mxu0 0
      %996 = vmatprep.subr.bf16.mxu0 0
      %997 = vmatpush1.bf16.msra.mxu0 0
      %998 = vmatprep.subr.bf16.mxu0 0
      %999 = vmatpush1.bf16.msra.mxu0 0
      %1000 = vmatprep.subr.bf16.mxu0 0
      %1001 = vmatpush1.bf16.msra.mxu0 0
      %1002 = vmatprep.subr.bf16.mxu0 0
      %1003 = vmatpush1.bf16.msra.mxu0 0
      %1004 = vmatprep.subr.bf16.mxu0 0
      %1005 = vmatpush1.bf16.msra.mxu0 0
      %1006 = vmatprep.subr.bf16.mxu0 0
      %1007 = vmatpush1.bf16.msra.mxu0 0
      %1008 = vmatprep.subr.bf16.mxu0 0
      %1009 = vmatpush1.bf16.msra.mxu0 0
      %1010 = vmatprep.subr.bf16.mxu0 0
      %1011 = vmatpush1.bf16.msra.mxu0 0
      %1012 = vmatprep.subr.bf16.mxu0 0
      %1013 = vmatpush1.bf16.msra.mxu0 0
      %1014 = vmatprep.subr.bf16.mxu0 0
      %1015 = vmatpush1.bf16.msra.mxu0 0
      %1016 = vmatprep.subr.bf16.mxu0 0
      %1017 = vmatpush1.bf16.msra.mxu0 0
      %1018 = vmatprep.mubr.bf16.mxu0 0
      %1019 = vmatmul.mubr.bf16.gmra.mrb[0].mxu0 %v981
      %v1020 = vpop.f32.mrb[0].mxu0
      %v1021 = vadd.f32 %v975, %v1020
      %v1022 = vpop.f32.mrb[0].mxu0
      %v1023 = vpop.f32.mrb[0].mxu0
      %v1024 = vpop.f32.mrb[0].mxu0
      %1025 = vdwg.mxu0
      %1026 = vrot.lane.b32.xlu0 %v480, 16
      %v1027 = vpop.permute.xlu0 %1026
      %v1029 = vmul.f32 %v472, %v1027
      %1030 = vrot.lane.b32.xlu0 %v481, 20
      %v1031 = vpop.permute.xlu0 %1030
      %v1033 = vmul.f32 %v472, %v1031
      %1035 = vrot.lane.b32.xlu0 %v1033, 124
      %v1036 = vpop.permute.xlu0 %1035
      %v1038 = vsub.f32 %v1029, %v1036
      %1039 = vrot.lane.b32.xlu0 %v480, 20
      %v1040 = vpop.permute.xlu0 %1039
      %v1042 = vmul.f32 %v472, %v1040
      %1043 = vrot.lane.b32.xlu0 %v481, 16
      %v1044 = vpop.permute.xlu0 %1043
      %v1046 = vmul.f32 %v472, %v1044
      %1048 = vrot.lane.b32.xlu0 %v1046, 4
      %v1049 = vpop.permute.xlu0 %1048
      %v1051 = vadd.f32 %v1042, %v1049
      %1052 = vrot.lane.b32.xlu0 %v480, 48
      %v1053 = vpop.permute.xlu0 %1052
      %v1055 = vmul.f32 %v472, %v1053
      %1056 = vrot.lane.b32.xlu0 %v481, 52
      %v1057 = vpop.permute.xlu0 %1056
      %v1059 = vmul.f32 %v472, %v1057
      %1061 = vrot.lane.b32.xlu0 %v1059, 124
      %v1062 = vpop.permute.xlu0 %1061
      %v1064 = vsub.f32 %v1055, %v1062
      %1065 = vrot.lane.b32.xlu0 %v480, 52
      %v1066 = vpop.permute.xlu0 %1065
      %v1068 = vmul.f32 %v472, %v1066
      %1069 = vrot.lane.b32.xlu0 %v481, 48
      %v1070 = vpop.permute.xlu0 %1069
      %v1072 = vmul.f32 %v472, %v1070
      %1074 = vrot.lane.b32.xlu0 %v1072, 4
      %v1075 = vpop.permute.xlu0 %1074
      %v1077 = vadd.f32 %v1068, %v1075
      %v1078 = vpack.c.bf16 %v1038, %v1038
      %v1079 = vpack.c.bf16 %v1064, %v1064
      %v1080 = vpack.c.bf16 %v1051, %v1051
      %v1081 = vpack.c.bf16 %v1077, %v1077
      %1083 = vrot.lane.b32.xlu0 %v1080, 108
      %v1084 = vpop.permute.xlu0 %1083
      %1086 = vrot.lane.b32.xlu0 %v1081, 76
      %v1087 = vpop.permute.xlu0 %1086
      %v1089 = vsel %vm544, %v1084, 0
      %v1092 = vsel %vm544, %v1087, 0
      %1094 = vmatprep.subr.bf16.mxu0 0
      %1095 = vmatpush1.bf16.xpose.msra.mxu0 %v1092
      %1096 = vmatprep.subr.bf16.mxu0 0
      %1097 = vmatpush1.bf16.xpose.msra.mxu0 0
      %1098 = vmatprep.subr.bf16.mxu0 0
      %1099 = vmatpush1.bf16.xpose.msra.mxu0 0
      %1100 = vmatprep.subr.bf16.mxu0 0
      %1101 = vmatpush1.bf16.xpose.msra.mxu0 0
      %1102 = vmatprep.subr.bf16.mxu0 0
      %1103 = vmatpush1.bf16.xpose.msra.mxu0 0
      %1104 = vmatprep.subr.bf16.mxu0 0
      %1105 = vmatpush1.bf16.xpose.msra.mxu0 0
      %1106 = vmatprep.subr.bf16.mxu0 0
      %1107 = vmatpush1.bf16.xpose.msra.mxu0 0
      %1108 = vmatprep.subr.bf16.mxu0 0
      %1109 = vmatpush1.bf16.xpose.msra.mxu0 0
      %1110 = vmatprep.subr.bf16.mxu0 0
      %1111 = vmatpush1.bf16.xpose.msra.mxu0 0
      %1112 = vmatprep.subr.bf16.mxu0 0
      %1113 = vmatpush1.bf16.xpose.msra.mxu0 0
      %1114 = vmatprep.subr.bf16.mxu0 0
      %1115 = vmatpush1.bf16.xpose.msra.mxu0 0
      %1116 = vmatprep.subr.bf16.mxu0 0
      %1117 = vmatpush1.bf16.xpose.msra.mxu0 0
      %1118 = vmatprep.subr.bf16.mxu0 0
      %1119 = vmatpush1.bf16.xpose.msra.mxu0 0
      %1120 = vmatprep.subr.bf16.mxu0 0
      %1121 = vmatpush1.bf16.xpose.msra.mxu0 0
      %1122 = vmatprep.subr.bf16.mxu0 0
      %1123 = vmatpush1.bf16.xpose.msra.mxu0 0
      %1124 = vmatprep.subr.bf16.mxu0 0
      %1125 = vmatpush1.bf16.xpose.msra.mxu0 0
      %1126 = vmatprep.mubr.bf16.mxu0 0
      %1127 = vmatmul.mubr.bf16.gmra.mrb[0].mxu0 %v1089
      %v1128 = vpop.f32.mrb[0].mxu0
      %v1129 = vadd.f32 0.0, %v1128
      %v1130 = vpop.f32.mrb[0].mxu0
      %v1131 = vpop.f32.mrb[0].mxu0
      %v1132 = vpop.f32.mrb[0].mxu0
      %1133 = vdwg.mxu0
      %1135 = vrot.lane.b32.xlu0 %v1078, 112
      %v1136 = vpop.permute.xlu0 %1135
      %1138 = vrot.lane.b32.xlu0 %v1079, 80
      %v1139 = vpop.permute.xlu0 %1138
      %v1141 = vsel %vm544, %v1136, 0
      %v1144 = vsel %vm544, %v1139, 0
      %1146 = vmatprep.subr.bf16.mxu0 0
      %1147 = vmatpush1.bf16.xpose.msra.mxu0 %v1144
      %1148 = vmatprep.subr.bf16.mxu0 0
      %1149 = vmatpush1.bf16.xpose.msra.mxu0 0
      %1150 = vmatprep.subr.bf16.mxu0 0
      %1151 = vmatpush1.bf16.xpose.msra.mxu0 0
      %1152 = vmatprep.subr.bf16.mxu0 0
      %1153 = vmatpush1.bf16.xpose.msra.mxu0 0
      %1154 = vmatprep.subr.bf16.mxu0 0
      %1155 = vmatpush1.bf16.xpose.msra.mxu0 0
      %1156 = vmatprep.subr.bf16.mxu0 0
      %1157 = vmatpush1.bf16.xpose.msra.mxu0 0
      %1158 = vmatprep.subr.bf16.mxu0 0
      %1159 = vmatpush1.bf16.xpose.msra.mxu0 0
      %1160 = vmatprep.subr.bf16.mxu0 0
      %1161 = vmatpush1.bf16.xpose.msra.mxu0 0
      %1162 = vmatprep.subr.bf16.mxu0 0
      %1163 = vmatpush1.bf16.xpose.msra.mxu0 0
      %1164 = vmatprep.subr.bf16.mxu0 0
      %1165 = vmatpush1.bf16.xpose.msra.mxu0 0
      %1166 = vmatprep.subr.bf16.mxu0 0
      %1167 = vmatpush1.bf16.xpose.msra.mxu0 0
      %1168 = vmatprep.subr.bf16.mxu0 0
      %1169 = vmatpush1.bf16.xpose.msra.mxu0 0
      %1170 = vmatprep.subr.bf16.mxu0 0
      %1171 = vmatpush1.bf16.xpose.msra.mxu0 0
      %1172 = vmatprep.subr.bf16.mxu0 0
      %1173 = vmatpush1.bf16.xpose.msra.mxu0 0
      %1174 = vmatprep.subr.bf16.mxu0 0
      %1175 = vmatpush1.bf16.xpose.msra.mxu0 0
      %1176 = vmatprep.subr.bf16.mxu0 0
      %1177 = vmatpush1.bf16.xpose.msra.mxu0 0
      %1178 = vmatprep.mubr.bf16.mxu0 0
      %1179 = vmatmul.mubr.bf16.gmra.mrb[0].mxu0 %v1141
      %v1180 = vpop.f32.mrb[0].mxu0
      %v1181 = vadd.f32 %v1129, %v1180
      %v1182 = vpop.f32.mrb[0].mxu0
      %v1183 = vpop.f32.mrb[0].mxu0
      %v1184 = vpop.f32.mrb[0].mxu0
      %1185 = vdwg.mxu0
      %v1186 = vadd.f32 %v1181, %v644
      %v1187 = vsel %vm647, %v1186, -inf
      %1188 = vmax.xlane.f32.xlu0 %v1187
      %v1189 = vpop.xlane.xlu0 %1188
      %v1190 = vsub.f32 %v1186, %v1189
      %v1191 = vmul.f32 %v1190, 1.442695
      %v1192 = vpow.pop %v1191
      %v1193 = vsel %vm647, %v1192, 0.0
      %1194 = vadd.xlane.f32.xlu0 %v1193
      %v1195 = vpop.xlane.xlu0 %1194
      %v1196 = vrcp.pop %v1195
      %v1197 = vmul.f32 %v1192, %v1196
      %v1198 = vpack.c.bf16 %v1197, %v1197
      %1199 = vrot.lane.b32.xlu0 %v660, 48
      %v1200 = vpop.permute.xlu0 %1199
      %v1202 = vsel %vm647, %v1198, 0
      %v1205 = vsel %vm667, %v1200, 0
      %1207 = vmatprep.subr.bf16.mxu0 0
      %1208 = vmatpush1.bf16.msra.mxu0 %v1205
      %1209 = vmatprep.subr.bf16.mxu0 0
      %1210 = vmatpush1.bf16.msra.mxu0 0
      %1211 = vmatprep.subr.bf16.mxu0 0
      %1212 = vmatpush1.bf16.msra.mxu0 0
      %1213 = vmatprep.subr.bf16.mxu0 0
      %1214 = vmatpush1.bf16.msra.mxu0 0
      %1215 = vmatprep.subr.bf16.mxu0 0
      %1216 = vmatpush1.bf16.msra.mxu0 0
      %1217 = vmatprep.subr.bf16.mxu0 0
      %1218 = vmatpush1.bf16.msra.mxu0 0
      %1219 = vmatprep.subr.bf16.mxu0 0
      %1220 = vmatpush1.bf16.msra.mxu0 0
      %1221 = vmatprep.subr.bf16.mxu0 0
      %1222 = vmatpush1.bf16.msra.mxu0 0
      %1223 = vmatprep.subr.bf16.mxu0 0
      %1224 = vmatpush1.bf16.msra.mxu0 0
      %1225 = vmatprep.subr.bf16.mxu0 0
      %1226 = vmatpush1.bf16.msra.mxu0 0
      %1227 = vmatprep.subr.bf16.mxu0 0
      %1228 = vmatpush1.bf16.msra.mxu0 0
      %1229 = vmatprep.subr.bf16.mxu0 0
      %1230 = vmatpush1.bf16.msra.mxu0 0
      %1231 = vmatprep.subr.bf16.mxu0 0
      %1232 = vmatpush1.bf16.msra.mxu0 0
      %1233 = vmatprep.subr.bf16.mxu0 0
      %1234 = vmatpush1.bf16.msra.mxu0 0
      %1235 = vmatprep.subr.bf16.mxu0 0
      %1236 = vmatpush1.bf16.msra.mxu0 0
      %1237 = vmatprep.subr.bf16.mxu0 0
      %1238 = vmatpush1.bf16.msra.mxu0 0
      %1239 = vmatprep.mubr.bf16.mxu0 0
      %1240 = vmatmul.mubr.bf16.gmra.mrb[0].mxu0 %v1202
      %v1241 = vpop.f32.mrb[0].mxu0
      %v1242 = vadd.f32 0.0, %v1241
      %v1243 = vpop.f32.mrb[0].mxu0
      %v1244 = vpop.f32.mrb[0].mxu0
      %v1245 = vpop.f32.mrb[0].mxu0
      %1246 = vdwg.mxu0
      %v1247 = vpack.c.bf16 %v1242, %v1242
      %v1249 = vsel %vm647, %v1247, 0
      %v1252 = vsel %vm667, %v484, 0
      %1254 = vmatprep.subr.bf16.mxu0 0
      %1255 = vmatpush1.bf16.msra.mxu0 %v1252
      %1256 = vmatprep.subr.bf16.mxu0 0
      %1257 = vmatpush1.bf16.msra.mxu0 0
      %1258 = vmatprep.subr.bf16.mxu0 0
      %1259 = vmatpush1.bf16.msra.mxu0 0
      %1260 = vmatprep.subr.bf16.mxu0 0
      %1261 = vmatpush1.bf16.msra.mxu0 0
      %1262 = vmatprep.subr.bf16.mxu0 0
      %1263 = vmatpush1.bf16.msra.mxu0 0
      %1264 = vmatprep.subr.bf16.mxu0 0
      %1265 = vmatpush1.bf16.msra.mxu0 0
      %1266 = vmatprep.subr.bf16.mxu0 0
      %1267 = vmatpush1.bf16.msra.mxu0 0
      %1268 = vmatprep.subr.bf16.mxu0 0
      %1269 = vmatpush1.bf16.msra.mxu0 0
      %1270 = vmatprep.subr.bf16.mxu0 0
      %1271 = vmatpush1.bf16.msra.mxu0 0
      %1272 = vmatprep.subr.bf16.mxu0 0
      %1273 = vmatpush1.bf16.msra.mxu0 0
      %1274 = vmatprep.subr.bf16.mxu0 0
      %1275 = vmatpush1.bf16.msra.mxu0 0
      %1276 = vmatprep.subr.bf16.mxu0 0
      %1277 = vmatpush1.bf16.msra.mxu0 0
      %1278 = vmatprep.subr.bf16.mxu0 0
      %1279 = vmatpush1.bf16.msra.mxu0 0
      %1280 = vmatprep.subr.bf16.mxu0 0
      %1281 = vmatpush1.bf16.msra.mxu0 0
      %1282 = vmatprep.subr.bf16.mxu0 0
      %1283 = vmatpush1.bf16.msra.mxu0 0
      %1284 = vmatprep.subr.bf16.mxu0 0
      %1285 = vmatpush1.bf16.msra.mxu0 0
      %1286 = vmatprep.mubr.bf16.mxu0 0
      %1287 = vmatmul.mubr.bf16.gmra.mrb[0].mxu0 %v1249
      %v1288 = vpop.f32.mrb[0].mxu0
      %v1289 = vadd.f32 0.0, %v1288
      %v1290 = vpop.f32.mrb[0].mxu0
      %v1291 = vpop.f32.mrb[0].mxu0
      %v1292 = vpop.f32.mrb[0].mxu0
      %1293 = vdwg.mxu0
      %v1294 = vadd.f32 %v1021, %v1289
      %1295 = vrot.lane.b32.xlu0 %v480, 24
      %v1296 = vpop.permute.xlu0 %1295
      %v1298 = vmul.f32 %v472, %v1296
      %1299 = vrot.lane.b32.xlu0 %v481, 28
      %v1300 = vpop.permute.xlu0 %1299
      %v1302 = vmul.f32 %v472, %v1300
      %1304 = vrot.lane.b32.xlu0 %v1302, 124
      %v1305 = vpop.permute.xlu0 %1304
      %v1307 = vsub.f32 %v1298, %v1305
      %1308 = vrot.lane.b32.xlu0 %v480, 28
      %v1309 = vpop.permute.xlu0 %1308
      %v1311 = vmul.f32 %v472, %v1309
      %1312 = vrot.lane.b32.xlu0 %v481, 24
      %v1313 = vpop.permute.xlu0 %1312
      %v1315 = vmul.f32 %v472, %v1313
      %1317 = vrot.lane.b32.xlu0 %v1315, 4
      %v1318 = vpop.permute.xlu0 %1317
      %v1320 = vadd.f32 %v1311, %v1318
      %1321 = vrot.lane.b32.xlu0 %v480, 56
      %v1322 = vpop.permute.xlu0 %1321
      %v1324 = vmul.f32 %v472, %v1322
      %1325 = vrot.lane.b32.xlu0 %v481, 60
      %v1326 = vpop.permute.xlu0 %1325
      %v1328 = vmul.f32 %v472, %v1326
      %1330 = vrot.lane.b32.xlu0 %v1328, 124
      %v1331 = vpop.permute.xlu0 %1330
      %v1333 = vsub.f32 %v1324, %v1331
      %1334 = vrot.lane.b32.xlu0 %v480, 60
      %v1335 = vpop.permute.xlu0 %1334
      %v1337 = vmul.f32 %v472, %v1335
      %1338 = vrot.lane.b32.xlu0 %v481, 56
      %v1339 = vpop.permute.xlu0 %1338
      %v1341 = vmul.f32 %v472, %v1339
      %1343 = vrot.lane.b32.xlu0 %v1341, 4
      %v1344 = vpop.permute.xlu0 %1343
      %v1346 = vadd.f32 %v1337, %v1344
      %v1347 = vpack.c.bf16 %v1307, %v1307
      %v1348 = vpack.c.bf16 %v1333, %v1333
      %v1349 = vpack.c.bf16 %v1320, %v1320
      %v1350 = vpack.c.bf16 %v1346, %v1346
      %1352 = vrot.lane.b32.xlu0 %v1349, 100
      %v1353 = vpop.permute.xlu0 %1352
      %1355 = vrot.lane.b32.xlu0 %v1350, 68
      %v1356 = vpop.permute.xlu0 %1355
      %v1358 = vsel %vm544, %v1353, 0
      %v1361 = vsel %vm544, %v1356, 0
      %1363 = vmatprep.subr.bf16.mxu0 0
      %1364 = vmatpush1.bf16.xpose.msra.mxu0 %v1361
      %1365 = vmatprep.subr.bf16.mxu0 0
      %1366 = vmatpush1.bf16.xpose.msra.mxu0 0
      %1367 = vmatprep.subr.bf16.mxu0 0
      %1368 = vmatpush1.bf16.xpose.msra.mxu0 0
      %1369 = vmatprep.subr.bf16.mxu0 0
      %1370 = vmatpush1.bf16.xpose.msra.mxu0 0
      %1371 = vmatprep.subr.bf16.mxu0 0
      %1372 = vmatpush1.bf16.xpose.msra.mxu0 0
      %1373 = vmatprep.subr.bf16.mxu0 0
      %1374 = vmatpush1.bf16.xpose.msra.mxu0 0
      %1375 = vmatprep.subr.bf16.mxu0 0
      %1376 = vmatpush1.bf16.xpose.msra.mxu0 0
      %1377 = vmatprep.subr.bf16.mxu0 0
      %1378 = vmatpush1.bf16.xpose.msra.mxu0 0
      %1379 = vmatprep.subr.bf16.mxu0 0
      %1380 = vmatpush1.bf16.xpose.msra.mxu0 0
      %1381 = vmatprep.subr.bf16.mxu0 0
      %1382 = vmatpush1.bf16.xpose.msra.mxu0 0
      %1383 = vmatprep.subr.bf16.mxu0 0
      %1384 = vmatpush1.bf16.xpose.msra.mxu0 0
      %1385 = vmatprep.subr.bf16.mxu0 0
      %1386 = vmatpush1.bf16.xpose.msra.mxu0 0
      %1387 = vmatprep.subr.bf16.mxu0 0
      %1388 = vmatpush1.bf16.xpose.msra.mxu0 0
      %1389 = vmatprep.subr.bf16.mxu0 0
      %1390 = vmatpush1.bf16.xpose.msra.mxu0 0
      %1391 = vmatprep.subr.bf16.mxu0 0
      %1392 = vmatpush1.bf16.xpose.msra.mxu0 0
      %1393 = vmatprep.subr.bf16.mxu0 0
      %1394 = vmatpush1.bf16.xpose.msra.mxu0 0
      %1395 = vmatprep.mubr.bf16.mxu0 0
      %1396 = vmatmul.mubr.bf16.gmra.mrb[0].mxu0 %v1358
      %v1397 = vpop.f32.mrb[0].mxu0
      %v1398 = vadd.f32 0.0, %v1397
      %v1399 = vpop.f32.mrb[0].mxu0
      %v1400 = vpop.f32.mrb[0].mxu0
      %v1401 = vpop.f32.mrb[0].mxu0
      %1402 = vdwg.mxu0
      %1404 = vrot.lane.b32.xlu0 %v1347, 104
      %v1405 = vpop.permute.xlu0 %1404
      %1407 = vrot.lane.b32.xlu0 %v1348, 72
      %v1408 = vpop.permute.xlu0 %1407
      %v1410 = vsel %vm544, %v1405, 0
      %v1413 = vsel %vm544, %v1408, 0
      %1415 = vmatprep.subr.bf16.mxu0 0
      %1416 = vmatpush1.bf16.xpose.msra.mxu0 %v1413
      %1417 = vmatprep.subr.bf16.mxu0 0
      %1418 = vmatpush1.bf16.xpose.msra.mxu0 0
      %1419 = vmatprep.subr.bf16.mxu0 0
      %1420 = vmatpush1.bf16.xpose.msra.mxu0 0
      %1421 = vmatprep.subr.bf16.mxu0 0
      %1422 = vmatpush1.bf16.xpose.msra.mxu0 0
      %1423 = vmatprep.subr.bf16.mxu0 0
      %1424 = vmatpush1.bf16.xpose.msra.mxu0 0
      %1425 = vmatprep.subr.bf16.mxu0 0
      %1426 = vmatpush1.bf16.xpose.msra.mxu0 0
      %1427 = vmatprep.subr.bf16.mxu0 0
      %1428 = vmatpush1.bf16.xpose.msra.mxu0 0
      %1429 = vmatprep.subr.bf16.mxu0 0
      %1430 = vmatpush1.bf16.xpose.msra.mxu0 0
      %1431 = vmatprep.subr.bf16.mxu0 0
      %1432 = vmatpush1.bf16.xpose.msra.mxu0 0
      %1433 = vmatprep.subr.bf16.mxu0 0
      %1434 = vmatpush1.bf16.xpose.msra.mxu0 0
      %1435 = vmatprep.subr.bf16.mxu0 0
      %1436 = vmatpush1.bf16.xpose.msra.mxu0 0
      %1437 = vmatprep.subr.bf16.mxu0 0
      %1438 = vmatpush1.bf16.xpose.msra.mxu0 0
      %1439 = vmatprep.subr.bf16.mxu0 0
      %1440 = vmatpush1.bf16.xpose.msra.mxu0 0
      %1441 = vmatprep.subr.bf16.mxu0 0
      %1442 = vmatpush1.bf16.xpose.msra.mxu0 0
      %1443 = vmatprep.subr.bf16.mxu0 0
      %1444 = vmatpush1.bf16.xpose.msra.mxu0 0
      %1445 = vmatprep.subr.bf16.mxu0 0
      %1446 = vmatpush1.bf16.xpose.msra.mxu0 0
      %1447 = vmatprep.mubr.bf16.mxu0 0
      %1448 = vmatmul.mubr.bf16.gmra.mrb[0].mxu0 %v1410
      %v1449 = vpop.f32.mrb[0].mxu0
      %v1450 = vadd.f32 %v1398, %v1449
      %v1451 = vpop.f32.mrb[0].mxu0
      %v1452 = vpop.f32.mrb[0].mxu0
      %v1453 = vpop.f32.mrb[0].mxu0
      %1454 = vdwg.mxu0
      %v1455 = vadd.f32 %v1450, %v644
      %v1456 = vsel %vm647, %v1455, -inf
      %1457 = vmax.xlane.f32.xlu0 %v1456
      %v1458 = vpop.xlane.xlu0 %1457
      %v1459 = vsub.f32 %v1455, %v1458
      %v1460 = vmul.f32 %v1459, 1.442695
      %v1461 = vpow.pop %v1460
      %v1462 = vsel %vm647, %v1461, 0.0
      %1463 = vadd.xlane.f32.xlu0 %v1462
      %v1464 = vpop.xlane.xlu0 %1463
      %v1465 = vrcp.pop %v1464
      %v1466 = vmul.f32 %v1461, %v1465
      %v1467 = vpack.c.bf16 %v1466, %v1466
      %1468 = vrot.lane.b32.xlu0 %v660, 40
      %v1469 = vpop.permute.xlu0 %1468
      %v1471 = vsel %vm647, %v1467, 0
      %v1474 = vsel %vm667, %v1469, 0
      %1476 = vmatprep.subr.bf16.mxu0 0
      %1477 = vmatpush1.bf16.msra.mxu0 %v1474
      %1478 = vmatprep.subr.bf16.mxu0 0
      %1479 = vmatpush1.bf16.msra.mxu0 0
      %1480 = vmatprep.subr.bf16.mxu0 0
      %1481 = vmatpush1.bf16.msra.mxu0 0
      %1482 = vmatprep.subr.bf16.mxu0 0
      %1483 = vmatpush1.bf16.msra.mxu0 0
      %1484 = vmatprep.subr.bf16.mxu0 0
      %1485 = vmatpush1.bf16.msra.mxu0 0
      %1486 = vmatprep.subr.bf16.mxu0 0
      %1487 = vmatpush1.bf16.msra.mxu0 0
      %1488 = vmatprep.subr.bf16.mxu0 0
      %1489 = vmatpush1.bf16.msra.mxu0 0
      %1490 = vmatprep.subr.bf16.mxu0 0
      %1491 = vmatpush1.bf16.msra.mxu0 0
      %1492 = vmatprep.subr.bf16.mxu0 0
      %1493 = vmatpush1.bf16.msra.mxu0 0
      %1494 = vmatprep.subr.bf16.mxu0 0
      %1495 = vmatpush1.bf16.msra.mxu0 0
      %1496 = vmatprep.subr.bf16.mxu0 0
      %1497 = vmatpush1.bf16.msra.mxu0 0
      %1498 = vmatprep.subr.bf16.mxu0 0
      %1499 = vmatpush1.bf16.msra.mxu0 0
      %1500 = vmatprep.subr.bf16.mxu0 0
      %1501 = vmatpush1.bf16.msra.mxu0 0
      %1502 = vmatprep.subr.bf16.mxu0 0
      %1503 = vmatpush1.bf16.msra.mxu0 0
      %1504 = vmatprep.subr.bf16.mxu0 0
      %1505 = vmatpush1.bf16.msra.mxu0 0
      %1506 = vmatprep.subr.bf16.mxu0 0
      %1507 = vmatpush1.bf16.msra.mxu0 0
      %1508 = vmatprep.mubr.bf16.mxu0 0
      %1509 = vmatmul.mubr.bf16.gmra.mrb[0].mxu0 %v1471
      %v1510 = vpop.f32.mrb[0].mxu0
      %v1511 = vadd.f32 0.0, %v1510
      %v1512 = vpop.f32.mrb[0].mxu0
      %v1513 = vpop.f32.mrb[0].mxu0
      %v1514 = vpop.f32.mrb[0].mxu0
      %1515 = vdwg.mxu0
      %v1516 = vpack.c.bf16 %v1511, %v1511
      %v1518 = vsel %vm647, %v1516, 0
      %v1521 = vsel %vm667, %v485, 0
      %1523 = vmatprep.subr.bf16.mxu0 0
      %1524 = vmatpush1.bf16.msra.mxu0 %v1521
      %1525 = vmatprep.subr.bf16.mxu0 0
      %1526 = vmatpush1.bf16.msra.mxu0 0
      %1527 = vmatprep.subr.bf16.mxu0 0
      %1528 = vmatpush1.bf16.msra.mxu0 0
      %1529 = vmatprep.subr.bf16.mxu0 0
      %1530 = vmatpush1.bf16.msra.mxu0 0
      %1531 = vmatprep.subr.bf16.mxu0 0
      %1532 = vmatpush1.bf16.msra.mxu0 0
      %1533 = vmatprep.subr.bf16.mxu0 0
      %1534 = vmatpush1.bf16.msra.mxu0 0
      %1535 = vmatprep.subr.bf16.mxu0 0
      %1536 = vmatpush1.bf16.msra.mxu0 0
      %1537 = vmatprep.subr.bf16.mxu0 0
      %1538 = vmatpush1.bf16.msra.mxu0 0
      %1539 = vmatprep.subr.bf16.mxu0 0
      %1540 = vmatpush1.bf16.msra.mxu0 0
      %1541 = vmatprep.subr.bf16.mxu0 0
      %1542 = vmatpush1.bf16.msra.mxu0 0
      %1543 = vmatprep.subr.bf16.mxu0 0
      %1544 = vmatpush1.bf16.msra.mxu0 0
      %1545 = vmatprep.subr.bf16.mxu0 0
      %1546 = vmatpush1.bf16.msra.mxu0 0
      %1547 = vmatprep.subr.bf16.mxu0 0
      %1548 = vmatpush1.bf16.msra.mxu0 0
      %1549 = vmatprep.subr.bf16.mxu0 0
      %1550 = vmatpush1.bf16.msra.mxu0 0
      %1551 = vmatprep.subr.bf16.mxu0 0
      %1552 = vmatpush1.bf16.msra.mxu0 0
      %1553 = vmatprep.subr.bf16.mxu0 0
      %1554 = vmatpush1.bf16.msra.mxu0 0
      %1555 = vmatprep.mubr.bf16.mxu0 0
      %1556 = vmatmul.mubr.bf16.gmra.mrb[0].mxu0 %v1518
      %v1557 = vpop.f32.mrb[0].mxu0
      %v1558 = vadd.f32 0.0, %v1557
      %v1559 = vpop.f32.mrb[0].mxu0
      %v1560 = vpop.f32.mrb[0].mxu0
      %v1561 = vpop.f32.mrb[0].mxu0
      %1562 = vdwg.mxu0
      %v1563 = vadd.f32 %v1294, %v1558
      %v1564 = vadd.f32 %v370, %v1563
      %v1565 = vld [vmem:[%s6] sm:$0x1]
      %v1567 = vlaneseq
      %v1568 = vshrl.u32 %v1567, 7
      %v1569 = vsub.s32 0, %v1568
      %v1570 = vrot.slane %v1565, %v1569
      %v1572 = vadd.f32 %v1564, %v1570
      %1573 = vst.msk [vmem:[%s368] sm:$0xff] %vm373, %v1572
      %p1574 = scmp.lt.s32.totalorder %s21, 1
      %s1575 = scalar_select %p1574, %s21, 1
      %s1576 = smul.addr %s1575, 8
      %s1577 = scalar_lea.vmem %s10, %s1576
      // Predicated region
      $region61: #{transformer_forward.12} parent=59 // pred_check
        %p1578 = pneg %p259
      $region62: #{transformer_forward.12} parent=59 // pred_check_branch
        %1580 = sbr.rel (%p1578) target = $region64
      $region63: #{transformer_forward.12} parent=59 // pred_region
        _
      $region64: #{transformer_forward.12} parent=59 // pred_fallthru
        _
    $region60: #{transformer_forward.12} parent=5 // pred_fallthru
      _
    %p1581 = scmp.le.s32.totalorder 2, %s16
    // Predicated region
    $region65: #{transformer_forward.12} parent=5 // pred_check
      %p1582 = pneg %p1581
    $region66: #{transformer_forward.12} parent=5 // pred_check_branch
      %1584 = sbr.rel (%p1582) target = $region68
    $region67: #{transformer_forward.12} parent=5 // pred_region
      %s1585 = ssub.s32 %s16, 2
      // Predicated region
      $region69: #{transformer_forward.12} parent=67 // pred_check
        %p1586 = pneg %p265
      $region70: #{transformer_forward.12} parent=67 // pred_check_branch
        %1588 = sbr.rel (%p1586) target = $region72
      $region71: #{transformer_forward.12} parent=67 // pred_region
        %p1589 = scmp.lt.s32.totalorder %s22, 1
        %s1590 = scalar_select %p1589, %s22, 1
        %s1591 = smul.addr %s1590, 8
        %s1592 = scalar_lea.vmem %s10, %s1591
      $region72: #{transformer_forward.12} parent=67 // pred_fallthru
        _
    $region68: #{transformer_forward.12} parent=5 // pred_fallthru
      _
  $region6: #{transformer_forward.12} parent=0 // loop_footer
    %s20 = sadd.s32 1, %s16
  $region7: #{transformer_forward.12} parent=0 // loop_footer_branch
    %15 = sbr.rel target = $region3
  $region8: #{transformer_forward.12} parent=0 // loop_exit
    _

// kernel: transformer_forward.23
$region0: #{transformer_forward.23}
  #allocation0 [shape = 'u32[]', space=smem, size = 0x4, offset = 0x4, fixed_abs, tag = 'smem constant byte address 0x4 - core index']
  #allocation1 [shape = 'u32[144,128]{1,0:T(1,128)}', space=vmem, size = 0x12000, scoped, tag = 'internal scratch']
  %s0 = inlined_call_operand.vmem [shape: f32[2,8,32], index: 0, kind: input, shape index: {}]
  %s1 = inlined_call_operand.vmem [shape: f32[1,32], index: 1, kind: input, shape index: {}]
  %s2 = inlined_call_operand.vmem [shape: f32[1,32], index: 2, kind: input, shape index: {}]
  %s3 = inlined_call_operand.vmem [shape: bf16[32,128], index: 3, kind: input, shape index: {}]
  %s4 = inlined_call_operand.vmem [shape: f32[1,128], index: 4, kind: input, shape index: {}]
  %s5 = inlined_call_operand.hbm [shape: f32[2,8,128], index: 5, kind: output, shape index: {}]
  %s6 = sld [smem:[#allocation0]]
  $region53: #{transformer_forward.23} parent=0
    _
  %s8 = ssub.s32 1, %s6
  %s9 = scalar_select 0, %s8, %s6
  $region1: #{transformer_forward.23} parent=0
    #allocation2 [shape = 'u8[8192]{0}', space=vmem, size = 0x2000, scoped, tag = 'output window, operand 0']
    #allocation3 [shape = 's32[2]{0}', space=sflag, size = 0x8, scoped, tag = 'scoped memory for transformer_forward.23']
    %10 = vsyncpa [#allocation3], 0
    %s11 = scalar_lea.sflag [#allocation3], 1
    %12 = vsyncpa %s11, 0
    loop: start=0, step=1, limit=4
    $region2: #{transformer_forward.23} parent=1 // loop_pre_header
      _
    $region3: #{transformer_forward.23} parent=1 // loop_header
      %s14 = sphi 0, %s18
      %p15 = scmp.ge.s32.totalorder %s14, 4
      %s24 = sphi 0, %s26
      %s27 = sphi 0, %s24
      %s28 = sphi 0, %s27
      %s44 = sphi 0, %s28
      %s48 = sphi 0, %s48
      %s50 = sphi 0, %s48
      %s51 = sphi 0, %s50
      %s65 = sphi 0, %s51
      %s69 = sphi 0, %s69
      %s71 = sphi 0, %s69
      %s72 = sphi 0, %s71
      %s86 = sphi 0, %s72
      %s90 = sphi 0, %s90
      %s92 = sphi 0, %s90
      %s93 = sphi 0, %s92
      %s107 = sphi 0, %s93
      %s111 = sphi 0, %s111
      %s113 = sphi 0, %s111
      %s114 = sphi 0, %s113
      %s128 = sphi 0, %s114
      %s134 = sphi 0, %s136
      %s137 = sphi 0, %s134
      %s138 = sphi 0, %s137
      %s154 = sphi 0, %s138
    $region4: #{transformer_forward.23} parent=1 // loop_header_branch
      %17 = sbr.rel (%p15) target = $region8
    $region5: #{transformer_forward.23} parent=1 // loop_body
      %s19 = ssub.s32 %s14, 1
      %s20 = ssub.s32 %s14, 2
      %s21 = sadd.s32 %s14, 1
      %s22 = ssub.s32 %s14, %s21
      %p23 = scmp.eq.s32.totalorder %s22, 0
      %s25 = sadd.s32 %s24, 1
      %s26 = scalar_select %p23, %s24, %s25
      %p29 = pneg %p23
      %p30 = scmp.eq.s32.totalorder %s14, 1
      %p31 = por %p29, %p30
      %p32 = scmp.ne.s32.totalorder %s24, %s27
      %p33 = scmp.eq.s32.totalorder %s14, 0
      %p34 = por %p32, %p33
      %p35 = scmp.ne.s32.totalorder %s24, %s27
      %p36 = scmp.eq.s32.totalorder %s19, 1
      %p37 = por %p35, %p36
      %p38 = scmp.ne.s32.totalorder %s27, %s28
      %p39 = scmp.eq.s32.totalorder %s19, 0
      %p40 = por %p38, %p39
      %p41 = scmp.ne.s32.totalorder %s27, %s28
      %p42 = scmp.eq.s32.totalorder %s20, 1
      %p43 = por %p41, %p42
      %p45 = scmp.ne.s32.totalorder %s28, %s44
      %p46 = scmp.eq.s32.totalorder %s20, 0
      %p47 = por %p45, %p46
      %s49 = sadd.s32 %s48, 1
      %p52 = scmp.eq.s32.totalorder %s14, 1
      %p53 = scmp.ne.s32.totalorder %s48, %s50
      %p54 = scmp.eq.s32.totalorder %s14, 0
      %p55 = por %p53, %p54
      %p56 = scmp.ne.s32.totalorder %s48, %s50
      %p57 = scmp.eq.s32.totalorder %s19, 1
      %p58 = por %p56, %p57
      %p59 = scmp.ne.s32.totalorder %s50, %s51
      %p60 = scmp.eq.s32.totalorder %s19, 0
      %p61 = por %p59, %p60
      %p62 = scmp.ne.s32.totalorder %s50, %s51
      %p63 = scmp.eq.s32.totalorder %s20, 1
      %p64 = por %p62, %p63
      %p66 = scmp.ne.s32.totalorder %s51, %s65
      %p67 = scmp.eq.s32.totalorder %s20, 0
      %p68 = por %p66, %p67
      %s70 = sadd.s32 %s69, 1
      %p73 = scmp.eq.s32.totalorder %s14, 1
      %p74 = scmp.ne.s32.totalorder %s69, %s71
      %p75 = scmp.eq.s32.totalorder %s14, 0
      %p76 = por %p74, %p75
      %p77 = scmp.ne.s32.totalorder %s69, %s71
      %p78 = scmp.eq.s32.totalorder %s19, 1
      %p79 = por %p77, %p78
      %p80 = scmp.ne.s32.totalorder %s71, %s72
      %p81 = scmp.eq.s32.totalorder %s19, 0
      %p82 = por %p80, %p81
      %p83 = scmp.ne.s32.totalorder %s71, %s72
      %p84 = scmp.eq.s32.totalorder %s20, 1
      %p85 = por %p83, %p84
      %p87 = scmp.ne.s32.totalorder %s72, %s86
      %p88 = scmp.eq.s32.totalorder %s20, 0
      %p89 = por %p87, %p88
      %s91 = sadd.s32 %s90, 1
      %p94 = scmp.eq.s32.totalorder %s14, 1
      %p95 = scmp.ne.s32.totalorder %s90, %s92
      %p96 = scmp.eq.s32.totalorder %s14, 0
      %p97 = por %p95, %p96
      %p98 = scmp.ne.s32.totalorder %s90, %s92
      %p99 = scmp.eq.s32.totalorder %s19, 1
      %p100 = por %p98, %p99
      %p101 = scmp.ne.s32.totalorder %s92, %s93
      %p102 = scmp.eq.s32.totalorder %s19, 0
      %p103 = por %p101, %p102
      %p104 = scmp.ne.s32.totalorder %s92, %s93
      %p105 = scmp.eq.s32.totalorder %s20, 1
      %p106 = por %p104, %p105
      %p108 = scmp.ne.s32.totalorder %s93, %s107
      %p109 = scmp.eq.s32.totalorder %s20, 0
      %p110 = por %p108, %p109
      %s112 = sadd.s32 %s111, 1
      %p115 = scmp.eq.s32.totalorder %s14, 1
      %p116 = scmp.ne.s32.totalorder %s111, %s113
      %p117 = scmp.eq.s32.totalorder %s14, 0
      %p118 = por %p116, %p117
      %p119 = scmp.ne.s32.totalorder %s111, %s113
      %p120 = scmp.eq.s32.totalorder %s19, 1
      %p121 = por %p119, %p120
      %p122 = scmp.ne.s32.totalorder %s113, %s114
      %p123 = scmp.eq.s32.totalorder %s19, 0
      %p124 = por %p122, %p123
      %p125 = scmp.ne.s32.totalorder %s113, %s114
      %p126 = scmp.eq.s32.totalorder %s20, 1
      %p127 = por %p125, %p126
      %p129 = scmp.ne.s32.totalorder %s114, %s128
      %p130 = scmp.eq.s32.totalorder %s20, 0
      %p131 = por %p129, %p130
      %s132 = ssub.s32 %s14, %s21
      %p133 = scmp.eq.s32.totalorder %s132, 0
      %s135 = sadd.s32 %s134, 1
      %s136 = scalar_select %p133, %s134, %s135
      %p139 = pneg %p133
      %p140 = scmp.eq.s32.totalorder %s14, 1
      %p141 = por %p139, %p140
      %p142 = scmp.ne.s32.totalorder %s134, %s137
      %p143 = scmp.eq.s32.totalorder %s14, 0
      %p144 = por %p142, %p143
      %p145 = scmp.ne.s32.totalorder %s134, %s137
      %p146 = scmp.eq.s32.totalorder %s19, 1
      %p147 = por %p145, %p146
      %p148 = scmp.ne.s32.totalorder %s137, %s138
      %p149 = scmp.eq.s32.totalorder %s19, 0
      %p150 = por %p148, %p149
      %p151 = scmp.ne.s32.totalorder %s137, %s138
      %p152 = scmp.eq.s32.totalorder %s20, 1
      %p153 = por %p151, %p152
      %p155 = scmp.ne.s32.totalorder %s138, %s154
      %p156 = scmp.eq.s32.totalorder %s20, 0
      %p157 = por %p155, %p156
      %p158 = scmp.le.s32.totalorder 1, %s14
      %p159 = scmp.lt.s32.totalorder %s14, 3
      %p160 = pnand %p158, %p159
      %p161 = pneg %p160
      // Predicated region
      $region9: #{transformer_forward.23} parent=5 // pred_check
        _
      $region10: #{transformer_forward.23} parent=5 // pred_check_branch
        %163 = sbr.rel (%p160) target = $region12
      $region11: #{transformer_forward.23} parent=5 // pred_region
        %s164 = ssub.s32 %s14, 1
        // Predicated region
        $region13: #{transformer_forward.23} parent=11 // pred_check
          %p165 = pneg %p61
        $region14: #{transformer_forward.23} parent=11 // pred_check_branch
          %167 = sbr.rel (%p165) target = $region16
        $region15: #{transformer_forward.23} parent=11 // pred_region
          _
        $region16: #{transformer_forward.23} parent=11 // pred_fallthru
          _
        // Predicated region
        $region17: #{transformer_forward.23} parent=11 // pred_check
          %p168 = pneg %p82
        $region18: #{transformer_forward.23} parent=11 // pred_check_branch
          %170 = sbr.rel (%p168) target = $region20
        $region19: #{transformer_forward.23} parent=11 // pred_region
          _
        $region20: #{transformer_forward.23} parent=11 // pred_fallthru
          _
        // Predicated region
        $region21: #{transformer_forward.23} parent=11 // pred_check
          %p171 = pneg %p103
        $region22: #{transformer_forward.23} parent=11 // pred_check_branch
          %173 = sbr.rel (%p171) target = $region24
        $region23: #{transformer_forward.23} parent=11 // pred_region
          _
        $region24: #{transformer_forward.23} parent=11 // pred_fallthru
          _
        // Predicated region
        $region25: #{transformer_forward.23} parent=11 // pred_check
          %p174 = pneg %p124
        $region26: #{transformer_forward.23} parent=11 // pred_check_branch
          %176 = sbr.rel (%p174) target = $region28
        $region27: #{transformer_forward.23} parent=11 // pred_region
          _
        $region28: #{transformer_forward.23} parent=11 // pred_fallthru
          _
      $region12: #{transformer_forward.23} parent=5 // pred_fallthru
        _
      %p177 = scmp.lt.s32.totalorder %s14, 2
      // Predicated region
      $region29: #{transformer_forward.23} parent=5 // pred_check
        %p178 = pneg %p177
      $region30: #{transformer_forward.23} parent=5 // pred_check_branch
        %180 = sbr.rel (%p178) target = $region32
      $region31: #{transformer_forward.23} parent=5 // pred_region
        // Predicated region
        $region33: #{transformer_forward.23} parent=31 // pred_check
          %p181 = pneg %p34
        $region34: #{transformer_forward.23} parent=31 // pred_check_branch
          %183 = sbr.rel (%p181) target = $region36
        $region35: #{transformer_forward.23} parent=31 // pred_region
          %p184 = scmp.lt.s32.totalorder %s14, 1
          %s185 = scalar_select %p184, %s14, 1
          %s186 = smul.addr %s185, 8
          %s187 = scalar_lea.vmem %s0, %s186
        $region36: #{transformer_forward.23} parent=31 // pred_fallthru
          _
      $region32: #{transformer_forward.23} parent=5 // pred_fallthru
        _
      %p188 = scmp.le.s32.totalorder 1, %s14
      %p189 = scmp.lt.s32.totalorder %s14, 3
      %p190 = pnand %p188, %p189
      %p191 = pneg %p190
      // Predicated region
      $region37: #{transformer_forward.23} parent=5 // pred_check
        _
      $region38: #{transformer_forward.23} parent=5 // pred_check_branch
        %193 = sbr.rel (%p190) target = $region40
      $region39: #{transformer_forward.23} parent=5 // pred_region
        %s194 = ssub.s32 %s14, 1
        %p195 = scmp.lt.s32.totalorder %s19, 1
        %s196 = scalar_select %p195, %s19, 1
        %s197 = smul.addr %s196, 8
        %s198 = scalar_lea.vmem %s0, %s197
        %p199 = pneg %p40
        %p200 = pneg %p37
        %p201 = pneg %p61
        %p202 = pneg %p58
        %p203 = pneg %p82
        %p204 = pneg %p79
        %p205 = pneg %p103
        %p206 = pneg %p100
        %p207 = pneg %p124
        %p208 = pneg %p121
        %p209 = pneg %p150
        %p210 = pneg %p147
        %s211 = sand.u32 %s137, 1
        %s212 = scalar_lea.sflag [#allocation3], %s211
        %s213 = sand.u32 %s137, 1
        %s214 = smul.addr %s213, 8
        %s215 = scalar_lea.vmem [#allocation2], %s214
        %p216 = scmp.lt.s32.totalorder %s19, 1
        %s217 = scalar_select %p216, %s19, 1
        %s218 = smul.addr %s217, 8
        %s219 = scalar_lea.vmem %s0, %s218
        %v221 = vld [vmem:[%s219] sm:$0xff]
        %v222 = vld [vmem:[%s1] sm:$0x1]
        %v223 = vld [vmem:[%s2] sm:$0x1]
        %vm224 = vcmask 261120
        %v225 = vsel %vm224, %v221, 0.0
        %226 = vadd.xlane.f32.xlu0 %v225
        %v227 = vpop.xlane.xlu0 %226
        %v228 = vrcp.pop 32.0
        %v229 = vmul.f32 %v227, %v228
        %v230 = vsub.f32 %v221, %v229
        %v231 = vmul.f32 %v230, %v230
        %v232 = vsel %vm224, %v231, 0.0
        %233 = vadd.xlane.f32.xlu0 %v232
        %v234 = vpop.xlane.xlu0 %233
        %v235 = vrcp.pop 31.0
        %v236 = vmul.f32 %v234, %v235
        %v237 = vrsqrt.pop %v236
        %v238 = vmul.f32 %v236, %v237
        %vm239 = vcmp.eq.f32.partialorder %v236, inf
        %v240 = vsel %vm239, %v236, %v238
        %vm241 = vcmp.eq.f32.partialorder %v236, 0.0
        %v242 = vand.u32 %v236, 2147483648
        %v243 = vsel %vm241, %v242, %v240
        %v245 = vlaneseq
        %v246 = vshrl.u32 %v245, 7
        %v247 = vsub.s32 0, %v246
        %v248 = vrot.slane %v222, %v247
        %v250 = vmul.f32 %v248, %v230
        %v251 = vadd.f32 %v243, 1e-06
        %v252 = vrcp.pop %v251
        %v253 = vmul.f32 %v250, %v252
        %v255 = vlaneseq
        %v256 = vshrl.u32 %v255, 7
        %v257 = vsub.s32 0, %v256
        %v258 = vrot.slane %v223, %v257
        %v260 = vadd.f32 %v253, %v258
        %v261 = vpack.c.bf16 %v260, %v260
        %v262 = vld [vmem:[%s3] sm:$0xf]
        %v263 = vld [vmem:[%s3 + $0x4] sm:$0xf]
        %v264 = vld [vmem:[%s3 + $0x8] sm:$0xf]
        %v265 = vld [vmem:[%s3 + $0xc] sm:$0xf]
        %v266 = vld [vmem:[%s4] sm:$0x1]
        %v268 = vlaneseq
        %v269 = vshrl.u32 %v268, 7
        %v270 = vsub.s32 0, %v269
        %v271 = vrot.slane %v266, %v270
        %v277 = vunpack.c.l.b16 %v262
        %v278 = vunpack.c.l.b16 %v263
        %v279 = vunpack.c.l.b16 %v264
        %v280 = vunpack.c.l.b16 %v265
        %v281 = vpack.c.b16 %v278, %v277
        %v282 = vpack.c.b16 %v280, %v279
        %v286 = vsel %vm224, %v261, 0
        %288 = vmatprep.subr.bf16.mxu0 0
        %289 = vmatpush1.bf16.msra.mxu0 %v281
        %290 = vmatprep.subr.bf16.mxu0 0
        %291 = vmatpush1.bf16.msra.mxu0 %v282
        %292 = vmatprep.subr.bf16.mxu0 0
        %293 = vmatpush1.bf16.msra.mxu0 0
        %294 = vmatprep.subr.bf16.mxu0 0
        %295 = vmatpush1.bf16.msra.mxu0 0
        %296 = vmatprep.subr.bf16.mxu0 0
        %297 = vmatpush1.bf16.msra.mxu0 0
        %298 = vmatprep.subr.bf16.mxu0 0
        %299 = vmatpush1.bf16.msra.mxu0 0
        %300 = vmatprep.subr.bf16.mxu0 0
        %301 = vmatpush1.bf16.msra.mxu0 0
        %302 = vmatprep.subr.bf16.mxu0 0
        %303 = vmatpush1.bf16.msra.mxu0 0
        %304 = vmatprep.subr.bf16.mxu0 0
        %305 = vmatpush1.bf16.msra.mxu0 0
        %306 = vmatprep.subr.bf16.mxu0 0
        %307 = vmatpush1.bf16.msra.mxu0 0
        %308 = vmatprep.subr.bf16.mxu0 0
        %309 = vmatpush1.bf16.msra.mxu0 0
        %310 = vmatprep.subr.bf16.mxu0 0
        %311 = vmatpush1.bf16.msra.mxu0 0
        %312 = vmatprep.subr.bf16.mxu0 0
        %313 = vmatpush1.bf16.msra.mxu0 0
        %314 = vmatprep.subr.bf16.mxu0 0
        %315 = vmatpush1.bf16.msra.mxu0 0
        %316 = vmatprep.subr.bf16.mxu0 0
        %317 = vmatpush1.bf16.msra.mxu0 0
        %318 = vmatprep.subr.bf16.mxu0 0
        %319 = vmatpush1.bf16.msra.mxu0 0
        %320 = vmatprep.mubr.bf16.mxu0 0
        %321 = vmatmul.mubr.bf16.gmra.mrb[0].mxu0 %v286
        %v322 = vpop.f32.mrb[0].mxu0
        %v323 = vadd.f32 %v271, %v322
        %v324 = vpop.f32.mrb[0].mxu0
        %v325 = vpop.f32.mrb[0].mxu0
        %v326 = vpop.f32.mrb[0].mxu0
        %327 = vdwg.mxu0
        %328 = vst [vmem:[%s215] sm:$0xff] %v323
        %s329 = sand.u32 %s137, 1
        %s330 = scalar_lea.sflag [#allocation3], %s329
        %s331 = sand.u32 %s137, 1
        %s332 = smul.addr %s331, 8
        %s333 = scalar_lea.vmem [#allocation2], %s332
        // Predicated region
        $region41: #{transformer_forward.23} parent=39 // pred_check
          %p334 = pneg %p147
        $region42: #{transformer_forward.23} parent=39 // pred_check_branch
          %336 = sbr.rel (%p334) target = $region44
        $region43: #{transformer_forward.23} parent=39 // pred_region
          %s338 = ssub.s32 128, 128
          %339 = vsyncadd %s330, %s338
          %s340 = smul.addr %s19, 128
          %s341 = scalar_lea.hbm %s5, %s340
          %s343 = sshll.u32 %s333, 4
          %s344 = int_to_ptr.vmem [resolvable:$true] %s343
          %346 = dma.vmem_to_hbm [thread:$0]  %s344, 128, %s341, %s330
        $region44: #{transformer_forward.23} parent=39 // pred_fallthru
          _
      $region40: #{transformer_forward.23} parent=5 // pred_fallthru
        _
      %p347 = scmp.le.s32.totalorder 2, %s14
      // Predicated region
      $region45: #{transformer_forward.23} parent=5 // pred_check
        %p348 = pneg %p347
      $region46: #{transformer_forward.23} parent=5 // pred_check_branch
        %350 = sbr.rel (%p348) target = $region48
      $region47: #{transformer_forward.23} parent=5 // pred_region
        %s351 = ssub.s32 %s14, 2
        // Predicated region
        $region49: #{transformer_forward.23} parent=47 // pred_check
          %p352 = pneg %p153
        $region50: #{transformer_forward.23} parent=47 // pred_check_branch
          %354 = sbr.rel (%p352) target = $region52
        $region51: #{transformer_forward.23} parent=47 // pred_region
          %s355 = sand.u32 %s138, 1
          %s356 = scalar_lea.sflag [#allocation3], %s355
          %s357 = sand.u32 %s138, 1
          %s358 = smul.addr %s357, 8
          %s359 = scalar_lea.vmem [#allocation2], %s358
          %360 = dma.done %s356, 128
        $region52: #{transformer_forward.23} parent=47 // pred_fallthru
          _
      $region48: #{transformer_forward.23} parent=5 // pred_fallthru
        _
    $region6: #{transformer_forward.23} parent=1 // loop_footer
      %s18 = sadd.s32 1, %s14
    $region7: #{transformer_forward.23} parent=1 // loop_footer_branch
      %13 = sbr.rel target = $region3
    $region8: #{transformer_forward.23} parent=1 // loop_exit
      _
    %361 = vsyncpa [#allocation3], 1
    %s362 = scalar_lea.sflag [#allocation3], 1
    %363 = vsyncpa %s362, 1

// kernel: transformer_forward.13
$region0: #{transformer_forward.13}
  #allocation0 [shape = 'u32[]', space=smem, size = 0x4, offset = 0x4, fixed_abs, tag = 'smem constant byte address 0x4 - core index']
  #allocation1 [shape = 'u32[144,128]{1,0:T(1,128)}', space=vmem, size = 0x12000, scoped, tag = 'internal scratch']
  %s0 = inlined_call_operand.vmem [shape: f32[2,8,32], index: 0, kind: input, shape index: {}]
  %s1 = inlined_call_operand.vmem [shape: f32[1,32], index: 1, kind: input, shape index: {}]
  %s2 = inlined_call_operand.vmem [shape: f32[1,32], index: 2, kind: input, shape index: {}]
  %s3 = inlined_call_operand.vmem [shape: bf16[32,2048], index: 3, kind: input, shape index: {}]
  %s4 = inlined_call_operand.vmem [shape: f32[1,2048], index: 4, kind: input, shape index: {}]
  %s5 = inlined_call_operand.vmem [shape: bf16[2048,32], index: 5, kind: input, shape index: {}]
  %s6 = inlined_call_operand.vmem [shape: f32[1,32], index: 6, kind: input, shape index: {}]
  %s7 = inlined_call_operand.vmem [shape: f32[2,8,32], index: 7, kind: output, shape index: {}]
  %s8 = sld [smem:[#allocation0]]
  $region61: #{transformer_forward.13} parent=0
    _
  %s10 = ssub.s32 1, %s8
  %s11 = scalar_select 0, %s10, %s8
  loop: start=0, step=1, limit=4
  $region2: #{transformer_forward.13} parent=0 // loop_pre_header
    _
  $region3: #{transformer_forward.13} parent=0 // loop_header
    %s13 = sphi 0, %s17
    %p14 = scmp.ge.s32.totalorder %s13, 4
    %s23 = sphi 0, %s25
    %s26 = sphi 0, %s23
    %s27 = sphi 0, %s26
    %s43 = sphi 0, %s27
    %s47 = sphi 0, %s47
    %s49 = sphi 0, %s47
    %s50 = sphi 0, %s49
    %s64 = sphi 0, %s50
    %s68 = sphi 0, %s68
    %s70 = sphi 0, %s68
    %s71 = sphi 0, %s70
    %s85 = sphi 0, %s71
    %s89 = sphi 0, %s89
    %s91 = sphi 0, %s89
    %s92 = sphi 0, %s91
    %s106 = sphi 0, %s92
    %s110 = sphi 0, %s110
    %s112 = sphi 0, %s110
    %s113 = sphi 0, %s112
    %s127 = sphi 0, %s113
    %s131 = sphi 0, %s131
    %s133 = sphi 0, %s131
    %s134 = sphi 0, %s133
    %s148 = sphi 0, %s134
    %s152 = sphi 0, %s152
    %s154 = sphi 0, %s152
    %s155 = sphi 0, %s154
    %s169 = sphi 0, %s155
    %s175 = sphi 0, %s177
    %s178 = sphi 0, %s175
    %s179 = sphi 0, %s178
    %s195 = sphi 0, %s179
  $region4: #{transformer_forward.13} parent=0 // loop_header_branch
    %16 = sbr.rel (%p14) target = $region8
  $region5: #{transformer_forward.13} parent=0 // loop_body
    %s18 = ssub.s32 %s13, 1
    %s19 = ssub.s32 %s13, 2
    %s20 = sadd.s32 %s13, 1
    %s21 = ssub.s32 %s13, %s20
    %p22 = scmp.eq.s32.totalorder %s21, 0
    %s24 = sadd.s32 %s23, 1
    %s25 = scalar_select %p22, %s23, %s24
    %p28 = pneg %p22
    %p29 = scmp.eq.s32.totalorder %s13, 1
    %p30 = por %p28, %p29
    %p31 = scmp.ne.s32.totalorder %s23, %s26
    %p32 = scmp.eq.s32.totalorder %s13, 0
    %p33 = por %p31, %p32
    %p34 = scmp.ne.s32.totalorder %s23, %s26
    %p35 = scmp.eq.s32.totalorder %s18, 1
    %p36 = por %p34, %p35
    %p37 = scmp.ne.s32.totalorder %s26, %s27
    %p38 = scmp.eq.s32.totalorder %s18, 0
    %p39 = por %p37, %p38
    %p40 = scmp.ne.s32.totalorder %s26, %s27
    %p41 = scmp.eq.s32.totalorder %s19, 1
    %p42 = por %p40, %p41
    %p44 = scmp.ne.s32.totalorder %s27, %s43
    %p45 = scmp.eq.s32.totalorder %s19, 0
    %p46 = por %p44, %p45
    %s48 = sadd.s32 %s47, 1
    %p51 = scmp.eq.s32.totalorder %s13, 1
    %p52 = scmp.ne.s32.totalorder %s47, %s49
    %p53 = scmp.eq.s32.totalorder %s13, 0
    %p54 = por %p52, %p53
    %p55 = scmp.ne.s32.totalorder %s47, %s49
    %p56 = scmp.eq.s32.totalorder %s18, 1
    %p57 = por %p55, %p56
    %p58 = scmp.ne.s32.totalorder %s49, %s50
    %p59 = scmp.eq.s32.totalorder %s18, 0
    %p60 = por %p58, %p59
    %p61 = scmp.ne.s32.totalorder %s49, %s50
    %p62 = scmp.eq.s32.totalorder %s19, 1
    %p63 = por %p61, %p62
    %p65 = scmp.ne.s32.totalorder %s50, %s64
    %p66 = scmp.eq.s32.totalorder %s19, 0
    %p67 = por %p65, %p66
    %s69 = sadd.s32 %s68, 1
    %p72 = scmp.eq.s32.totalorder %s13, 1
    %p73 = scmp.ne.s32.totalorder %s68, %s70
    %p74 = scmp.eq.s32.totalorder %s13, 0
    %p75 = por %p73, %p74
    %p76 = scmp.ne.s32.totalorder %s68, %s70
    %p77 = scmp.eq.s32.totalorder %s18, 1
    %p78 = por %p76, %p77
    %p79 = scmp.ne.s32.totalorder %s70, %s71
    %p80 = scmp.eq.s32.totalorder %s18, 0
    %p81 = por %p79, %p80
    %p82 = scmp.ne.s32.totalorder %s70, %s71
    %p83 = scmp.eq.s32.totalorder %s19, 1
    %p84 = por %p82, %p83
    %p86 = scmp.ne.s32.totalorder %s71, %s85
    %p87 = scmp.eq.s32.totalorder %s19, 0
    %p88 = por %p86, %p87
    %s90 = sadd.s32 %s89, 1
    %p93 = scmp.eq.s32.totalorder %s13, 1
    %p94 = scmp.ne.s32.totalorder %s89, %s91
    %p95 = scmp.eq.s32.totalorder %s13, 0
    %p96 = por %p94, %p95
    %p97 = scmp.ne.s32.totalorder %s89, %s91
    %p98 = scmp.eq.s32.totalorder %s18, 1
    %p99 = por %p97, %p98
    %p100 = scmp.ne.s32.totalorder %s91, %s92
    %p101 = scmp.eq.s32.totalorder %s18, 0
    %p102 = por %p100, %p101
    %p103 = scmp.ne.s32.totalorder %s91, %s92
    %p104 = scmp.eq.s32.totalorder %s19, 1
    %p105 = por %p103, %p104
    %p107 = scmp.ne.s32.totalorder %s92, %s106
    %p108 = scmp.eq.s32.totalorder %s19, 0
    %p109 = por %p107, %p108
    %s111 = sadd.s32 %s110, 1
    %p114 = scmp.eq.s32.totalorder %s13, 1
    %p115 = scmp.ne.s32.totalorder %s110, %s112
    %p116 = scmp.eq.s32.totalorder %s13, 0
    %p117 = por %p115, %p116
    %p118 = scmp.ne.s32.totalorder %s110, %s112
    %p119 = scmp.eq.s32.totalorder %s18, 1
    %p120 = por %p118, %p119
    %p121 = scmp.ne.s32.totalorder %s112, %s113
    %p122 = scmp.eq.s32.totalorder %s18, 0
    %p123 = por %p121, %p122
    %p124 = scmp.ne.s32.totalorder %s112, %s113
    %p125 = scmp.eq.s32.totalorder %s19, 1
    %p126 = por %p124, %p125
    %p128 = scmp.ne.s32.totalorder %s113, %s127
    %p129 = scmp.eq.s32.totalorder %s19, 0
    %p130 = por %p128, %p129
    %s132 = sadd.s32 %s131, 1
    %p135 = scmp.eq.s32.totalorder %s13, 1
    %p136 = scmp.ne.s32.totalorder %s131, %s133
    %p137 = scmp.eq.s32.totalorder %s13, 0
    %p138 = por %p136, %p137
    %p139 = scmp.ne.s32.totalorder %s131, %s133
    %p140 = scmp.eq.s32.totalorder %s18, 1
    %p141 = por %p139, %p140
    %p142 = scmp.ne.s32.totalorder %s133, %s134
    %p143 = scmp.eq.s32.totalorder %s18, 0
    %p144 = por %p142, %p143
    %p145 = scmp.ne.s32.totalorder %s133, %s134
    %p146 = scmp.eq.s32.totalorder %s19, 1
    %p147 = por %p145, %p146
    %p149 = scmp.ne.s32.totalorder %s134, %s148
    %p150 = scmp.eq.s32.totalorder %s19, 0
    %p151 = por %p149, %p150
    %s153 = sadd.s32 %s152, 1
    %p156 = scmp.eq.s32.totalorder %s13, 1
    %p157 = scmp.ne.s32.totalorder %s152, %s154
    %p158 = scmp.eq.s32.totalorder %s13, 0
    %p159 = por %p157, %p158
    %p160 = scmp.ne.s32.totalorder %s152, %s154
    %p161 = scmp.eq.s32.totalorder %s18, 1
    %p162 = por %p160, %p161
    %p163 = scmp.ne.s32.totalorder %s154, %s155
    %p164 = scmp.eq.s32.totalorder %s18, 0
    %p165 = por %p163, %p164
    %p166 = scmp.ne.s32.totalorder %s154, %s155
    %p167 = scmp.eq.s32.totalorder %s19, 1
    %p168 = por %p166, %p167
    %p170 = scmp.ne.s32.totalorder %s155, %s169
    %p171 = scmp.eq.s32.totalorder %s19, 0
    %p172 = por %p170, %p171
    %s173 = ssub.s32 %s13, %s20
    %p174 = scmp.eq.s32.totalorder %s173, 0
    %s176 = sadd.s32 %s175, 1
    %s177 = scalar_select %p174, %s175, %s176
    %p180 = pneg %p174
    %p181 = scmp.eq.s32.totalorder %s13, 1
    %p182 = por %p180, %p181
    %p183 = scmp.ne.s32.totalorder %s175, %s178
    %p184 = scmp.eq.s32.totalorder %s13, 0
    %p185 = por %p183, %p184
    %p186 = scmp.ne.s32.totalorder %s175, %s178
    %p187 = scmp.eq.s32.totalorder %s18, 1
    %p188 = por %p186, %p187
    %p189 = scmp.ne.s32.totalorder %s178, %s179
    %p190 = scmp.eq.s32.totalorder %s18, 0
    %p191 = por %p189, %p190
    %p192 = scmp.ne.s32.totalorder %s178, %s179
    %p193 = scmp.eq.s32.totalorder %s19, 1
    %p194 = por %p192, %p193
    %p196 = scmp.ne.s32.totalorder %s179, %s195
    %p197 = scmp.eq.s32.totalorder %s19, 0
    %p198 = por %p196, %p197
    %p199 = scmp.le.s32.totalorder 1, %s13
    %p200 = scmp.lt.s32.totalorder %s13, 3
    %p201 = pnand %p199, %p200
    %p202 = pneg %p201
    // Predicated region
    $region9: #{transformer_forward.13} parent=5 // pred_check
      _
    $region10: #{transformer_forward.13} parent=5 // pred_check_branch
      %204 = sbr.rel (%p201) target = $region12
    $region11: #{transformer_forward.13} parent=5 // pred_region
      %s205 = ssub.s32 %s13, 1
      // Predicated region
      $region13: #{transformer_forward.13} parent=11 // pred_check
        %p206 = pneg %p60
      $region14: #{transformer_forward.13} parent=11 // pred_check_branch
        %208 = sbr.rel (%p206) target = $region16
      $region15: #{transformer_forward.13} parent=11 // pred_region
        _
      $region16: #{transformer_forward.13} parent=11 // pred_fallthru
        _
      // Predicated region
      $region17: #{transformer_forward.13} parent=11 // pred_check
        %p209 = pneg %p81
      $region18: #{transformer_forward.13} parent=11 // pred_check_branch
        %211 = sbr.rel (%p209) target = $region20
      $region19: #{transformer_forward.13} parent=11 // pred_region
        _
      $region20: #{transformer_forward.13} parent=11 // pred_fallthru
        _
      // Predicated region
      $region21: #{transformer_forward.13} parent=11 // pred_check
        %p212 = pneg %p102
      $region22: #{transformer_forward.13} parent=11 // pred_check_branch
        %214 = sbr.rel (%p212) target = $region24
      $region23: #{transformer_forward.13} parent=11 // pred_region
        _
      $region24: #{transformer_forward.13} parent=11 // pred_fallthru
        _
      // Predicated region
      $region25: #{transformer_forward.13} parent=11 // pred_check
        %p215 = pneg %p123
      $region26: #{transformer_forward.13} parent=11 // pred_check_branch
        %217 = sbr.rel (%p215) target = $region28
      $region27: #{transformer_forward.13} parent=11 // pred_region
        _
      $region28: #{transformer_forward.13} parent=11 // pred_fallthru
        _
      // Predicated region
      $region29: #{transformer_forward.13} parent=11 // pred_check
        %p218 = pneg %p144
      $region30: #{transformer_forward.13} parent=11 // pred_check_branch
        %220 = sbr.rel (%p218) target = $region32
      $region31: #{transformer_forward.13} parent=11 // pred_region
        _
      $region32: #{transformer_forward.13} parent=11 // pred_fallthru
        _
      // Predicated region
      $region33: #{transformer_forward.13} parent=11 // pred_check
        %p221 = pneg %p165
      $region34: #{transformer_forward.13} parent=11 // pred_check_branch
        %223 = sbr.rel (%p221) target = $region36
      $region35: #{transformer_forward.13} parent=11 // pred_region
        _
      $region36: #{transformer_forward.13} parent=11 // pred_fallthru
        _
    $region12: #{transformer_forward.13} parent=5 // pred_fallthru
      _
    %p224 = scmp.lt.s32.totalorder %s13, 2
    // Predicated region
    $region37: #{transformer_forward.13} parent=5 // pred_check
      %p225 = pneg %p224
    $region38: #{transformer_forward.13} parent=5 // pred_check_branch
      %227 = sbr.rel (%p225) target = $region40
    $region39: #{transformer_forward.13} parent=5 // pred_region
      // Predicated region
      $region41: #{transformer_forward.13} parent=39 // pred_check
        %p228 = pneg %p33
      $region42: #{transformer_forward.13} parent=39 // pred_check_branch
        %230 = sbr.rel (%p228) target = $region44
      $region43: #{transformer_forward.13} parent=39 // pred_region
        %p231 = scmp.lt.s32.totalorder %s13, 1
        %s232 = scalar_select %p231, %s13, 1
        %s233 = smul.addr %s232, 8
        %s234 = scalar_lea.vmem %s0, %s233
      $region44: #{transformer_forward.13} parent=39 // pred_fallthru
        _
    $region40: #{transformer_forward.13} parent=5 // pred_fallthru
      _
    %p235 = scmp.le.s32.totalorder 1, %s13
    %p236 = scmp.lt.s32.totalorder %s13, 3
    %p237 = pnand %p235, %p236
    %p238 = pneg %p237
    // Predicated region
    $region45: #{transformer_forward.13} parent=5 // pred_check
      _
    $region46: #{transformer_forward.13} parent=5 // pred_check_branch
      %240 = sbr.rel (%p237) target = $region48
    $region47: #{transformer_forward.13} parent=5 // pred_region
      %s241 = ssub.s32 %s13, 1
      %p242 = scmp.lt.s32.totalorder %s18, 1
      %s243 = scalar_select %p242, %s18, 1
      %s244 = smul.addr %s243, 8
      %s245 = scalar_lea.vmem %s0, %s244
      %p246 = pneg %p39
      %p247 = pneg %p36
      %p248 = pneg %p60
      %p249 = pneg %p57
      %p250 = pneg %p81
      %p251 = pneg %p78
      %p252 = pneg %p102
      %p253 = pneg %p99
      %p254 = pneg %p123
      %p255 = pneg %p120
      %p256 = pneg %p144
      %p257 = pneg %p141
      %p258 = pneg %p165
      %p259 = pneg %p162
      %p260 = pneg %p191
      %p261 = pneg %p188
      %p262 = scmp.lt.s32.totalorder %s18, 1
      %s263 = scalar_select %p262, %s18, 1
      %s264 = smul.addr %s263, 8
      %s265 = scalar_lea.vmem %s7, %s264
      %p266 = scmp.lt.s32.totalorder %s18, 1
      %s267 = scalar_select %p266, %s18, 1
      %s268 = smul.addr %s267, 8
      %s269 = scalar_lea.vmem %s0, %s268
      %p270 = scmp.lt.s32.totalorder %s18, 1
      %s271 = scalar_select %p270, %s18, 1
      %s272 = smul.addr %s271, 8
      %s273 = scalar_lea.vmem %s7, %s272
      %v275 = vld [vmem:[%s269] sm:$0xff]
      %v276 = vld [vmem:[%s1] sm:$0x1]
      %v277 = vld [vmem:[%s2] sm:$0x1]
      %vm278 = vcmask 261120
      %v279 = vsel %vm278, %v275, 0.0
      %280 = vadd.xlane.f32.xlu0 %v279
      %v281 = vpop.xlane.xlu0 %280
      %v282 = vrcp.pop 32.0
      %v283 = vmul.f32 %v281, %v282
      %v284 = vsub.f32 %v275, %v283
      %v285 = vmul.f32 %v284, %v284
      %v286 = vsel %vm278, %v285, 0.0
      %287 = vadd.xlane.f32.xlu0 %v286
      %v288 = vpop.xlane.xlu0 %287
      %v289 = vrcp.pop 31.0
      %v290 = vmul.f32 %v288, %v289
      %v291 = vrsqrt.pop %v290
      %v292 = vmul.f32 %v290, %v291
      %vm293 = vcmp.eq.f32.partialorder %v290, inf
      %v294 = vsel %vm293, %v290, %v292
      %vm295 = vcmp.eq.f32.partialorder %v290, 0.0
      %v296 = vand.u32 %v290, 2147483648
      %v297 = vsel %vm295, %v296, %v294
      %v299 = vlaneseq
      %v300 = vshrl.u32 %v299, 7
      %v301 = vsub.s32 0, %v300
      %v302 = vrot.slane %v276, %v301
      %v304 = vmul.f32 %v302, %v284
      %v305 = vadd.f32 %v297, 1e-06
      %v306 = vrcp.pop %v305
      %v307 = vmul.f32 %v304, %v306
      %v309 = vlaneseq
      %v310 = vshrl.u32 %v309, 7
      %v311 = vsub.s32 0, %v310
      %v312 = vrot.slane %v277, %v311
      %v314 = vadd.f32 %v307, %v312
      %v315 = vpack.c.bf16 %v314, %v314
      %v316 = vld [vmem:[%s3] sm:$0xff]
      %v317 = vld [vmem:[%s3 + $0x8] sm:$0xff]
      %v318 = vld [vmem:[%s3 + $0x10] sm:$0xff]
      %v319 = vld [vmem:[%s3 + $0x18] sm:$0xff]
      %v320 = vld [vmem:[%s3 + $0x20] sm:$0xff]
      %v321 = vld [vmem:[%s3 + $0x28] sm:$0xff]
      %v322 = vld [vmem:[%s3 + $0x30] sm:$0xff]
      %v323 = vld [vmem:[%s3 + $0x38] sm:$0xff]
      %v324 = vld [vmem:[%s3 + $0x40] sm:$0xff]
      %v325 = vld [vmem:[%s3 + $0x48] sm:$0xff]
      %v326 = vld [vmem:[%s3 + $0x50] sm:$0xff]
      %v327 = vld [vmem:[%s3 + $0x58] sm:$0xff]
      %v328 = vld [vmem:[%s3 + $0x60] sm:$0xff]
      %v329 = vld [vmem:[%s3 + $0x68] sm:$0xff]
      %v330 = vld [vmem:[%s3 + $0x70] sm:$0xff]
      %v331 = vld [vmem:[%s3 + $0x78] sm:$0xff]
      %v332 = vld [vmem:[%s3 + $0x80] sm:$0xff]
      %v333 = vld [vmem:[%s3 + $0x88] sm:$0xff]
      %v334 = vld [vmem:[%s3 + $0x90] sm:$0xff]
      %v335 = vld [vmem:[%s3 + $0x98] sm:$0xff]
      %v336 = vld [vmem:[%s3 + $0xa0] sm:$0xff]
      %v337 = vld [vmem:[%s3 + $0xa8] sm:$0xff]
      %v338 = vld [vmem:[%s3 + $0xb0] sm:$0xff]
      %v339 = vld [vmem:[%s3 + $0xb8] sm:$0xff]
      %v340 = vld [vmem:[%s3 + $0xc0] sm:$0xff]
      %v341 = vld [vmem:[%s3 + $0xc8] sm:$0xff]
      %v342 = vld [vmem:[%s3 + $0xd0] sm:$0xff]
      %v343 = vld [vmem:[%s3 + $0xd8] sm:$0xff]
      %v344 = vld [vmem:[%s3 + $0xe0] sm:$0xff]
      %v345 = vld [vmem:[%s3 + $0xe8] sm:$0xff]
      %v346 = vld [vmem:[%s3 + $0xf0] sm:$0xff]
      %v347 = vld [vmem:[%s3 + $0xf8] sm:$0xff]
      %v348 = vld [vmem:[%s4] sm:$0xff]
      %v349 = vld [vmem:[%s4 + $0x8] sm:$0xff]
      %v352 = vlaneseq
      %v353 = vshrl.u32 %v352, 7
      %v354 = vsub.s32 0, %v353
      %v355 = vrot.slane %v348, %v354
      %v356 = vlaneseq
      %v357 = vshrl.u32 %v356, 7
      %v358 = vsub.s32 1, %v357
      %v359 = vrot.slane %v348, %v358
      %v360 = vlaneseq
      %v361 = vshrl.u32 %v360, 7
      %v362 = vsub.s32 2, %v361
      %v363 = vrot.slane %v348, %v362
      %v364 = vlaneseq
      %v365 = vshrl.u32 %v364, 7
      %v366 = vsub.s32 3, %v365
      %v367 = vrot.slane %v348, %v366
      %v368 = vlaneseq
      %v369 = vshrl.u32 %v368, 7
      %v370 = vsub.s32 4, %v369
      %v371 = vrot.slane %v348, %v370
      %v372 = vlaneseq
      %v373 = vshrl.u32 %v372, 7
      %v374 = vsub.s32 5, %v373
      %v375 = vrot.slane %v348, %v374
      %v376 = vlaneseq
      %v377 = vshrl.u32 %v376, 7
      %v378 = vsub.s32 6, %v377
      %v379 = vrot.slane %v348, %v378
      %v380 = vlaneseq
      %v381 = vshrl.u32 %v380, 7
      %v382 = vsub.s32 7, %v381
      %v383 = vrot.slane %v348, %v382
      %v384 = vlaneseq
      %v385 = vshrl.u32 %v384, 7
      %v386 = vsub.s32 0, %v385
      %v387 = vrot.slane %v349, %v386
      %v388 = vlaneseq
      %v389 = vshrl.u32 %v388, 7
      %v390 = vsub.s32 1, %v389
      %v391 = vrot.slane %v349, %v390
      %v392 = vlaneseq
      %v393 = vshrl.u32 %v392, 7
      %v394 = vsub.s32 2, %v393
      %v395 = vrot.slane %v349, %v394
      %v396 = vlaneseq
      %v397 = vshrl.u32 %v396, 7
      %v398 = vsub.s32 3, %v397
      %v399 = vrot.slane %v349, %v398
      %v400 = vlaneseq
      %v401 = vshrl.u32 %v400, 7
      %v402 = vsub.s32 4, %v401
      %v403 = vrot.slane %v349, %v402
      %v404 = vlaneseq
      %v405 = vshrl.u32 %v404, 7
      %v406 = vsub.s32 5, %v405
      %v407 = vrot.slane %v349, %v406
      %v408 = vlaneseq
      %v409 = vshrl.u32 %v408, 7
      %v410 = vsub.s32 6, %v409
      %v411 = vrot.slane %v349, %v410
      %v412 = vlaneseq
      %v413 = vshrl.u32 %v412, 7
      %v414 = vsub.s32 7, %v413
      %v415 = vrot.slane %v349, %v414
      %v464 = vunpack.c.l.b16 %v316
      %v465 = vunpack.c.h.b16 %v316
      %v466 = vunpack.c.l.b16 %v317
      %v467 = vunpack.c.h.b16 %v317
      %v468 = vunpack.c.l.b16 %v318
      %v469 = vunpack.c.h.b16 %v318
      %v470 = vunpack.c.l.b16 %v319
      %v471 = vunpack.c.h.b16 %v319
      %v472 = vunpack.c.l.b16 %v320
      %v473 = vunpack.c.h.b16 %v320
      %v474 = vunpack.c.l.b16 %v321
      %v475 = vunpack.c.h.b16 %v321
      %v476 = vunpack.c.l.b16 %v322
      %v477 = vunpack.c.h.b16 %v322
      %v478 = vunpack.c.l.b16 %v323
      %v479 = vunpack.c.h.b16 %v323
      %v480 = vunpack.c.l.b16 %v324
      %v481 = vunpack.c.h.b16 %v324
      %v482 = vunpack.c.l.b16 %v325
      %v483 = vunpack.c.h.b16 %v325
      %v484 = vunpack.c.l.b16 %v326
      %v485 = vunpack.c.h.b16 %v326
      %v486 = vunpack.c.l.b16 %v327
      %v487 = vunpack.c.h.b16 %v327
      %v488 = vunpack.c.l.b16 %v328
      %v489 = vunpack.c.h.b16 %v328
      %v490 = vunpack.c.l.b16 %v329
      %v491 = vunpack.c.h.b16 %v329
      %v492 = vunpack.c.l.b16 %v330
      %v493 = vunpack.c.h.b16 %v330
      %v494 = vunpack.c.l.b16 %v331
      %v495 = vunpack.c.h.b16 %v331
      %v496 = vunpack.c.l.b16 %v332
      %v497 = vunpack.c.h.b16 %v332
      %v498 = vunpack.c.l.b16 %v333
      %v499 = vunpack.c.h.b16 %v333
      %v500 = vunpack.c.l.b16 %v334
      %v501 = vunpack.c.h.b16 %v334
      %v502 = vunpack.c.l.b16 %v335
      %v503 = vunpack.c.h.b16 %v335
      %v504 = vunpack.c.l.b16 %v336
      %v505 = vunpack.c.h.b16 %v336
      %v506 = vunpack.c.l.b16 %v337
      %v507 = vunpack.c.h.b16 %v337
      %v508 = vunpack.c.l.b16 %v338
      %v509 = vunpack.c.h.b16 %v338
      %v510 = vunpack.c.l.b16 %v339
      %v511 = vunpack.c.h.b16 %v339
      %v512 = vunpack.c.l.b16 %v340
      %v513 = vunpack.c.h.b16 %v340
      %v514 = vunpack.c.l.b16 %v341
      %v515 = vunpack.c.h.b16 %v341
      %v516 = vunpack.c.l.b16 %v342
      %v517 = vunpack.c.h.b16 %v342
      %v518 = vunpack.c.l.b16 %v343
      %v519 = vunpack.c.h.b16 %v343
      %v520 = vunpack.c.l.b16 %v344
      %v521 = vunpack.c.h.b16 %v344
      %v522 = vunpack.c.l.b16 %v345
      %v523 = vunpack.c.h.b16 %v345
      %v524 = vunpack.c.l.b16 %v346
      %v525 = vunpack.c.h.b16 %v346
      %v526 = vunpack.c.l.b16 %v347
      %v527 = vunpack.c.h.b16 %v347
      %v528 = vpack.c.b16 %v480, %v464
      %v529 = vpack.c.b16 %v481, %v465
      %v530 = vpack.c.b16 %v482, %v466
      %v531 = vpack.c.b16 %v483, %v467
      %v532 = vpack.c.b16 %v484, %v468
      %v533 = vpack.c.b16 %v485, %v469
      %v534 = vpack.c.b16 %v486, %v470
      %v535 = vpack.c.b16 %v487, %v471
      %v536 = vpack.c.b16 %v488, %v472
      %v537 = vpack.c.b16 %v489, %v473
      %v538 = vpack.c.b16 %v490, %v474
      %v539 = vpack.c.b16 %v491, %v475
      %v540 = vpack.c.b16 %v492, %v476
      %v541 = vpack.c.b16 %v493, %v477
      %v542 = vpack.c.b16 %v494, %v478
      %v543 = vpack.c.b16 %v495, %v479
      %v544 = vpack.c.b16 %v512, %v496
      %v545 = vpack.c.b16 %v513, %v497
      %v546 = vpack.c.b16 %v514, %v498
      %v547 = vpack.c.b16 %v515, %v499
      %v548 = vpack.c.b16 %v516, %v500
      %v549 = vpack.c.b16 %v517, %v501
      %v550 = vpack.c.b16 %v518, %v502
      %v551 = vpack.c.b16 %v519, %v503
      %v552 = vpack.c.b16 %v520, %v504
      %v553 = vpack.c.b16 %v521, %v505
      %v554 = vpack.c.b16 %v522, %v506
      %v555 = vpack.c.b16 %v523, %v507
      %v556 = vpack.c.b16 %v524, %v508
      %v557 = vpack.c.b16 %v525, %v509
      %v558 = vpack.c.b16 %v526, %v510
      %v559 = vpack.c.b16 %v527, %v511
      %v593 = vsel %vm278, %v315, 0
      %595 = vmatprep.subr.bf16.mxu0 %v529
      %596 = vmatpush1.bf16.msra.mxu0 %v528
      %597 = vmatprep.subr.bf16.mxu0 %v545
      %598 = vmatpush1.bf16.msra.mxu0 %v544
      %599 = vmatprep.subr.bf16.mxu0 0
      %600 = vmatpush1.bf16.msra.mxu0 0
      %601 = vmatprep.subr.bf16.mxu0 0
      %602 = vmatpush1.bf16.msra.mxu0 0
      %603 = vmatprep.subr.bf16.mxu0 0
      %604 = vmatpush1.bf16.msra.mxu0 0
      %605 = vmatprep.subr.bf16.mxu0 0
      %606 = vmatpush1.bf16.msra.mxu0 0
      %607 = vmatprep.subr.bf16.mxu0 0
      %608 = vmatpush1.bf16.msra.mxu0 0
      %609 = vmatprep.subr.bf16.mxu0 0
      %610 = vmatpush1.bf16.msra.mxu0 0
      %611 = vmatprep.subr.bf16.mxu0 0
      %612 = vmatpush1.bf16.msra.mxu0 0
      %613 = vmatprep.subr.bf16.mxu0 0
      %614 = vmatpush1.bf16.msra.mxu0 0
      %615 = vmatprep.subr.bf16.mxu0 0
      %616 = vmatpush1.bf16.msra.mxu0 0
      %617 = vmatprep.subr.bf16.mxu0 0
      %618 = vmatpush1.bf16.msra.mxu0 0
      %619 = vmatprep.subr.bf16.mxu0 0
      %620 = vmatpush1.bf16.msra.mxu0 0
      %621 = vmatprep.subr.bf16.mxu0 0
      %622 = vmatpush1.bf16.msra.mxu0 0
      %623 = vmatprep.subr.bf16.mxu0 0
      %624 = vmatpush1.bf16.msra.mxu0 0
      %625 = vmatprep.subr.bf16.mxu0 0
      %626 = vmatpush1.bf16.msra.mxu0 0
      %627 = vmatprep.mubr.bf16.mxu0 0
      %628 = vmatmul.mubr.bf16.gmra.mrb[0].mxu0 %v593
      %v629 = vpop.f32.mrb[0].mxu0
      %v630 = vadd.f32 %v355, %v629
      %v631 = vpop.f32.mrb[0].mxu0
      %v632 = vadd.f32 %v359, %v631
      %v633 = vpop.f32.mrb[0].mxu0
      %v634 = vpop.f32.mrb[0].mxu0
      %635 = vdwg.mxu0
      %636 = vmatprep.subr.bf16.mxu0 %v531
      %637 = vmatpush1.bf16.msra.mxu0 %v530
      %638 = vmatprep.subr.bf16.mxu0 %v547
      %639 = vmatpush1.bf16.msra.mxu0 %v546
      %640 = vmatprep.subr.bf16.mxu0 0
      %641 = vmatpush1.bf16.msra.mxu0 0
      %642 = vmatprep.subr.bf16.mxu0 0
      %643 = vmatpush1.bf16.msra.mxu0 0
      %644 = vmatprep.subr.bf16.mxu0 0
      %645 = vmatpush1.bf16.msra.mxu0 0
      %646 = vmatprep.subr.bf16.mxu0 0
      %647 = vmatpush1.bf16.msra.mxu0 0
      %648 = vmatprep.subr.bf16.mxu0 0
      %649 = vmatpush1.bf16.msra.mxu0 0
      %650 = vmatprep.subr.bf16.mxu0 0
      %651 = vmatpush1.bf16.msra.mxu0 0
      %652 = vmatprep.subr.bf16.mxu0 0
      %653 = vmatpush1.bf16.msra.mxu0 0
      %654 = vmatprep.subr.bf16.mxu0 0
      %655 = vmatpush1.bf16.msra.mxu0 0
      %656 = vmatprep.subr.bf16.mxu0 0
      %657 = vmatpush1.bf16.msra.mxu0 0
      %658 = vmatprep.subr.bf16.mxu0 0
      %659 = vmatpush1.bf16.msra.mxu0 0
      %660 = vmatprep.subr.bf16.mxu0 0
      %661 = vmatpush1.bf16.msra.mxu0 0
      %662 = vmatprep.subr.bf16.mxu0 0
      %663 = vmatpush1.bf16.msra.mxu0 0
      %664 = vmatprep.subr.bf16.mxu0 0
      %665 = vmatpush1.bf16.msra.mxu0 0
      %666 = vmatprep.subr.bf16.mxu0 0
      %667 = vmatpush1.bf16.msra.mxu0 0
      %668 = vmatprep.mubr.bf16.mxu0 0
      %669 = vmatmul.mubr.bf16.gmra.mrb[0].mxu0 %v593
      %v670 = vpop.f32.mrb[0].mxu0
      %v671 = vadd.f32 %v363, %v670
      %v672 = vpop.f32.mrb[0].mxu0
      %v673 = vadd.f32 %v367, %v672
      %v674 = vpop.f32.mrb[0].mxu0
      %v675 = vpop.f32.mrb[0].mxu0
      %676 = vdwg.mxu0
      %677 = vmatprep.subr.bf16.mxu0 %v533
      %678 = vmatpush1.bf16.msra.mxu0 %v532
      %679 = vmatprep.subr.bf16.mxu0 %v549
      %680 = vmatpush1.bf16.msra.mxu0 %v548
      %681 = vmatprep.subr.bf16.mxu0 0
      %682 = vmatpush1.bf16.msra.mxu0 0
      %683 = vmatprep.subr.bf16.mxu0 0
      %684 = vmatpush1.bf16.msra.mxu0 0
      %685 = vmatprep.subr.bf16.mxu0 0
      %686 = vmatpush1.bf16.msra.mxu0 0
      %687 = vmatprep.subr.bf16.mxu0 0
      %688 = vmatpush1.bf16.msra.mxu0 0
      %689 = vmatprep.subr.bf16.mxu0 0
      %690 = vmatpush1.bf16.msra.mxu0 0
      %691 = vmatprep.subr.bf16.mxu0 0
      %692 = vmatpush1.bf16.msra.mxu0 0
      %693 = vmatprep.subr.bf16.mxu0 0
      %694 = vmatpush1.bf16.msra.mxu0 0
      %695 = vmatprep.subr.bf16.mxu0 0
      %696 = vmatpush1.bf16.msra.mxu0 0
      %697 = vmatprep.subr.bf16.mxu0 0
      %698 = vmatpush1.bf16.msra.mxu0 0
      %699 = vmatprep.subr.bf16.mxu0 0
      %700 = vmatpush1.bf16.msra.mxu0 0
      %701 = vmatprep.subr.bf16.mxu0 0
      %702 = vmatpush1.bf16.msra.mxu0 0
      %703 = vmatprep.subr.bf16.mxu0 0
      %704 = vmatpush1.bf16.msra.mxu0 0
      %705 = vmatprep.subr.bf16.mxu0 0
      %706 = vmatpush1.bf16.msra.mxu0 0
      %707 = vmatprep.subr.bf16.mxu0 0
      %708 = vmatpush1.bf16.msra.mxu0 0
      %709 = vmatprep.mubr.bf16.mxu0 0
      %710 = vmatmul.mubr.bf16.gmra.mrb[0].mxu0 %v593
      %v711 = vpop.f32.mrb[0].mxu0
      %v712 = vadd.f32 %v371, %v711
      %v713 = vpop.f32.mrb[0].mxu0
      %v714 = vadd.f32 %v375, %v713
      %v715 = vpop.f32.mrb[0].mxu0
      %v716 = vpop.f32.mrb[0].mxu0
      %717 = vdwg.mxu0
      %718 = vmatprep.subr.bf16.mxu0 %v535
      %719 = vmatpush1.bf16.msra.mxu0 %v534
      %720 = vmatprep.subr.bf16.mxu0 %v551
      %721 = vmatpush1.bf16.msra.mxu0 %v550
      %722 = vmatprep.subr.bf16.mxu0 0
      %723 = vmatpush1.bf16.msra.mxu0 0
      %724 = vmatprep.subr.bf16.mxu0 0
      %725 = vmatpush1.bf16.msra.mxu0 0
      %726 = vmatprep.subr.bf16.mxu0 0
      %727 = vmatpush1.bf16.msra.mxu0 0
      %728 = vmatprep.subr.bf16.mxu0 0
      %729 = vmatpush1.bf16.msra.mxu0 0
      %730 = vmatprep.subr.bf16.mxu0 0
      %731 = vmatpush1.bf16.msra.mxu0 0
      %732 = vmatprep.subr.bf16.mxu0 0
      %733 = vmatpush1.bf16.msra.mxu0 0
      %734 = vmatprep.subr.bf16.mxu0 0
      %735 = vmatpush1.bf16.msra.mxu0 0
      %736 = vmatprep.subr.bf16.mxu0 0
      %737 = vmatpush1.bf16.msra.mxu0 0
      %738 = vmatprep.subr.bf16.mxu0 0
      %739 = vmatpush1.bf16.msra.mxu0 0
      %740 = vmatprep.subr.bf16.mxu0 0
      %741 = vmatpush1.bf16.msra.mxu0 0
      %742 = vmatprep.subr.bf16.mxu0 0
      %743 = vmatpush1.bf16.msra.mxu0 0
      %744 = vmatprep.subr.bf16.mxu0 0
      %745 = vmatpush1.bf16.msra.mxu0 0
      %746 = vmatprep.subr.bf16.mxu0 0
      %747 = vmatpush1.bf16.msra.mxu0 0
      %748 = vmatprep.subr.bf16.mxu0 0
      %749 = vmatpush1.bf16.msra.mxu0 0
      %750 = vmatprep.mubr.bf16.mxu0 0
      %751 = vmatmul.mubr.bf16.gmra.mrb[0].mxu0 %v593
      %v752 = vpop.f32.mrb[0].mxu0
      %v753 = vadd.f32 %v379, %v752
      %v754 = vpop.f32.mrb[0].mxu0
      %v755 = vadd.f32 %v383, %v754
      %v756 = vpop.f32.mrb[0].mxu0
      %v757 = vpop.f32.mrb[0].mxu0
      %758 = vdwg.mxu0
      %759 = vmatprep.subr.bf16.mxu0 %v537
      %760 = vmatpush1.bf16.msra.mxu0 %v536
      %761 = vmatprep.subr.bf16.mxu0 %v553
      %762 = vmatpush1.bf16.msra.mxu0 %v552
      %763 = vmatprep.subr.bf16.mxu0 0
      %764 = vmatpush1.bf16.msra.mxu0 0
      %765 = vmatprep.subr.bf16.mxu0 0
      %766 = vmatpush1.bf16.msra.mxu0 0
      %767 = vmatprep.subr.bf16.mxu0 0
      %768 = vmatpush1.bf16.msra.mxu0 0
      %769 = vmatprep.subr.bf16.mxu0 0
      %770 = vmatpush1.bf16.msra.mxu0 0
      %771 = vmatprep.subr.bf16.mxu0 0
      %772 = vmatpush1.bf16.msra.mxu0 0
      %773 = vmatprep.subr.bf16.mxu0 0
      %774 = vmatpush1.bf16.msra.mxu0 0
      %775 = vmatprep.subr.bf16.mxu0 0
      %776 = vmatpush1.bf16.msra.mxu0 0
      %777 = vmatprep.subr.bf16.mxu0 0
      %778 = vmatpush1.bf16.msra.mxu0 0
      %779 = vmatprep.subr.bf16.mxu0 0
      %780 = vmatpush1.bf16.msra.mxu0 0
      %781 = vmatprep.subr.bf16.mxu0 0
      %782 = vmatpush1.bf16.msra.mxu0 0
      %783 = vmatprep.subr.bf16.mxu0 0
      %784 = vmatpush1.bf16.msra.mxu0 0
      %785 = vmatprep.subr.bf16.mxu0 0
      %786 = vmatpush1.bf16.msra.mxu0 0
      %787 = vmatprep.subr.bf16.mxu0 0
      %788 = vmatpush1.bf16.msra.mxu0 0
      %789 = vmatprep.subr.bf16.mxu0 0
      %790 = vmatpush1.bf16.msra.mxu0 0
      %791 = vmatprep.mubr.bf16.mxu0 0
      %792 = vmatmul.mubr.bf16.gmra.mrb[0].mxu0 %v593
      %v793 = vpop.f32.mrb[0].mxu0
      %v794 = vadd.f32 %v387, %v793
      %v795 = vpop.f32.mrb[0].mxu0
      %v796 = vadd.f32 %v391, %v795
      %v797 = vpop.f32.mrb[0].mxu0
      %v798 = vpop.f32.mrb[0].mxu0
      %799 = vdwg.mxu0
      %800 = vmatprep.subr.bf16.mxu0 %v539
      %801 = vmatpush1.bf16.msra.mxu0 %v538
      %802 = vmatprep.subr.bf16.mxu0 %v555
      %803 = vmatpush1.bf16.msra.mxu0 %v554
      %804 = vmatprep.subr.bf16.mxu0 0
      %805 = vmatpush1.bf16.msra.mxu0 0
      %806 = vmatprep.subr.bf16.mxu0 0
      %807 = vmatpush1.bf16.msra.mxu0 0
      %808 = vmatprep.subr.bf16.mxu0 0
      %809 = vmatpush1.bf16.msra.mxu0 0
      %810 = vmatprep.subr.bf16.mxu0 0
      %811 = vmatpush1.bf16.msra.mxu0 0
      %812 = vmatprep.subr.bf16.mxu0 0
      %813 = vmatpush1.bf16.msra.mxu0 0
      %814 = vmatprep.subr.bf16.mxu0 0
      %815 = vmatpush1.bf16.msra.mxu0 0
      %816 = vmatprep.subr.bf16.mxu0 0
      %817 = vmatpush1.bf16.msra.mxu0 0
      %818 = vmatprep.subr.bf16.mxu0 0
      %819 = vmatpush1.bf16.msra.mxu0 0
      %820 = vmatprep.subr.bf16.mxu0 0
      %821 = vmatpush1.bf16.msra.mxu0 0
      %822 = vmatprep.subr.bf16.mxu0 0
      %823 = vmatpush1.bf16.msra.mxu0 0
      %824 = vmatprep.subr.bf16.mxu0 0
      %825 = vmatpush1.bf16.msra.mxu0 0
      %826 = vmatprep.subr.bf16.mxu0 0
      %827 = vmatpush1.bf16.msra.mxu0 0
      %828 = vmatprep.subr.bf16.mxu0 0
      %829 = vmatpush1.bf16.msra.mxu0 0
      %830 = vmatprep.subr.bf16.mxu0 0
      %831 = vmatpush1.bf16.msra.mxu0 0
      %832 = vmatprep.mubr.bf16.mxu0 0
      %833 = vmatmul.mubr.bf16.gmra.mrb[0].mxu0 %v593
      %v834 = vpop.f32.mrb[0].mxu0
      %v835 = vadd.f32 %v395, %v834
      %v836 = vpop.f32.mrb[0].mxu0
      %v837 = vadd.f32 %v399, %v836
      %v838 = vpop.f32.mrb[0].mxu0
      %v839 = vpop.f32.mrb[0].mxu0
      %840 = vdwg.mxu0
      %841 = vmatprep.subr.bf16.mxu0 %v541
      %842 = vmatpush1.bf16.msra.mxu0 %v540
      %843 = vmatprep.subr.bf16.mxu0 %v557
      %844 = vmatpush1.bf16.msra.mxu0 %v556
      %845 = vmatprep.subr.bf16.mxu0 0
      %846 = vmatpush1.bf16.msra.mxu0 0
      %847 = vmatprep.subr.bf16.mxu0 0
      %848 = vmatpush1.bf16.msra.mxu0 0
      %849 = vmatprep.subr.bf16.mxu0 0
      %850 = vmatpush1.bf16.msra.mxu0 0
      %851 = vmatprep.subr.bf16.mxu0 0
      %852 = vmatpush1.bf16.msra.mxu0 0
      %853 = vmatprep.subr.bf16.mxu0 0
      %854 = vmatpush1.bf16.msra.mxu0 0
      %855 = vmatprep.subr.bf16.mxu0 0
      %856 = vmatpush1.bf16.msra.mxu0 0
      %857 = vmatprep.subr.bf16.mxu0 0
      %858 = vmatpush1.bf16.msra.mxu0 0
      %859 = vmatprep.subr.bf16.mxu0 0
      %860 = vmatpush1.bf16.msra.mxu0 0
      %861 = vmatprep.subr.bf16.mxu0 0
      %862 = vmatpush1.bf16.msra.mxu0 0
      %863 = vmatprep.subr.bf16.mxu0 0
      %864 = vmatpush1.bf16.msra.mxu0 0
      %865 = vmatprep.subr.bf16.mxu0 0
      %866 = vmatpush1.bf16.msra.mxu0 0
      %867 = vmatprep.subr.bf16.mxu0 0
      %868 = vmatpush1.bf16.msra.mxu0 0
      %869 = vmatprep.subr.bf16.mxu0 0
      %870 = vmatpush1.bf16.msra.mxu0 0
      %871 = vmatprep.subr.bf16.mxu0 0
      %872 = vmatpush1.bf16.msra.mxu0 0
      %873 = vmatprep.mubr.bf16.mxu0 0
      %874 = vmatmul.mubr.bf16.gmra.mrb[0].mxu0 %v593
      %v875 = vpop.f32.mrb[0].mxu0
      %v876 = vadd.f32 %v403, %v875
      %v877 = vpop.f32.mrb[0].mxu0
      %v878 = vadd.f32 %v407, %v877
      %v879 = vpop.f32.mrb[0].mxu0
      %v880 = vpop.f32.mrb[0].mxu0
      %881 = vdwg.mxu0
      %882 = vmatprep.subr.bf16.mxu0 %v543
      %883 = vmatpush1.bf16.msra.mxu0 %v542
      %884 = vmatprep.subr.bf16.mxu0 %v559
      %885 = vmatpush1.bf16.msra.mxu0 %v558
      %886 = vmatprep.subr.bf16.mxu0 0
      %887 = vmatpush1.bf16.msra.mxu0 0
      %888 = vmatprep.subr.bf16.mxu0 0
      %889 = vmatpush1.bf16.msra.mxu0 0
      %890 = vmatprep.subr.bf16.mxu0 0
      %891 = vmatpush1.bf16.msra.mxu0 0
      %892 = vmatprep.subr.bf16.mxu0 0
      %893 = vmatpush1.bf16.msra.mxu0 0
      %894 = vmatprep.subr.bf16.mxu0 0
      %895 = vmatpush1.bf16.msra.mxu0 0
      %896 = vmatprep.subr.bf16.mxu0 0
      %897 = vmatpush1.bf16.msra.mxu0 0
      %898 = vmatprep.subr.bf16.mxu0 0
      %899 = vmatpush1.bf16.msra.mxu0 0
      %900 = vmatprep.subr.bf16.mxu0 0
      %901 = vmatpush1.bf16.msra.mxu0 0
      %902 = vmatprep.subr.bf16.mxu0 0
      %903 = vmatpush1.bf16.msra.mxu0 0
      %904 = vmatprep.subr.bf16.mxu0 0
      %905 = vmatpush1.bf16.msra.mxu0 0
      %906 = vmatprep.subr.bf16.mxu0 0
      %907 = vmatpush1.bf16.msra.mxu0 0
      %908 = vmatprep.subr.bf16.mxu0 0
      %909 = vmatpush1.bf16.msra.mxu0 0
      %910 = vmatprep.subr.bf16.mxu0 0
      %911 = vmatpush1.bf16.msra.mxu0 0
      %912 = vmatprep.subr.bf16.mxu0 0
      %913 = vmatpush1.bf16.msra.mxu0 0
      %914 = vmatprep.mubr.bf16.mxu0 0
      %915 = vmatmul.mubr.bf16.gmra.mrb[0].mxu0 %v593
      %v916 = vpop.f32.mrb[0].mxu0
      %v917 = vadd.f32 %v411, %v916
      %v918 = vpop.f32.mrb[0].mxu0
      %v919 = vadd.f32 %v415, %v918
      %v920 = vpop.f32.mrb[0].mxu0
      %v921 = vpop.f32.mrb[0].mxu0
      %922 = vdwg.mxu0
      %v923 = vmax.f32 %v630, 0.0
      %v924 = vmax.f32 %v632, 0.0
      %v925 = vmax.f32 %v671, 0.0
      %v926 = vmax.f32 %v673, 0.0
      %v927 = vmax.f32 %v712, 0.0
      %v928 = vmax.f32 %v714, 0.0
      %v929 = vmax.f32 %v753, 0.0
      %v930 = vmax.f32 %v755, 0.0
      %v931 = vmax.f32 %v794, 0.0
      %v932 = vmax.f32 %v796, 0.0
      %v933 = vmax.f32 %v835, 0.0
      %v934 = vmax.f32 %v837, 0.0
      %v935 = vmax.f32 %v876, 0.0
      %v936 = vmax.f32 %v878, 0.0
      %v937 = vmax.f32 %v917, 0.0
      %v938 = vmax.f32 %v919, 0.0
      %v939 = vpack.c.bf16 %v923, %v923
      %v940 = vpack.c.bf16 %v924, %v924
      %v941 = vpack.c.bf16 %v925, %v925
      %v942 = vpack.c.bf16 %v926, %v926
      %v943 = vpack.c.bf16 %v927, %v927
      %v944 = vpack.c.bf16 %v928, %v928
      %v945 = vpack.c.bf16 %v929, %v929
      %v946 = vpack.c.bf16 %v930, %v930
      %v947 = vpack.c.bf16 %v931, %v931
      %v948 = vpack.c.bf16 %v932, %v932
      %v949 = vpack.c.bf16 %v933, %v933
      %v950 = vpack.c.bf16 %v934, %v934
      %v951 = vpack.c.bf16 %v935, %v935
      %v952 = vpack.c.bf16 %v936, %v936
      %v953 = vpack.c.bf16 %v937, %v937
      %v954 = vpack.c.bf16 %v938, %v938
      %v955 = vld [vmem:[%s5] sm:$0xf]
      %v956 = vld [vmem:[%s5 + $0x4] sm:$0xf]
      %v957 = vld [vmem:[%s5 + $0x8] sm:$0xf]
      %v958 = vld [vmem:[%s5 + $0xc] sm:$0xf]
      %v959 = vld [vmem:[%s5 + $0x10] sm:$0xf]
      %v960 = vld [vmem:[%s5 + $0x14] sm:$0xf]
      %v961 = vld [vmem:[%s5 + $0x18] sm:$0xf]
      %v962 = vld [vmem:[%s5 + $0x1c] sm:$0xf]
      %v963 = vld [vmem:[%s5 + $0x20] sm:$0xf]
      %v964 = vld [vmem:[%s5 + $0x24] sm:$0xf]
      %v965 = vld [vmem:[%s5 + $0x28] sm:$0xf]
      %v966 = vld [vmem:[%s5 + $0x2c] sm:$0xf]
      %v967 = vld [vmem:[%s5 + $0x30] sm:$0xf]
      %v968 = vld [vmem:[%s5 + $0x34] sm:$0xf]
      %v969 = vld [vmem:[%s5 + $0x38] sm:$0xf]
      %v970 = vld [vmem:[%s5 + $0x3c] sm:$0xf]
      %v971 = vld [vmem:[%s5 + $0x40] sm:$0xf]
      %v972 = vld [vmem:[%s5 + $0x44] sm:$0xf]
      %v973 = vld [vmem:[%s5 + $0x48] sm:$0xf]
      %v974 = vld [vmem:[%s5 + $0x4c] sm:$0xf]
      %v975 = vld [vmem:[%s5 + $0x50] sm:$0xf]
      %v976 = vld [vmem:[%s5 + $0x54] sm:$0xf]
      %v977 = vld [vmem:[%s5 + $0x58] sm:$0xf]
      %v978 = vld [vmem:[%s5 + $0x5c] sm:$0xf]
      %v979 = vld [vmem:[%s5 + $0x60] sm:$0xf]
      %v980 = vld [vmem:[%s5 + $0x64] sm:$0xf]
      %v981 = vld [vmem:[%s5 + $0x68] sm:$0xf]
      %v982 = vld [vmem:[%s5 + $0x6c] sm:$0xf]
      %v983 = vld [vmem:[%s5 + $0x70] sm:$0xf]
      %v984 = vld [vmem:[%s5 + $0x74] sm:$0xf]
      %v985 = vld [vmem:[%s5 + $0x78] sm:$0xf]
      %v986 = vld [vmem:[%s5 + $0x7c] sm:$0xf]
      %v987 = vld [vmem:[%s5 + $0x80] sm:$0xf]
      %v988 = vld [vmem:[%s5 + $0x84] sm:$0xf]
      %v989 = vld [vmem:[%s5 + $0x88] sm:$0xf]
      %v990 = vld [vmem:[%s5 + $0x8c] sm:$0xf]
      %v991 = vld [vmem:[%s5 + $0x90] sm:$0xf]
      %v992 = vld [vmem:[%s5 + $0x94] sm:$0xf]
      %v993 = vld [vmem:[%s5 + $0x98] sm:$0xf]
      %v994 = vld [vmem:[%s5 + $0x9c] sm:$0xf]
      %v995 = vld [vmem:[%s5 + $0xa0] sm:$0xf]
      %v996 = vld [vmem:[%s5 + $0xa4] sm:$0xf]
      %v997 = vld [vmem:[%s5 + $0xa8] sm:$0xf]
      %v998 = vld [vmem:[%s5 + $0xac] sm:$0xf]
      %v999 = vld [vmem:[%s5 + $0xb0] sm:$0xf]
      %v1000 = vld [vmem:[%s5 + $0xb4] sm:$0xf]
      %v1001 = vld [vmem:[%s5 + $0xb8] sm:$0xf]
      %v1002 = vld [vmem:[%s5 + $0xbc] sm:$0xf]
      %v1003 = vld [vmem:[%s5 + $0xc0] sm:$0xf]
      %v1004 = vld [vmem:[%s5 + $0xc4] sm:$0xf]
      %v1005 = vld [vmem:[%s5 + $0xc8] sm:$0xf]
      %v1006 = vld [vmem:[%s5 + $0xcc] sm:$0xf]
      %v1007 = vld [vmem:[%s5 + $0xd0] sm:$0xf]
      %v1008 = vld [vmem:[%s5 + $0xd4] sm:$0xf]
      %v1009 = vld [vmem:[%s5 + $0xd8] sm:$0xf]
      %v1010 = vld [vmem:[%s5 + $0xdc] sm:$0xf]
      %v1011 = vld [vmem:[%s5 + $0xe0] sm:$0xf]
      %v1012 = vld [vmem:[%s5 + $0xe4] sm:$0xf]
      %v1013 = vld [vmem:[%s5 + $0xe8] sm:$0xf]
      %v1014 = vld [vmem:[%s5 + $0xec] sm:$0xf]
      %v1015 = vld [vmem:[%s5 + $0xf0] sm:$0xf]
      %v1016 = vld [vmem:[%s5 + $0xf4] sm:$0xf]
      %v1017 = vld [vmem:[%s5 + $0xf8] sm:$0xf]
      %v1018 = vld [vmem:[%s5 + $0xfc] sm:$0xf]
      %v1019 = vld [vmem:[%s5 + $0x100] sm:$0xf]
      %v1020 = vld [vmem:[%s5 + $0x104] sm:$0xf]
      %v1021 = vld [vmem:[%s5 + $0x108] sm:$0xf]
      %v1022 = vld [vmem:[%s5 + $0x10c] sm:$0xf]
      %v1023 = vld [vmem:[%s5 + $0x110] sm:$0xf]
      %v1024 = vld [vmem:[%s5 + $0x114] sm:$0xf]
      %v1025 = vld [vmem:[%s5 + $0x118] sm:$0xf]
      %v1026 = vld [vmem:[%s5 + $0x11c] sm:$0xf]
      %v1027 = vld [vmem:[%s5 + $0x120] sm:$0xf]
      %v1028 = vld [vmem:[%s5 + $0x124] sm:$0xf]
      %v1029 = vld [vmem:[%s5 + $0x128] sm:$0xf]
      %v1030 = vld [vmem:[%s5 + $0x12c] sm:$0xf]
      %v1031 = vld [vmem:[%s5 + $0x130] sm:$0xf]
      %v1032 = vld [vmem:[%s5 + $0x134] sm:$0xf]
      %v1033 = vld [vmem:[%s5 + $0x138] sm:$0xf]
      %v1034 = vld [vmem:[%s5 + $0x13c] sm:$0xf]
      %v1035 = vld [vmem:[%s5 + $0x140] sm:$0xf]
      %v1036 = vld [vmem:[%s5 + $0x144] sm:$0xf]
      %v1037 = vld [vmem:[%s5 + $0x148] sm:$0xf]
      %v1038 = vld [vmem:[%s5 + $0x14c] sm:$0xf]
      %v1039 = vld [vmem:[%s5 + $0x150] sm:$0xf]
      %v1040 = vld [vmem:[%s5 + $0x154] sm:$0xf]
      %v1041 = vld [vmem:[%s5 + $0x158] sm:$0xf]
      %v1042 = vld [vmem:[%s5 + $0x15c] sm:$0xf]
      %v1043 = vld [vmem:[%s5 + $0x160] sm:$0xf]
      %v1044 = vld [vmem:[%s5 + $0x164] sm:$0xf]
      %v1045 = vld [vmem:[%s5 + $0x168] sm:$0xf]
      %v1046 = vld [vmem:[%s5 + $0x16c] sm:$0xf]
      %v1047 = vld [vmem:[%s5 + $0x170] sm:$0xf]
      %v1048 = vld [vmem:[%s5 + $0x174] sm:$0xf]
      %v1049 = vld [vmem:[%s5 + $0x178] sm:$0xf]
      %v1050 = vld [vmem:[%s5 + $0x17c] sm:$0xf]
      %v1051 = vld [vmem:[%s5 + $0x180] sm:$0xf]
      %v1052 = vld [vmem:[%s5 + $0x184] sm:$0xf]
      %v1053 = vld [vmem:[%s5 + $0x188] sm:$0xf]
      %v1054 = vld [vmem:[%s5 + $0x18c] sm:$0xf]
      %v1055 = vld [vmem:[%s5 + $0x190] sm:$0xf]
      %v1056 = vld [vmem:[%s5 + $0x194] sm:$0xf]
      %v1057 = vld [vmem:[%s5 + $0x198] sm:$0xf]
      %v1058 = vld [vmem:[%s5 + $0x19c] sm:$0xf]
      %v1059 = vld [vmem:[%s5 + $0x1a0] sm:$0xf]
      %v1060 = vld [vmem:[%s5 + $0x1a4] sm:$0xf]
      %v1061 = vld [vmem:[%s5 + $0x1a8] sm:$0xf]
      %v1062 = vld [vmem:[%s5 + $0x1ac] sm:$0xf]
      %v1063 = vld [vmem:[%s5 + $0x1b0] sm:$0xf]
      %v1064 = vld [vmem:[%s5 + $0x1b4] sm:$0xf]
      %v1065 = vld [vmem:[%s5 + $0x1b8] sm:$0xf]
      %v1066 = vld [vmem:[%s5 + $0x1bc] sm:$0xf]
      %v1067 = vld [vmem:[%s5 + $0x1c0] sm:$0xf]
      %v1068 = vld [vmem:[%s5 + $0x1c4] sm:$0xf]
      %v1069 = vld [vmem:[%s5 + $0x1c8] sm:$0xf]
      %v1070 = vld [vmem:[%s5 + $0x1cc] sm:$0xf]
      %v1071 = vld [vmem:[%s5 + $0x1d0] sm:$0xf]
      %v1072 = vld [vmem:[%s5 + $0x1d4] sm:$0xf]
      %v1073 = vld [vmem:[%s5 + $0x1d8] sm:$0xf]
      %v1074 = vld [vmem:[%s5 + $0x1dc] sm:$0xf]
      %v1075 = vld [vmem:[%s5 + $0x1e0] sm:$0xf]
      %v1076 = vld [vmem:[%s5 + $0x1e4] sm:$0xf]
      %v1077 = vld [vmem:[%s5 + $0x1e8] sm:$0xf]
      %v1078 = vld [vmem:[%s5 + $0x1ec] sm:$0xf]
      %v1079 = vld [vmem:[%s5 + $0x1f0] sm:$0xf]
      %v1080 = vld [vmem:[%s5 + $0x1f4] sm:$0xf]
      %v1081 = vld [vmem:[%s5 + $0x1f8] sm:$0xf]
      %v1082 = vld [vmem:[%s5 + $0x1fc] sm:$0xf]
      %v1083 = vld [vmem:[%s5 + $0x200] sm:$0xf]
      %v1084 = vld [vmem:[%s5 + $0x204] sm:$0xf]
      %v1085 = vld [vmem:[%s5 + $0x208] sm:$0xf]
      %v1086 = vld [vmem:[%s5 + $0x20c] sm:$0xf]
      %v1087 = vld [vmem:[%s5 + $0x210] sm:$0xf]
      %v1088 = vld [vmem:[%s5 + $0x214] sm:$0xf]
      %v1089 = vld [vmem:[%s5 + $0x218] sm:$0xf]
      %v1090 = vld [vmem:[%s5 + $0x21c] sm:$0xf]
      %v1091 = vld [vmem:[%s5 + $0x220] sm:$0xf]
      %v1092 = vld [vmem:[%s5 + $0x224] sm:$0xf]
      %v1093 = vld [vmem:[%s5 + $0x228] sm:$0xf]
      %v1094 = vld [vmem:[%s5 + $0x22c] sm:$0xf]
      %v1095 = vld [vmem:[%s5 + $0x230] sm:$0xf]
      %v1096 = vld [vmem:[%s5 + $0x234] sm:$0xf]
      %v1097 = vld [vmem:[%s5 + $0x238] sm:$0xf]
      %v1098 = vld [vmem:[%s5 + $0x23c] sm:$0xf]
      %v1099 = vld [vmem:[%s5 + $0x240] sm:$0xf]
      %v1100 = vld [vmem:[%s5 + $0x244] sm:$0xf]
      %v1101 = vld [vmem:[%s5 + $0x248] sm:$0xf]
      %v1102 = vld [vmem:[%s5 + $0x24c] sm:$0xf]
      %v1103 = vld [vmem:[%s5 + $0x250] sm:$0xf]
      %v1104 = vld [vmem:[%s5 + $0x254] sm:$0xf]
      %v1105 = vld [vmem:[%s5 + $0x258] sm:$0xf]
      %v1106 = vld [vmem:[%s5 + $0x25c] sm:$0xf]
      %v1107 = vld [vmem:[%s5 + $0x260] sm:$0xf]
      %v1108 = vld [vmem:[%s5 + $0x264] sm:$0xf]
      %v1109 = vld [vmem:[%s5 + $0x268] sm:$0xf]
      %v1110 = vld [vmem:[%s5 + $0x26c] sm:$0xf]
      %v1111 = vld [vmem:[%s5 + $0x270] sm:$0xf]
      %v1112 = vld [vmem:[%s5 + $0x274] sm:$0xf]
      %v1113 = vld [vmem:[%s5 + $0x278] sm:$0xf]
      %v1114 = vld [vmem:[%s5 + $0x27c] sm:$0xf]
      %v1115 = vld [vmem:[%s5 + $0x280] sm:$0xf]
      %v1116 = vld [vmem:[%s5 + $0x284] sm:$0xf]
      %v1117 = vld [vmem:[%s5 + $0x288] sm:$0xf]
      %v1118 = vld [vmem:[%s5 + $0x28c] sm:$0xf]
      %v1119 = vld [vmem:[%s5 + $0x290] sm:$0xf]
      %v1120 = vld [vmem:[%s5 + $0x294] sm:$0xf]
      %v1121 = vld [vmem:[%s5 + $0x298] sm:$0xf]
      %v1122 = vld [vmem:[%s5 + $0x29c] sm:$0xf]
      %v1123 = vld [vmem:[%s5 + $0x2a0] sm:$0xf]
      %v1124 = vld [vmem:[%s5 + $0x2a4] sm:$0xf]
      %v1125 = vld [vmem:[%s5 + $0x2a8] sm:$0xf]
      %v1126 = vld [vmem:[%s5 + $0x2ac] sm:$0xf]
      %v1127 = vld [vmem:[%s5 + $0x2b0] sm:$0xf]
      %v1128 = vld [vmem:[%s5 + $0x2b4] sm:$0xf]
      %v1129 = vld [vmem:[%s5 + $0x2b8] sm:$0xf]
      %v1130 = vld [vmem:[%s5 + $0x2bc] sm:$0xf]
      %v1131 = vld [vmem:[%s5 + $0x2c0] sm:$0xf]
      %v1132 = vld [vmem:[%s5 + $0x2c4] sm:$0xf]
      %v1133 = vld [vmem:[%s5 + $0x2c8] sm:$0xf]
      %v1134 = vld [vmem:[%s5 + $0x2cc] sm:$0xf]
      %v1135 = vld [vmem:[%s5 + $0x2d0] sm:$0xf]
      %v1136 = vld [vmem:[%s5 + $0x2d4] sm:$0xf]
      %v1137 = vld [vmem:[%s5 + $0x2d8] sm:$0xf]
      %v1138 = vld [vmem:[%s5 + $0x2dc] sm:$0xf]
      %v1139 = vld [vmem:[%s5 + $0x2e0] sm:$0xf]
      %v1140 = vld [vmem:[%s5 + $0x2e4] sm:$0xf]
      %v1141 = vld [vmem:[%s5 + $0x2e8] sm:$0xf]
      %v1142 = vld [vmem:[%s5 + $0x2ec] sm:$0xf]
      %v1143 = vld [vmem:[%s5 + $0x2f0] sm:$0xf]
      %v1144 = vld [vmem:[%s5 + $0x2f4] sm:$0xf]
      %v1145 = vld [vmem:[%s5 + $0x2f8] sm:$0xf]
      %v1146 = vld [vmem:[%s5 + $0x2fc] sm:$0xf]
      %v1147 = vld [vmem:[%s5 + $0x300] sm:$0xf]
      %v1148 = vld [vmem:[%s5 + $0x304] sm:$0xf]
      %v1149 = vld [vmem:[%s5 + $0x308] sm:$0xf]
      %v1150 = vld [vmem:[%s5 + $0x30c] sm:$0xf]
      %v1151 = vld [vmem:[%s5 + $0x310] sm:$0xf]
      %v1152 = vld [vmem:[%s5 + $0x314] sm:$0xf]
      %v1153 = vld [vmem:[%s5 + $0x318] sm:$0xf]
      %v1154 = vld [vmem:[%s5 + $0x31c] sm:$0xf]
      %v1155 = vld [vmem:[%s5 + $0x320] sm:$0xf]
      %v1156 = vld [vmem:[%s5 + $0x324] sm:$0xf]
      %v1157 = vld [vmem:[%s5 + $0x328] sm:$0xf]
      %v1158 = vld [vmem:[%s5 + $0x32c] sm:$0xf]
      %v1159 = vld [vmem:[%s5 + $0x330] sm:$0xf]
      %v1160 = vld [vmem:[%s5 + $0x334] sm:$0xf]
      %v1161 = vld [vmem:[%s5 + $0x338] sm:$0xf]
      %v1162 = vld [vmem:[%s5 + $0x33c] sm:$0xf]
      %v1163 = vld [vmem:[%s5 + $0x340] sm:$0xf]
      %v1164 = vld [vmem:[%s5 + $0x344] sm:$0xf]
      %v1165 = vld [vmem:[%s5 + $0x348] sm:$0xf]
      %v1166 = vld [vmem:[%s5 + $0x34c] sm:$0xf]
      %v1167 = vld [vmem:[%s5 + $0x350] sm:$0xf]
      %v1168 = vld [vmem:[%s5 + $0x354] sm:$0xf]
      %v1169 = vld [vmem:[%s5 + $0x358] sm:$0xf]
      %v1170 = vld [vmem:[%s5 + $0x35c] sm:$0xf]
      %v1171 = vld [vmem:[%s5 + $0x360] sm:$0xf]
      %v1172 = vld [vmem:[%s5 + $0x364] sm:$0xf]
      %v1173 = vld [vmem:[%s5 + $0x368] sm:$0xf]
      %v1174 = vld [vmem:[%s5 + $0x36c] sm:$0xf]
      %v1175 = vld [vmem:[%s5 + $0x370] sm:$0xf]
      %v1176 = vld [vmem:[%s5 + $0x374] sm:$0xf]
      %v1177 = vld [vmem:[%s5 + $0x378] sm:$0xf]
      %v1178 = vld [vmem:[%s5 + $0x37c] sm:$0xf]
      %v1179 = vld [vmem:[%s5 + $0x380] sm:$0xf]
      %v1180 = vld [vmem:[%s5 + $0x384] sm:$0xf]
      %v1181 = vld [vmem:[%s5 + $0x388] sm:$0xf]
      %v1182 = vld [vmem:[%s5 + $0x38c] sm:$0xf]
      %v1183 = vld [vmem:[%s5 + $0x390] sm:$0xf]
      %v1184 = vld [vmem:[%s5 + $0x394] sm:$0xf]
      %v1185 = vld [vmem:[%s5 + $0x398] sm:$0xf]
      %v1186 = vld [vmem:[%s5 + $0x39c] sm:$0xf]
      %v1187 = vld [vmem:[%s5 + $0x3a0] sm:$0xf]
      %v1188 = vld [vmem:[%s5 + $0x3a4] sm:$0xf]
      %v1189 = vld [vmem:[%s5 + $0x3a8] sm:$0xf]
      %v1190 = vld [vmem:[%s5 + $0x3ac] sm:$0xf]
      %v1191 = vld [vmem:[%s5 + $0x3b0] sm:$0xf]
      %v1192 = vld [vmem:[%s5 + $0x3b4] sm:$0xf]
      %v1193 = vld [vmem:[%s5 + $0x3b8] sm:$0xf]
      %v1194 = vld [vmem:[%s5 + $0x3bc] sm:$0xf]
      %v1195 = vld [vmem:[%s5 + $0x3c0] sm:$0xf]
      %v1196 = vld [vmem:[%s5 + $0x3c4] sm:$0xf]
      %v1197 = vld [vmem:[%s5 + $0x3c8] sm:$0xf]
      %v1198 = vld [vmem:[%s5 + $0x3cc] sm:$0xf]
      %v1199 = vld [vmem:[%s5 + $0x3d0] sm:$0xf]
      %v1200 = vld [vmem:[%s5 + $0x3d4] sm:$0xf]
      %v1201 = vld [vmem:[%s5 + $0x3d8] sm:$0xf]
      %v1202 = vld [vmem:[%s5 + $0x3dc] sm:$0xf]
      %v1203 = vld [vmem:[%s5 + $0x3e0] sm:$0xf]
      %v1204 = vld [vmem:[%s5 + $0x3e4] sm:$0xf]
      %v1205 = vld [vmem:[%s5 + $0x3e8] sm:$0xf]
      %v1206 = vld [vmem:[%s5 + $0x3ec] sm:$0xf]
      %v1207 = vld [vmem:[%s5 + $0x3f0] sm:$0xf]
      %v1208 = vld [vmem:[%s5 + $0x3f4] sm:$0xf]
      %v1209 = vld [vmem:[%s5 + $0x3f8] sm:$0xf]
      %v1210 = vld [vmem:[%s5 + $0x3fc] sm:$0xf]
      %v1211 = vld [vmem:[%s6] sm:$0x1]
      %v1213 = vlaneseq
      %v1214 = vshrl.u32 %v1213, 7
      %v1215 = vsub.s32 0, %v1214
      %v1216 = vrot.slane %v1211, %v1215
      %v1474 = vunpack.c.l.b16 %v955
      %v1475 = vunpack.c.l.b16 %v956
      %v1476 = vunpack.c.l.b16 %v957
      %v1477 = vunpack.c.l.b16 %v958
      %v1478 = vunpack.c.l.b16 %v959
      %v1479 = vunpack.c.l.b16 %v960
      %v1480 = vunpack.c.l.b16 %v961
      %v1481 = vunpack.c.l.b16 %v962
      %v1482 = vunpack.c.l.b16 %v963
      %v1483 = vunpack.c.l.b16 %v964
      %v1484 = vunpack.c.l.b16 %v965
      %v1485 = vunpack.c.l.b16 %v966
      %v1486 = vunpack.c.l.b16 %v967
      %v1487 = vunpack.c.l.b16 %v968
      %v1488 = vunpack.c.l.b16 %v969
      %v1489 = vunpack.c.l.b16 %v970
      %v1490 = vunpack.c.l.b16 %v971
      %v1491 = vunpack.c.l.b16 %v972
      %v1492 = vunpack.c.l.b16 %v973
      %v1493 = vunpack.c.l.b16 %v974
      %v1494 = vunpack.c.l.b16 %v975
      %v1495 = vunpack.c.l.b16 %v976
      %v1496 = vunpack.c.l.b16 %v977
      %v1497 = vunpack.c.l.b16 %v978
      %v1498 = vunpack.c.l.b16 %v979
      %v1499 = vunpack.c.l.b16 %v980
      %v1500 = vunpack.c.l.b16 %v981
      %v1501 = vunpack.c.l.b16 %v982
      %v1502 = vunpack.c.l.b16 %v983
      %v1503 = vunpack.c.l.b16 %v984
      %v1504 = vunpack.c.l.b16 %v985
      %v1505 = vunpack.c.l.b16 %v986
      %v1506 = vunpack.c.l.b16 %v987
      %v1507 = vunpack.c.l.b16 %v988
      %v1508 = vunpack.c.l.b16 %v989
      %v1509 = vunpack.c.l.b16 %v990
      %v1510 = vunpack.c.l.b16 %v991
      %v1511 = vunpack.c.l.b16 %v992
      %v1512 = vunpack.c.l.b16 %v993
      %v1513 = vunpack.c.l.b16 %v994
      %v1514 = vunpack.c.l.b16 %v995
      %v1515 = vunpack.c.l.b16 %v996
      %v1516 = vunpack.c.l.b16 %v997
      %v1517 = vunpack.c.l.b16 %v998
      %v1518 = vunpack.c.l.b16 %v999
      %v1519 = vunpack.c.l.b16 %v1000
      %v1520 = vunpack.c.l.b16 %v1001
      %v1521 = vunpack.c.l.b16 %v1002
      %v1522 = vunpack.c.l.b16 %v1003
      %v1523 = vunpack.c.l.b16 %v1004
      %v1524 = vunpack.c.l.b16 %v1005
      %v1525 = vunpack.c.l.b16 %v1006
      %v1526 = vunpack.c.l.b16 %v1007
      %v1527 = vunpack.c.l.b16 %v1008
      %v1528 = vunpack.c.l.b16 %v1009
      %v1529 = vunpack.c.l.b16 %v1010
      %v1530 = vunpack.c.l.b16 %v1011
      %v1531 = vunpack.c.l.b16 %v1012
      %v1532 = vunpack.c.l.b16 %v1013
      %v1533 = vunpack.c.l.b16 %v1014
      %v1534 = vunpack.c.l.b16 %v1015
      %v1535 = vunpack.c.l.b16 %v1016
      %v1536 = vunpack.c.l.b16 %v1017
      %v1537 = vunpack.c.l.b16 %v1018
      %v1538 = vunpack.c.l.b16 %v1019
      %v1539 = vunpack.c.l.b16 %v1020
      %v1540 = vunpack.c.l.b16 %v1021
      %v1541 = vunpack.c.l.b16 %v1022
      %v1542 = vunpack.c.l.b16 %v1023
      %v1543 = vunpack.c.l.b16 %v1024
      %v1544 = vunpack.c.l.b16 %v1025
      %v1545 = vunpack.c.l.b16 %v1026
      %v1546 = vunpack.c.l.b16 %v1027
      %v1547 = vunpack.c.l.b16 %v1028
      %v1548 = vunpack.c.l.b16 %v1029
      %v1549 = vunpack.c.l.b16 %v1030
      %v1550 = vunpack.c.l.b16 %v1031
      %v1551 = vunpack.c.l.b16 %v1032
      %v1552 = vunpack.c.l.b16 %v1033
      %v1553 = vunpack.c.l.b16 %v1034
      %v1554 = vunpack.c.l.b16 %v1035
      %v1555 = vunpack.c.l.b16 %v1036
      %v1556 = vunpack.c.l.b16 %v1037
      %v1557 = vunpack.c.l.b16 %v1038
      %v1558 = vunpack.c.l.b16 %v1039
      %v1559 = vunpack.c.l.b16 %v1040
      %v1560 = vunpack.c.l.b16 %v1041
      %v1561 = vunpack.c.l.b16 %v1042
      %v1562 = vunpack.c.l.b16 %v1043
      %v1563 = vunpack.c.l.b16 %v1044
      %v1564 = vunpack.c.l.b16 %v1045
      %v1565 = vunpack.c.l.b16 %v1046
      %v1566 = vunpack.c.l.b16 %v1047
      %v1567 = vunpack.c.l.b16 %v1048
      %v1568 = vunpack.c.l.b16 %v1049
      %v1569 = vunpack.c.l.b16 %v1050
      %v1570 = vunpack.c.l.b16 %v1051
      %v1571 = vunpack.c.l.b16 %v1052
      %v1572 = vunpack.c.l.b16 %v1053
      %v1573 = vunpack.c.l.b16 %v1054
      %v1574 = vunpack.c.l.b16 %v1055
      %v1575 = vunpack.c.l.b16 %v1056
      %v1576 = vunpack.c.l.b16 %v1057
      %v1577 = vunpack.c.l.b16 %v1058
      %v1578 = vunpack.c.l.b16 %v1059
      %v1579 = vunpack.c.l.b16 %v1060
      %v1580 = vunpack.c.l.b16 %v1061
      %v1581 = vunpack.c.l.b16 %v1062
      %v1582 = vunpack.c.l.b16 %v1063
      %v1583 = vunpack.c.l.b16 %v1064
      %v1584 = vunpack.c.l.b16 %v1065
      %v1585 = vunpack.c.l.b16 %v1066
      %v1586 = vunpack.c.l.b16 %v1067
      %v1587 = vunpack.c.l.b16 %v1068
      %v1588 = vunpack.c.l.b16 %v1069
      %v1589 = vunpack.c.l.b16 %v1070
      %v1590 = vunpack.c.l.b16 %v1071
      %v1591 = vunpack.c.l.b16 %v1072
      %v1592 = vunpack.c.l.b16 %v1073
      %v1593 = vunpack.c.l.b16 %v1074
      %v1594 = vunpack.c.l.b16 %v1075
      %v1595 = vunpack.c.l.b16 %v1076
      %v1596 = vunpack.c.l.b16 %v1077
      %v1597 = vunpack.c.l.b16 %v1078
      %v1598 = vunpack.c.l.b16 %v1079
      %v1599 = vunpack.c.l.b16 %v1080
      %v1600 = vunpack.c.l.b16 %v1081
      %v1601 = vunpack.c.l.b16 %v1082
      %v1602 = vunpack.c.l.b16 %v1083
      %v1603 = vunpack.c.l.b16 %v1084
      %v1604 = vunpack.c.l.b16 %v1085
      %v1605 = vunpack.c.l.b16 %v1086
      %v1606 = vunpack.c.l.b16 %v1087
      %v1607 = vunpack.c.l.b16 %v1088
      %v1608 = vunpack.c.l.b16 %v1089
      %v1609 = vunpack.c.l.b16 %v1090
      %v1610 = vunpack.c.l.b16 %v1091
      %v1611 = vunpack.c.l.b16 %v1092
      %v1612 = vunpack.c.l.b16 %v1093
      %v1613 = vunpack.c.l.b16 %v1094
      %v1614 = vunpack.c.l.b16 %v1095
      %v1615 = vunpack.c.l.b16 %v1096
      %v1616 = vunpack.c.l.b16 %v1097
      %v1617 = vunpack.c.l.b16 %v1098
      %v1618 = vunpack.c.l.b16 %v1099
      %v1619 = vunpack.c.l.b16 %v1100
      %v1620 = vunpack.c.l.b16 %v1101
      %v1621 = vunpack.c.l.b16 %v1102
      %v1622 = vunpack.c.l.b16 %v1103
      %v1623 = vunpack.c.l.b16 %v1104
      %v1624 = vunpack.c.l.b16 %v1105
      %v1625 = vunpack.c.l.b16 %v1106
      %v1626 = vunpack.c.l.b16 %v1107
      %v1627 = vunpack.c.l.b16 %v1108
      %v1628 = vunpack.c.l.b16 %v1109
      %v1629 = vunpack.c.l.b16 %v1110
      %v1630 = vunpack.c.l.b16 %v1111
      %v1631 = vunpack.c.l.b16 %v1112
      %v1632 = vunpack.c.l.b16 %v1113
      %v1633 = vunpack.c.l.b16 %v1114
      %v1634 = vunpack.c.l.b16 %v1115
      %v1635 = vunpack.c.l.b16 %v1116
      %v1636 = vunpack.c.l.b16 %v1117
      %v1637 = vunpack.c.l.b16 %v1118
      %v1638 = vunpack.c.l.b16 %v1119
      %v1639 = vunpack.c.l.b16 %v1120
      %v1640 = vunpack.c.l.b16 %v1121
      %v1641 = vunpack.c.l.b16 %v1122
      %v1642 = vunpack.c.l.b16 %v1123
      %v1643 = vunpack.c.l.b16 %v1124
      %v1644 = vunpack.c.l.b16 %v1125
      %v1645 = vunpack.c.l.b16 %v1126
      %v1646 = vunpack.c.l.b16 %v1127
      %v1647 = vunpack.c.l.b16 %v1128
      %v1648 = vunpack.c.l.b16 %v1129
      %v1649 = vunpack.c.l.b16 %v1130
      %v1650 = vunpack.c.l.b16 %v1131
      %v1651 = vunpack.c.l.b16 %v1132
      %v1652 = vunpack.c.l.b16 %v1133
      %v1653 = vunpack.c.l.b16 %v1134
      %v1654 = vunpack.c.l.b16 %v1135
      %v1655 = vunpack.c.l.b16 %v1136
      %v1656 = vunpack.c.l.b16 %v1137
      %v1657 = vunpack.c.l.b16 %v1138
      %v1658 = vunpack.c.l.b16 %v1139
      %v1659 = vunpack.c.l.b16 %v1140
      %v1660 = vunpack.c.l.b16 %v1141
      %v1661 = vunpack.c.l.b16 %v1142
      %v1662 = vunpack.c.l.b16 %v1143
      %v1663 = vunpack.c.l.b16 %v1144
      %v1664 = vunpack.c.l.b16 %v1145
      %v1665 = vunpack.c.l.b16 %v1146
      %v1666 = vunpack.c.l.b16 %v1147
      %v1667 = vunpack.c.l.b16 %v1148
      %v1668 = vunpack.c.l.b16 %v1149
      %v1669 = vunpack.c.l.b16 %v1150
      %v1670 = vunpack.c.l.b16 %v1151
      %v1671 = vunpack.c.l.b16 %v1152
      %v1672 = vunpack.c.l.b16 %v1153
      %v1673 = vunpack.c.l.b16 %v1154
      %v1674 = vunpack.c.l.b16 %v1155
      %v1675 = vunpack.c.l.b16 %v1156
      %v1676 = vunpack.c.l.b16 %v1157
      %v1677 = vunpack.c.l.b16 %v1158
      %v1678 = vunpack.c.l.b16 %v1159
      %v1679 = vunpack.c.l.b16 %v1160
      %v1680 = vunpack.c.l.b16 %v1161
      %v1681 = vunpack.c.l.b16 %v1162
      %v1682 = vunpack.c.l.b16 %v1163
      %v1683 = vunpack.c.l.b16 %v1164
      %v1684 = vunpack.c.l.b16 %v1165
      %v1685 = vunpack.c.l.b16 %v1166
      %v1686 = vunpack.c.l.b16 %v1167
      %v1687 = vunpack.c.l.b16 %v1168
      %v1688 = vunpack.c.l.b16 %v1169
      %v1689 = vunpack.c.l.b16 %v1170
      %v1690 = vunpack.c.l.b16 %v1171
      %v1691 = vunpack.c.l.b16 %v1172
      %v1692 = vunpack.c.l.b16 %v1173
      %v1693 = vunpack.c.l.b16 %v1174
      %v1694 = vunpack.c.l.b16 %v1175
      %v1695 = vunpack.c.l.b16 %v1176
      %v1696 = vunpack.c.l.b16 %v1177
      %v1697 = vunpack.c.l.b16 %v1178
      %v1698 = vunpack.c.l.b16 %v1179
      %v1699 = vunpack.c.l.b16 %v1180
      %v1700 = vunpack.c.l.b16 %v1181
      %v1701 = vunpack.c.l.b16 %v1182
      %v1702 = vunpack.c.l.b16 %v1183
      %v1703 = vunpack.c.l.b16 %v1184
      %v1704 = vunpack.c.l.b16 %v1185
      %v1705 = vunpack.c.l.b16 %v1186
      %v1706 = vunpack.c.l.b16 %v1187
      %v1707 = vunpack.c.l.b16 %v1188
      %v1708 = vunpack.c.l.b16 %v1189
      %v1709 = vunpack.c.l.b16 %v1190
      %v1710 = vunpack.c.l.b16 %v1191
      %v1711 = vunpack.c.l.b16 %v1192
      %v1712 = vunpack.c.l.b16 %v1193
      %v1713 = vunpack.c.l.b16 %v1194
      %v1714 = vunpack.c.l.b16 %v1195
      %v1715 = vunpack.c.l.b16 %v1196
      %v1716 = vunpack.c.l.b16 %v1197
      %v1717 = vunpack.c.l.b16 %v1198
      %v1718 = vunpack.c.l.b16 %v1199
      %v1719 = vunpack.c.l.b16 %v1200
      %v1720 = vunpack.c.l.b16 %v1201
      %v1721 = vunpack.c.l.b16 %v1202
      %v1722 = vunpack.c.l.b16 %v1203
      %v1723 = vunpack.c.l.b16 %v1204
      %v1724 = vunpack.c.l.b16 %v1205
      %v1725 = vunpack.c.l.b16 %v1206
      %v1726 = vunpack.c.l.b16 %v1207
      %v1727 = vunpack.c.l.b16 %v1208
      %v1728 = vunpack.c.l.b16 %v1209
      %v1729 = vunpack.c.l.b16 %v1210
      %v1730 = vpack.c.b16 %v1475, %v1474
      %v1731 = vpack.c.b16 %v1477, %v1476
      %v1732 = vpack.c.b16 %v1479, %v1478
      %v1733 = vpack.c.b16 %v1481, %v1480
      %v1734 = vpack.c.b16 %v1483, %v1482
      %v1735 = vpack.c.b16 %v1485, %v1484
      %v1736 = vpack.c.b16 %v1487, %v1486
      %v1737 = vpack.c.b16 %v1489, %v1488
      %v1738 = vpack.c.b16 %v1491, %v1490
      %v1739 = vpack.c.b16 %v1493, %v1492
      %v1740 = vpack.c.b16 %v1495, %v1494
      %v1741 = vpack.c.b16 %v1497, %v1496
      %v1742 = vpack.c.b16 %v1499, %v1498
      %v1743 = vpack.c.b16 %v1501, %v1500
      %v1744 = vpack.c.b16 %v1503, %v1502
      %v1745 = vpack.c.b16 %v1505, %v1504
      %v1746 = vpack.c.b16 %v1507, %v1506
      %v1747 = vpack.c.b16 %v1509, %v1508
      %v1748 = vpack.c.b16 %v1511, %v1510
      %v1749 = vpack.c.b16 %v1513, %v1512
      %v1750 = vpack.c.b16 %v1515, %v1514
      %v1751 = vpack.c.b16 %v1517, %v1516
      %v1752 = vpack.c.b16 %v1519, %v1518
      %v1753 = vpack.c.b16 %v1521, %v1520
      %v1754 = vpack.c.b16 %v1523, %v1522
      %v1755 = vpack.c.b16 %v1525, %v1524
      %v1756 = vpack.c.b16 %v1527, %v1526
      %v1757 = vpack.c.b16 %v1529, %v1528
      %v1758 = vpack.c.b16 %v1531, %v1530
      %v1759 = vpack.c.b16 %v1533, %v1532
      %v1760 = vpack.c.b16 %v1535, %v1534
      %v1761 = vpack.c.b16 %v1537, %v1536
      %v1762 = vpack.c.b16 %v1539, %v1538
      %v1763 = vpack.c.b16 %v1541, %v1540
      %v1764 = vpack.c.b16 %v1543, %v1542
      %v1765 = vpack.c.b16 %v1545, %v1544
      %v1766 = vpack.c.b16 %v1547, %v1546
      %v1767 = vpack.c.b16 %v1549, %v1548
      %v1768 = vpack.c.b16 %v1551, %v1550
      %v1769 = vpack.c.b16 %v1553, %v1552
      %v1770 = vpack.c.b16 %v1555, %v1554
      %v1771 = vpack.c.b16 %v1557, %v1556
      %v1772 = vpack.c.b16 %v1559, %v1558
      %v1773 = vpack.c.b16 %v1561, %v1560
      %v1774 = vpack.c.b16 %v1563, %v1562
      %v1775 = vpack.c.b16 %v1565, %v1564
      %v1776 = vpack.c.b16 %v1567, %v1566
      %v1777 = vpack.c.b16 %v1569, %v1568
      %v1778 = vpack.c.b16 %v1571, %v1570
      %v1779 = vpack.c.b16 %v1573, %v1572
      %v1780 = vpack.c.b16 %v1575, %v1574
      %v1781 = vpack.c.b16 %v1577, %v1576
      %v1782 = vpack.c.b16 %v1579, %v1578
      %v1783 = vpack.c.b16 %v1581, %v1580
      %v1784 = vpack.c.b16 %v1583, %v1582
      %v1785 = vpack.c.b16 %v1585, %v1584
      %v1786 = vpack.c.b16 %v1587, %v1586
      %v1787 = vpack.c.b16 %v1589, %v1588
      %v1788 = vpack.c.b16 %v1591, %v1590
      %v1789 = vpack.c.b16 %v1593, %v1592
      %v1790 = vpack.c.b16 %v1595, %v1594
      %v1791 = vpack.c.b16 %v1597, %v1596
      %v1792 = vpack.c.b16 %v1599, %v1598
      %v1793 = vpack.c.b16 %v1601, %v1600
      %v1794 = vpack.c.b16 %v1603, %v1602
      %v1795 = vpack.c.b16 %v1605, %v1604
      %v1796 = vpack.c.b16 %v1607, %v1606
      %v1797 = vpack.c.b16 %v1609, %v1608
      %v1798 = vpack.c.b16 %v1611, %v1610
      %v1799 = vpack.c.b16 %v1613, %v1612
      %v1800 = vpack.c.b16 %v1615, %v1614
      %v1801 = vpack.c.b16 %v1617, %v1616
      %v1802 = vpack.c.b16 %v1619, %v1618
      %v1803 = vpack.c.b16 %v1621, %v1620
      %v1804 = vpack.c.b16 %v1623, %v1622
      %v1805 = vpack.c.b16 %v1625, %v1624
      %v1806 = vpack.c.b16 %v1627, %v1626
      %v1807 = vpack.c.b16 %v1629, %v1628
      %v1808 = vpack.c.b16 %v1631, %v1630
      %v1809 = vpack.c.b16 %v1633, %v1632
      %v1810 = vpack.c.b16 %v1635, %v1634
      %v1811 = vpack.c.b16 %v1637, %v1636
      %v1812 = vpack.c.b16 %v1639, %v1638
      %v1813 = vpack.c.b16 %v1641, %v1640
      %v1814 = vpack.c.b16 %v1643, %v1642
      %v1815 = vpack.c.b16 %v1645, %v1644
      %v1816 = vpack.c.b16 %v1647, %v1646
      %v1817 = vpack.c.b16 %v1649, %v1648
      %v1818 = vpack.c.b16 %v1651, %v1650
      %v1819 = vpack.c.b16 %v1653, %v1652
      %v1820 = vpack.c.b16 %v1655, %v1654
      %v1821 = vpack.c.b16 %v1657, %v1656
      %v1822 = vpack.c.b16 %v1659, %v1658
      %v1823 = vpack.c.b16 %v1661, %v1660
      %v1824 = vpack.c.b16 %v1663, %v1662
      %v1825 = vpack.c.b16 %v1665, %v1664
      %v1826 = vpack.c.b16 %v1667, %v1666
      %v1827 = vpack.c.b16 %v1669, %v1668
      %v1828 = vpack.c.b16 %v1671, %v1670
      %v1829 = vpack.c.b16 %v1673, %v1672
      %v1830 = vpack.c.b16 %v1675, %v1674
      %v1831 = vpack.c.b16 %v1677, %v1676
      %v1832 = vpack.c.b16 %v1679, %v1678
      %v1833 = vpack.c.b16 %v1681, %v1680
      %v1834 = vpack.c.b16 %v1683, %v1682
      %v1835 = vpack.c.b16 %v1685, %v1684
      %v1836 = vpack.c.b16 %v1687, %v1686
      %v1837 = vpack.c.b16 %v1689, %v1688
      %v1838 = vpack.c.b16 %v1691, %v1690
      %v1839 = vpack.c.b16 %v1693, %v1692
      %v1840 = vpack.c.b16 %v1695, %v1694
      %v1841 = vpack.c.b16 %v1697, %v1696
      %v1842 = vpack.c.b16 %v1699, %v1698
      %v1843 = vpack.c.b16 %v1701, %v1700
      %v1844 = vpack.c.b16 %v1703, %v1702
      %v1845 = vpack.c.b16 %v1705, %v1704
      %v1846 = vpack.c.b16 %v1707, %v1706
      %v1847 = vpack.c.b16 %v1709, %v1708
      %v1848 = vpack.c.b16 %v1711, %v1710
      %v1849 = vpack.c.b16 %v1713, %v1712
      %v1850 = vpack.c.b16 %v1715, %v1714
      %v1851 = vpack.c.b16 %v1717, %v1716
      %v1852 = vpack.c.b16 %v1719, %v1718
      %v1853 = vpack.c.b16 %v1721, %v1720
      %v1854 = vpack.c.b16 %v1723, %v1722
      %v1855 = vpack.c.b16 %v1725, %v1724
      %v1856 = vpack.c.b16 %v1727, %v1726
      %v1857 = vpack.c.b16 %v1729, %v1728
      %1986 = vmatprep.subr.bf16.mxu0 0
      %1987 = vmatpush1.bf16.msra.mxu0 %v1730
      %1988 = vmatprep.subr.bf16.mxu0 0
      %1989 = vmatpush1.bf16.msra.mxu0 %v1731
      %1990 = vmatprep.subr.bf16.mxu0 0
      %1991 = vmatpush1.bf16.msra.mxu0 %v1732
      %1992 = vmatprep.subr.bf16.mxu0 0
      %1993 = vmatpush1.bf16.msra.mxu0 %v1733
      %1994 = vmatprep.subr.bf16.mxu0 0
      %1995 = vmatpush1.bf16.msra.mxu0 %v1734
      %1996 = vmatprep.subr.bf16.mxu0 0
      %1997 = vmatpush1.bf16.msra.mxu0 %v1735
      %1998 = vmatprep.subr.bf16.mxu0 0
      %1999 = vmatpush1.bf16.msra.mxu0 %v1736
      %2000 = vmatprep.subr.bf16.mxu0 0
      %2001 = vmatpush1.bf16.msra.mxu0 %v1737
      %2002 = vmatprep.subr.bf16.mxu0 0
      %2003 = vmatpush1.bf16.msra.mxu0 %v1738
      %2004 = vmatprep.subr.bf16.mxu0 0
      %2005 = vmatpush1.bf16.msra.mxu0 %v1739
      %2006 = vmatprep.subr.bf16.mxu0 0
      %2007 = vmatpush1.bf16.msra.mxu0 %v1740
      %2008 = vmatprep.subr.bf16.mxu0 0
      %2009 = vmatpush1.bf16.msra.mxu0 %v1741
      %2010 = vmatprep.subr.bf16.mxu0 0
      %2011 = vmatpush1.bf16.msra.mxu0 %v1742
      %2012 = vmatprep.subr.bf16.mxu0 0
      %2013 = vmatpush1.bf16.msra.mxu0 %v1743
      %2014 = vmatprep.subr.bf16.mxu0 0
      %2015 = vmatpush1.bf16.msra.mxu0 %v1744
      %2016 = vmatprep.subr.bf16.mxu0 0
      %2017 = vmatpush1.bf16.msra.mxu0 %v1745
      %2018 = vmatprep.mubr.bf16.mxu0 %v940
      %2019 = vmatmul.mubr.bf16.gmra.mrb[0].mxu0 %v939
      %v2020 = vpop.f32.mrb[0].mxu0
      %v2021 = vadd.f32 %v1216, %v2020
      %v2022 = vpop.f32.mrb[0].mxu0
      %v2023 = vpop.f32.mrb[0].mxu0
      %v2024 = vpop.f32.mrb[0].mxu0
      %2025 = vdwg.mxu0
      %2026 = vmatprep.subr.bf16.mxu0 0
      %2027 = vmatpush1.bf16.msra.mxu0 %v1746
      %2028 = vmatprep.subr.bf16.mxu0 0
      %2029 = vmatpush1.bf16.msra.mxu0 %v1747
      %2030 = vmatprep.subr.bf16.mxu0 0
      %2031 = vmatpush1.bf16.msra.mxu0 %v1748
      %2032 = vmatprep.subr.bf16.mxu0 0
      %2033 = vmatpush1.bf16.msra.mxu0 %v1749
      %2034 = vmatprep.subr.bf16.mxu0 0
      %2035 = vmatpush1.bf16.msra.mxu0 %v1750
      %2036 = vmatprep.subr.bf16.mxu0 0
      %2037 = vmatpush1.bf16.msra.mxu0 %v1751
      %2038 = vmatprep.subr.bf16.mxu0 0
      %2039 = vmatpush1.bf16.msra.mxu0 %v1752
      %2040 = vmatprep.subr.bf16.mxu0 0
      %2041 = vmatpush1.bf16.msra.mxu0 %v1753
      %2042 = vmatprep.subr.bf16.mxu0 0
      %2043 = vmatpush1.bf16.msra.mxu0 %v1754
      %2044 = vmatprep.subr.bf16.mxu0 0
      %2045 = vmatpush1.bf16.msra.mxu0 %v1755
      %2046 = vmatprep.subr.bf16.mxu0 0
      %2047 = vmatpush1.bf16.msra.mxu0 %v1756
      %2048 = vmatprep.subr.bf16.mxu0 0
      %2049 = vmatpush1.bf16.msra.mxu0 %v1757
      %2050 = vmatprep.subr.bf16.mxu0 0
      %2051 = vmatpush1.bf16.msra.mxu0 %v1758
      %2052 = vmatprep.subr.bf16.mxu0 0
      %2053 = vmatpush1.bf16.msra.mxu0 %v1759
      %2054 = vmatprep.subr.bf16.mxu0 0
      %2055 = vmatpush1.bf16.msra.mxu0 %v1760
      %2056 = vmatprep.subr.bf16.mxu0 0
      %2057 = vmatpush1.bf16.msra.mxu0 %v1761
      %2058 = vmatprep.mubr.bf16.mxu0 %v942
      %2059 = vmatmul.mubr.bf16.gmra.mrb[0].mxu0 %v941
      %v2060 = vpop.f32.mrb[0].mxu0
      %v2061 = vadd.f32 %v2021, %v2060
      %v2062 = vpop.f32.mrb[0].mxu0
      %v2063 = vpop.f32.mrb[0].mxu0
      %v2064 = vpop.f32.mrb[0].mxu0
      %2065 = vdwg.mxu0
      %2066 = vmatprep.subr.bf16.mxu0 0
      %2067 = vmatpush1.bf16.msra.mxu0 %v1762
      %2068 = vmatprep.subr.bf16.mxu0 0
      %2069 = vmatpush1.bf16.msra.mxu0 %v1763
      %2070 = vmatprep.subr.bf16.mxu0 0
      %2071 = vmatpush1.bf16.msra.mxu0 %v1764
      %2072 = vmatprep.subr.bf16.mxu0 0
      %2073 = vmatpush1.bf16.msra.mxu0 %v1765
      %2074 = vmatprep.subr.bf16.mxu0 0
      %2075 = vmatpush1.bf16.msra.mxu0 %v1766
      %2076 = vmatprep.subr.bf16.mxu0 0
      %2077 = vmatpush1.bf16.msra.mxu0 %v1767
      %2078 = vmatprep.subr.bf16.mxu0 0
      %2079 = vmatpush1.bf16.msra.mxu0 %v1768
      %2080 = vmatprep.subr.bf16.mxu0 0
      %2081 = vmatpush1.bf16.msra.mxu0 %v1769
      %2082 = vmatprep.subr.bf16.mxu0 0
      %2083 = vmatpush1.bf16.msra.mxu0 %v1770
      %2084 = vmatprep.subr.bf16.mxu0 0
      %2085 = vmatpush1.bf16.msra.mxu0 %v1771
      %2086 = vmatprep.subr.bf16.mxu0 0
      %2087 = vmatpush1.bf16.msra.mxu0 %v1772
      %2088 = vmatprep.subr.bf16.mxu0 0
      %2089 = vmatpush1.bf16.msra.mxu0 %v1773
      %2090 = vmatprep.subr.bf16.mxu0 0
      %2091 = vmatpush1.bf16.msra.mxu0 %v1774
      %2092 = vmatprep.subr.bf16.mxu0 0
      %2093 = vmatpush1.bf16.msra.mxu0 %v1775
      %2094 = vmatprep.subr.bf16.mxu0 0
      %2095 = vmatpush1.bf16.msra.mxu0 %v1776
      %2096 = vmatprep.subr.bf16.mxu0 0
      %2097 = vmatpush1.bf16.msra.mxu0 %v1777
      %2098 = vmatprep.mubr.bf16.mxu0 %v944
      %2099 = vmatmul.mubr.bf16.gmra.mrb[0].mxu0 %v943
      %v2100 = vpop.f32.mrb[0].mxu0
      %v2101 = vadd.f32 %v2061, %v2100
      %v2102 = vpop.f32.mrb[0].mxu0
      %v2103 = vpop.f32.mrb[0].mxu0
      %v2104 = vpop.f32.mrb[0].mxu0
      %2105 = vdwg.mxu0
      %2106 = vmatprep.subr.bf16.mxu0 0
      %2107 = vmatpush1.bf16.msra.mxu0 %v1778
      %2108 = vmatprep.subr.bf16.mxu0 0
      %2109 = vmatpush1.bf16.msra.mxu0 %v1779
      %2110 = vmatprep.subr.bf16.mxu0 0
      %2111 = vmatpush1.bf16.msra.mxu0 %v1780
      %2112 = vmatprep.subr.bf16.mxu0 0
      %2113 = vmatpush1.bf16.msra.mxu0 %v1781
      %2114 = vmatprep.subr.bf16.mxu0 0
      %2115 = vmatpush1.bf16.msra.mxu0 %v1782
      %2116 = vmatprep.subr.bf16.mxu0 0
      %2117 = vmatpush1.bf16.msra.mxu0 %v1783
      %2118 = vmatprep.subr.bf16.mxu0 0
      %2119 = vmatpush1.bf16.msra.mxu0 %v1784
      %2120 = vmatprep.subr.bf16.mxu0 0
      %2121 = vmatpush1.bf16.msra.mxu0 %v1785
      %2122 = vmatprep.subr.bf16.mxu0 0
      %2123 = vmatpush1.bf16.msra.mxu0 %v1786
      %2124 = vmatprep.subr.bf16.mxu0 0
      %2125 = vmatpush1.bf16.msra.mxu0 %v1787
      %2126 = vmatprep.subr.bf16.mxu0 0
      %2127 = vmatpush1.bf16.msra.mxu0 %v1788
      %2128 = vmatprep.subr.bf16.mxu0 0
      %2129 = vmatpush1.bf16.msra.mxu0 %v1789
      %2130 = vmatprep.subr.bf16.mxu0 0
      %2131 = vmatpush1.bf16.msra.mxu0 %v1790
      %2132 = vmatprep.subr.bf16.mxu0 0
      %2133 = vmatpush1.bf16.msra.mxu0 %v1791
      %2134 = vmatprep.subr.bf16.mxu0 0
      %2135 = vmatpush1.bf16.msra.mxu0 %v1792
      %2136 = vmatprep.subr.bf16.mxu0 0
      %2137 = vmatpush1.bf16.msra.mxu0 %v1793
      %2138 = vmatprep.mubr.bf16.mxu0 %v946
      %2139 = vmatmul.mubr.bf16.gmra.mrb[0].mxu0 %v945
      %v2140 = vpop.f32.mrb[0].mxu0
      %v2141 = vadd.f32 %v2101, %v2140
      %v2142 = vpop.f32.mrb[0].mxu0
      %v2143 = vpop.f32.mrb[0].mxu0
      %v2144 = vpop.f32.mrb[0].mxu0
      %2145 = vdwg.mxu0
      %2146 = vmatprep.subr.bf16.mxu0 0
      %2147 = vmatpush1.bf16.msra.mxu0 %v1794
      %2148 = vmatprep.subr.bf16.mxu0 0
      %2149 = vmatpush1.bf16.msra.mxu0 %v1795
      %2150 = vmatprep.subr.bf16.mxu0 0
      %2151 = vmatpush1.bf16.msra.mxu0 %v1796
      %2152 = vmatprep.subr.bf16.mxu0 0
      %2153 = vmatpush1.bf16.msra.mxu0 %v1797
      %2154 = vmatprep.subr.bf16.mxu0 0
      %2155 = vmatpush1.bf16.msra.mxu0 %v1798
      %2156 = vmatprep.subr.bf16.mxu0 0
      %2157 = vmatpush1.bf16.msra.mxu0 %v1799
      %2158 = vmatprep.subr.bf16.mxu0 0
      %2159 = vmatpush1.bf16.msra.mxu0 %v1800
      %2160 = vmatprep.subr.bf16.mxu0 0
      %2161 = vmatpush1.bf16.msra.mxu0 %v1801
      %2162 = vmatprep.subr.bf16.mxu0 0
      %2163 = vmatpush1.bf16.msra.mxu0 %v1802
      %2164 = vmatprep.subr.bf16.mxu0 0
      %2165 = vmatpush1.bf16.msra.mxu0 %v1803
      %2166 = vmatprep.subr.bf16.mxu0 0
      %2167 = vmatpush1.bf16.msra.mxu0 %v1804
      %2168 = vmatprep.subr.bf16.mxu0 0
      %2169 = vmatpush1.bf16.msra.mxu0 %v1805
      %2170 = vmatprep.subr.bf16.mxu0 0
      %2171 = vmatpush1.bf16.msra.mxu0 %v1806
      %2172 = vmatprep.subr.bf16.mxu0 0
      %2173 = vmatpush1.bf16.msra.mxu0 %v1807
      %2174 = vmatprep.subr.bf16.mxu0 0
      %2175 = vmatpush1.bf16.msra.mxu0 %v1808
      %2176 = vmatprep.subr.bf16.mxu0 0
      %2177 = vmatpush1.bf16.msra.mxu0 %v1809
      %2178 = vmatprep.mubr.bf16.mxu0 %v948
      %2179 = vmatmul.mubr.bf16.gmra.mrb[0].mxu0 %v947
      %v2180 = vpop.f32.mrb[0].mxu0
      %v2181 = vadd.f32 %v2141, %v2180
      %v2182 = vpop.f32.mrb[0].mxu0
      %v2183 = vpop.f32.mrb[0].mxu0
      %v2184 = vpop.f32.mrb[0].mxu0
      %2185 = vdwg.mxu0
      %2186 = vmatprep.subr.bf16.mxu0 0
      %2187 = vmatpush1.bf16.msra.mxu0 %v1810
      %2188 = vmatprep.subr.bf16.mxu0 0
      %2189 = vmatpush1.bf16.msra.mxu0 %v1811
      %2190 = vmatprep.subr.bf16.mxu0 0
      %2191 = vmatpush1.bf16.msra.mxu0 %v1812
      %2192 = vmatprep.subr.bf16.mxu0 0
      %2193 = vmatpush1.bf16.msra.mxu0 %v1813
      %2194 = vmatprep.subr.bf16.mxu0 0
      %2195 = vmatpush1.bf16.msra.mxu0 %v1814
      %2196 = vmatprep.subr.bf16.mxu0 0
      %2197 = vmatpush1.bf16.msra.mxu0 %v1815
      %2198 = vmatprep.subr.bf16.mxu0 0
      %2199 = vmatpush1.bf16.msra.mxu0 %v1816
      %2200 = vmatprep.subr.bf16.mxu0 0
      %2201 = vmatpush1.bf16.msra.mxu0 %v1817
      %2202 = vmatprep.subr.bf16.mxu0 0
      %2203 = vmatpush1.bf16.msra.mxu0 %v1818
      %2204 = vmatprep.subr.bf16.mxu0 0
      %2205 = vmatpush1.bf16.msra.mxu0 %v1819
      %2206 = vmatprep.subr.bf16.mxu0 0
      %2207 = vmatpush1.bf16.msra.mxu0 %v1820
      %2208 = vmatprep.subr.bf16.mxu0 0
      %2209 = vmatpush1.bf16.msra.mxu0 %v1821
      %2210 = vmatprep.subr.bf16.mxu0 0
      %2211 = vmatpush1.bf16.msra.mxu0 %v1822
      %2212 = vmatprep.subr.bf16.mxu0 0
      %2213 = vmatpush1.bf16.msra.mxu0 %v1823
      %2214 = vmatprep.subr.bf16.mxu0 0
      %2215 = vmatpush1.bf16.msra.mxu0 %v1824
      %2216 = vmatprep.subr.bf16.mxu0 0
      %2217 = vmatpush1.bf16.msra.mxu0 %v1825
      %2218 = vmatprep.mubr.bf16.mxu0 %v950
      %2219 = vmatmul.mubr.bf16.gmra.mrb[0].mxu0 %v949
      %v2220 = vpop.f32.mrb[0].mxu0
      %v2221 = vadd.f32 %v2181, %v2220
      %v2222 = vpop.f32.mrb[0].mxu0
      %v2223 = vpop.f32.mrb[0].mxu0
      %v2224 = vpop.f32.mrb[0].mxu0
      %2225 = vdwg.mxu0
      %2226 = vmatprep.subr.bf16.mxu0 0
      %2227 = vmatpush1.bf16.msra.mxu0 %v1826
      %2228 = vmatprep.subr.bf16.mxu0 0
      %2229 = vmatpush1.bf16.msra.mxu0 %v1827
      %2230 = vmatprep.subr.bf16.mxu0 0
      %2231 = vmatpush1.bf16.msra.mxu0 %v1828
      %2232 = vmatprep.subr.bf16.mxu0 0
      %2233 = vmatpush1.bf16.msra.mxu0 %v1829
      %2234 = vmatprep.subr.bf16.mxu0 0
      %2235 = vmatpush1.bf16.msra.mxu0 %v1830
      %2236 = vmatprep.subr.bf16.mxu0 0
      %2237 = vmatpush1.bf16.msra.mxu0 %v1831
      %2238 = vmatprep.subr.bf16.mxu0 0
      %2239 = vmatpush1.bf16.msra.mxu0 %v1832
      %2240 = vmatprep.subr.bf16.mxu0 0
      %2241 = vmatpush1.bf16.msra.mxu0 %v1833
      %2242 = vmatprep.subr.bf16.mxu0 0
      %2243 = vmatpush1.bf16.msra.mxu0 %v1834
      %2244 = vmatprep.subr.bf16.mxu0 0
      %2245 = vmatpush1.bf16.msra.mxu0 %v1835
      %2246 = vmatprep.subr.bf16.mxu0 0
      %2247 = vmatpush1.bf16.msra.mxu0 %v1836
      %2248 = vmatprep.subr.bf16.mxu0 0
      %2249 = vmatpush1.bf16.msra.mxu0 %v1837
      %2250 = vmatprep.subr.bf16.mxu0 0
      %2251 = vmatpush1.bf16.msra.mxu0 %v1838
      %2252 = vmatprep.subr.bf16.mxu0 0
      %2253 = vmatpush1.bf16.msra.mxu0 %v1839
      %2254 = vmatprep.subr.bf16.mxu0 0
      %2255 = vmatpush1.bf16.msra.mxu0 %v1840
      %2256 = vmatprep.subr.bf16.mxu0 0
      %2257 = vmatpush1.bf16.msra.mxu0 %v1841
      %2258 = vmatprep.mubr.bf16.mxu0 %v952
      %2259 = vmatmul.mubr.bf16.gmra.mrb[0].mxu0 %v951
      %v2260 = vpop.f32.mrb[0].mxu0
      %v2261 = vadd.f32 %v2221, %v2260
      %v2262 = vpop.f32.mrb[0].mxu0
      %v2263 = vpop.f32.mrb[0].mxu0
      %v2264 = vpop.f32.mrb[0].mxu0
      %2265 = vdwg.mxu0
      %2266 = vmatprep.subr.bf16.mxu0 0
      %2267 = vmatpush1.bf16.msra.mxu0 %v1842
      %2268 = vmatprep.subr.bf16.mxu0 0
      %2269 = vmatpush1.bf16.msra.mxu0 %v1843
      %2270 = vmatprep.subr.bf16.mxu0 0
      %2271 = vmatpush1.bf16.msra.mxu0 %v1844
      %2272 = vmatprep.subr.bf16.mxu0 0
      %2273 = vmatpush1.bf16.msra.mxu0 %v1845
      %2274 = vmatprep.subr.bf16.mxu0 0
      %2275 = vmatpush1.bf16.msra.mxu0 %v1846
      %2276 = vmatprep.subr.bf16.mxu0 0
      %2277 = vmatpush1.bf16.msra.mxu0 %v1847
      %2278 = vmatprep.subr.bf16.mxu0 0
      %2279 = vmatpush1.bf16.msra.mxu0 %v1848
      %2280 = vmatprep.subr.bf16.mxu0 0
      %2281 = vmatpush1.bf16.msra.mxu0 %v1849
      %2282 = vmatprep.subr.bf16.mxu0 0
      %2283 = vmatpush1.bf16.msra.mxu0 %v1850
      %2284 = vmatprep.subr.bf16.mxu0 0
      %2285 = vmatpush1.bf16.msra.mxu0 %v1851
      %2286 = vmatprep.subr.bf16.mxu0 0
      %2287 = vmatpush1.bf16.msra.mxu0 %v1852
      %2288 = vmatprep.subr.bf16.mxu0 0
      %2289 = vmatpush1.bf16.msra.mxu0 %v1853
      %2290 = vmatprep.subr.bf16.mxu0 0
      %2291 = vmatpush1.bf16.msra.mxu0 %v1854
      %2292 = vmatprep.subr.bf16.mxu0 0
      %2293 = vmatpush1.bf16.msra.mxu0 %v1855
      %2294 = vmatprep.subr.bf16.mxu0 0
      %2295 = vmatpush1.bf16.msra.mxu0 %v1856
      %2296 = vmatprep.subr.bf16.mxu0 0
      %2297 = vmatpush1.bf16.msra.mxu0 %v1857
      %2298 = vmatprep.mubr.bf16.mxu0 %v954
      %2299 = vmatmul.mubr.bf16.gmra.mrb[0].mxu0 %v953
      %v2300 = vpop.f32.mrb[0].mxu0
      %v2301 = vadd.f32 %v2261, %v2300
      %v2302 = vpop.f32.mrb[0].mxu0
      %v2303 = vpop.f32.mrb[0].mxu0
      %v2304 = vpop.f32.mrb[0].mxu0
      %2305 = vdwg.mxu0
      %v2306 = vadd.f32 %v275, %v2301
      %2307 = vst.msk [vmem:[%s273] sm:$0xff] %vm278, %v2306
      %p2308 = scmp.lt.s32.totalorder %s18, 1
      %s2309 = scalar_select %p2308, %s18, 1
      %s2310 = smul.addr %s2309, 8
      %s2311 = scalar_lea.vmem %s7, %s2310
      // Predicated region
      $region49: #{transformer_forward.13} parent=47 // pred_check
        %p2312 = pneg %p188
      $region50: #{transformer_forward.13} parent=47 // pred_check_branch
        %2314 = sbr.rel (%p2312) target = $region52
      $region51: #{transformer_forward.13} parent=47 // pred_region
        _
      $region52: #{transformer_forward.13} parent=47 // pred_fallthru
        _
    $region48: #{transformer_forward.13} parent=5 // pred_fallthru
      _
    %p2315 = scmp.le.s32.totalorder 2, %s13
    // Predicated region
    $region53: #{transformer_forward.13} parent=5 // pred_check
      %p2316 = pneg %p2315
    $region54: #{transformer_forward.13} parent=5 // pred_check_branch
      %2318 = sbr.rel (%p2316) target = $region56
    $region55: #{transformer_forward.13} parent=5 // pred_region
      %s2319 = ssub.s32 %s13, 2
      // Predicated region
      $region57: #{transformer_forward.13} parent=55 // pred_check
        %p2320 = pneg %p194
      $region58: #{transformer_forward.13} parent=55 // pred_check_branch
        %2322 = sbr.rel (%p2320) target = $region60
      $region59: #{transformer_forward.13} parent=55 // pred_region
        %p2323 = scmp.lt.s32.totalorder %s19, 1
        %s2324 = scalar_select %p2323, %s19, 1
        %s2325 = smul.addr %s2324, 8
        %s2326 = scalar_lea.vmem %s7, %s2325
      $region60: #{transformer_forward.13} parent=55 // pred_fallthru
        _
    $region56: #{transformer_forward.13} parent=5 // pred_fallthru
      _
  $region6: #{transformer_forward.13} parent=0 // loop_footer
    %s17 = sadd.s32 1, %s13
  $region7: #{transformer_forward.13} parent=0 // loop_footer_branch
    %12 = sbr.rel target = $region3
  $region8: #{transformer_forward.13} parent=0 // loop_exit
    _

// kernel: transformer_forward.18
$region0: #{transformer_forward.18}
  #allocation0 [shape = 'u32[]', space=smem, size = 0x4, offset = 0x4, fixed_abs, tag = 'smem constant byte address 0x4 - core index']
  #allocation1 [shape = 'u32[144,128]{1,0:T(1,128)}', space=vmem, size = 0x12000, scoped, tag = 'internal scratch']
  %s0 = inlined_call_operand.vmem [shape: f32[2,8,32], index: 0, kind: input, shape index: {}]
  %s1 = inlined_call_operand.vmem [shape: f32[2,8,32], index: 1, kind: input, shape index: {}]
  %s2 = inlined_call_operand.vmem [shape: f32[1,32], index: 2, kind: input, shape index: {}]
  %s3 = inlined_call_operand.vmem [shape: f32[1,32], index: 3, kind: input, shape index: {}]
  %s4 = inlined_call_operand.vmem [shape: bf16[32,32], index: 4, kind: input, shape index: {}]
  %s5 = inlined_call_operand.vmem [shape: f32[1,32], index: 5, kind: input, shape index: {}]
  %s6 = inlined_call_operand.vmem [shape: bf16[32,64], index: 6, kind: input, shape index: {}]
  %s7 = inlined_call_operand.vmem [shape: f32[1,64], index: 7, kind: input, shape index: {}]
  %s8 = inlined_call_operand.vmem [shape: bf16[32,32], index: 8, kind: input, shape index: {}]
  %s9 = inlined_call_operand.vmem [shape: f32[1,32], index: 9, kind: input, shape index: {}]
  %s10 = inlined_call_operand.vmem [shape: f32[8,4], index: 10, kind: input, shape index: {}, may-alias: {10,12}]
  %s11 = inlined_call_operand.vmem [shape: f32[8,4], index: 11, kind: input, shape index: {}, may-alias: {11,13}]
  %s12 = inlined_call_operand.vmem [shape: f32[8,4], index: 12, kind: input, shape index: {}, may-alias: {10,12}]
  %s13 = inlined_call_operand.vmem [shape: f32[8,4], index: 13, kind: input, shape index: {}, may-alias: {11,13}]
  %s14 = inlined_call_operand.vmem [shape: f32[2,1,8], index: 14, kind: input, shape index: {}]
  %s15 = inlined_call_operand.vmem [shape: f32[2,8,32], index: 15, kind: output, shape index: {}]
  %s16 = sld [smem:[#allocation0]]
  $region93: #{transformer_forward.18} parent=0
    _
  %s18 = ssub.s32 1, %s16
  %s19 = scalar_select 0, %s18, %s16
  loop: start=0, step=1, limit=4
  $region2: #{transformer_forward.18} parent=0 // loop_pre_header
    _
  $region3: #{transformer_forward.18} parent=0 // loop_header
    %s21 = sphi 0, %s25
    %p22 = scmp.ge.s32.totalorder %s21, 4
    %s31 = sphi 0, %s33
    %s34 = sphi 0, %s31
    %s35 = sphi 0, %s34
    %s51 = sphi 0, %s35
    %s57 = sphi 0, %s59
    %s60 = sphi 0, %s57
    %s61 = sphi 0, %s60
    %s77 = sphi 0, %s61
    %s81 = sphi 0, %s81
    %s83 = sphi 0, %s81
    %s84 = sphi 0, %s83
    %s98 = sphi 0, %s84
    %s102 = sphi 0, %s102
    %s104 = sphi 0, %s102
    %s105 = sphi 0, %s104
    %s119 = sphi 0, %s105
    %s123 = sphi 0, %s123
    %s125 = sphi 0, %s123
    %s126 = sphi 0, %s125
    %s140 = sphi 0, %s126
    %s144 = sphi 0, %s144
    %s146 = sphi 0, %s144
    %s147 = sphi 0, %s146
    %s161 = sphi 0, %s147
    %s165 = sphi 0, %s165
    %s167 = sphi 0, %s165
    %s168 = sphi 0, %s167
    %s182 = sphi 0, %s168
    %s186 = sphi 0, %s186
    %s188 = sphi 0, %s186
    %s189 = sphi 0, %s188
    %s203 = sphi 0, %s189
    %s207 = sphi 0, %s207
    %s209 = sphi 0, %s207
    %s210 = sphi 0, %s209
    %s224 = sphi 0, %s210
    %s228 = sphi 0, %s228
    %s230 = sphi 0, %s228
    %s231 = sphi 0, %s230
    %s245 = sphi 0, %s231
    %s249 = sphi 0, %s249
    %s251 = sphi 0, %s249
    %s252 = sphi 0, %s251
    %s266 = sphi 0, %s252
    %s270 = sphi 0, %s270
    %s272 = sphi 0, %s270
    %s273 = sphi 0, %s272
    %s287 = sphi 0, %s273
    %s291 = sphi 0, %s291
    %s293 = sphi 0, %s291
    %s294 = sphi 0, %s293
    %s308 = sphi 0, %s294
    %s312 = sphi 0, %s312
    %s314 = sphi 0, %s312
    %s315 = sphi 0, %s314
    %s329 = sphi 0, %s315
    %s335 = sphi 0, %s337
    %s338 = sphi 0, %s335
    %s339 = sphi 0, %s338
    %s355 = sphi 0, %s339
    %s361 = sphi 0, %s363
    %s364 = sphi 0, %s361
    %s365 = sphi 0, %s364
    %s381 = sphi 0, %s365
  $region4: #{transformer_forward.18} parent=0 // loop_header_branch
    %24 = sbr.rel (%p22) target = $region8
  $region5: #{transformer_forward.18} parent=0 // loop_body
    %s26 = ssub.s32 %s21, 1
    %s27 = ssub.s32 %s21, 2
    %s28 = sadd.s32 %s21, 1
    %s29 = ssub.s32 %s21, %s28
    %p30 = scmp.eq.s32.totalorder %s29, 0
    %s32 = sadd.s32 %s31, 1
    %s33 = scalar_select %p30, %s31, %s32
    %p36 = pneg %p30
    %p37 = scmp.eq.s32.totalorder %s21, 1
    %p38 = por %p36, %p37
    %p39 = scmp.ne.s32.totalorder %s31, %s34
    %p40 = scmp.eq.s32.totalorder %s21, 0
    %p41 = por %p39, %p40
    %p42 = scmp.ne.s32.totalorder %s31, %s34
    %p43 = scmp.eq.s32.totalorder %s26, 1
    %p44 = por %p42, %p43
    %p45 = scmp.ne.s32.totalorder %s34, %s35
    %p46 = scmp.eq.s32.totalorder %s26, 0
    %p47 = por %p45, %p46
    %p48 = scmp.ne.s32.totalorder %s34, %s35
    %p49 = scmp.eq.s32.totalorder %s27, 1
    %p50 = por %p48, %p49
    %p52 = scmp.ne.s32.totalorder %s35, %s51
    %p53 = scmp.eq.s32.totalorder %s27, 0
    %p54 = por %p52, %p53
    %s55 = ssub.s32 %s21, %s28
    %p56 = scmp.eq.s32.totalorder %s55, 0
    %s58 = sadd.s32 %s57, 1
    %s59 = scalar_select %p56, %s57, %s58
    %p62 = pneg %p56
    %p63 = scmp.eq.s32.totalorder %s21, 1
    %p64 = por %p62, %p63
    %p65 = scmp.ne.s32.totalorder %s57, %s60
    %p66 = scmp.eq.s32.totalorder %s21, 0
    %p67 = por %p65, %p66
    %p68 = scmp.ne.s32.totalorder %s57, %s60
    %p69 = scmp.eq.s32.totalorder %s26, 1
    %p70 = por %p68, %p69
    %p71 = scmp.ne.s32.totalorder %s60, %s61
    %p72 = scmp.eq.s32.totalorder %s26, 0
    %p73 = por %p71, %p72
    %p74 = scmp.ne.s32.totalorder %s60, %s61
    %p75 = scmp.eq.s32.totalorder %s27, 1
    %p76 = por %p74, %p75
    %p78 = scmp.ne.s32.totalorder %s61, %s77
    %p79 = scmp.eq.s32.totalorder %s27, 0
    %p80 = por %p78, %p79
    %s82 = sadd.s32 %s81, 1
    %p85 = scmp.eq.s32.totalorder %s21, 1
    %p86 = scmp.ne.s32.totalorder %s81, %s83
    %p87 = scmp.eq.s32.totalorder %s21, 0
    %p88 = por %p86, %p87
    %p89 = scmp.ne.s32.totalorder %s81, %s83
    %p90 = scmp.eq.s32.totalorder %s26, 1
    %p91 = por %p89, %p90
    %p92 = scmp.ne.s32.totalorder %s83, %s84
    %p93 = scmp.eq.s32.totalorder %s26, 0
    %p94 = por %p92, %p93
    %p95 = scmp.ne.s32.totalorder %s83, %s84
    %p96 = scmp.eq.s32.totalorder %s27, 1
    %p97 = por %p95, %p96
    %p99 = scmp.ne.s32.totalorder %s84, %s98
    %p100 = scmp.eq.s32.totalorder %s27, 0
    %p101 = por %p99, %p100
    %s103 = sadd.s32 %s102, 1
    %p106 = scmp.eq.s32.totalorder %s21, 1
    %p107 = scmp.ne.s32.totalorder %s102, %s104
    %p108 = scmp.eq.s32.totalorder %s21, 0
    %p109 = por %p107, %p108
    %p110 = scmp.ne.s32.totalorder %s102, %s104
    %p111 = scmp.eq.s32.totalorder %s26, 1
    %p112 = por %p110, %p111
    %p113 = scmp.ne.s32.totalorder %s104, %s105
    %p114 = scmp.eq.s32.totalorder %s26, 0
    %p115 = por %p113, %p114
    %p116 = scmp.ne.s32.totalorder %s104, %s105
    %p117 = scmp.eq.s32.totalorder %s27, 1
    %p118 = por %p116, %p117
    %p120 = scmp.ne.s32.totalorder %s105, %s119
    %p121 = scmp.eq.s32.totalorder %s27, 0
    %p122 = por %p120, %p121
    %s124 = sadd.s32 %s123, 1
    %p127 = scmp.eq.s32.totalorder %s21, 1
    %p128 = scmp.ne.s32.totalorder %s123, %s125
    %p129 = scmp.eq.s32.totalorder %s21, 0
    %p130 = por %p128, %p129
    %p131 = scmp.ne.s32.totalorder %s123, %s125
    %p132 = scmp.eq.s32.totalorder %s26, 1
    %p133 = por %p131, %p132
    %p134 = scmp.ne.s32.totalorder %s125, %s126
    %p135 = scmp.eq.s32.totalorder %s26, 0
    %p136 = por %p134, %p135
    %p137 = scmp.ne.s32.totalorder %s125, %s126
    %p138 = scmp.eq.s32.totalorder %s27, 1
    %p139 = por %p137, %p138
    %p141 = scmp.ne.s32.totalorder %s126, %s140
    %p142 = scmp.eq.s32.totalorder %s27, 0
    %p143 = por %p141, %p142
    %s145 = sadd.s32 %s144, 1
    %p148 = scmp.eq.s32.totalorder %s21, 1
    %p149 = scmp.ne.s32.totalorder %s144, %s146
    %p150 = scmp.eq.s32.totalorder %s21, 0
    %p151 = por %p149, %p150
    %p152 = scmp.ne.s32.totalorder %s144, %s146
    %p153 = scmp.eq.s32.totalorder %s26, 1
    %p154 = por %p152, %p153
    %p155 = scmp.ne.s32.totalorder %s146, %s147
    %p156 = scmp.eq.s32.totalorder %s26, 0
    %p157 = por %p155, %p156
    %p158 = scmp.ne.s32.totalorder %s146, %s147
    %p159 = scmp.eq.s32.totalorder %s27, 1
    %p160 = por %p158, %p159
    %p162 = scmp.ne.s32.totalorder %s147, %s161
    %p163 = scmp.eq.s32.totalorder %s27, 0
    %p164 = por %p162, %p163
    %s166 = sadd.s32 %s165, 1
    %p169 = scmp.eq.s32.totalorder %s21, 1
    %p170 = scmp.ne.s32.totalorder %s165, %s167
    %p171 = scmp.eq.s32.totalorder %s21, 0
    %p172 = por %p170, %p171
    %p173 = scmp.ne.s32.totalorder %s165, %s167
    %p174 = scmp.eq.s32.totalorder %s26, 1
    %p175 = por %p173, %p174
    %p176 = scmp.ne.s32.totalorder %s167, %s168
    %p177 = scmp.eq.s32.totalorder %s26, 0
    %p178 = por %p176, %p177
    %p179 = scmp.ne.s32.totalorder %s167, %s168
    %p180 = scmp.eq.s32.totalorder %s27, 1
    %p181 = por %p179, %p180
    %p183 = scmp.ne.s32.totalorder %s168, %s182
    %p184 = scmp.eq.s32.totalorder %s27, 0
    %p185 = por %p183, %p184
    %s187 = sadd.s32 %s186, 1
    %p190 = scmp.eq.s32.totalorder %s21, 1
    %p191 = scmp.ne.s32.totalorder %s186, %s188
    %p192 = scmp.eq.s32.totalorder %s21, 0
    %p193 = por %p191, %p192
    %p194 = scmp.ne.s32.totalorder %s186, %s188
    %p195 = scmp.eq.s32.totalorder %s26, 1
    %p196 = por %p194, %p195
    %p197 = scmp.ne.s32.totalorder %s188, %s189
    %p198 = scmp.eq.s32.totalorder %s26, 0
    %p199 = por %p197, %p198
    %p200 = scmp.ne.s32.totalorder %s188, %s189
    %p201 = scmp.eq.s32.totalorder %s27, 1
    %p202 = por %p200, %p201
    %p204 = scmp.ne.s32.totalorder %s189, %s203
    %p205 = scmp.eq.s32.totalorder %s27, 0
    %p206 = por %p204, %p205
    %s208 = sadd.s32 %s207, 1
    %p211 = scmp.eq.s32.totalorder %s21, 1
    %p212 = scmp.ne.s32.totalorder %s207, %s209
    %p213 = scmp.eq.s32.totalorder %s21, 0
    %p214 = por %p212, %p213
    %p215 = scmp.ne.s32.totalorder %s207, %s209
    %p216 = scmp.eq.s32.totalorder %s26, 1
    %p217 = por %p215, %p216
    %p218 = scmp.ne.s32.totalorder %s209, %s210
    %p219 = scmp.eq.s32.totalorder %s26, 0
    %p220 = por %p218, %p219
    %p221 = scmp.ne.s32.totalorder %s209, %s210
    %p222 = scmp.eq.s32.totalorder %s27, 1
    %p223 = por %p221, %p222
    %p225 = scmp.ne.s32.totalorder %s210, %s224
    %p226 = scmp.eq.s32.totalorder %s27, 0
    %p227 = por %p225, %p226
    %s229 = sadd.s32 %s228, 1
    %p232 = scmp.eq.s32.totalorder %s21, 1
    %p233 = scmp.ne.s32.totalorder %s228, %s230
    %p234 = scmp.eq.s32.totalorder %s21, 0
    %p235 = por %p233, %p234
    %p236 = scmp.ne.s32.totalorder %s228, %s230
    %p237 = scmp.eq.s32.totalorder %s26, 1
    %p238 = por %p236, %p237
    %p239 = scmp.ne.s32.totalorder %s230, %s231
    %p240 = scmp.eq.s32.totalorder %s26, 0
    %p241 = por %p239, %p240
    %p242 = scmp.ne.s32.totalorder %s230, %s231
    %p243 = scmp.eq.s32.totalorder %s27, 1
    %p244 = por %p242, %p243
    %p246 = scmp.ne.s32.totalorder %s231, %s245
    %p247 = scmp.eq.s32.totalorder %s27, 0
    %p248 = por %p246, %p247
    %s250 = sadd.s32 %s249, 1
    %p253 = scmp.eq.s32.totalorder %s21, 1
    %p254 = scmp.ne.s32.totalorder %s249, %s251
    %p255 = scmp.eq.s32.totalorder %s21, 0
    %p256 = por %p254, %p255
    %p257 = scmp.ne.s32.totalorder %s249, %s251
    %p258 = scmp.eq.s32.totalorder %s26, 1
    %p259 = por %p257, %p258
    %p260 = scmp.ne.s32.totalorder %s251, %s252
    %p261 = scmp.eq.s32.totalorder %s26, 0
    %p262 = por %p260, %p261
    %p263 = scmp.ne.s32.totalorder %s251, %s252
    %p264 = scmp.eq.s32.totalorder %s27, 1
    %p265 = por %p263, %p264
    %p267 = scmp.ne.s32.totalorder %s252, %s266
    %p268 = scmp.eq.s32.totalorder %s27, 0
    %p269 = por %p267, %p268
    %s271 = sadd.s32 %s270, 1
    %p274 = scmp.eq.s32.totalorder %s21, 1
    %p275 = scmp.ne.s32.totalorder %s270, %s272
    %p276 = scmp.eq.s32.totalorder %s21, 0
    %p277 = por %p275, %p276
    %p278 = scmp.ne.s32.totalorder %s270, %s272
    %p279 = scmp.eq.s32.totalorder %s26, 1
    %p280 = por %p278, %p279
    %p281 = scmp.ne.s32.totalorder %s272, %s273
    %p282 = scmp.eq.s32.totalorder %s26, 0
    %p283 = por %p281, %p282
    %p284 = scmp.ne.s32.totalorder %s272, %s273
    %p285 = scmp.eq.s32.totalorder %s27, 1
    %p286 = por %p284, %p285
    %p288 = scmp.ne.s32.totalorder %s273, %s287
    %p289 = scmp.eq.s32.totalorder %s27, 0
    %p290 = por %p288, %p289
    %s292 = sadd.s32 %s291, 1
    %p295 = scmp.eq.s32.totalorder %s21, 1
    %p296 = scmp.ne.s32.totalorder %s291, %s293
    %p297 = scmp.eq.s32.totalorder %s21, 0
    %p298 = por %p296, %p297
    %p299 = scmp.ne.s32.totalorder %s291, %s293
    %p300 = scmp.eq.s32.totalorder %s26, 1
    %p301 = por %p299, %p300
    %p302 = scmp.ne.s32.totalorder %s293, %s294
    %p303 = scmp.eq.s32.totalorder %s26, 0
    %p304 = por %p302, %p303
    %p305 = scmp.ne.s32.totalorder %s293, %s294
    %p306 = scmp.eq.s32.totalorder %s27, 1
    %p307 = por %p305, %p306
    %p309 = scmp.ne.s32.totalorder %s294, %s308
    %p310 = scmp.eq.s32.totalorder %s27, 0
    %p311 = por %p309, %p310
    %s313 = sadd.s32 %s312, 1
    %p316 = scmp.eq.s32.totalorder %s21, 1
    %p317 = scmp.ne.s32.totalorder %s312, %s314
    %p318 = scmp.eq.s32.totalorder %s21, 0
    %p319 = por %p317, %p318
    %p320 = scmp.ne.s32.totalorder %s312, %s314
    %p321 = scmp.eq.s32.totalorder %s26, 1
    %p322 = por %p320, %p321
    %p323 = scmp.ne.s32.totalorder %s314, %s315
    %p324 = scmp.eq.s32.totalorder %s26, 0
    %p325 = por %p323, %p324
    %p326 = scmp.ne.s32.totalorder %s314, %s315
    %p327 = scmp.eq.s32.totalorder %s27, 1
    %p328 = por %p326, %p327
    %p330 = scmp.ne.s32.totalorder %s315, %s329
    %p331 = scmp.eq.s32.totalorder %s27, 0
    %p332 = por %p330, %p331
    %s333 = ssub.s32 %s21, %s28
    %p334 = scmp.eq.s32.totalorder %s333, 0
    %s336 = sadd.s32 %s335, 1
    %s337 = scalar_select %p334, %s335, %s336
    %p340 = pneg %p334
    %p341 = scmp.eq.s32.totalorder %s21, 1
    %p342 = por %p340, %p341
    %p343 = scmp.ne.s32.totalorder %s335, %s338
    %p344 = scmp.eq.s32.totalorder %s21, 0
    %p345 = por %p343, %p344
    %p346 = scmp.ne.s32.totalorder %s335, %s338
    %p347 = scmp.eq.s32.totalorder %s26, 1
    %p348 = por %p346, %p347
    %p349 = scmp.ne.s32.totalorder %s338, %s339
    %p350 = scmp.eq.s32.totalorder %s26, 0
    %p351 = por %p349, %p350
    %p352 = scmp.ne.s32.totalorder %s338, %s339
    %p353 = scmp.eq.s32.totalorder %s27, 1
    %p354 = por %p352, %p353
    %p356 = scmp.ne.s32.totalorder %s339, %s355
    %p357 = scmp.eq.s32.totalorder %s27, 0
    %p358 = por %p356, %p357
    %s359 = ssub.s32 %s21, %s28
    %p360 = scmp.eq.s32.totalorder %s359, 0
    %s362 = sadd.s32 %s361, 1
    %s363 = scalar_select %p360, %s361, %s362
    %p366 = pneg %p360
    %p367 = scmp.eq.s32.totalorder %s21, 1
    %p368 = por %p366, %p367
    %p369 = scmp.ne.s32.totalorder %s361, %s364
    %p370 = scmp.eq.s32.totalorder %s21, 0
    %p371 = por %p369, %p370
    %p372 = scmp.ne.s32.totalorder %s361, %s364
    %p373 = scmp.eq.s32.totalorder %s26, 1
    %p374 = por %p372, %p373
    %p375 = scmp.ne.s32.totalorder %s364, %s365
    %p376 = scmp.eq.s32.totalorder %s26, 0
    %p377 = por %p375, %p376
    %p378 = scmp.ne.s32.totalorder %s364, %s365
    %p379 = scmp.eq.s32.totalorder %s27, 1
    %p380 = por %p378, %p379
    %p382 = scmp.ne.s32.totalorder %s365, %s381
    %p383 = scmp.eq.s32.totalorder %s27, 0
    %p384 = por %p382, %p383
    %p385 = scmp.le.s32.totalorder 1, %s21
    %p386 = scmp.lt.s32.totalorder %s21, 3
    %p387 = pnand %p385, %p386
    %p388 = pneg %p387
    // Predicated region
    $region9: #{transformer_forward.18} parent=5 // pred_check
      _
    $region10: #{transformer_forward.18} parent=5 // pred_check_branch
      %390 = sbr.rel (%p387) target = $region12
    $region11: #{transformer_forward.18} parent=5 // pred_region
      %s391 = ssub.s32 %s21, 1
      // Predicated region
      $region13: #{transformer_forward.18} parent=11 // pred_check
        %p392 = pneg %p94
      $region14: #{transformer_forward.18} parent=11 // pred_check_branch
        %394 = sbr.rel (%p392) target = $region16
      $region15: #{transformer_forward.18} parent=11 // pred_region
        _
      $region16: #{transformer_forward.18} parent=11 // pred_fallthru
        _
      // Predicated region
      $region17: #{transformer_forward.18} parent=11 // pred_check
        %p395 = pneg %p115
      $region18: #{transformer_forward.18} parent=11 // pred_check_branch
        %397 = sbr.rel (%p395) target = $region20
      $region19: #{transformer_forward.18} parent=11 // pred_region
        _
      $region20: #{transformer_forward.18} parent=11 // pred_fallthru
        _
      // Predicated region
      $region21: #{transformer_forward.18} parent=11 // pred_check
        %p398 = pneg %p136
      $region22: #{transformer_forward.18} parent=11 // pred_check_branch
        %400 = sbr.rel (%p398) target = $region24
      $region23: #{transformer_forward.18} parent=11 // pred_region
        _
      $region24: #{transformer_forward.18} parent=11 // pred_fallthru
        _
      // Predicated region
      $region25: #{transformer_forward.18} parent=11 // pred_check
        %p401 = pneg %p157
      $region26: #{transformer_forward.18} parent=11 // pred_check_branch
        %403 = sbr.rel (%p401) target = $region28
      $region27: #{transformer_forward.18} parent=11 // pred_region
        _
      $region28: #{transformer_forward.18} parent=11 // pred_fallthru
        _
      // Predicated region
      $region29: #{transformer_forward.18} parent=11 // pred_check
        %p404 = pneg %p178
      $region30: #{transformer_forward.18} parent=11 // pred_check_branch
        %406 = sbr.rel (%p404) target = $region32
      $region31: #{transformer_forward.18} parent=11 // pred_region
        _
      $region32: #{transformer_forward.18} parent=11 // pred_fallthru
        _
      // Predicated region
      $region33: #{transformer_forward.18} parent=11 // pred_check
        %p407 = pneg %p199
      $region34: #{transformer_forward.18} parent=11 // pred_check_branch
        %409 = sbr.rel (%p407) target = $region36
      $region35: #{transformer_forward.18} parent=11 // pred_region
        _
      $region36: #{transformer_forward.18} parent=11 // pred_fallthru
        _
      // Predicated region
      $region37: #{transformer_forward.18} parent=11 // pred_check
        %p410 = pneg %p220
      $region38: #{transformer_forward.18} parent=11 // pred_check_branch
        %412 = sbr.rel (%p410) target = $region40
      $region39: #{transformer_forward.18} parent=11 // pred_region
        _
      $region40: #{transformer_forward.18} parent=11 // pred_fallthru
        _
      // Predicated region
      $region41: #{transformer_forward.18} parent=11 // pred_check
        %p413 = pneg %p241
      $region42: #{transformer_forward.18} parent=11 // pred_check_branch
        %415 = sbr.rel (%p413) target = $region44
      $region43: #{transformer_forward.18} parent=11 // pred_region
        _
      $region44: #{transformer_forward.18} parent=11 // pred_fallthru
        _
      // Predicated region
      $region45: #{transformer_forward.18} parent=11 // pred_check
        %p416 = pneg %p262
      $region46: #{transformer_forward.18} parent=11 // pred_check_branch
        %418 = sbr.rel (%p416) target = $region48
      $region47: #{transformer_forward.18} parent=11 // pred_region
        _
      $region48: #{transformer_forward.18} parent=11 // pred_fallthru
        _
      // Predicated region
      $region49: #{transformer_forward.18} parent=11 // pred_check
        %p419 = pneg %p283
      $region50: #{transformer_forward.18} parent=11 // pred_check_branch
        %421 = sbr.rel (%p419) target = $region52
      $region51: #{transformer_forward.18} parent=11 // pred_region
        _
      $region52: #{transformer_forward.18} parent=11 // pred_fallthru
        _
      // Predicated region
      $region53: #{transformer_forward.18} parent=11 // pred_check
        %p422 = pneg %p304
      $region54: #{transformer_forward.18} parent=11 // pred_check_branch
        %424 = sbr.rel (%p422) target = $region56
      $region55: #{transformer_forward.18} parent=11 // pred_region
        _
      $region56: #{transformer_forward.18} parent=11 // pred_fallthru
        _
      // Predicated region
      $region57: #{transformer_forward.18} parent=11 // pred_check
        %p425 = pneg %p325
      $region58: #{transformer_forward.18} parent=11 // pred_check_branch
        %427 = sbr.rel (%p425) target = $region60
      $region59: #{transformer_forward.18} parent=11 // pred_region
        _
      $region60: #{transformer_forward.18} parent=11 // pred_fallthru
        _
    $region12: #{transformer_forward.18} parent=5 // pred_fallthru
      _
    %p428 = scmp.lt.s32.totalorder %s21, 2
    // Predicated region
    $region61: #{transformer_forward.18} parent=5 // pred_check
      %p429 = pneg %p428
    $region62: #{transformer_forward.18} parent=5 // pred_check_branch
      %431 = sbr.rel (%p429) target = $region64
    $region63: #{transformer_forward.18} parent=5 // pred_region
      // Predicated region
      $region65: #{transformer_forward.18} parent=63 // pred_check
        %p432 = pneg %p41
      $region66: #{transformer_forward.18} parent=63 // pred_check_branch
        %434 = sbr.rel (%p432) target = $region68
      $region67: #{transformer_forward.18} parent=63 // pred_region
        %p435 = scmp.lt.s32.totalorder %s21, 1
        %s436 = scalar_select %p435, %s21, 1
        %s437 = smul.addr %s436, 8
        %s438 = scalar_lea.vmem %s0, %s437
      $region68: #{transformer_forward.18} parent=63 // pred_fallthru
        _
      // Predicated region
      $region69: #{transformer_forward.18} parent=63 // pred_check
        %p439 = pneg %p67
      $region70: #{transformer_forward.18} parent=63 // pred_check_branch
        %441 = sbr.rel (%p439) target = $region72
      $region71: #{transformer_forward.18} parent=63 // pred_region
        %p442 = scmp.lt.s32.totalorder %s21, 1
        %s443 = scalar_select %p442, %s21, 1
        %s444 = smul.addr %s443, 8
        %s445 = scalar_lea.vmem %s1, %s444
      $region72: #{transformer_forward.18} parent=63 // pred_fallthru
        _
      // Predicated region
      $region73: #{transformer_forward.18} parent=63 // pred_check
        %p446 = pneg %p345
      $region74: #{transformer_forward.18} parent=63 // pred_check_branch
        %448 = sbr.rel (%p446) target = $region76
      $region75: #{transformer_forward.18} parent=63 // pred_region
        %p449 = scmp.lt.s32.totalorder %s21, 1
        %s450 = scalar_select %p449, %s21, 1
        %s451 = scalar_lea.vmem %s14, %s450
      $region76: #{transformer_forward.18} parent=63 // pred_fallthru
        _
    $region64: #{transformer_forward.18} parent=5 // pred_fallthru
      _
    %p452 = scmp.le.s32.totalorder 1, %s21
    %p453 = scmp.lt.s32.totalorder %s21, 3
    %p454 = pnand %p452, %p453
    %p455 = pneg %p454
    // Predicated region
    $region77: #{transformer_forward.18} parent=5 // pred_check
      _
    $region78: #{transformer_forward.18} parent=5 // pred_check_branch
      %457 = sbr.rel (%p454) target = $region80
    $region79: #{transformer_forward.18} parent=5 // pred_region
      %s458 = ssub.s32 %s21, 1
      %p459 = scmp.lt.s32.totalorder %s26, 1
      %s460 = scalar_select %p459, %s26, 1
      %s461 = smul.addr %s460, 8
      %s462 = scalar_lea.vmem %s0, %s461
      %p463 = pneg %p47
      %p464 = pneg %p44
      %p465 = scmp.lt.s32.totalorder %s26, 1
      %s466 = scalar_select %p465, %s26, 1
      %s467 = smul.addr %s466, 8
      %s468 = scalar_lea.vmem %s1, %s467
      %p469 = pneg %p73
      %p470 = pneg %p70
      %p471 = pneg %p94
      %p472 = pneg %p91
      %p473 = pneg %p115
      %p474 = pneg %p112
      %p475 = pneg %p136
      %p476 = pneg %p133
      %p477 = pneg %p157
      %p478 = pneg %p154
      %p479 = pneg %p178
      %p480 = pneg %p175
      %p481 = pneg %p199
      %p482 = pneg %p196
      %p483 = pneg %p220
      %p484 = pneg %p217
      %p485 = pneg %p241
      %p486 = pneg %p238
      %p487 = pneg %p262
      %p488 = pneg %p259
      %p489 = pneg %p283
      %p490 = pneg %p280
      %p491 = pneg %p304
      %p492 = pneg %p301
      %p493 = pneg %p325
      %p494 = pneg %p322
      %p495 = scmp.lt.s32.totalorder %s26, 1
      %s496 = scalar_select %p495, %s26, 1
      %s497 = scalar_lea.vmem %s14, %s496
      %p498 = pneg %p351
      %p499 = pneg %p348
      %p500 = pneg %p377
      %p501 = pneg %p374
      %p502 = scmp.lt.s32.totalorder %s26, 1
      %s503 = scalar_select %p502, %s26, 1
      %s504 = smul.addr %s503, 8
      %s505 = scalar_lea.vmem %s15, %s504
      %p506 = scmp.lt.s32.totalorder %s26, 1
      %s507 = scalar_select %p506, %s26, 1
      %s508 = smul.addr %s507, 8
      %s509 = scalar_lea.vmem %s0, %s508
      %p510 = scmp.lt.s32.totalorder %s26, 1
      %s511 = scalar_select %p510, %s26, 1
      %s512 = smul.addr %s511, 8
      %s513 = scalar_lea.vmem %s1, %s512
      %p514 = scmp.lt.s32.totalorder %s26, 1
      %s515 = scalar_select %p514, %s26, 1
      %s516 = scalar_lea.vmem %s14, %s515
      %p517 = scmp.lt.s32.totalorder %s26, 1
      %s518 = scalar_select %p517, %s26, 1
      %s519 = smul.addr %s518, 8
      %s520 = scalar_lea.vmem %s15, %s519
      %v522 = vld [vmem:[%s509] sm:$0xff]
      %v523 = vld [vmem:[%s2] sm:$0x1]
      %v524 = vld [vmem:[%s3] sm:$0x1]
      %vm525 = vcmask 261120
      %v526 = vsel %vm525, %v522, 0.0
      %527 = vadd.xlane.f32.xlu0 %v526
      %v528 = vpop.xlane.xlu0 %527
      %v529 = vrcp.pop 32.0
      %v530 = vmul.f32 %v528, %v529
      %v531 = vsub.f32 %v522, %v530
      %v532 = vmul.f32 %v531, %v531
      %v533 = vsel %vm525, %v532, 0.0
      %534 = vadd.xlane.f32.xlu0 %v533
      %v535 = vpop.xlane.xlu0 %534
      %v536 = vrcp.pop 31.0
      %v537 = vmul.f32 %v535, %v536
      %v538 = vrsqrt.pop %v537
      %v539 = vmul.f32 %v537, %v538
      %vm540 = vcmp.eq.f32.partialorder %v537, inf
      %v541 = vsel %vm540, %v537, %v539
      %vm542 = vcmp.eq.f32.partialorder %v537, 0.0
      %v543 = vand.u32 %v537, 2147483648
      %v544 = vsel %vm542, %v543, %v541
      %v546 = vlaneseq
      %v547 = vshrl.u32 %v546, 7
      %v548 = vsub.s32 0, %v547
      %v549 = vrot.slane %v523, %v548
      %v551 = vmul.f32 %v549, %v531
      %v552 = vadd.f32 %v544, 1e-06
      %v553 = vrcp.pop %v552
      %v554 = vmul.f32 %v551, %v553
      %v556 = vlaneseq
      %v557 = vshrl.u32 %v556, 7
      %v558 = vsub.s32 0, %v557
      %v559 = vrot.slane %v524, %v558
      %v561 = vadd.f32 %v554, %v559
      %v562 = vpack.c.bf16 %v561, %v561
      %v563 = vld [vmem:[%s4] sm:$0xf]
      %v564 = vld [vmem:[%s4 + $0x4] sm:$0xf]
      %v565 = vld [vmem:[%s4 + $0x8] sm:$0xf]
      %v566 = vld [vmem:[%s4 + $0xc] sm:$0xf]
      %v567 = vld [vmem:[%s5] sm:$0x1]
      %v569 = vlaneseq
      %v570 = vshrl.u32 %v569, 7
      %v571 = vsub.s32 0, %v570
      %v572 = vrot.slane %v567, %v571
      %v578 = vunpack.c.l.b16 %v563
      %v579 = vunpack.c.l.b16 %v564
      %v580 = vunpack.c.l.b16 %v565
      %v581 = vunpack.c.l.b16 %v566
      %v582 = vpack.c.b16 %v579, %v578
      %v583 = vpack.c.b16 %v581, %v580
      %v587 = vsel %vm525, %v562, 0
      %589 = vmatprep.subr.bf16.mxu0 0
      %590 = vmatpush1.bf16.msra.mxu0 %v582
      %591 = vmatprep.subr.bf16.mxu0 0
      %592 = vmatpush1.bf16.msra.mxu0 %v583
      %593 = vmatprep.subr.bf16.mxu0 0
      %594 = vmatpush1.bf16.msra.mxu0 0
      %595 = vmatprep.subr.bf16.mxu0 0
      %596 = vmatpush1.bf16.msra.mxu0 0
      %597 = vmatprep.subr.bf16.mxu0 0
      %598 = vmatpush1.bf16.msra.mxu0 0
      %599 = vmatprep.subr.bf16.mxu0 0
      %600 = vmatpush1.bf16.msra.mxu0 0
      %601 = vmatprep.subr.bf16.mxu0 0
      %602 = vmatpush1.bf16.msra.mxu0 0
      %603 = vmatprep.subr.bf16.mxu0 0
      %604 = vmatpush1.bf16.msra.mxu0 0
      %605 = vmatprep.subr.bf16.mxu0 0
      %606 = vmatpush1.bf16.msra.mxu0 0
      %607 = vmatprep.subr.bf16.mxu0 0
      %608 = vmatpush1.bf16.msra.mxu0 0
      %609 = vmatprep.subr.bf16.mxu0 0
      %610 = vmatpush1.bf16.msra.mxu0 0
      %611 = vmatprep.subr.bf16.mxu0 0
      %612 = vmatpush1.bf16.msra.mxu0 0
      %613 = vmatprep.subr.bf16.mxu0 0
      %614 = vmatpush1.bf16.msra.mxu0 0
      %615 = vmatprep.subr.bf16.mxu0 0
      %616 = vmatpush1.bf16.msra.mxu0 0
      %617 = vmatprep.subr.bf16.mxu0 0
      %618 = vmatpush1.bf16.msra.mxu0 0
      %619 = vmatprep.subr.bf16.mxu0 0
      %620 = vmatpush1.bf16.msra.mxu0 0
      %621 = vmatprep.mubr.bf16.mxu0 0
      %622 = vmatmul.mubr.bf16.gmra.mrb[0].mxu0 %v587
      %v623 = vpop.f32.mrb[0].mxu0
      %v624 = vadd.f32 %v572, %v623
      %v625 = vpop.f32.mrb[0].mxu0
      %v626 = vpop.f32.mrb[0].mxu0
      %v627 = vpop.f32.mrb[0].mxu0
      %628 = vdwg.mxu0
      %v629 = vld [vmem:[%s513] sm:$0xff]
      %v630 = vpack.c.bf16 %v629, %v629
      %v631 = vld [vmem:[%s6] sm:$0xf]
      %v632 = vld [vmem:[%s6 + $0x4] sm:$0xf]
      %v633 = vld [vmem:[%s6 + $0x8] sm:$0xf]
      %v634 = vld [vmem:[%s6 + $0xc] sm:$0xf]
      %v635 = vld [vmem:[%s7] sm:$0x1]
      %v637 = vlaneseq
      %v638 = vshrl.u32 %v637, 7
      %v639 = vsub.s32 0, %v638
      %v640 = vrot.slane %v635, %v639
      %v646 = vunpack.c.l.b16 %v631
      %v647 = vunpack.c.l.b16 %v632
      %v648 = vunpack.c.l.b16 %v633
      %v649 = vunpack.c.l.b16 %v634
      %v650 = vpack.c.b16 %v647, %v646
      %v651 = vpack.c.b16 %v649, %v648
      %v655 = vsel %vm525, %v630, 0
      %657 = vmatprep.subr.bf16.mxu0 0
      %658 = vmatpush1.bf16.msra.mxu0 %v650
      %659 = vmatprep.subr.bf16.mxu0 0
      %660 = vmatpush1.bf16.msra.mxu0 %v651
      %661 = vmatprep.subr.bf16.mxu0 0
      %662 = vmatpush1.bf16.msra.mxu0 0
      %663 = vmatprep.subr.bf16.mxu0 0
      %664 = vmatpush1.bf16.msra.mxu0 0
      %665 = vmatprep.subr.bf16.mxu0 0
      %666 = vmatpush1.bf16.msra.mxu0 0
      %667 = vmatprep.subr.bf16.mxu0 0
      %668 = vmatpush1.bf16.msra.mxu0 0
      %669 = vmatprep.subr.bf16.mxu0 0
      %670 = vmatpush1.bf16.msra.mxu0 0
      %671 = vmatprep.subr.bf16.mxu0 0
      %672 = vmatpush1.bf16.msra.mxu0 0
      %673 = vmatprep.subr.bf16.mxu0 0
      %674 = vmatpush1.bf16.msra.mxu0 0
      %675 = vmatprep.subr.bf16.mxu0 0
      %676 = vmatpush1.bf16.msra.mxu0 0
      %677 = vmatprep.subr.bf16.mxu0 0
      %678 = vmatpush1.bf16.msra.mxu0 0
      %679 = vmatprep.subr.bf16.mxu0 0
      %680 = vmatpush1.bf16.msra.mxu0 0
      %681 = vmatprep.subr.bf16.mxu0 0
      %682 = vmatpush1.bf16.msra.mxu0 0
      %683 = vmatprep.subr.bf16.mxu0 0
      %684 = vmatpush1.bf16.msra.mxu0 0
      %685 = vmatprep.subr.bf16.mxu0 0
      %686 = vmatpush1.bf16.msra.mxu0 0
      %687 = vmatprep.subr.bf16.mxu0 0
      %688 = vmatpush1.bf16.msra.mxu0 0
      %689 = vmatprep.mubr.bf16.mxu0 0
      %690 = vmatmul.mubr.bf16.gmra.mrb[0].mxu0 %v655
      %v691 = vpop.f32.mrb[0].mxu0
      %v692 = vadd.f32 %v640, %v691
      %v693 = vpop.f32.mrb[0].mxu0
      %v694 = vpop.f32.mrb[0].mxu0
      %v695 = vpop.f32.mrb[0].mxu0
      %696 = vdwg.mxu0
      %v697 = vld [vmem:[%s516] sm:$0x1]
      %vm698 = vcmp.eq.f32.partialorder %v697, 0.0
      %v699 = vsel %vm698, -1e+09, 0.0
      %v700 = vld [vmem:[%s10] sm:$0xff]
      %v701 = vld [vmem:[%s11] sm:$0xff]
      %v702 = vld [vmem:[%s12] sm:$0xff]
      %v703 = vld [vmem:[%s13] sm:$0xff]
      %v704 = vld [vmem:[%s8] sm:$0xf]
      %v705 = vld [vmem:[%s8 + $0x4] sm:$0xf]
      %v706 = vld [vmem:[%s8 + $0x8] sm:$0xf]
      %v707 = vld [vmem:[%s8 + $0xc] sm:$0xf]
      %v708 = vmul.f32 %v624, %v700
      %710 = vrot.lane.b32.xlu0 %v701, 4
      %v711 = vpop.permute.xlu0 %710
      %v713 = vmul.f32 %v624, %v711
      %715 = vrot.lane.b32.xlu0 %v713, 124
      %v716 = vpop.permute.xlu0 %715
      %v718 = vsub.f32 %v708, %v716
      %720 = vrot.lane.b32.xlu0 %v700, 4
      %v721 = vpop.permute.xlu0 %720
      %v723 = vmul.f32 %v624, %v721
      %v724 = vmul.f32 %v624, %v701
      %726 = vrot.lane.b32.xlu0 %v724, 4
      %v727 = vpop.permute.xlu0 %726
      %v729 = vadd.f32 %v723, %v727
      %v730 = vmul.f32 %v692, %v702
      %732 = vrot.lane.b32.xlu0 %v703, 4
      %v733 = vpop.permute.xlu0 %732
      %v735 = vmul.f32 %v692, %v733
      %737 = vrot.lane.b32.xlu0 %v735, 124
      %v738 = vpop.permute.xlu0 %737
      %v740 = vsub.f32 %v730, %v738
      %742 = vrot.lane.b32.xlu0 %v702, 4
      %v743 = vpop.permute.xlu0 %742
      %v745 = vmul.f32 %v692, %v743
      %v746 = vmul.f32 %v692, %v703
      %748 = vrot.lane.b32.xlu0 %v746, 4
      %v749 = vpop.permute.xlu0 %748
      %v751 = vadd.f32 %v745, %v749
      %v752 = vpack.c.bf16 %v718, %v718
      %v753 = vpack.c.bf16 %v740, %v740
      %v754 = vpack.c.bf16 %v729, %v729
      %v755 = vpack.c.bf16 %v751, %v751
      %757 = vrot.lane.b32.xlu0 %v754, 124
      %v758 = vpop.permute.xlu0 %757
      %760 = vrot.lane.b32.xlu0 %v755, 124
      %v761 = vpop.permute.xlu0 %760
      %vm762 = vcmask 31744
      %v764 = vsel %vm762, %v758, 0
      %v767 = vsel %vm762, %v761, 0
      %769 = vmatprep.subr.bf16.mxu0 0
      %770 = vmatpush1.bf16.xpose.msra.mxu0 %v767
      %771 = vmatprep.subr.bf16.mxu0 0
      %772 = vmatpush1.bf16.xpose.msra.mxu0 0
      %773 = vmatprep.subr.bf16.mxu0 0
      %774 = vmatpush1.bf16.xpose.msra.mxu0 0
      %775 = vmatprep.subr.bf16.mxu0 0
      %776 = vmatpush1.bf16.xpose.msra.mxu0 0
      %777 = vmatprep.subr.bf16.mxu0 0
      %778 = vmatpush1.bf16.xpose.msra.mxu0 0
      %779 = vmatprep.subr.bf16.mxu0 0
      %780 = vmatpush1.bf16.xpose.msra.mxu0 0
      %781 = vmatprep.subr.bf16.mxu0 0
      %782 = vmatpush1.bf16.xpose.msra.mxu0 0
      %783 = vmatprep.subr.bf16.mxu0 0
      %784 = vmatpush1.bf16.xpose.msra.mxu0 0
      %785 = vmatprep.subr.bf16.mxu0 0
      %786 = vmatpush1.bf16.xpose.msra.mxu0 0
      %787 = vmatprep.subr.bf16.mxu0 0
      %788 = vmatpush1.bf16.xpose.msra.mxu0 0
      %789 = vmatprep.subr.bf16.mxu0 0
      %790 = vmatpush1.bf16.xpose.msra.mxu0 0
      %791 = vmatprep.subr.bf16.mxu0 0
      %792 = vmatpush1.bf16.xpose.msra.mxu0 0
      %793 = vmatprep.subr.bf16.mxu0 0
      %794 = vmatpush1.bf16.xpose.msra.mxu0 0
      %795 = vmatprep.subr.bf16.mxu0 0
      %796 = vmatpush1.bf16.xpose.msra.mxu0 0
      %797 = vmatprep.subr.bf16.mxu0 0
      %798 = vmatpush1.bf16.xpose.msra.mxu0 0
      %799 = vmatprep.subr.bf16.mxu0 0
      %800 = vmatpush1.bf16.xpose.msra.mxu0 0
      %801 = vmatprep.mubr.bf16.mxu0 0
      %802 = vmatmul.mubr.bf16.gmra.mrb[0].mxu0 %v764
      %v803 = vpop.f32.mrb[0].mxu0
      %v804 = vadd.f32 0.0, %v803
      %v805 = vpop.f32.mrb[0].mxu0
      %v806 = vpop.f32.mrb[0].mxu0
      %v807 = vpop.f32.mrb[0].mxu0
      %808 = vdwg.mxu0
      %v810 = vsel %vm762, %v752, 0
      %v813 = vsel %vm762, %v753, 0
      %815 = vmatprep.subr.bf16.mxu0 0
      %816 = vmatpush1.bf16.xpose.msra.mxu0 %v813
      %817 = vmatprep.subr.bf16.mxu0 0
      %818 = vmatpush1.bf16.xpose.msra.mxu0 0
      %819 = vmatprep.subr.bf16.mxu0 0
      %820 = vmatpush1.bf16.xpose.msra.mxu0 0
      %821 = vmatprep.subr.bf16.mxu0 0
      %822 = vmatpush1.bf16.xpose.msra.mxu0 0
      %823 = vmatprep.subr.bf16.mxu0 0
      %824 = vmatpush1.bf16.xpose.msra.mxu0 0
      %825 = vmatprep.subr.bf16.mxu0 0
      %826 = vmatpush1.bf16.xpose.msra.mxu0 0
      %827 = vmatprep.subr.bf16.mxu0 0
      %828 = vmatpush1.bf16.xpose.msra.mxu0 0
      %829 = vmatprep.subr.bf16.mxu0 0
      %830 = vmatpush1.bf16.xpose.msra.mxu0 0
      %831 = vmatprep.subr.bf16.mxu0 0
      %832 = vmatpush1.bf16.xpose.msra.mxu0 0
      %833 = vmatprep.subr.bf16.mxu0 0
      %834 = vmatpush1.bf16.xpose.msra.mxu0 0
      %835 = vmatprep.subr.bf16.mxu0 0
      %836 = vmatpush1.bf16.xpose.msra.mxu0 0
      %837 = vmatprep.subr.bf16.mxu0 0
      %838 = vmatpush1.bf16.xpose.msra.mxu0 0
      %839 = vmatprep.subr.bf16.mxu0 0
      %840 = vmatpush1.bf16.xpose.msra.mxu0 0
      %841 = vmatprep.subr.bf16.mxu0 0
      %842 = vmatpush1.bf16.xpose.msra.mxu0 0
      %843 = vmatprep.subr.bf16.mxu0 0
      %844 = vmatpush1.bf16.xpose.msra.mxu0 0
      %845 = vmatprep.subr.bf16.mxu0 0
      %846 = vmatpush1.bf16.xpose.msra.mxu0 0
      %847 = vmatprep.mubr.bf16.mxu0 0
      %848 = vmatmul.mubr.bf16.gmra.mrb[0].mxu0 %v810
      %v849 = vpop.f32.mrb[0].mxu0
      %v850 = vadd.f32 %v804, %v849
      %v851 = vpop.f32.mrb[0].mxu0
      %v852 = vpop.f32.mrb[0].mxu0
      %v853 = vpop.f32.mrb[0].mxu0
      %854 = vdwg.mxu0
      %v856 = vlaneseq
      %v857 = vshrl.u32 %v856, 7
      %v858 = vsub.s32 0, %v857
      %v859 = vrot.slane %v699, %v858
      %v861 = vadd.f32 %v850, %v859
      %vm862 = vcmask 64512
      %v863 = vsel %vm862, %v861, -inf
      %864 = vmax.xlane.f32.xlu0 %v863
      %v865 = vpop.xlane.xlu0 %864
      %v866 = vsub.f32 %v861, %v865
      %v867 = vmul.f32 %v866, 1.442695
      %v868 = vpow.pop %v867
      %v869 = vsel %vm862, %v868, 0.0
      %870 = vadd.xlane.f32.xlu0 %v869
      %v871 = vpop.xlane.xlu0 %870
      %v872 = vrcp.pop %v871
      %v873 = vmul.f32 %v868, %v872
      %v874 = vpack.c.bf16 %v873, %v873
      %v875 = vpack.c.bf16 %v692, %v692
      %877 = vrot.lane.b32.xlu0 %v875, 96
      %v878 = vpop.permute.xlu0 %877
      %v880 = vsel %vm862, %v874, 0
      %vm882 = vcmask 1043456
      %v884 = vsel %vm882, %v878, 0
      %886 = vmatprep.subr.bf16.mxu0 0
      %887 = vmatpush1.bf16.msra.mxu0 %v884
      %888 = vmatprep.subr.bf16.mxu0 0
      %889 = vmatpush1.bf16.msra.mxu0 0
      %890 = vmatprep.subr.bf16.mxu0 0
      %891 = vmatpush1.bf16.msra.mxu0 0
      %892 = vmatprep.subr.bf16.mxu0 0
      %893 = vmatpush1.bf16.msra.mxu0 0
      %894 = vmatprep.subr.bf16.mxu0 0
      %895 = vmatpush1.bf16.msra.mxu0 0
      %896 = vmatprep.subr.bf16.mxu0 0
      %897 = vmatpush1.bf16.msra.mxu0 0
      %898 = vmatprep.subr.bf16.mxu0 0
      %899 = vmatpush1.bf16.msra.mxu0 0
      %900 = vmatprep.subr.bf16.mxu0 0
      %901 = vmatpush1.bf16.msra.mxu0 0
      %902 = vmatprep.subr.bf16.mxu0 0
      %903 = vmatpush1.bf16.msra.mxu0 0
      %904 = vmatprep.subr.bf16.mxu0 0
      %905 = vmatpush1.bf16.msra.mxu0 0
      %906 = vmatprep.subr.bf16.mxu0 0
      %907 = vmatpush1.bf16.msra.mxu0 0
      %908 = vmatprep.subr.bf16.mxu0 0
      %909 = vmatpush1.bf16.msra.mxu0 0
      %910 = vmatprep.subr.bf16.mxu0 0
      %911 = vmatpush1.bf16.msra.mxu0 0
      %912 = vmatprep.subr.bf16.mxu0 0
      %913 = vmatpush1.bf16.msra.mxu0 0
      %914 = vmatprep.subr.bf16.mxu0 0
      %915 = vmatpush1.bf16.msra.mxu0 0
      %916 = vmatprep.subr.bf16.mxu0 0
      %917 = vmatpush1.bf16.msra.mxu0 0
      %918 = vmatprep.mubr.bf16.mxu0 0
      %919 = vmatmul.mubr.bf16.gmra.mrb[0].mxu0 %v880
      %v920 = vpop.f32.mrb[0].mxu0
      %v921 = vadd.f32 0.0, %v920
      %v922 = vpop.f32.mrb[0].mxu0
      %v923 = vpop.f32.mrb[0].mxu0
      %v924 = vpop.f32.mrb[0].mxu0
      %925 = vdwg.mxu0
      %v926 = vpack.c.bf16 %v921, %v921
      %927 = vrot.lane.b32.xlu0 %v700, 8
      %v928 = vpop.permute.xlu0 %927
      %v930 = vmul.f32 %v624, %v928
      %931 = vrot.lane.b32.xlu0 %v701, 12
      %v932 = vpop.permute.xlu0 %931
      %v934 = vmul.f32 %v624, %v932
      %936 = vrot.lane.b32.xlu0 %v934, 124
      %v937 = vpop.permute.xlu0 %936
      %v939 = vsub.f32 %v930, %v937
      %940 = vrot.lane.b32.xlu0 %v700, 12
      %v941 = vpop.permute.xlu0 %940
      %v943 = vmul.f32 %v624, %v941
      %944 = vrot.lane.b32.xlu0 %v701, 8
      %v945 = vpop.permute.xlu0 %944
      %v947 = vmul.f32 %v624, %v945
      %949 = vrot.lane.b32.xlu0 %v947, 4
      %v950 = vpop.permute.xlu0 %949
      %v952 = vadd.f32 %v943, %v950
      %953 = vrot.lane.b32.xlu0 %v702, 8
      %v954 = vpop.permute.xlu0 %953
      %v956 = vmul.f32 %v692, %v954
      %957 = vrot.lane.b32.xlu0 %v703, 12
      %v958 = vpop.permute.xlu0 %957
      %v960 = vmul.f32 %v692, %v958
      %962 = vrot.lane.b32.xlu0 %v960, 124
      %v963 = vpop.permute.xlu0 %962
      %v965 = vsub.f32 %v956, %v963
      %966 = vrot.lane.b32.xlu0 %v702, 12
      %v967 = vpop.permute.xlu0 %966
      %v969 = vmul.f32 %v692, %v967
      %970 = vrot.lane.b32.xlu0 %v703, 8
      %v971 = vpop.permute.xlu0 %970
      %v973 = vmul.f32 %v692, %v971
      %975 = vrot.lane.b32.xlu0 %v973, 4
      %v976 = vpop.permute.xlu0 %975
      %v978 = vadd.f32 %v969, %v976
      %v979 = vpack.c.bf16 %v939, %v939
      %v980 = vpack.c.bf16 %v965, %v965
      %v981 = vpack.c.bf16 %v952, %v952
      %v982 = vpack.c.bf16 %v978, %v978
      %984 = vrot.lane.b32.xlu0 %v981, 116
      %v985 = vpop.permute.xlu0 %984
      %987 = vrot.lane.b32.xlu0 %v982, 116
      %v988 = vpop.permute.xlu0 %987
      %v990 = vsel %vm762, %v985, 0
      %v993 = vsel %vm762, %v988, 0
      %995 = vmatprep.subr.bf16.mxu0 0
      %996 = vmatpush1.bf16.xpose.msra.mxu0 %v993
      %997 = vmatprep.subr.bf16.mxu0 0
      %998 = vmatpush1.bf16.xpose.msra.mxu0 0
      %999 = vmatprep.subr.bf16.mxu0 0
      %1000 = vmatpush1.bf16.xpose.msra.mxu0 0
      %1001 = vmatprep.subr.bf16.mxu0 0
      %1002 = vmatpush1.bf16.xpose.msra.mxu0 0
      %1003 = vmatprep.subr.bf16.mxu0 0
      %1004 = vmatpush1.bf16.xpose.msra.mxu0 0
      %1005 = vmatprep.subr.bf16.mxu0 0
      %1006 = vmatpush1.bf16.xpose.msra.mxu0 0
      %1007 = vmatprep.subr.bf16.mxu0 0
      %1008 = vmatpush1.bf16.xpose.msra.mxu0 0
      %1009 = vmatprep.subr.bf16.mxu0 0
      %1010 = vmatpush1.bf16.xpose.msra.mxu0 0
      %1011 = vmatprep.subr.bf16.mxu0 0
      %1012 = vmatpush1.bf16.xpose.msra.mxu0 0
      %1013 = vmatprep.subr.bf16.mxu0 0
      %1014 = vmatpush1.bf16.xpose.msra.mxu0 0
      %1015 = vmatprep.subr.bf16.mxu0 0
      %1016 = vmatpush1.bf16.xpose.msra.mxu0 0
      %1017 = vmatprep.subr.bf16.mxu0 0
      %1018 = vmatpush1.bf16.xpose.msra.mxu0 0
      %1019 = vmatprep.subr.bf16.mxu0 0
      %1020 = vmatpush1.bf16.xpose.msra.mxu0 0
      %1021 = vmatprep.subr.bf16.mxu0 0
      %1022 = vmatpush1.bf16.xpose.msra.mxu0 0
      %1023 = vmatprep.subr.bf16.mxu0 0
      %1024 = vmatpush1.bf16.xpose.msra.mxu0 0
      %1025 = vmatprep.subr.bf16.mxu0 0
      %1026 = vmatpush1.bf16.xpose.msra.mxu0 0
      %1027 = vmatprep.mubr.bf16.mxu0 0
      %1028 = vmatmul.mubr.bf16.gmra.mrb[0].mxu0 %v990
      %v1029 = vpop.f32.mrb[0].mxu0
      %v1030 = vadd.f32 0.0, %v1029
      %v1031 = vpop.f32.mrb[0].mxu0
      %v1032 = vpop.f32.mrb[0].mxu0
      %v1033 = vpop.f32.mrb[0].mxu0
      %1034 = vdwg.mxu0
      %1036 = vrot.lane.b32.xlu0 %v979, 120
      %v1037 = vpop.permute.xlu0 %1036
      %1039 = vrot.lane.b32.xlu0 %v980, 120
      %v1040 = vpop.permute.xlu0 %1039
      %v1042 = vsel %vm762, %v1037, 0
      %v1045 = vsel %vm762, %v1040, 0
      %1047 = vmatprep.subr.bf16.mxu0 0
      %1048 = vmatpush1.bf16.xpose.msra.mxu0 %v1045
      %1049 = vmatprep.subr.bf16.mxu0 0
      %1050 = vmatpush1.bf16.xpose.msra.mxu0 0
      %1051 = vmatprep.subr.bf16.mxu0 0
      %1052 = vmatpush1.bf16.xpose.msra.mxu0 0
      %1053 = vmatprep.subr.bf16.mxu0 0
      %1054 = vmatpush1.bf16.xpose.msra.mxu0 0
      %1055 = vmatprep.subr.bf16.mxu0 0
      %1056 = vmatpush1.bf16.xpose.msra.mxu0 0
      %1057 = vmatprep.subr.bf16.mxu0 0
      %1058 = vmatpush1.bf16.xpose.msra.mxu0 0
      %1059 = vmatprep.subr.bf16.mxu0 0
      %1060 = vmatpush1.bf16.xpose.msra.mxu0 0
      %1061 = vmatprep.subr.bf16.mxu0 0
      %1062 = vmatpush1.bf16.xpose.msra.mxu0 0
      %1063 = vmatprep.subr.bf16.mxu0 0
      %1064 = vmatpush1.bf16.xpose.msra.mxu0 0
      %1065 = vmatprep.subr.bf16.mxu0 0
      %1066 = vmatpush1.bf16.xpose.msra.mxu0 0
      %1067 = vmatprep.subr.bf16.mxu0 0
      %1068 = vmatpush1.bf16.xpose.msra.mxu0 0
      %1069 = vmatprep.subr.bf16.mxu0 0
      %1070 = vmatpush1.bf16.xpose.msra.mxu0 0
      %1071 = vmatprep.subr.bf16.mxu0 0
      %1072 = vmatpush1.bf16.xpose.msra.mxu0 0
      %1073 = vmatprep.subr.bf16.mxu0 0
      %1074 = vmatpush1.bf16.xpose.msra.mxu0 0
      %1075 = vmatprep.subr.bf16.mxu0 0
      %1076 = vmatpush1.bf16.xpose.msra.mxu0 0
      %1077 = vmatprep.subr.bf16.mxu0 0
      %1078 = vmatpush1.bf16.xpose.msra.mxu0 0
      %1079 = vmatprep.mubr.bf16.mxu0 0
      %1080 = vmatmul.mubr.bf16.gmra.mrb[0].mxu0 %v1042
      %v1081 = vpop.f32.mrb[0].mxu0
      %v1082 = vadd.f32 %v1030, %v1081
      %v1083 = vpop.f32.mrb[0].mxu0
      %v1084 = vpop.f32.mrb[0].mxu0
      %v1085 = vpop.f32.mrb[0].mxu0
      %1086 = vdwg.mxu0
      %v1087 = vadd.f32 %v1082, %v859
      %v1088 = vsel %vm862, %v1087, -inf
      %1089 = vmax.xlane.f32.xlu0 %v1088
      %v1090 = vpop.xlane.xlu0 %1089
      %v1091 = vsub.f32 %v1087, %v1090
      %v1092 = vmul.f32 %v1091, 1.442695
      %v1093 = vpow.pop %v1092
      %v1094 = vsel %vm862, %v1093, 0.0
      %1095 = vadd.xlane.f32.xlu0 %v1094
      %v1096 = vpop.xlane.xlu0 %1095
      %v1097 = vrcp.pop %v1096
      %v1098 = vmul.f32 %v1093, %v1097
      %v1099 = vpack.c.bf16 %v1098, %v1098
      %1100 = vrot.lane.b32.xlu0 %v875, 88
      %v1101 = vpop.permute.xlu0 %1100
      %v1103 = vsel %vm862, %v1099, 0
      %v1106 = vsel %vm882, %v1101, 0
      %1108 = vmatprep.subr.bf16.mxu0 0
      %1109 = vmatpush1.bf16.msra.mxu0 %v1106
      %1110 = vmatprep.subr.bf16.mxu0 0
      %1111 = vmatpush1.bf16.msra.mxu0 0
      %1112 = vmatprep.subr.bf16.mxu0 0
      %1113 = vmatpush1.bf16.msra.mxu0 0
      %1114 = vmatprep.subr.bf16.mxu0 0
      %1115 = vmatpush1.bf16.msra.mxu0 0
      %1116 = vmatprep.subr.bf16.mxu0 0
      %1117 = vmatpush1.bf16.msra.mxu0 0
      %1118 = vmatprep.subr.bf16.mxu0 0
      %1119 = vmatpush1.bf16.msra.mxu0 0
      %1120 = vmatprep.subr.bf16.mxu0 0
      %1121 = vmatpush1.bf16.msra.mxu0 0
      %1122 = vmatprep.subr.bf16.mxu0 0
      %1123 = vmatpush1.bf16.msra.mxu0 0
      %1124 = vmatprep.subr.bf16.mxu0 0
      %1125 = vmatpush1.bf16.msra.mxu0 0
      %1126 = vmatprep.subr.bf16.mxu0 0
      %1127 = vmatpush1.bf16.msra.mxu0 0
      %1128 = vmatprep.subr.bf16.mxu0 0
      %1129 = vmatpush1.bf16.msra.mxu0 0
      %1130 = vmatprep.subr.bf16.mxu0 0
      %1131 = vmatpush1.bf16.msra.mxu0 0
      %1132 = vmatprep.subr.bf16.mxu0 0
      %1133 = vmatpush1.bf16.msra.mxu0 0
      %1134 = vmatprep.subr.bf16.mxu0 0
      %1135 = vmatpush1.bf16.msra.mxu0 0
      %1136 = vmatprep.subr.bf16.mxu0 0
      %1137 = vmatpush1.bf16.msra.mxu0 0
      %1138 = vmatprep.subr.bf16.mxu0 0
      %1139 = vmatpush1.bf16.msra.mxu0 0
      %1140 = vmatprep.mubr.bf16.mxu0 0
      %1141 = vmatmul.mubr.bf16.gmra.mrb[0].mxu0 %v1103
      %v1142 = vpop.f32.mrb[0].mxu0
      %v1143 = vadd.f32 0.0, %v1142
      %v1144 = vpop.f32.mrb[0].mxu0
      %v1145 = vpop.f32.mrb[0].mxu0
      %v1146 = vpop.f32.mrb[0].mxu0
      %1147 = vdwg.mxu0
      %v1148 = vpack.c.bf16 %v1143, %v1143
      %v1150 = vsel %vm862, %v1148, 0
      %v1153 = vsel %vm882, %v705, 0
      %1155 = vmatprep.subr.bf16.mxu0 0
      %1156 = vmatpush1.bf16.msra.mxu0 %v1153
      %1157 = vmatprep.subr.bf16.mxu0 0
      %1158 = vmatpush1.bf16.msra.mxu0 0
      %1159 = vmatprep.subr.bf16.mxu0 0
      %1160 = vmatpush1.bf16.msra.mxu0 0
      %1161 = vmatprep.subr.bf16.mxu0 0
      %1162 = vmatpush1.bf16.msra.mxu0 0
      %1163 = vmatprep.subr.bf16.mxu0 0
      %1164 = vmatpush1.bf16.msra.mxu0 0
      %1165 = vmatprep.subr.bf16.mxu0 0
      %1166 = vmatpush1.bf16.msra.mxu0 0
      %1167 = vmatprep.subr.bf16.mxu0 0
      %1168 = vmatpush1.bf16.msra.mxu0 0
      %1169 = vmatprep.subr.bf16.mxu0 0
      %1170 = vmatpush1.bf16.msra.mxu0 0
      %1171 = vmatprep.subr.bf16.mxu0 0
      %1172 = vmatpush1.bf16.msra.mxu0 0
      %1173 = vmatprep.subr.bf16.mxu0 0
      %1174 = vmatpush1.bf16.msra.mxu0 0
      %1175 = vmatprep.subr.bf16.mxu0 0
      %1176 = vmatpush1.bf16.msra.mxu0 0
      %1177 = vmatprep.subr.bf16.mxu0 0
      %1178 = vmatpush1.bf16.msra.mxu0 0
      %1179 = vmatprep.subr.bf16.mxu0 0
      %1180 = vmatpush1.bf16.msra.mxu0 0
      %1181 = vmatprep.subr.bf16.mxu0 0
      %1182 = vmatpush1.bf16.msra.mxu0 0
      %1183 = vmatprep.subr.bf16.mxu0 0
      %1184 = vmatpush1.bf16.msra.mxu0 0
      %1185 = vmatprep.subr.bf16.mxu0 0
      %1186 = vmatpush1.bf16.msra.mxu0 0
      %1187 = vmatprep.mubr.bf16.mxu0 0
      %1188 = vmatmul.mubr.bf16.gmra.mrb[0].mxu0 %v1150
      %v1189 = vpop.f32.mrb[0].mxu0
      %v1190 = vadd.f32 0.0, %v1189
      %v1191 = vpop.f32.mrb[0].mxu0
      %v1192 = vpop.f32.mrb[0].mxu0
      %v1193 = vpop.f32.mrb[0].mxu0
      %1194 = vdwg.mxu0
      %v1196 = vsel %vm862, %v926, 0
      %v1199 = vsel %vm882, %v704, 0
      %1201 = vmatprep.subr.bf16.mxu0 0
      %1202 = vmatpush1.bf16.msra.mxu0 %v1199
      %1203 = vmatprep.subr.bf16.mxu0 0
      %1204 = vmatpush1.bf16.msra.mxu0 0
      %1205 = vmatprep.subr.bf16.mxu0 0
      %1206 = vmatpush1.bf16.msra.mxu0 0
      %1207 = vmatprep.subr.bf16.mxu0 0
      %1208 = vmatpush1.bf16.msra.mxu0 0
      %1209 = vmatprep.subr.bf16.mxu0 0
      %1210 = vmatpush1.bf16.msra.mxu0 0
      %1211 = vmatprep.subr.bf16.mxu0 0
      %1212 = vmatpush1.bf16.msra.mxu0 0
      %1213 = vmatprep.subr.bf16.mxu0 0
      %1214 = vmatpush1.bf16.msra.mxu0 0
      %1215 = vmatprep.subr.bf16.mxu0 0
      %1216 = vmatpush1.bf16.msra.mxu0 0
      %1217 = vmatprep.subr.bf16.mxu0 0
      %1218 = vmatpush1.bf16.msra.mxu0 0
      %1219 = vmatprep.subr.bf16.mxu0 0
      %1220 = vmatpush1.bf16.msra.mxu0 0
      %1221 = vmatprep.subr.bf16.mxu0 0
      %1222 = vmatpush1.bf16.msra.mxu0 0
      %1223 = vmatprep.subr.bf16.mxu0 0
      %1224 = vmatpush1.bf16.msra.mxu0 0
      %1225 = vmatprep.subr.bf16.mxu0 0
      %1226 = vmatpush1.bf16.msra.mxu0 0
      %1227 = vmatprep.subr.bf16.mxu0 0
      %1228 = vmatpush1.bf16.msra.mxu0 0
      %1229 = vmatprep.subr.bf16.mxu0 0
      %1230 = vmatpush1.bf16.msra.mxu0 0
      %1231 = vmatprep.subr.bf16.mxu0 0
      %1232 = vmatpush1.bf16.msra.mxu0 0
      %1233 = vmatprep.mubr.bf16.mxu0 0
      %1234 = vmatmul.mubr.bf16.gmra.mrb[0].mxu0 %v1196
      %v1235 = vpop.f32.mrb[0].mxu0
      %v1236 = vadd.f32 %v1190, %v1235
      %v1237 = vpop.f32.mrb[0].mxu0
      %v1238 = vpop.f32.mrb[0].mxu0
      %v1239 = vpop.f32.mrb[0].mxu0
      %1240 = vdwg.mxu0
      %1241 = vrot.lane.b32.xlu0 %v700, 16
      %v1242 = vpop.permute.xlu0 %1241
      %v1244 = vmul.f32 %v624, %v1242
      %1245 = vrot.lane.b32.xlu0 %v701, 20
      %v1246 = vpop.permute.xlu0 %1245
      %v1248 = vmul.f32 %v624, %v1246
      %1250 = vrot.lane.b32.xlu0 %v1248, 124
      %v1251 = vpop.permute.xlu0 %1250
      %v1253 = vsub.f32 %v1244, %v1251
      %1254 = vrot.lane.b32.xlu0 %v700, 20
      %v1255 = vpop.permute.xlu0 %1254
      %v1257 = vmul.f32 %v624, %v1255
      %1258 = vrot.lane.b32.xlu0 %v701, 16
      %v1259 = vpop.permute.xlu0 %1258
      %v1261 = vmul.f32 %v624, %v1259
      %1263 = vrot.lane.b32.xlu0 %v1261, 4
      %v1264 = vpop.permute.xlu0 %1263
      %v1266 = vadd.f32 %v1257, %v1264
      %1267 = vrot.lane.b32.xlu0 %v702, 16
      %v1268 = vpop.permute.xlu0 %1267
      %v1270 = vmul.f32 %v692, %v1268
      %1271 = vrot.lane.b32.xlu0 %v703, 20
      %v1272 = vpop.permute.xlu0 %1271
      %v1274 = vmul.f32 %v692, %v1272
      %1276 = vrot.lane.b32.xlu0 %v1274, 124
      %v1277 = vpop.permute.xlu0 %1276
      %v1279 = vsub.f32 %v1270, %v1277
      %1280 = vrot.lane.b32.xlu0 %v702, 20
      %v1281 = vpop.permute.xlu0 %1280
      %v1283 = vmul.f32 %v692, %v1281
      %1284 = vrot.lane.b32.xlu0 %v703, 16
      %v1285 = vpop.permute.xlu0 %1284
      %v1287 = vmul.f32 %v692, %v1285
      %1289 = vrot.lane.b32.xlu0 %v1287, 4
      %v1290 = vpop.permute.xlu0 %1289
      %v1292 = vadd.f32 %v1283, %v1290
      %v1293 = vpack.c.bf16 %v1253, %v1253
      %v1294 = vpack.c.bf16 %v1279, %v1279
      %v1295 = vpack.c.bf16 %v1266, %v1266
      %v1296 = vpack.c.bf16 %v1292, %v1292
      %1298 = vrot.lane.b32.xlu0 %v1295, 108
      %v1299 = vpop.permute.xlu0 %1298
      %1301 = vrot.lane.b32.xlu0 %v1296, 108
      %v1302 = vpop.permute.xlu0 %1301
      %v1304 = vsel %vm762, %v1299, 0
      %v1307 = vsel %vm762, %v1302, 0
      %1309 = vmatprep.subr.bf16.mxu0 0
      %1310 = vmatpush1.bf16.xpose.msra.mxu0 %v1307
      %1311 = vmatprep.subr.bf16.mxu0 0
      %1312 = vmatpush1.bf16.xpose.msra.mxu0 0
      %1313 = vmatprep.subr.bf16.mxu0 0
      %1314 = vmatpush1.bf16.xpose.msra.mxu0 0
      %1315 = vmatprep.subr.bf16.mxu0 0
      %1316 = vmatpush1.bf16.xpose.msra.mxu0 0
      %1317 = vmatprep.subr.bf16.mxu0 0
      %1318 = vmatpush1.bf16.xpose.msra.mxu0 0
      %1319 = vmatprep.subr.bf16.mxu0 0
      %1320 = vmatpush1.bf16.xpose.msra.mxu0 0
      %1321 = vmatprep.subr.bf16.mxu0 0
      %1322 = vmatpush1.bf16.xpose.msra.mxu0 0
      %1323 = vmatprep.subr.bf16.mxu0 0
      %1324 = vmatpush1.bf16.xpose.msra.mxu0 0
      %1325 = vmatprep.subr.bf16.mxu0 0
      %1326 = vmatpush1.bf16.xpose.msra.mxu0 0
      %1327 = vmatprep.subr.bf16.mxu0 0
      %1328 = vmatpush1.bf16.xpose.msra.mxu0 0
      %1329 = vmatprep.subr.bf16.mxu0 0
      %1330 = vmatpush1.bf16.xpose.msra.mxu0 0
      %1331 = vmatprep.subr.bf16.mxu0 0
      %1332 = vmatpush1.bf16.xpose.msra.mxu0 0
      %1333 = vmatprep.subr.bf16.mxu0 0
      %1334 = vmatpush1.bf16.xpose.msra.mxu0 0
      %1335 = vmatprep.subr.bf16.mxu0 0
      %1336 = vmatpush1.bf16.xpose.msra.mxu0 0
      %1337 = vmatprep.subr.bf16.mxu0 0
      %1338 = vmatpush1.bf16.xpose.msra.mxu0 0
      %1339 = vmatprep.subr.bf16.mxu0 0
      %1340 = vmatpush1.bf16.xpose.msra.mxu0 0
      %1341 = vmatprep.mubr.bf16.mxu0 0
      %1342 = vmatmul.mubr.bf16.gmra.mrb[0].mxu0 %v1304
      %v1343 = vpop.f32.mrb[0].mxu0
      %v1344 = vadd.f32 0.0, %v1343
      %v1345 = vpop.f32.mrb[0].mxu0
      %v1346 = vpop.f32.mrb[0].mxu0
      %v1347 = vpop.f32.mrb[0].mxu0
      %1348 = vdwg.mxu0
      %1350 = vrot.lane.b32.xlu0 %v1293, 112
      %v1351 = vpop.permute.xlu0 %1350
      %1353 = vrot.lane.b32.xlu0 %v1294, 112
      %v1354 = vpop.permute.xlu0 %1353
      %v1356 = vsel %vm762, %v1351, 0
      %v1359 = vsel %vm762, %v1354, 0
      %1361 = vmatprep.subr.bf16.mxu0 0
      %1362 = vmatpush1.bf16.xpose.msra.mxu0 %v1359
      %1363 = vmatprep.subr.bf16.mxu0 0
      %1364 = vmatpush1.bf16.xpose.msra.mxu0 0
      %1365 = vmatprep.subr.bf16.mxu0 0
      %1366 = vmatpush1.bf16.xpose.msra.mxu0 0
      %1367 = vmatprep.subr.bf16.mxu0 0
      %1368 = vmatpush1.bf16.xpose.msra.mxu0 0
      %1369 = vmatprep.subr.bf16.mxu0 0
      %1370 = vmatpush1.bf16.xpose.msra.mxu0 0
      %1371 = vmatprep.subr.bf16.mxu0 0
      %1372 = vmatpush1.bf16.xpose.msra.mxu0 0
      %1373 = vmatprep.subr.bf16.mxu0 0
      %1374 = vmatpush1.bf16.xpose.msra.mxu0 0
      %1375 = vmatprep.subr.bf16.mxu0 0
      %1376 = vmatpush1.bf16.xpose.msra.mxu0 0
      %1377 = vmatprep.subr.bf16.mxu0 0
      %1378 = vmatpush1.bf16.xpose.msra.mxu0 0
      %1379 = vmatprep.subr.bf16.mxu0 0
      %1380 = vmatpush1.bf16.xpose.msra.mxu0 0
      %1381 = vmatprep.subr.bf16.mxu0 0
      %1382 = vmatpush1.bf16.xpose.msra.mxu0 0
      %1383 = vmatprep.subr.bf16.mxu0 0
      %1384 = vmatpush1.bf16.xpose.msra.mxu0 0
      %1385 = vmatprep.subr.bf16.mxu0 0
      %1386 = vmatpush1.bf16.xpose.msra.mxu0 0
      %1387 = vmatprep.subr.bf16.mxu0 0
      %1388 = vmatpush1.bf16.xpose.msra.mxu0 0
      %1389 = vmatprep.subr.bf16.mxu0 0
      %1390 = vmatpush1.bf16.xpose.msra.mxu0 0
      %1391 = vmatprep.subr.bf16.mxu0 0
      %1392 = vmatpush1.bf16.xpose.msra.mxu0 0
      %1393 = vmatprep.mubr.bf16.mxu0 0
      %1394 = vmatmul.mubr.bf16.gmra.mrb[0].mxu0 %v1356
      %v1395 = vpop.f32.mrb[0].mxu0
      %v1396 = vadd.f32 %v1344, %v1395
      %v1397 = vpop.f32.mrb[0].mxu0
      %v1398 = vpop.f32.mrb[0].mxu0
      %v1399 = vpop.f32.mrb[0].mxu0
      %1400 = vdwg.mxu0
      %v1401 = vadd.f32 %v1396, %v859
      %v1402 = vsel %vm862, %v1401, -inf
      %1403 = vmax.xlane.f32.xlu0 %v1402
      %v1404 = vpop.xlane.xlu0 %1403
      %v1405 = vsub.f32 %v1401, %v1404
      %v1406 = vmul.f32 %v1405, 1.442695
      %v1407 = vpow.pop %v1406
      %v1408 = vsel %vm862, %v1407, 0.0
      %1409 = vadd.xlane.f32.xlu0 %v1408
      %v1410 = vpop.xlane.xlu0 %1409
      %v1411 = vrcp.pop %v1410
      %v1412 = vmul.f32 %v1407, %v1411
      %v1413 = vpack.c.bf16 %v1412, %v1412
      %1414 = vrot.lane.b32.xlu0 %v875, 80
      %v1415 = vpop.permute.xlu0 %1414
      %v1417 = vsel %vm862, %v1413, 0
      %v1420 = vsel %vm882, %v1415, 0
      %1422 = vmatprep.subr.bf16.mxu0 0
      %1423 = vmatpush1.bf16.msra.mxu0 %v1420
      %1424 = vmatprep.subr.bf16.mxu0 0
      %1425 = vmatpush1.bf16.msra.mxu0 0
      %1426 = vmatprep.subr.bf16.mxu0 0
      %1427 = vmatpush1.bf16.msra.mxu0 0
      %1428 = vmatprep.subr.bf16.mxu0 0
      %1429 = vmatpush1.bf16.msra.mxu0 0
      %1430 = vmatprep.subr.bf16.mxu0 0
      %1431 = vmatpush1.bf16.msra.mxu0 0
      %1432 = vmatprep.subr.bf16.mxu0 0
      %1433 = vmatpush1.bf16.msra.mxu0 0
      %1434 = vmatprep.subr.bf16.mxu0 0
      %1435 = vmatpush1.bf16.msra.mxu0 0
      %1436 = vmatprep.subr.bf16.mxu0 0
      %1437 = vmatpush1.bf16.msra.mxu0 0
      %1438 = vmatprep.subr.bf16.mxu0 0
      %1439 = vmatpush1.bf16.msra.mxu0 0
      %1440 = vmatprep.subr.bf16.mxu0 0
      %1441 = vmatpush1.bf16.msra.mxu0 0
      %1442 = vmatprep.subr.bf16.mxu0 0
      %1443 = vmatpush1.bf16.msra.mxu0 0
      %1444 = vmatprep.subr.bf16.mxu0 0
      %1445 = vmatpush1.bf16.msra.mxu0 0
      %1446 = vmatprep.subr.bf16.mxu0 0
      %1447 = vmatpush1.bf16.msra.mxu0 0
      %1448 = vmatprep.subr.bf16.mxu0 0
      %1449 = vmatpush1.bf16.msra.mxu0 0
      %1450 = vmatprep.subr.bf16.mxu0 0
      %1451 = vmatpush1.bf16.msra.mxu0 0
      %1452 = vmatprep.subr.bf16.mxu0 0
      %1453 = vmatpush1.bf16.msra.mxu0 0
      %1454 = vmatprep.mubr.bf16.mxu0 0
      %1455 = vmatmul.mubr.bf16.gmra.mrb[0].mxu0 %v1417
      %v1456 = vpop.f32.mrb[0].mxu0
      %v1457 = vadd.f32 0.0, %v1456
      %v1458 = vpop.f32.mrb[0].mxu0
      %v1459 = vpop.f32.mrb[0].mxu0
      %v1460 = vpop.f32.mrb[0].mxu0
      %1461 = vdwg.mxu0
      %v1462 = vpack.c.bf16 %v1457, %v1457
      %v1464 = vsel %vm862, %v1462, 0
      %v1467 = vsel %vm882, %v706, 0
      %1469 = vmatprep.subr.bf16.mxu0 0
      %1470 = vmatpush1.bf16.msra.mxu0 %v1467
      %1471 = vmatprep.subr.bf16.mxu0 0
      %1472 = vmatpush1.bf16.msra.mxu0 0
      %1473 = vmatprep.subr.bf16.mxu0 0
      %1474 = vmatpush1.bf16.msra.mxu0 0
      %1475 = vmatprep.subr.bf16.mxu0 0
      %1476 = vmatpush1.bf16.msra.mxu0 0
      %1477 = vmatprep.subr.bf16.mxu0 0
      %1478 = vmatpush1.bf16.msra.mxu0 0
      %1479 = vmatprep.subr.bf16.mxu0 0
      %1480 = vmatpush1.bf16.msra.mxu0 0
      %1481 = vmatprep.subr.bf16.mxu0 0
      %1482 = vmatpush1.bf16.msra.mxu0 0
      %1483 = vmatprep.subr.bf16.mxu0 0
      %1484 = vmatpush1.bf16.msra.mxu0 0
      %1485 = vmatprep.subr.bf16.mxu0 0
      %1486 = vmatpush1.bf16.msra.mxu0 0
      %1487 = vmatprep.subr.bf16.mxu0 0
      %1488 = vmatpush1.bf16.msra.mxu0 0
      %1489 = vmatprep.subr.bf16.mxu0 0
      %1490 = vmatpush1.bf16.msra.mxu0 0
      %1491 = vmatprep.subr.bf16.mxu0 0
      %1492 = vmatpush1.bf16.msra.mxu0 0
      %1493 = vmatprep.subr.bf16.mxu0 0
      %1494 = vmatpush1.bf16.msra.mxu0 0
      %1495 = vmatprep.subr.bf16.mxu0 0
      %1496 = vmatpush1.bf16.msra.mxu0 0
      %1497 = vmatprep.subr.bf16.mxu0 0
      %1498 = vmatpush1.bf16.msra.mxu0 0
      %1499 = vmatprep.subr.bf16.mxu0 0
      %1500 = vmatpush1.bf16.msra.mxu0 0
      %1501 = vmatprep.mubr.bf16.mxu0 0
      %1502 = vmatmul.mubr.bf16.gmra.mrb[0].mxu0 %v1464
      %v1503 = vpop.f32.mrb[0].mxu0
      %v1504 = vadd.f32 0.0, %v1503
      %v1505 = vpop.f32.mrb[0].mxu0
      %v1506 = vpop.f32.mrb[0].mxu0
      %v1507 = vpop.f32.mrb[0].mxu0
      %1508 = vdwg.mxu0
      %v1509 = vadd.f32 %v1236, %v1504
      %1510 = vrot.lane.b32.xlu0 %v700, 24
      %v1511 = vpop.permute.xlu0 %1510
      %v1513 = vmul.f32 %v624, %v1511
      %1514 = vrot.lane.b32.xlu0 %v701, 28
      %v1515 = vpop.permute.xlu0 %1514
      %v1517 = vmul.f32 %v624, %v1515
      %1519 = vrot.lane.b32.xlu0 %v1517, 124
      %v1520 = vpop.permute.xlu0 %1519
      %v1522 = vsub.f32 %v1513, %v1520
      %1523 = vrot.lane.b32.xlu0 %v700, 28
      %v1524 = vpop.permute.xlu0 %1523
      %v1526 = vmul.f32 %v624, %v1524
      %1527 = vrot.lane.b32.xlu0 %v701, 24
      %v1528 = vpop.permute.xlu0 %1527
      %v1530 = vmul.f32 %v624, %v1528
      %1532 = vrot.lane.b32.xlu0 %v1530, 4
      %v1533 = vpop.permute.xlu0 %1532
      %v1535 = vadd.f32 %v1526, %v1533
      %1536 = vrot.lane.b32.xlu0 %v702, 24
      %v1537 = vpop.permute.xlu0 %1536
      %v1539 = vmul.f32 %v692, %v1537
      %1540 = vrot.lane.b32.xlu0 %v703, 28
      %v1541 = vpop.permute.xlu0 %1540
      %v1543 = vmul.f32 %v692, %v1541
      %1545 = vrot.lane.b32.xlu0 %v1543, 124
      %v1546 = vpop.permute.xlu0 %1545
      %v1548 = vsub.f32 %v1539, %v1546
      %1549 = vrot.lane.b32.xlu0 %v702, 28
      %v1550 = vpop.permute.xlu0 %1549
      %v1552 = vmul.f32 %v692, %v1550
      %1553 = vrot.lane.b32.xlu0 %v703, 24
      %v1554 = vpop.permute.xlu0 %1553
      %v1556 = vmul.f32 %v692, %v1554
      %1558 = vrot.lane.b32.xlu0 %v1556, 4
      %v1559 = vpop.permute.xlu0 %1558
      %v1561 = vadd.f32 %v1552, %v1559
      %v1562 = vpack.c.bf16 %v1522, %v1522
      %v1563 = vpack.c.bf16 %v1548, %v1548
      %v1564 = vpack.c.bf16 %v1535, %v1535
      %v1565 = vpack.c.bf16 %v1561, %v1561
      %1567 = vrot.lane.b32.xlu0 %v1564, 100
      %v1568 = vpop.permute.xlu0 %1567
      %1570 = vrot.lane.b32.xlu0 %v1565, 100
      %v1571 = vpop.permute.xlu0 %1570
      %v1573 = vsel %vm762, %v1568, 0
      %v1576 = vsel %vm762, %v1571, 0
      %1578 = vmatprep.subr.bf16.mxu0 0
      %1579 = vmatpush1.bf16.xpose.msra.mxu0 %v1576
      %1580 = vmatprep.subr.bf16.mxu0 0
      %1581 = vmatpush1.bf16.xpose.msra.mxu0 0
      %1582 = vmatprep.subr.bf16.mxu0 0
      %1583 = vmatpush1.bf16.xpose.msra.mxu0 0
      %1584 = vmatprep.subr.bf16.mxu0 0
      %1585 = vmatpush1.bf16.xpose.msra.mxu0 0
      %1586 = vmatprep.subr.bf16.mxu0 0
      %1587 = vmatpush1.bf16.xpose.msra.mxu0 0
      %1588 = vmatprep.subr.bf16.mxu0 0
      %1589 = vmatpush1.bf16.xpose.msra.mxu0 0
      %1590 = vmatprep.subr.bf16.mxu0 0
      %1591 = vmatpush1.bf16.xpose.msra.mxu0 0
      %1592 = vmatprep.subr.bf16.mxu0 0
      %1593 = vmatpush1.bf16.xpose.msra.mxu0 0
      %1594 = vmatprep.subr.bf16.mxu0 0
      %1595 = vmatpush1.bf16.xpose.msra.mxu0 0
      %1596 = vmatprep.subr.bf16.mxu0 0
      %1597 = vmatpush1.bf16.xpose.msra.mxu0 0
      %1598 = vmatprep.subr.bf16.mxu0 0
      %1599 = vmatpush1.bf16.xpose.msra.mxu0 0
      %1600 = vmatprep.subr.bf16.mxu0 0
      %1601 = vmatpush1.bf16.xpose.msra.mxu0 0
      %1602 = vmatprep.subr.bf16.mxu0 0
      %1603 = vmatpush1.bf16.xpose.msra.mxu0 0
      %1604 = vmatprep.subr.bf16.mxu0 0
      %1605 = vmatpush1.bf16.xpose.msra.mxu0 0
      %1606 = vmatprep.subr.bf16.mxu0 0
      %1607 = vmatpush1.bf16.xpose.msra.mxu0 0
      %1608 = vmatprep.subr.bf16.mxu0 0
      %1609 = vmatpush1.bf16.xpose.msra.mxu0 0
      %1610 = vmatprep.mubr.bf16.mxu0 0
      %1611 = vmatmul.mubr.bf16.gmra.mrb[0].mxu0 %v1573
      %v1612 = vpop.f32.mrb[0].mxu0
      %v1613 = vadd.f32 0.0, %v1612
      %v1614 = vpop.f32.mrb[0].mxu0
      %v1615 = vpop.f32.mrb[0].mxu0
      %v1616 = vpop.f32.mrb[0].mxu0
      %1617 = vdwg.mxu0
      %1619 = vrot.lane.b32.xlu0 %v1562, 104
      %v1620 = vpop.permute.xlu0 %1619
      %1622 = vrot.lane.b32.xlu0 %v1563, 104
      %v1623 = vpop.permute.xlu0 %1622
      %v1625 = vsel %vm762, %v1620, 0
      %v1628 = vsel %vm762, %v1623, 0
      %1630 = vmatprep.subr.bf16.mxu0 0
      %1631 = vmatpush1.bf16.xpose.msra.mxu0 %v1628
      %1632 = vmatprep.subr.bf16.mxu0 0
      %1633 = vmatpush1.bf16.xpose.msra.mxu0 0
      %1634 = vmatprep.subr.bf16.mxu0 0
      %1635 = vmatpush1.bf16.xpose.msra.mxu0 0
      %1636 = vmatprep.subr.bf16.mxu0 0
      %1637 = vmatpush1.bf16.xpose.msra.mxu0 0
      %1638 = vmatprep.subr.bf16.mxu0 0
      %1639 = vmatpush1.bf16.xpose.msra.mxu0 0
      %1640 = vmatprep.subr.bf16.mxu0 0
      %1641 = vmatpush1.bf16.xpose.msra.mxu0 0
      %1642 = vmatprep.subr.bf16.mxu0 0
      %1643 = vmatpush1.bf16.xpose.msra.mxu0 0
      %1644 = vmatprep.subr.bf16.mxu0 0
      %1645 = vmatpush1.bf16.xpose.msra.mxu0 0
      %1646 = vmatprep.subr.bf16.mxu0 0
      %1647 = vmatpush1.bf16.xpose.msra.mxu0 0
      %1648 = vmatprep.subr.bf16.mxu0 0
      %1649 = vmatpush1.bf16.xpose.msra.mxu0 0
      %1650 = vmatprep.subr.bf16.mxu0 0
      %1651 = vmatpush1.bf16.xpose.msra.mxu0 0
      %1652 = vmatprep.subr.bf16.mxu0 0
      %1653 = vmatpush1.bf16.xpose.msra.mxu0 0
      %1654 = vmatprep.subr.bf16.mxu0 0
      %1655 = vmatpush1.bf16.xpose.msra.mxu0 0
      %1656 = vmatprep.subr.bf16.mxu0 0
      %1657 = vmatpush1.bf16.xpose.msra.mxu0 0
      %1658 = vmatprep.subr.bf16.mxu0 0
      %1659 = vmatpush1.bf16.xpose.msra.mxu0 0
      %1660 = vmatprep.subr.bf16.mxu0 0
      %1661 = vmatpush1.bf16.xpose.msra.mxu0 0
      %1662 = vmatprep.mubr.bf16.mxu0 0
      %1663 = vmatmul.mubr.bf16.gmra.mrb[0].mxu0 %v1625
      %v1664 = vpop.f32.mrb[0].mxu0
      %v1665 = vadd.f32 %v1613, %v1664
      %v1666 = vpop.f32.mrb[0].mxu0
      %v1667 = vpop.f32.mrb[0].mxu0
      %v1668 = vpop.f32.mrb[0].mxu0
      %1669 = vdwg.mxu0
      %v1670 = vadd.f32 %v1665, %v859
      %v1671 = vsel %vm862, %v1670, -inf
      %1672 = vmax.xlane.f32.xlu0 %v1671
      %v1673 = vpop.xlane.xlu0 %1672
      %v1674 = vsub.f32 %v1670, %v1673
      %v1675 = vmul.f32 %v1674, 1.442695
      %v1676 = vpow.pop %v1675
      %v1677 = vsel %vm862, %v1676, 0.0
      %1678 = vadd.xlane.f32.xlu0 %v1677
      %v1679 = vpop.xlane.xlu0 %1678
      %v1680 = vrcp.pop %v1679
      %v1681 = vmul.f32 %v1676, %v1680
      %v1682 = vpack.c.bf16 %v1681, %v1681
      %1683 = vrot.lane.b32.xlu0 %v875, 72
      %v1684 = vpop.permute.xlu0 %1683
      %v1686 = vsel %vm862, %v1682, 0
      %v1689 = vsel %vm882, %v1684, 0
      %1691 = vmatprep.subr.bf16.mxu0 0
      %1692 = vmatpush1.bf16.msra.mxu0 %v1689
      %1693 = vmatprep.subr.bf16.mxu0 0
      %1694 = vmatpush1.bf16.msra.mxu0 0
      %1695 = vmatprep.subr.bf16.mxu0 0
      %1696 = vmatpush1.bf16.msra.mxu0 0
      %1697 = vmatprep.subr.bf16.mxu0 0
      %1698 = vmatpush1.bf16.msra.mxu0 0
      %1699 = vmatprep.subr.bf16.mxu0 0
      %1700 = vmatpush1.bf16.msra.mxu0 0
      %1701 = vmatprep.subr.bf16.mxu0 0
      %1702 = vmatpush1.bf16.msra.mxu0 0
      %1703 = vmatprep.subr.bf16.mxu0 0
      %1704 = vmatpush1.bf16.msra.mxu0 0
      %1705 = vmatprep.subr.bf16.mxu0 0
      %1706 = vmatpush1.bf16.msra.mxu0 0
      %1707 = vmatprep.subr.bf16.mxu0 0
      %1708 = vmatpush1.bf16.msra.mxu0 0
      %1709 = vmatprep.subr.bf16.mxu0 0
      %1710 = vmatpush1.bf16.msra.mxu0 0
      %1711 = vmatprep.subr.bf16.mxu0 0
      %1712 = vmatpush1.bf16.msra.mxu0 0
      %1713 = vmatprep.subr.bf16.mxu0 0
      %1714 = vmatpush1.bf16.msra.mxu0 0
      %1715 = vmatprep.subr.bf16.mxu0 0
      %1716 = vmatpush1.bf16.msra.mxu0 0
      %1717 = vmatprep.subr.bf16.mxu0 0
      %1718 = vmatpush1.bf16.msra.mxu0 0
      %1719 = vmatprep.subr.bf16.mxu0 0
      %1720 = vmatpush1.bf16.msra.mxu0 0
      %1721 = vmatprep.subr.bf16.mxu0 0
      %1722 = vmatpush1.bf16.msra.mxu0 0
      %1723 = vmatprep.mubr.bf16.mxu0 0
      %1724 = vmatmul.mubr.bf16.gmra.mrb[0].mxu0 %v1686
      %v1725 = vpop.f32.mrb[0].mxu0
      %v1726 = vadd.f32 0.0, %v1725
      %v1727 = vpop.f32.mrb[0].mxu0
      %v1728 = vpop.f32.mrb[0].mxu0
      %v1729 = vpop.f32.mrb[0].mxu0
      %1730 = vdwg.mxu0
      %v1731 = vpack.c.bf16 %v1726, %v1726
      %v1733 = vsel %vm862, %v1731, 0
      %v1736 = vsel %vm882, %v707, 0
      %1738 = vmatprep.subr.bf16.mxu0 0
      %1739 = vmatpush1.bf16.msra.mxu0 %v1736
      %1740 = vmatprep.subr.bf16.mxu0 0
      %1741 = vmatpush1.bf16.msra.mxu0 0
      %1742 = vmatprep.subr.bf16.mxu0 0
      %1743 = vmatpush1.bf16.msra.mxu0 0
      %1744 = vmatprep.subr.bf16.mxu0 0
      %1745 = vmatpush1.bf16.msra.mxu0 0
      %1746 = vmatprep.subr.bf16.mxu0 0
      %1747 = vmatpush1.bf16.msra.mxu0 0
      %1748 = vmatprep.subr.bf16.mxu0 0
      %1749 = vmatpush1.bf16.msra.mxu0 0
      %1750 = vmatprep.subr.bf16.mxu0 0
      %1751 = vmatpush1.bf16.msra.mxu0 0
      %1752 = vmatprep.subr.bf16.mxu0 0
      %1753 = vmatpush1.bf16.msra.mxu0 0
      %1754 = vmatprep.subr.bf16.mxu0 0
      %1755 = vmatpush1.bf16.msra.mxu0 0
      %1756 = vmatprep.subr.bf16.mxu0 0
      %1757 = vmatpush1.bf16.msra.mxu0 0
      %1758 = vmatprep.subr.bf16.mxu0 0
      %1759 = vmatpush1.bf16.msra.mxu0 0
      %1760 = vmatprep.subr.bf16.mxu0 0
      %1761 = vmatpush1.bf16.msra.mxu0 0
      %1762 = vmatprep.subr.bf16.mxu0 0
      %1763 = vmatpush1.bf16.msra.mxu0 0
      %1764 = vmatprep.subr.bf16.mxu0 0
      %1765 = vmatpush1.bf16.msra.mxu0 0
      %1766 = vmatprep.subr.bf16.mxu0 0
      %1767 = vmatpush1.bf16.msra.mxu0 0
      %1768 = vmatprep.subr.bf16.mxu0 0
      %1769 = vmatpush1.bf16.msra.mxu0 0
      %1770 = vmatprep.mubr.bf16.mxu0 0
      %1771 = vmatmul.mubr.bf16.gmra.mrb[0].mxu0 %v1733
      %v1772 = vpop.f32.mrb[0].mxu0
      %v1773 = vadd.f32 0.0, %v1772
      %v1774 = vpop.f32.mrb[0].mxu0
      %v1775 = vpop.f32.mrb[0].mxu0
      %v1776 = vpop.f32.mrb[0].mxu0
      %1777 = vdwg.mxu0
      %v1778 = vadd.f32 %v1509, %v1773
      %v1779 = vadd.f32 %v522, %v1778
      %v1780 = vld [vmem:[%s9] sm:$0x1]
      %v1782 = vlaneseq
      %v1783 = vshrl.u32 %v1782, 7
      %v1784 = vsub.s32 0, %v1783
      %v1785 = vrot.slane %v1780, %v1784
      %v1787 = vadd.f32 %v1779, %v1785
      %1788 = vst.msk [vmem:[%s520] sm:$0xff] %vm525, %v1787
      %p1789 = scmp.lt.s32.totalorder %s26, 1
      %s1790 = scalar_select %p1789, %s26, 1
      %s1791 = smul.addr %s1790, 8
      %s1792 = scalar_lea.vmem %s15, %s1791
      // Predicated region
      $region81: #{transformer_forward.18} parent=79 // pred_check
        %p1793 = pneg %p374
      $region82: #{transformer_forward.18} parent=79 // pred_check_branch
        %1795 = sbr.rel (%p1793) target = $region84
      $region83: #{transformer_forward.18} parent=79 // pred_region
        _
      $region84: #{transformer_forward.18} parent=79 // pred_fallthru
        _
    $region80: #{transformer_forward.18} parent=5 // pred_fallthru
      _
    %p1796 = scmp.le.s32.totalorder 2, %s21
    // Predicated region
    $region85: #{transformer_forward.18} parent=5 // pred_check
      %p1797 = pneg %p1796
    $region86: #{transformer_forward.18} parent=5 // pred_check_branch
      %1799 = sbr.rel (%p1797) target = $region88
    $region87: #{transformer_forward.18} parent=5 // pred_region
      %s1800 = ssub.s32 %s21, 2
      // Predicated region
      $region89: #{transformer_forward.18} parent=87 // pred_check
        %p1801 = pneg %p380
      $region90: #{transformer_forward.18} parent=87 // pred_check_branch
        %1803 = sbr.rel (%p1801) target = $region92
      $region91: #{transformer_forward.18} parent=87 // pred_region
        %p1804 = scmp.lt.s32.totalorder %s27, 1
        %s1805 = scalar_select %p1804, %s27, 1
        %s1806 = smul.addr %s1805, 8
        %s1807 = scalar_lea.vmem %s15, %s1806
      $region92: #{transformer_forward.18} parent=87 // pred_fallthru
        _
    $region88: #{transformer_forward.18} parent=5 // pred_fallthru
      _
  $region6: #{transformer_forward.18} parent=0 // loop_footer
    %s25 = sadd.s32 1, %s21
  $region7: #{transformer_forward.18} parent=0 // loop_footer_branch
    %20 = sbr.rel target = $region3
  $region8: #{transformer_forward.18} parent=0 // loop_exit
    _

</llo_original>
